<compile_context>
chip_gen: v7x
topology: tpu7x:2x2x1
jax: 0.10.0
libtpu: 0.0.40
codegen_flags: <defaults>
</compile_context>

<pallas_src>
import functools

import numpy as np
import jax
import jax.numpy as jnp
from jax.experimental import pallas as pl
from jax.experimental.pallas import tpu as pltpu

_LN_EPS = 1e-5          # torch.nn.LayerNorm default eps


def _sigmoid(v):
    # Single-EUP-op sigmoid (tanh form); exp+reciprocal form costs 2 EUP ops.
    return 0.5 * (jnp.tanh(0.5 * v) + 1.0)


def _silu(v):
    return v * _sigmoid(v)


# --------------------------------------------------------------------------- #
# Kernel: one EGNN layer for one batch element (grid step = (batch, layer)).
# --------------------------------------------------------------------------- #
def _egnn_layer_kernel(
    feats_ref,    # [n, d]       initial node features (used at layer 0 only)
    onej_ref,     # [n*n, n+8]   cols 0..n-1: one-hot of j; col n: dist(i,j); rest 0
    pool_ref,     # [n, n*n]     bf16: pool[i, i*n+j] = 1 if j in kNN(i) else 0
    we1a_ref, be1_ref,           # edge MLP Linear 1, feats_i part (+bias)
    we1b_ref, we1c_ref,          # edge MLP Linear 1, feats_j part and rel_dist row
    we2_ref, be2_ref,            # edge MLP Linear 2 (we2 stored bf16)
    wg_ref, bg_ref,              # soft edge gate [MP,1], [1,1]
    gamma_ref, beta_ref,         # node LayerNorm
    wn1a_ref, wn1b_ref, bn1_ref, # node MLP Linear 1 (split normed / pooled msg)
    wn2_ref, bn2_ref,            # node MLP Linear 2
    o_ref,        # [n, d]       carried node features / final output
    brow_ref,     # scratch [n+8, EH]: rows 0..n-1 = x@we1b, row n = we1c, rest 0
):
    l = pl.program_id(1)

    @pl.when(l == 0)
    def _init():                              # layer 0: seed the carried state
        o_ref[...] = feats_ref[...]

    x = o_ref[...]                            # current layer input, [n, d]
    n, _ = x.shape
    dot = functools.partial(jnp.dot, preferred_element_type=jnp.float32)

    # ---- edge Linear 1, factorised over ordered pairs ------------------------
    a_rows = dot(x, we1a_ref[...]) + be1_ref[...]          # [n, EH]
    brow_ref[...] = jnp.zeros_like(brow_ref)
    brow_ref[0:n, :] = dot(x, we1b_ref[...])               # b_rows
    brow_ref[n:n + 1, :] = we1c_ref[...]                   # rel_dist weight row
    # single MXU matmul yields  b_rows[j] + dist(i,j) * we1c  for every pair
    h1 = dot(onej_ref[...], brow_ref[...])                 # [n*n, EH]
    eh = h1.shape[-1]
    h1 = h1.reshape(n, n, eh) + a_rows[:, None, :]         # + a_rows[i] (sublane splat)
    h1 = _silu(h1).reshape(n * n, eh)

    # ---- edge Linear 2 on the MXU in bf16 ------------------------------------
    m = _silu(dot(h1.astype(jnp.bfloat16), we2_ref[...]) + be2_ref[...])   # [n*n, MP]

    # ---- soft edge gate: logit via MXU (no VPU mult + lane reduction) --------
    gate = _sigmoid(dot(m, wg_ref[...]) + bg_ref[...])     # [n*n, 1]
    m = (m * gate).astype(jnp.bfloat16)

    # ---- kNN 'sum' pooling as a bf16 matmul with the masked pooling matrix ---
    m_i = dot(pool_ref[...], m)                            # [n, MP] f32

    # ---- node update: LayerNorm -> MLP -> residual ----------------------------
    mu = jnp.mean(x, axis=-1, keepdims=True)
    xc = x - mu
    var = jnp.mean(xc * xc, axis=-1, keepdims=True)
    normed = xc * jax.lax.rsqrt(var + _LN_EPS) * gamma_ref[...] + beta_ref[...]

    h = _silu(dot(normed, wn1a_ref[...]) + dot(m_i, wn1b_ref[...])
              + bn1_ref[...])                              # [n, NH]
    o_ref[...] = dot(h, wn2_ref[...]) + bn2_ref[...] + x   # residual


# --------------------------------------------------------------------------- #
# Wrapper: single fused pallas_call for the whole EGNN_Net forward.
# --------------------------------------------------------------------------- #
@functools.partial(jax.jit, static_argnames=("k",))
def egnn_net_pallas(feats, coors, params, *, k):
    b, n, d = feats.shape
    depth, _, EH = params["we1a"].shape
    MP = params["we2"].shape[2]
    NH = params["wn1a"].shape[2]
    npairs = n * n
    w = n + 8                     # one_j width: dist folded in col n, pad to mult of 8

    # Coordinates never change (update_coors=False): distances and the exact
    # k-nearest-neighbour pooling matrix are computed once.
    rel = coors[:, :, None, :] - coors[:, None, :, :]               # [b, n, n, 3]
    dist = jnp.sum(rel * rel, axis=-1)                              # [b, n, n]
    _, idx = jax.lax.top_k(-dist, k)                                # k smallest (incl. self)
    knn = jnp.sum(jax.nn.one_hot(idx, n, dtype=jnp.float32), axis=2)   # exact 0/1, k per row
    eye = jnp.eye(n, dtype=jnp.float32)
    # pool[b, i, i'*n + j] = knn[b, i, j] * (i == i')
    pool = (knn[:, :, None, :] * eye[None, :, :, None]).reshape(b, n, npairs)
    pool = pool.astype(jnp.bfloat16)                                # 0/1 -> lossless
    one_j = jnp.tile(eye, (n, 1))                                   # [n*n, n]
    onej_ext = jnp.zeros((b, npairs, w), jnp.float32)
    onej_ext = onej_ext.at[:, :, :n].set(jnp.broadcast_to(one_j, (b, npairs, n)))
    onej_ext = onej_ext.at[:, :, n].set(dist.reshape(b, npairs))    # dist column

    bmap = lambda i, l: (i, 0, 0)      # per-batch blocks (resident over depth)
    lmap = lambda i, l: (l, 0, 0)      # per-layer weight blocks

    in_specs = [
        pl.BlockSpec((None, n, d), bmap),          # feats
        pl.BlockSpec((None, npairs, w), bmap),     # one_j | dist
        pl.BlockSpec((None, n, npairs), bmap),     # masked pooling matrix (bf16)
        pl.BlockSpec((None, d, EH), lmap),         # we1a
        pl.BlockSpec((None, 1, EH), lmap),         # be1
        pl.BlockSpec((None, d, EH), lmap),         # we1b
        pl.BlockSpec((None, 1, EH), lmap),         # we1c (rel_dist row)
        pl.BlockSpec((None, EH, MP), lmap),        # we2 (bf16)
        pl.BlockSpec((None, 1, MP), lmap),         # be2
        pl.BlockSpec((None, MP, 1), lmap),         # wg (column)
        pl.BlockSpec((None, 1, 1), lmap),          # bg
        pl.BlockSpec((None, 1, d), lmap),          # gamma
        pl.BlockSpec((None, 1, d), lmap),          # beta
        pl.BlockSpec((None, d, NH), lmap),         # wn1a
        pl.BlockSpec((None, MP, NH), lmap),        # wn1b
        pl.BlockSpec((None, 1, NH), lmap),         # bn1
        pl.BlockSpec((None, NH, d), lmap),         # wn2
        pl.BlockSpec((None, 1, d), lmap),          # bn2
    ]

    return pl.pallas_call(
        _egnn_layer_kernel,
        grid=(b, depth),
        in_specs=in_specs,
        out_specs=pl.BlockSpec((None, n, d), bmap),
        out_shape=jax.ShapeDtypeStruct((b, n, d), jnp.float32),
        scratch_shapes=[pltpu.VMEM((w, EH), jnp.float32)],
        compiler_params=pltpu.CompilerParams(
            dimension_semantics=("parallel", "arbitrary"),
            vmem_limit_bytes=24 * 1024 * 1024,     # actual footprint ~8 MB
        ),
    )(feats, onej_ext, pool,
      params["we1a"], params["be1"], params["we1b"], params["we1c"],
      params["we2"], params["be2"], params["wg"], params["bg"],
      params["gamma"], params["beta"],
      params["wn1a"], params["wn1b"], params["bn1"],
      params["wn2"], params["bn2"])


# --------------------------------------------------------------------------- #
# Parameters (weights stored [in, out] so y = x @ W + b == nn.Linear).
# --------------------------------------------------------------------------- #
def _linear_init(key, fan_in, fan_out, init_eps):
    kw, kb = jax.random.split(key)
    w = init_eps * jax.random.normal(kw, (fan_in, fan_out), dtype=jnp.float32)
    bound = 1.0 / float(np.sqrt(fan_in))
    b = jax.random.uniform(kb, (fan_out,), minval=-bound, maxval=bound,
                           dtype=jnp.float32)
    return w, b


def init_egnn_layers(key, dim, depth, m_dim, init_eps=1e-3):
    edge_in = 2 * dim + 1
    layers = []
    for kl in jax.random.split(key, depth):
        k1, k2, k3, k4, k5 = jax.random.split(kl, 5)
        W_e1, b_e1 = _linear_init(k1, edge_in, edge_in * 2, init_eps)
        W_e2, b_e2 = _linear_init(k2, edge_in * 2, m_dim, init_eps)
        W_g, b_g = _linear_init(k3, m_dim, 1, init_eps)
        W_n1, b_n1 = _linear_init(k4, dim + m_dim, 2 * dim, init_eps)
        W_n2, b_n2 = _linear_init(k5, 2 * dim, dim, init_eps)
        layers.append(dict(
            W_e1=W_e1, b_e1=b_e1, W_e2=W_e2, b_e2=b_e2, W_g=W_g, b_g=b_g,
            gamma=jnp.ones((dim,), jnp.float32),
            beta=jnp.zeros((dim,), jnp.float32),
            W_n1=W_n1, b_n1=b_n1, W_n2=W_n2, b_n2=b_n2))
    return layers


def _round_up(v, m):
    return ((v + m - 1) // m) * m


def _pad2d(a, rows, cols):
    return jnp.zeros((rows, cols), jnp.float32).at[:a.shape[0], :a.shape[1]].set(a)


def pack_egnn_params(layers, dim, m_dim):
    """Stack per-layer weights along a leading depth axis, zero-padded so every
    lane dimension is a multiple of 128 (math is exactly unchanged)."""
    eh0, nh0 = 2 * (2 * dim + 1), 2 * dim
    EH, MP, NH = _round_up(eh0, 128), _round_up(m_dim, 128), _round_up(nh0, 128)
    keys = ("we1a", "be1", "we1b", "we1c", "we2", "be2", "wg", "bg",
            "gamma", "beta", "wn1a", "wn1b", "bn1", "wn2", "bn2")
    packed = {kk: [] for kk in keys}
    for p in layers:
        packed["we1a"].append(_pad2d(p["W_e1"][:dim], dim, EH))
        packed["be1"].append(_pad2d(p["b_e1"][None, :], 1, EH))
        packed["we1b"].append(_pad2d(p["W_e1"][dim:2 * dim], dim, EH))
        packed["we1c"].append(_pad2d(p["W_e1"][2 * dim:2 * dim + 1], 1, EH))
        packed["we2"].append(_pad2d(p["W_e2"], EH, MP))
        packed["be2"].append(_pad2d(p["b_e2"][None, :], 1, MP))
        packed["wg"].append(_pad2d(p["W_g"], MP, 1))          # column form
        packed["bg"].append(p["b_g"].reshape(1, 1))
        packed["gamma"].append(p["gamma"][None, :])
        packed["beta"].append(p["beta"][None, :])
        packed["wn1a"].append(_pad2d(p["W_n1"][:dim], dim, NH))
        packed["wn1b"].append(_pad2d(p["W_n1"][dim:], MP, NH))
        packed["bn1"].append(_pad2d(p["b_n1"][None, :], 1, NH))
        packed["wn2"].append(_pad2d(p["W_n2"], NH, dim))
        packed["bn2"].append(p["b_n2"][None, :])
    out = {kk: jnp.stack(v, axis=0) for kk, v in packed.items()}
    out["we2"] = out["we2"].astype(jnp.bfloat16)              # bf16 MXU operand
    return out


# --------------------------------------------------------------------------- #
# Pure-JAX reference that mirrors the PyTorch layer op-for-op
# (topk gather of the k nearest neighbours, soft edges, sum pooling,
#  LayerNorm'd node MLP with residual, coordinates untouched).
# --------------------------------------------------------------------------- #
def egnn_net_reference(feats, coors, layers, k):
    x = feats
    b, n, d = x.shape
    rel = coors[:, :, None, :] - coors[:, None, :, :]
    dist = jnp.sum(rel * rel, axis=-1)                               # [b,n,n]
    _, idx = jax.lax.top_k(-dist, k)                                 # [b,n,k]
    rel_dist = jnp.take_along_axis(dist, idx, axis=-1)[..., None]    # [b,n,k,1]
    for p in layers:
        feats_j = jax.vmap(lambda f, ix: f[ix])(x, idx)              # [b,n,k,d]
        feats_i = jnp.broadcast_to(x[:, :, None, :], (b, n, k, d))
        edge_in = jnp.concatenate([feats_i, feats_j, rel_dist], axis=-1)
        h = jax.nn.silu(edge_in @ p["W_e1"] + p["b_e1"])
        m_ij = jax.nn.silu(h @ p["W_e2"] + p["b_e2"])
        m_ij = m_ij * jax.nn.sigmoid(m_ij @ p["W_g"] + p["b_g"])
        m_i = jnp.sum(m_ij, axis=-2)                                  # [b,n,m]
        mu = jnp.mean(x, axis=-1, keepdims=True)
        var = jnp.mean((x - mu) ** 2, axis=-1, keepdims=True)
        normed = (x - mu) / jnp.sqrt(var + _LN_EPS) * p["gamma"] + p["beta"]
        node_in = jnp.concatenate([normed, m_i], axis=-1)
        x = jax.nn.silu(node_in @ p["W_n1"] + p["b_n1"]) @ p["W_n2"] + p["b_n2"] + x
    return x


# --------------------------------------------------------------------------- #
if __name__ == "__main__":
    dim = 64            # node feature dimension
    depth = 3           # EGNN_Net default depth
    m_dim = 16          # EGNN default message dim
    k = 30              # num_nearest_neighbors default
    batch, n_nodes = 2, 32

    key = jax.random.PRNGKey(0)
    kp, kf, kc = jax.random.split(key, 3)
    layers = init_egnn_layers(kp, dim, depth, m_dim, init_eps=1e-3)
    packed = pack_egnn_params(layers, dim, m_dim)

    feats = jax.random.normal(kf, (batch, n_nodes, dim), dtype=jnp.float32)
    coors = jax.random.normal(kc, (batch, n_nodes, 3), dtype=jnp.float32)

    out = egnn_net_pallas(feats, coors, packed, k=k)
    out = jax.block_until_ready(out)

    ref = egnn_net_reference(feats, coors, layers, k)
    np.testing.assert_allclose(np.asarray(out), np.asarray(ref),
                               rtol=2e-3, atol=2e-3)
    assert out.shape == (batch, n_nodes, dim)
    print("KERNEL_OK")
</pallas_src>

<mosaic_0001>
module attributes {stable_mosaic.version = 11 : i64} {
  func.func @_egnn_layer_kernel(%arg0: i32, %arg1: i32, %arg2: memref<1x32x64xf32, #tpu.memory_space<vmem>>, %arg3: memref<1x1024x40xf32, #tpu.memory_space<vmem>>, %arg4: memref<1x32x1024xbf16, #tpu.memory_space<vmem>>, %arg5: memref<1x64x384xf32, #tpu.memory_space<vmem>>, %arg6: memref<1x1x384xf32, #tpu.memory_space<vmem>>, %arg7: memref<1x64x384xf32, #tpu.memory_space<vmem>>, %arg8: memref<1x1x384xf32, #tpu.memory_space<vmem>>, %arg9: memref<1x384x128xbf16, #tpu.memory_space<vmem>>, %arg10: memref<1x1x128xf32, #tpu.memory_space<vmem>>, %arg11: memref<1x128x1xf32, #tpu.memory_space<vmem>>, %arg12: memref<1x1x1xf32, #tpu.memory_space<vmem>>, %arg13: memref<1x1x64xf32, #tpu.memory_space<vmem>>, %arg14: memref<1x1x64xf32, #tpu.memory_space<vmem>>, %arg15: memref<1x64x128xf32, #tpu.memory_space<vmem>>, %arg16: memref<1x128x128xf32, #tpu.memory_space<vmem>>, %arg17: memref<1x1x128xf32, #tpu.memory_space<vmem>>, %arg18: memref<1x128x64xf32, #tpu.memory_space<vmem>>, %arg19: memref<1x1x64xf32, #tpu.memory_space<vmem>>, %arg20: memref<1x32x64xf32, #tpu.memory_space<vmem>>, %arg21: memref<40x384xf32, #tpu.memory_space<vmem>>) attributes {dimension_semantics = [#tpu.dimension_semantics<parallel>, #tpu.dimension_semantics<arbitrary>], iteration_bounds = array<i64: 2, 3>, scalar_prefetch = 0 : i64, scratch_operands = 1 : i64, tpu.core_type = #tpu.core_type<tc>, window_params = [{transform_indices = @transform_0, window_bounds = array<i64: 1, 32, 64>}, {transform_indices = @transform_1, window_bounds = array<i64: 1, 1024, 40>}, {transform_indices = @transform_2, window_bounds = array<i64: 1, 32, 1024>}, {transform_indices = @transform_3, window_bounds = array<i64: 1, 64, 384>}, {transform_indices = @transform_4, window_bounds = array<i64: 1, 1, 384>}, {transform_indices = @transform_5, window_bounds = array<i64: 1, 64, 384>}, {transform_indices = @transform_6, window_bounds = array<i64: 1, 1, 384>}, {transform_indices = @transform_7, window_bounds = array<i64: 1, 384, 128>}, {transform_indices = @transform_8, window_bounds = array<i64: 1, 1, 128>}, {transform_indices = @transform_9, window_bounds = array<i64: 1, 128, 1>}, {transform_indices = @transform_10, window_bounds = array<i64: 1, 1, 1>}, {transform_indices = @transform_11, window_bounds = array<i64: 1, 1, 64>}, {transform_indices = @transform_12, window_bounds = array<i64: 1, 1, 64>}, {transform_indices = @transform_13, window_bounds = array<i64: 1, 64, 128>}, {transform_indices = @transform_14, window_bounds = array<i64: 1, 128, 128>}, {transform_indices = @transform_15, window_bounds = array<i64: 1, 1, 128>}, {transform_indices = @transform_16, window_bounds = array<i64: 1, 128, 64>}, {transform_indices = @transform_17, window_bounds = array<i64: 1, 1, 64>}, {transform_indices = @transform_18, window_bounds = array<i64: 1, 32, 64>}]} {
    %c0_i32 = arith.constant 0 : i32
    %0 = arith.cmpi eq, %arg1, %c0_i32 : i32
    %1 = arith.extui %0 : i1 to i32
    %c0_i32_0 = arith.constant 0 : i32
    %2 = arith.cmpi ne, %1, %c0_i32_0 : i32
    scf.if %2 {
      %c0_90 = arith.constant 0 : index
      %c0_91 = arith.constant 0 : index
      %c0_92 = arith.constant 0 : index
      %128 = vector.load %arg2[%c0_90, %c0_91, %c0_92] : memref<1x32x64xf32, #tpu.memory_space<vmem>>, vector<1x32x64xf32>
      %129 = vector.shape_cast %128 : vector<1x32x64xf32> to vector<32x64xf32>
      %c0_93 = arith.constant 0 : index
      %c0_94 = arith.constant 0 : index
      %c0_95 = arith.constant 0 : index
      %130 = vector.load %arg20[%c0_93, %c0_94, %c0_95] : memref<1x32x64xf32, #tpu.memory_space<vmem>>, vector<1x32x64xf32>
      %131 = vector.shape_cast %130 : vector<1x32x64xf32> to vector<32x64xf32>
      %132 = vector.shape_cast %129 : vector<32x64xf32> to vector<1x32x64xf32>
      tpu.vector_store %arg20[%c0_93, %c0_94, %c0_95], %132 {strides = array<i32>} : memref<1x32x64xf32, #tpu.memory_space<vmem>>, vector<1x32x64xf32>,
    } else {
    }
    %c0 = arith.constant 0 : index
    %c0_1 = arith.constant 0 : index
    %c0_2 = arith.constant 0 : index
    %3 = vector.load %arg20[%c0, %c0_1, %c0_2] : memref<1x32x64xf32, #tpu.memory_space<vmem>>, vector<1x32x64xf32>
    %4 = vector.shape_cast %3 : vector<1x32x64xf32> to vector<32x64xf32>
    %c0_3 = arith.constant 0 : index
    %c0_4 = arith.constant 0 : index
    %c0_5 = arith.constant 0 : index
    %5 = vector.load %arg5[%c0_3, %c0_4, %c0_5] : memref<1x64x384xf32, #tpu.memory_space<vmem>>, vector<1x64x384xf32>
    %6 = vector.shape_cast %5 : vector<1x64x384xf32> to vector<64x384xf32>
    %cst = arith.constant dense<0.000000e+00> : vector<32x384xf32>
    %7 = tpu.matmul %4, %6, %cst {dimension_numbers = #tpu.dot_dimension_numbers<[1], [0], [0], [1], [0, 0, 1, 1], [], []>} : vector<32x64xf32>, vector<64x384xf32>, vector<32x384xf32> -> vector<32x384xf32>
    %c0_6 = arith.constant 0 : index
    %c0_7 = arith.constant 0 : index
    %c0_8 = arith.constant 0 : index
    %8 = vector.load %arg6[%c0_6, %c0_7, %c0_8] : memref<1x1x384xf32, #tpu.memory_space<vmem>>, vector<1x1x384xf32>
    %9 = vector.shape_cast %8 : vector<1x1x384xf32> to vector<1x384xf32>
    %10 = vector.broadcast %9 : vector<1x384xf32> to vector<32x384xf32>
    %11 = arith.addf %7, %10 : vector<32x384xf32>
    %cst_9 = arith.constant 0.000000e+00 : f32
    %12 = vector.broadcast %cst_9 : f32 to vector<40x384xf32>
    %c0_10 = arith.constant 0 : index
    %c0_11 = arith.constant 0 : index
    %13 = vector.load %arg21[%c0_10, %c0_11] : memref<40x384xf32, #tpu.memory_space<vmem>>, vector<40x384xf32>
    tpu.vector_store %arg21[%c0_10, %c0_11], %12 {strides = array<i32>} : memref<40x384xf32, #tpu.memory_space<vmem>>, vector<40x384xf32>,
    %c0_12 = arith.constant 0 : index
    %c0_13 = arith.constant 0 : index
    %c0_14 = arith.constant 0 : index
    %14 = vector.load %arg7[%c0_12, %c0_13, %c0_14] : memref<1x64x384xf32, #tpu.memory_space<vmem>>, vector<1x64x384xf32>
    %15 = vector.shape_cast %14 : vector<1x64x384xf32> to vector<64x384xf32>
    %cst_15 = arith.constant dense<0.000000e+00> : vector<32x384xf32>
    %16 = tpu.matmul %4, %15, %cst_15 {dimension_numbers = #tpu.dot_dimension_numbers<[1], [0], [0], [1], [0, 0, 1, 1], [], []>} : vector<32x64xf32>, vector<64x384xf32>, vector<32x384xf32> -> vector<32x384xf32>
    %c0_16 = arith.constant 0 : index
    %c0_17 = arith.constant 0 : index
    %17 = vector.load %arg21[%c0_16, %c0_17] : memref<40x384xf32, #tpu.memory_space<vmem>>, vector<32x384xf32>
    tpu.vector_store %arg21[%c0_16, %c0_17], %16 {strides = array<i32>} : memref<40x384xf32, #tpu.memory_space<vmem>>, vector<32x384xf32>,
    %c0_18 = arith.constant 0 : index
    %c0_19 = arith.constant 0 : index
    %c0_20 = arith.constant 0 : index
    %18 = vector.load %arg8[%c0_18, %c0_19, %c0_20] : memref<1x1x384xf32, #tpu.memory_space<vmem>>, vector<1x1x384xf32>
    %19 = vector.shape_cast %18 : vector<1x1x384xf32> to vector<1x384xf32>
    %c32 = arith.constant 32 : index
    %c0_21 = arith.constant 0 : index
    %20 = vector.load %arg21[%c32, %c0_21] : memref<40x384xf32, #tpu.memory_space<vmem>>, vector<1x384xf32>
    tpu.vector_store %arg21[%c32, %c0_21], %19 {strides = array<i32>} : memref<40x384xf32, #tpu.memory_space<vmem>>, vector<1x384xf32>,
    %c0_22 = arith.constant 0 : index
    %c0_23 = arith.constant 0 : index
    %c0_24 = arith.constant 0 : index
    %21 = vector.load %arg3[%c0_22, %c0_23, %c0_24] : memref<1x1024x40xf32, #tpu.memory_space<vmem>>, vector<1x1024x40xf32>
    %22 = vector.shape_cast %21 : vector<1x1024x40xf32> to vector<1024x40xf32>
    %c0_25 = arith.constant 0 : index
    %c0_26 = arith.constant 0 : index
    %23 = vector.load %arg21[%c0_25, %c0_26] : memref<40x384xf32, #tpu.memory_space<vmem>>, vector<40x384xf32>
    %cst_27 = arith.constant dense<0.000000e+00> : vector<1024x384xf32>
    %24 = tpu.matmul %22, %23, %cst_27 {dimension_numbers = #tpu.dot_dimension_numbers<[1], [0], [0], [1], [0, 0, 1, 1], [], []>} : vector<1024x40xf32>, vector<40x384xf32>, vector<1024x384xf32> -> vector<1024x384xf32>
    %25 = vector.shape_cast %24 : vector<1024x384xf32> to vector<32x32x384xf32>
    %26 = vector.shape_cast %11 : vector<32x384xf32> to vector<32x1x384xf32>
    %27 = vector.broadcast %26 : vector<32x1x384xf32> to vector<32x32x384xf32>
    %28 = arith.addf %25, %27 : vector<32x32x384xf32>
    %cst_28 = arith.constant 5.000000e-01 : f32
    %29 = vector.broadcast %cst_28 : f32 to vector<32x32x384xf32>
    %30 = arith.mulf %29, %28 : vector<32x32x384xf32>
    %31 = math.tanh %30 : vector<32x32x384xf32>
    %cst_29 = arith.constant 1.000000e+00 : f32
    %32 = vector.broadcast %cst_29 : f32 to vector<32x32x384xf32>
    %33 = arith.addf %31, %32 : vector<32x32x384xf32>
    %cst_30 = arith.constant 5.000000e-01 : f32
    %34 = vector.broadcast %cst_30 : f32 to vector<32x32x384xf32>
    %35 = arith.mulf %34, %33 : vector<32x32x384xf32>
    %36 = arith.mulf %28, %35 : vector<32x32x384xf32>
    %37 = vector.shape_cast %36 : vector<32x32x384xf32> to vector<1024x384xf32>
    %38 = arith.truncf %37 : vector<1024x384xf32> to vector<1024x384xbf16>
    %c0_31 = arith.constant 0 : index
    %c0_32 = arith.constant 0 : index
    %c0_33 = arith.constant 0 : index
    %39 = vector.load %arg9[%c0_31, %c0_32, %c0_33] : memref<1x384x128xbf16, #tpu.memory_space<vmem>>, vector<1x384x128xbf16>
    %40 = vector.shape_cast %39 : vector<1x384x128xbf16> to vector<384x128xbf16>
    %cst_34 = arith.constant dense<0.000000e+00> : vector<1024x128xf32>
    %41 = tpu.matmul %38, %40, %cst_34 {dimension_numbers = #tpu.dot_dimension_numbers<[1], [0], [0], [1], [0, 0, 1, 1], [], []>} : vector<1024x384xbf16>, vector<384x128xbf16>, vector<1024x128xf32> -> vector<1024x128xf32>
    %c0_35 = arith.constant 0 : index
    %c0_36 = arith.constant 0 : index
    %c0_37 = arith.constant 0 : index
    %42 = vector.load %arg10[%c0_35, %c0_36, %c0_37] : memref<1x1x128xf32, #tpu.memory_space<vmem>>, vector<1x1x128xf32>
    %43 = vector.shape_cast %42 : vector<1x1x128xf32> to vector<1x128xf32>
    %44 = vector.broadcast %43 : vector<1x128xf32> to vector<1024x128xf32>
    %45 = arith.addf %41, %44 : vector<1024x128xf32>
    %cst_38 = arith.constant 5.000000e-01 : f32
    %46 = vector.broadcast %cst_38 : f32 to vector<1024x128xf32>
    %47 = arith.mulf %46, %45 : vector<1024x128xf32>
    %48 = math.tanh %47 : vector<1024x128xf32>
    %cst_39 = arith.constant 1.000000e+00 : f32
    %49 = vector.broadcast %cst_39 : f32 to vector<1024x128xf32>
    %50 = arith.addf %48, %49 : vector<1024x128xf32>
    %cst_40 = arith.constant 5.000000e-01 : f32
    %51 = vector.broadcast %cst_40 : f32 to vector<1024x128xf32>
    %52 = arith.mulf %51, %50 : vector<1024x128xf32>
    %53 = arith.mulf %45, %52 : vector<1024x128xf32>
    %c0_41 = arith.constant 0 : index
    %c0_42 = arith.constant 0 : index
    %c0_43 = arith.constant 0 : index
    %54 = vector.load %arg11[%c0_41, %c0_42, %c0_43] : memref<1x128x1xf32, #tpu.memory_space<vmem>>, vector<1x128x1xf32>
    %55 = vector.shape_cast %54 : vector<1x128x1xf32> to vector<128x1xf32>
    %cst_44 = arith.constant dense<0.000000e+00> : vector<1024x1xf32>
    %56 = tpu.matmul %53, %55, %cst_44 {dimension_numbers = #tpu.dot_dimension_numbers<[1], [0], [0], [1], [0, 0, 1, 1], [], []>} : vector<1024x128xf32>, vector<128x1xf32>, vector<1024x1xf32> -> vector<1024x1xf32>
    %c0_45 = arith.constant 0 : index
    %c0_46 = arith.constant 0 : index
    %c0_47 = arith.constant 0 : index
    %57 = vector.load %arg12[%c0_45, %c0_46, %c0_47] : memref<1x1x1xf32, #tpu.memory_space<vmem>>, vector<1x1x1xf32>
    %58 = vector.shape_cast %57 : vector<1x1x1xf32> to vector<1x1xf32>
    %59 = vector.broadcast %58 : vector<1x1xf32> to vector<1024x1xf32>
    %60 = arith.addf %56, %59 : vector<1024x1xf32>
    %cst_48 = arith.constant 5.000000e-01 : f32
    %61 = vector.broadcast %cst_48 : f32 to vector<1024x1xf32>
    %62 = arith.mulf %61, %60 : vector<1024x1xf32>
    %63 = math.tanh %62 : vector<1024x1xf32>
    %cst_49 = arith.constant 1.000000e+00 : f32
    %64 = vector.broadcast %cst_49 : f32 to vector<1024x1xf32>
    %65 = arith.addf %63, %64 : vector<1024x1xf32>
    %cst_50 = arith.constant 5.000000e-01 : f32
    %66 = vector.broadcast %cst_50 : f32 to vector<1024x1xf32>
    %67 = arith.mulf %66, %65 : vector<1024x1xf32>
    %68 = vector.broadcast %67 : vector<1024x1xf32> to vector<1024x128xf32>
    %69 = arith.mulf %53, %68 : vector<1024x128xf32>
    %70 = arith.truncf %69 : vector<1024x128xf32> to vector<1024x128xbf16>
    %c0_51 = arith.constant 0 : index
    %c0_52 = arith.constant 0 : index
    %c0_53 = arith.constant 0 : index
    %71 = vector.load %arg4[%c0_51, %c0_52, %c0_53] : memref<1x32x1024xbf16, #tpu.memory_space<vmem>>, vector<1x32x1024xbf16>
    %72 = vector.shape_cast %71 : vector<1x32x1024xbf16> to vector<32x1024xbf16>
    %cst_54 = arith.constant dense<0.000000e+00> : vector<32x128xf32>
    %73 = tpu.matmul %72, %70, %cst_54 {dimension_numbers = #tpu.dot_dimension_numbers<[1], [0], [0], [1], [0, 0, 1, 1], [], []>} : vector<32x1024xbf16>, vector<1024x128xbf16>, vector<32x128xf32> -> vector<32x128xf32>
    %cst_55 = arith.constant dense<0.000000e+00> : vector<32xf32>
    %74 = vector.multi_reduction <add>, %4, %cst_55 [1] : vector<32x64xf32> to vector<32xf32>
    %75 = vector.shape_cast %74 : vector<32xf32> to vector<32x1xf32>
    %cst_56 = arith.constant 6.400000e+01 : f32
    %76 = vector.broadcast %cst_56 : f32 to vector<32x1xf32>
    %77 = arith.divf %75, %76 : vector<32x1xf32>
    %78 = vector.broadcast %77 : vector<32x1xf32> to vector<32x64xf32>
    %79 = arith.subf %4, %78 : vector<32x64xf32>
    %80 = arith.mulf %79, %79 : vector<32x64xf32>
    %cst_57 = arith.constant dense<0.000000e+00> : vector<32xf32>
    %81 = vector.multi_reduction <add>, %80, %cst_57 [1] : vector<32x64xf32> to vector<32xf32>
    %82 = vector.shape_cast %81 : vector<32xf32> to vector<32x1xf32>
    %cst_58 = arith.constant 6.400000e+01 : f32
    %83 = vector.broadcast %cst_58 : f32 to vector<32x1xf32>
    %84 = arith.divf %82, %83 : vector<32x1xf32>
    %cst_59 = arith.constant 9.99999974E-6 : f32
    %85 = vector.broadcast %cst_59 : f32 to vector<32x1xf32>
    %86 = arith.addf %84, %85 : vector<32x1xf32>
    %87 = math.rsqrt %86 : vector<32x1xf32>
    %88 = vector.broadcast %87 : vector<32x1xf32> to vector<32x64xf32>
    %89 = arith.mulf %79, %88 : vector<32x64xf32>
    %c0_60 = arith.constant 0 : index
    %c0_61 = arith.constant 0 : index
    %c0_62 = arith.constant 0 : index
    %90 = vector.load %arg13[%c0_60, %c0_61, %c0_62] : memref<1x1x64xf32, #tpu.memory_space<vmem>>, vector<1x1x64xf32>
    %91 = vector.shape_cast %90 : vector<1x1x64xf32> to vector<1x64xf32>
    %92 = vector.broadcast %91 : vector<1x64xf32> to vector<32x64xf32>
    %93 = arith.mulf %89, %92 : vector<32x64xf32>
    %c0_63 = arith.constant 0 : index
    %c0_64 = arith.constant 0 : index
    %c0_65 = arith.constant 0 : index
    %94 = vector.load %arg14[%c0_63, %c0_64, %c0_65] : memref<1x1x64xf32, #tpu.memory_space<vmem>>, vector<1x1x64xf32>
    %95 = vector.shape_cast %94 : vector<1x1x64xf32> to vector<1x64xf32>
    %96 = vector.broadcast %95 : vector<1x64xf32> to vector<32x64xf32>
    %97 = arith.addf %93, %96 : vector<32x64xf32>
    %c0_66 = arith.constant 0 : index
    %c0_67 = arith.constant 0 : index
    %c0_68 = arith.constant 0 : index
    %98 = vector.load %arg15[%c0_66, %c0_67, %c0_68] : memref<1x64x128xf32, #tpu.memory_space<vmem>>, vector<1x64x128xf32>
    %99 = vector.shape_cast %98 : vector<1x64x128xf32> to vector<64x128xf32>
    %cst_69 = arith.constant dense<0.000000e+00> : vector<32x128xf32>
    %100 = tpu.matmul %97, %99, %cst_69 {dimension_numbers = #tpu.dot_dimension_numbers<[1], [0], [0], [1], [0, 0, 1, 1], [], []>} : vector<32x64xf32>, vector<64x128xf32>, vector<32x128xf32> -> vector<32x128xf32>
    %c0_70 = arith.constant 0 : index
    %c0_71 = arith.constant 0 : index
    %c0_72 = arith.constant 0 : index
    %101 = vector.load %arg16[%c0_70, %c0_71, %c0_72] : memref<1x128x128xf32, #tpu.memory_space<vmem>>, vector<1x128x128xf32>
    %102 = vector.shape_cast %101 : vector<1x128x128xf32> to vector<128x128xf32>
    %cst_73 = arith.constant dense<0.000000e+00> : vector<32x128xf32>
    %103 = tpu.matmul %73, %102, %cst_73 {dimension_numbers = #tpu.dot_dimension_numbers<[1], [0], [0], [1], [0, 0, 1, 1], [], []>} : vector<32x128xf32>, vector<128x128xf32>, vector<32x128xf32> -> vector<32x128xf32>
    %104 = arith.addf %100, %103 : vector<32x128xf32>
    %c0_74 = arith.constant 0 : index
    %c0_75 = arith.constant 0 : index
    %c0_76 = arith.constant 0 : index
    %105 = vector.load %arg17[%c0_74, %c0_75, %c0_76] : memref<1x1x128xf32, #tpu.memory_space<vmem>>, vector<1x1x128xf32>
    %106 = vector.shape_cast %105 : vector<1x1x128xf32> to vector<1x128xf32>
    %107 = vector.broadcast %106 : vector<1x128xf32> to vector<32x128xf32>
    %108 = arith.addf %104, %107 : vector<32x128xf32>
    %cst_77 = arith.constant 5.000000e-01 : f32
    %109 = vector.broadcast %cst_77 : f32 to vector<32x128xf32>
    %110 = arith.mulf %109, %108 : vector<32x128xf32>
    %111 = math.tanh %110 : vector<32x128xf32>
    %cst_78 = arith.constant 1.000000e+00 : f32
    %112 = vector.broadcast %cst_78 : f32 to vector<32x128xf32>
    %113 = arith.addf %111, %112 : vector<32x128xf32>
    %cst_79 = arith.constant 5.000000e-01 : f32
    %114 = vector.broadcast %cst_79 : f32 to vector<32x128xf32>
    %115 = arith.mulf %114, %113 : vector<32x128xf32>
    %116 = arith.mulf %108, %115 : vector<32x128xf32>
    %c0_80 = arith.constant 0 : index
    %c0_81 = arith.constant 0 : index
    %c0_82 = arith.constant 0 : index
    %117 = vector.load %arg18[%c0_80, %c0_81, %c0_82] : memref<1x128x64xf32, #tpu.memory_space<vmem>>, vector<1x128x64xf32>
    %118 = vector.shape_cast %117 : vector<1x128x64xf32> to vector<128x64xf32>
    %cst_83 = arith.constant dense<0.000000e+00> : vector<32x64xf32>
    %119 = tpu.matmul %116, %118, %cst_83 {dimension_numbers = #tpu.dot_dimension_numbers<[1], [0], [0], [1], [0, 0, 1, 1], [], []>} : vector<32x128xf32>, vector<128x64xf32>, vector<32x64xf32> -> vector<32x64xf32>
    %c0_84 = arith.constant 0 : index
    %c0_85 = arith.constant 0 : index
    %c0_86 = arith.constant 0 : index
    %120 = vector.load %arg19[%c0_84, %c0_85, %c0_86] : memref<1x1x64xf32, #tpu.memory_space<vmem>>, vector<1x1x64xf32>
    %121 = vector.shape_cast %120 : vector<1x1x64xf32> to vector<1x64xf32>
    %122 = vector.broadcast %121 : vector<1x64xf32> to vector<32x64xf32>
    %123 = arith.addf %119, %122 : vector<32x64xf32>
    %124 = arith.addf %123, %4 : vector<32x64xf32>
    %c0_87 = arith.constant 0 : index
    %c0_88 = arith.constant 0 : index
    %c0_89 = arith.constant 0 : index
    %125 = vector.load %arg20[%c0_87, %c0_88, %c0_89] : memref<1x32x64xf32, #tpu.memory_space<vmem>>, vector<1x32x64xf32>
    %126 = vector.shape_cast %125 : vector<1x32x64xf32> to vector<32x64xf32>
    %127 = vector.shape_cast %124 : vector<32x64xf32> to vector<1x32x64xf32>
    tpu.vector_store %arg20[%c0_87, %c0_88, %c0_89], %127 {strides = array<i32>} : memref<1x32x64xf32, #tpu.memory_space<vmem>>, vector<1x32x64xf32>,
    return
  }
  func.func @transform_0(%arg0: i32, %arg1: i32) -> (i32, i32, i32) {
    %c0_i32 = arith.constant 0 : i32
    %c0_i32_0 = arith.constant 0 : i32
    %c0_i32_1 = arith.constant 0 : i32
    return %arg0, %c0_i32, %c0_i32_0 : i32, i32, i32
  }
  func.func @transform_1(%arg0: i32, %arg1: i32) -> (i32, i32, i32) {
    %c0_i32 = arith.constant 0 : i32
    %c0_i32_0 = arith.constant 0 : i32
    %c0_i32_1 = arith.constant 0 : i32
    return %arg0, %c0_i32, %c0_i32_0 : i32, i32, i32
  }
  func.func @transform_2(%arg0: i32, %arg1: i32) -> (i32, i32, i32) {
    %c0_i32 = arith.constant 0 : i32
    %c0_i32_0 = arith.constant 0 : i32
    %c0_i32_1 = arith.constant 0 : i32
    return %arg0, %c0_i32, %c0_i32_0 : i32, i32, i32
  }
  func.func @transform_3(%arg0: i32, %arg1: i32) -> (i32, i32, i32) {
    %c0_i32 = arith.constant 0 : i32
    %c0_i32_0 = arith.constant 0 : i32
    %c0_i32_1 = arith.constant 0 : i32
    return %arg1, %c0_i32, %c0_i32_0 : i32, i32, i32
  }
  func.func @transform_4(%arg0: i32, %arg1: i32) -> (i32, i32, i32) {
    %c0_i32 = arith.constant 0 : i32
    %c0_i32_0 = arith.constant 0 : i32
    %c0_i32_1 = arith.constant 0 : i32
    return %arg1, %c0_i32, %c0_i32_0 : i32, i32, i32
  }
  func.func @transform_5(%arg0: i32, %arg1: i32) -> (i32, i32, i32) {
    %c0_i32 = arith.constant 0 : i32
    %c0_i32_0 = arith.constant 0 : i32
    %c0_i32_1 = arith.constant 0 : i32
    return %arg1, %c0_i32, %c0_i32_0 : i32, i32, i32
  }
  func.func @transform_6(%arg0: i32, %arg1: i32) -> (i32, i32, i32) {
    %c0_i32 = arith.constant 0 : i32
    %c0_i32_0 = arith.constant 0 : i32
    %c0_i32_1 = arith.constant 0 : i32
    return %arg1, %c0_i32, %c0_i32_0 : i32, i32, i32
  }
  func.func @transform_7(%arg0: i32, %arg1: i32) -> (i32, i32, i32) {
    %c0_i32 = arith.constant 0 : i32
    %c0_i32_0 = arith.constant 0 : i32
    %c0_i32_1 = arith.constant 0 : i32
    return %arg1, %c0_i32, %c0_i32_0 : i32, i32, i32
  }
  func.func @transform_8(%arg0: i32, %arg1: i32) -> (i32, i32, i32) {
    %c0_i32 = arith.constant 0 : i32
    %c0_i32_0 = arith.constant 0 : i32
    %c0_i32_1 = arith.constant 0 : i32
    return %arg1, %c0_i32, %c0_i32_0 : i32, i32, i32
  }
  func.func @transform_9(%arg0: i32, %arg1: i32) -> (i32, i32, i32) {
    %c0_i32 = arith.constant 0 : i32
    %c0_i32_0 = arith.constant 0 : i32
    %c0_i32_1 = arith.constant 0 : i32
    return %arg1, %c0_i32, %c0_i32_0 : i32, i32, i32
  }
  func.func @transform_10(%arg0: i32, %arg1: i32) -> (i32, i32, i32) {
    %c0_i32 = arith.constant 0 : i32
    %c0_i32_0 = arith.constant 0 : i32
    %c0_i32_1 = arith.constant 0 : i32
    return %arg1, %c0_i32, %c0_i32_0 : i32, i32, i32
  }
  func.func @transform_11(%arg0: i32, %arg1: i32) -> (i32, i32, i32) {
    %c0_i32 = arith.constant 0 : i32
    %c0_i32_0 = arith.constant 0 : i32
    %c0_i32_1 = arith.constant 0 : i32
    return %arg1, %c0_i32, %c0_i32_0 : i32, i32, i32
  }
  func.func @transform_12(%arg0: i32, %arg1: i32) -> (i32, i32, i32) {
    %c0_i32 = arith.constant 0 : i32
    %c0_i32_0 = arith.constant 0 : i32
    %c0_i32_1 = arith.constant 0 : i32
    return %arg1, %c0_i32, %c0_i32_0 : i32, i32, i32
  }
  func.func @transform_13(%arg0: i32, %arg1: i32) -> (i32, i32, i32) {
    %c0_i32 = arith.constant 0 : i32
    %c0_i32_0 = arith.constant 0 : i32
    %c0_i32_1 = arith.constant 0 : i32
    return %arg1, %c0_i32, %c0_i32_0 : i32, i32, i32
  }
  func.func @transform_14(%arg0: i32, %arg1: i32) -> (i32, i32, i32) {
    %c0_i32 = arith.constant 0 : i32
    %c0_i32_0 = arith.constant 0 : i32
    %c0_i32_1 = arith.constant 0 : i32
    return %arg1, %c0_i32, %c0_i32_0 : i32, i32, i32
  }
  func.func @transform_15(%arg0: i32, %arg1: i32) -> (i32, i32, i32) {
    %c0_i32 = arith.constant 0 : i32
    %c0_i32_0 = arith.constant 0 : i32
    %c0_i32_1 = arith.constant 0 : i32
    return %arg1, %c0_i32, %c0_i32_0 : i32, i32, i32
  }
  func.func @transform_16(%arg0: i32, %arg1: i32) -> (i32, i32, i32) {
    %c0_i32 = arith.constant 0 : i32
    %c0_i32_0 = arith.constant 0 : i32
    %c0_i32_1 = arith.constant 0 : i32
    return %arg1, %c0_i32, %c0_i32_0 : i32, i32, i32
  }
  func.func @transform_17(%arg0: i32, %arg1: i32) -> (i32, i32, i32) {
    %c0_i32 = arith.constant 0 : i32
    %c0_i32_0 = arith.constant 0 : i32
    %c0_i32_1 = arith.constant 0 : i32
    return %arg1, %c0_i32, %c0_i32_0 : i32, i32, i32
  }
  func.func @transform_18(%arg0: i32, %arg1: i32) -> (i32, i32, i32) {
    %c0_i32 = arith.constant 0 : i32
    %c0_i32_0 = arith.constant 0 : i32
    %c0_i32_1 = arith.constant 0 : i32
    return %arg0, %c0_i32, %c0_i32_0 : i32, i32, i32
  }
}

</mosaic_0001>

<llo_original>
// kernel: neg.1
$region0: #{neg.1}
  #allocation0 [shape = 's32[1]{0}', space=sflag, size = 0x4, scoped, tag = 'scoped memory for neg.1']
  %s0 = inlined_call_operand.vmem [shape: f32[2,32,32], index: 0, kind: input, shape index: {}]
  %s1 = inlined_call_operand.vmem [shape: f32[2,32,32], index: 1, kind: output, shape index: {}]
  %v2 = vld [vmem:[%s0] sm:$0xff]
  %3 = xla_tuple %v2
  %4 = xla_tuple %3
  %v5 = vxor.u32 %v2, 2147483648
  %6 = xla_tuple %v5
  %7 = vst [vmem:[%s1] sm:$0xff] %v5
  %s8 = scalar_lea.vmem %s0, 32
  %v9 = vld [vmem:[%s8] sm:$0xff]
  %10 = xla_tuple %v9
  %11 = xla_tuple %10
  %v12 = vxor.u32 %v9, 2147483648
  %13 = xla_tuple %v12
  %s14 = scalar_lea.vmem %s1, 32
  %15 = vst [vmem:[%s14] sm:$0xff] %v12
  %s16 = scalar_lea.vmem %s0, 8
  %v17 = vld [vmem:[%s16] sm:$0xff]
  %18 = xla_tuple %v17
  %19 = xla_tuple %18
  %v20 = vxor.u32 %v17, 2147483648
  %21 = xla_tuple %v20
  %s22 = scalar_lea.vmem %s1, 8
  %23 = vst [vmem:[%s22] sm:$0xff] %v20
  %s24 = scalar_lea.vmem %s0, 40
  %v25 = vld [vmem:[%s24] sm:$0xff]
  %26 = xla_tuple %v25
  %27 = xla_tuple %26
  %v28 = vxor.u32 %v25, 2147483648
  %29 = xla_tuple %v28
  %s30 = scalar_lea.vmem %s1, 40
  %31 = vst [vmem:[%s30] sm:$0xff] %v28
  %s32 = scalar_lea.vmem %s0, 16
  %v33 = vld [vmem:[%s32] sm:$0xff]
  %34 = xla_tuple %v33
  %35 = xla_tuple %34
  %v36 = vxor.u32 %v33, 2147483648
  %37 = xla_tuple %v36
  %s38 = scalar_lea.vmem %s1, 16
  %39 = vst [vmem:[%s38] sm:$0xff] %v36
  %s40 = scalar_lea.vmem %s0, 48
  %v41 = vld [vmem:[%s40] sm:$0xff]
  %42 = xla_tuple %v41
  %43 = xla_tuple %42
  %v44 = vxor.u32 %v41, 2147483648
  %45 = xla_tuple %v44
  %s46 = scalar_lea.vmem %s1, 48
  %47 = vst [vmem:[%s46] sm:$0xff] %v44
  %s48 = scalar_lea.vmem %s0, 24
  %v49 = vld [vmem:[%s48] sm:$0xff]
  %50 = xla_tuple %v49
  %51 = xla_tuple %50
  %v52 = vxor.u32 %v49, 2147483648
  %53 = xla_tuple %v52
  %s54 = scalar_lea.vmem %s1, 24
  %55 = vst [vmem:[%s54] sm:$0xff] %v52
  %s56 = scalar_lea.vmem %s0, 56
  %v57 = vld [vmem:[%s56] sm:$0xff]
  %58 = xla_tuple %v57
  %59 = xla_tuple %58
  %v60 = vxor.u32 %v57, 2147483648
  %61 = xla_tuple %v60
  %s62 = scalar_lea.vmem %s1, 56
  %63 = vst [vmem:[%s62] sm:$0xff] %v60

// kernel: egnn_net_pallas.1
$region0: #{egnn_net_pallas.1}
  #allocation0 [shape = 'u32[]', space=smem, size = 0x4, offset = 0x4, fixed_abs, tag = 'smem constant byte address 0x4 - core index']
  #allocation1 [shape = 'u32[144,128]{1,0:T(1,128)}', space=vmem, size = 0x12000, scoped, tag = 'internal scratch']
  #allocation2 [shape = 'f32[40,384]{1,0:T(8,128)}', space=vmem, size = 0xf000, scoped, tag = 'scratch operand']
  %s0 = inlined_call_operand.vmem [shape: f32[2,32,64], index: 0, kind: input, shape index: {}]
  %s1 = inlined_call_operand.vmem [shape: f32[2,1024,40], index: 1, kind: input, shape index: {}]
  %s2 = inlined_call_operand.vmem [shape: bf16[2,32,1024], index: 2, kind: input, shape index: {}]
  %s3 = inlined_call_operand.vmem [shape: f32[3,64,384], index: 3, kind: input, shape index: {}]
  %s4 = inlined_call_operand.vmem [shape: f32[3,1,384], index: 4, kind: input, shape index: {}]
  %s5 = inlined_call_operand.vmem [shape: f32[3,64,384], index: 5, kind: input, shape index: {}]
  %s6 = inlined_call_operand.vmem [shape: f32[3,1,384], index: 6, kind: input, shape index: {}]
  %s7 = inlined_call_operand.vmem [shape: bf16[3,384,128], index: 7, kind: input, shape index: {}]
  %s8 = inlined_call_operand.vmem [shape: f32[3,1,128], index: 8, kind: input, shape index: {}]
  %s9 = inlined_call_operand.vmem [shape: f32[3,128,1], index: 9, kind: input, shape index: {}]
  %s10 = inlined_call_operand.vmem [shape: f32[3,1,1], index: 10, kind: input, shape index: {}]
  %s11 = inlined_call_operand.vmem [shape: f32[3,1,64], index: 11, kind: input, shape index: {}]
  %s12 = inlined_call_operand.vmem [shape: f32[3,1,64], index: 12, kind: input, shape index: {}]
  %s13 = inlined_call_operand.vmem [shape: f32[3,64,128], index: 13, kind: input, shape index: {}]
  %s14 = inlined_call_operand.vmem [shape: f32[3,128,128], index: 14, kind: input, shape index: {}]
  %s15 = inlined_call_operand.vmem [shape: f32[3,1,128], index: 15, kind: input, shape index: {}]
  %s16 = inlined_call_operand.vmem [shape: f32[3,128,64], index: 16, kind: input, shape index: {}]
  %s17 = inlined_call_operand.vmem [shape: f32[3,1,64], index: 17, kind: input, shape index: {}]
  %s18 = inlined_call_operand.hbm [shape: f32[2,32,64], index: 18, kind: output, shape index: {}]
  %s19 = sld [smem:[#allocation0]]
  $region109: #{egnn_net_pallas.1} parent=0
    _
  %s21 = ssub.s32 1, %s19
  %s22 = scalar_select 0, %s21, %s19
  $region1: #{egnn_net_pallas.1} parent=0
    #allocation3 [shape = 'u8[32768]{0}', space=vmem, size = 0x8000, scoped, tag = 'output window, operand 0']
    #allocation4 [shape = 's32[2]{0}', space=sflag, size = 0x8, scoped, tag = 'scoped memory for egnn_net_pallas.1']
    %23 = vsyncpa [#allocation4], 0
    %s24 = scalar_lea.sflag [#allocation4], 1
    %25 = vsyncpa %s24, 0
    loop: start=0, step=1, limit=8
    $region2: #{egnn_net_pallas.1} parent=1 // loop_pre_header
      _
    $region3: #{egnn_net_pallas.1} parent=1 // loop_header
      %s27 = sphi 0, %s31
      %p28 = scmp.ge.s32.totalorder %s27, 8
      %s34 = sphi 0, %s46
      %s35 = sphi 0, %s42
      %s36 = sphi 0, %s34
      %s37 = sphi 0, %s35
      %s38 = sphi 0, %s36
      %s39 = sphi 0, %s37
      %s49 = sphi 0, %s51
      %s52 = sphi 0, %s49
      %s53 = sphi 0, %s52
      %s69 = sphi 0, %s53
      %s75 = sphi 0, %s77
      %s78 = sphi 0, %s75
      %s79 = sphi 0, %s78
      %s95 = sphi 0, %s79
      %s101 = sphi 0, %s103
      %s104 = sphi 0, %s101
      %s105 = sphi 0, %s104
      %s121 = sphi 0, %s105
      %s127 = sphi 0, %s129
      %s130 = sphi 0, %s127
      %s131 = sphi 0, %s130
      %s147 = sphi 0, %s131
      %s153 = sphi 0, %s155
      %s156 = sphi 0, %s153
      %s157 = sphi 0, %s156
      %s173 = sphi 0, %s157
      %s179 = sphi 0, %s181
      %s182 = sphi 0, %s179
      %s183 = sphi 0, %s182
      %s199 = sphi 0, %s183
      %s205 = sphi 0, %s207
      %s208 = sphi 0, %s205
      %s209 = sphi 0, %s208
      %s225 = sphi 0, %s209
      %s231 = sphi 0, %s233
      %s234 = sphi 0, %s231
      %s235 = sphi 0, %s234
      %s251 = sphi 0, %s235
      %s257 = sphi 0, %s259
      %s260 = sphi 0, %s257
      %s261 = sphi 0, %s260
      %s277 = sphi 0, %s261
      %s283 = sphi 0, %s285
      %s286 = sphi 0, %s283
      %s287 = sphi 0, %s286
      %s303 = sphi 0, %s287
      %s309 = sphi 0, %s311
      %s312 = sphi 0, %s309
      %s313 = sphi 0, %s312
      %s329 = sphi 0, %s313
      %s335 = sphi 0, %s337
      %s338 = sphi 0, %s335
      %s339 = sphi 0, %s338
      %s355 = sphi 0, %s339
      %s361 = sphi 0, %s363
      %s364 = sphi 0, %s361
      %s365 = sphi 0, %s364
      %s381 = sphi 0, %s365
      %s387 = sphi 0, %s389
      %s390 = sphi 0, %s387
      %s391 = sphi 0, %s390
      %s407 = sphi 0, %s391
      %s413 = sphi 0, %s415
      %s416 = sphi 0, %s413
      %s417 = sphi 0, %s416
      %s433 = sphi 0, %s417
      %s439 = sphi 0, %s441
      %s442 = sphi 0, %s439
      %s443 = sphi 0, %s442
      %s459 = sphi 0, %s443
      %s465 = sphi 0, %s467
      %s468 = sphi 0, %s465
      %s469 = sphi 0, %s468
      %s485 = sphi 0, %s469
      %s491 = sphi 0, %s493
      %s494 = sphi 0, %s491
      %s495 = sphi 0, %s494
      %s511 = sphi 0, %s495
      %s517 = sphi 0, %s519
      %s520 = sphi 0, %s517
      %s521 = sphi 0, %s520
      %s537 = sphi 0, %s521
    $region4: #{egnn_net_pallas.1} parent=1 // loop_header_branch
      %30 = sbr.rel (%p28) target = $region8
    $region5: #{egnn_net_pallas.1} parent=1 // loop_body
      %s32 = ssub.s32 %s27, 1
      %s33 = ssub.s32 %s27, 2
      %s40 = sadd.s32 1, %s35
      %p41 = scmp.ge.s32.totalorder %s40, 3
      %s42 = scalar_select %p41, 0, %s40
      %s43 = sadd.s32 1, %s34
      %s44 = scalar_select %p41, %s43, %s34
      %p45 = scmp.ge.s32.totalorder %s44, 2
      %s46 = scalar_select %p45, 0, %s44
      %s47 = ssub.s32 %s34, %s46
      %p48 = scmp.eq.s32.totalorder %s47, 0
      %s50 = sadd.s32 %s49, 1
      %s51 = scalar_select %p48, %s49, %s50
      %p54 = pneg %p48
      %p55 = scmp.eq.s32.totalorder %s27, 5
      %p56 = por %p54, %p55
      %p57 = scmp.ne.s32.totalorder %s49, %s52
      %p58 = scmp.eq.s32.totalorder %s27, 0
      %p59 = por %p57, %p58
      %p60 = scmp.ne.s32.totalorder %s49, %s52
      %p61 = scmp.eq.s32.totalorder %s32, 5
      %p62 = por %p60, %p61
      %p63 = scmp.ne.s32.totalorder %s52, %s53
      %p64 = scmp.eq.s32.totalorder %s32, 0
      %p65 = por %p63, %p64
      %p66 = scmp.ne.s32.totalorder %s52, %s53
      %p67 = scmp.eq.s32.totalorder %s33, 5
      %p68 = por %p66, %p67
      %p70 = scmp.ne.s32.totalorder %s53, %s69
      %p71 = scmp.eq.s32.totalorder %s33, 0
      %p72 = por %p70, %p71
      %s73 = ssub.s32 %s34, %s46
      %p74 = scmp.eq.s32.totalorder %s73, 0
      %s76 = sadd.s32 %s75, 1
      %s77 = scalar_select %p74, %s75, %s76
      %p80 = pneg %p74
      %p81 = scmp.eq.s32.totalorder %s27, 5
      %p82 = por %p80, %p81
      %p83 = scmp.ne.s32.totalorder %s75, %s78
      %p84 = scmp.eq.s32.totalorder %s27, 0
      %p85 = por %p83, %p84
      %p86 = scmp.ne.s32.totalorder %s75, %s78
      %p87 = scmp.eq.s32.totalorder %s32, 5
      %p88 = por %p86, %p87
      %p89 = scmp.ne.s32.totalorder %s78, %s79
      %p90 = scmp.eq.s32.totalorder %s32, 0
      %p91 = por %p89, %p90
      %p92 = scmp.ne.s32.totalorder %s78, %s79
      %p93 = scmp.eq.s32.totalorder %s33, 5
      %p94 = por %p92, %p93
      %p96 = scmp.ne.s32.totalorder %s79, %s95
      %p97 = scmp.eq.s32.totalorder %s33, 0
      %p98 = por %p96, %p97
      %s99 = ssub.s32 %s34, %s46
      %p100 = scmp.eq.s32.totalorder %s99, 0
      %s102 = sadd.s32 %s101, 1
      %s103 = scalar_select %p100, %s101, %s102
      %p106 = pneg %p100
      %p107 = scmp.eq.s32.totalorder %s27, 5
      %p108 = por %p106, %p107
      %p109 = scmp.ne.s32.totalorder %s101, %s104
      %p110 = scmp.eq.s32.totalorder %s27, 0
      %p111 = por %p109, %p110
      %p112 = scmp.ne.s32.totalorder %s101, %s104
      %p113 = scmp.eq.s32.totalorder %s32, 5
      %p114 = por %p112, %p113
      %p115 = scmp.ne.s32.totalorder %s104, %s105
      %p116 = scmp.eq.s32.totalorder %s32, 0
      %p117 = por %p115, %p116
      %p118 = scmp.ne.s32.totalorder %s104, %s105
      %p119 = scmp.eq.s32.totalorder %s33, 5
      %p120 = por %p118, %p119
      %p122 = scmp.ne.s32.totalorder %s105, %s121
      %p123 = scmp.eq.s32.totalorder %s33, 0
      %p124 = por %p122, %p123
      %s125 = ssub.s32 %s35, %s42
      %p126 = scmp.eq.s32.totalorder %s125, 0
      %s128 = sadd.s32 %s127, 1
      %s129 = scalar_select %p126, %s127, %s128
      %p132 = pneg %p126
      %p133 = scmp.eq.s32.totalorder %s27, 5
      %p134 = por %p132, %p133
      %p135 = scmp.ne.s32.totalorder %s127, %s130
      %p136 = scmp.eq.s32.totalorder %s27, 0
      %p137 = por %p135, %p136
      %p138 = scmp.ne.s32.totalorder %s127, %s130
      %p139 = scmp.eq.s32.totalorder %s32, 5
      %p140 = por %p138, %p139
      %p141 = scmp.ne.s32.totalorder %s130, %s131
      %p142 = scmp.eq.s32.totalorder %s32, 0
      %p143 = por %p141, %p142
      %p144 = scmp.ne.s32.totalorder %s130, %s131
      %p145 = scmp.eq.s32.totalorder %s33, 5
      %p146 = por %p144, %p145
      %p148 = scmp.ne.s32.totalorder %s131, %s147
      %p149 = scmp.eq.s32.totalorder %s33, 0
      %p150 = por %p148, %p149
      %s151 = ssub.s32 %s35, %s42
      %p152 = scmp.eq.s32.totalorder %s151, 0
      %s154 = sadd.s32 %s153, 1
      %s155 = scalar_select %p152, %s153, %s154
      %p158 = pneg %p152
      %p159 = scmp.eq.s32.totalorder %s27, 5
      %p160 = por %p158, %p159
      %p161 = scmp.ne.s32.totalorder %s153, %s156
      %p162 = scmp.eq.s32.totalorder %s27, 0
      %p163 = por %p161, %p162
      %p164 = scmp.ne.s32.totalorder %s153, %s156
      %p165 = scmp.eq.s32.totalorder %s32, 5
      %p166 = por %p164, %p165
      %p167 = scmp.ne.s32.totalorder %s156, %s157
      %p168 = scmp.eq.s32.totalorder %s32, 0
      %p169 = por %p167, %p168
      %p170 = scmp.ne.s32.totalorder %s156, %s157
      %p171 = scmp.eq.s32.totalorder %s33, 5
      %p172 = por %p170, %p171
      %p174 = scmp.ne.s32.totalorder %s157, %s173
      %p175 = scmp.eq.s32.totalorder %s33, 0
      %p176 = por %p174, %p175
      %s177 = ssub.s32 %s35, %s42
      %p178 = scmp.eq.s32.totalorder %s177, 0
      %s180 = sadd.s32 %s179, 1
      %s181 = scalar_select %p178, %s179, %s180
      %p184 = pneg %p178
      %p185 = scmp.eq.s32.totalorder %s27, 5
      %p186 = por %p184, %p185
      %p187 = scmp.ne.s32.totalorder %s179, %s182
      %p188 = scmp.eq.s32.totalorder %s27, 0
      %p189 = por %p187, %p188
      %p190 = scmp.ne.s32.totalorder %s179, %s182
      %p191 = scmp.eq.s32.totalorder %s32, 5
      %p192 = por %p190, %p191
      %p193 = scmp.ne.s32.totalorder %s182, %s183
      %p194 = scmp.eq.s32.totalorder %s32, 0
      %p195 = por %p193, %p194
      %p196 = scmp.ne.s32.totalorder %s182, %s183
      %p197 = scmp.eq.s32.totalorder %s33, 5
      %p198 = por %p196, %p197
      %p200 = scmp.ne.s32.totalorder %s183, %s199
      %p201 = scmp.eq.s32.totalorder %s33, 0
      %p202 = por %p200, %p201
      %s203 = ssub.s32 %s35, %s42
      %p204 = scmp.eq.s32.totalorder %s203, 0
      %s206 = sadd.s32 %s205, 1
      %s207 = scalar_select %p204, %s205, %s206
      %p210 = pneg %p204
      %p211 = scmp.eq.s32.totalorder %s27, 5
      %p212 = por %p210, %p211
      %p213 = scmp.ne.s32.totalorder %s205, %s208
      %p214 = scmp.eq.s32.totalorder %s27, 0
      %p215 = por %p213, %p214
      %p216 = scmp.ne.s32.totalorder %s205, %s208
      %p217 = scmp.eq.s32.totalorder %s32, 5
      %p218 = por %p216, %p217
      %p219 = scmp.ne.s32.totalorder %s208, %s209
      %p220 = scmp.eq.s32.totalorder %s32, 0
      %p221 = por %p219, %p220
      %p222 = scmp.ne.s32.totalorder %s208, %s209
      %p223 = scmp.eq.s32.totalorder %s33, 5
      %p224 = por %p222, %p223
      %p226 = scmp.ne.s32.totalorder %s209, %s225
      %p227 = scmp.eq.s32.totalorder %s33, 0
      %p228 = por %p226, %p227
      %s229 = ssub.s32 %s35, %s42
      %p230 = scmp.eq.s32.totalorder %s229, 0
      %s232 = sadd.s32 %s231, 1
      %s233 = scalar_select %p230, %s231, %s232
      %p236 = pneg %p230
      %p237 = scmp.eq.s32.totalorder %s27, 5
      %p238 = por %p236, %p237
      %p239 = scmp.ne.s32.totalorder %s231, %s234
      %p240 = scmp.eq.s32.totalorder %s27, 0
      %p241 = por %p239, %p240
      %p242 = scmp.ne.s32.totalorder %s231, %s234
      %p243 = scmp.eq.s32.totalorder %s32, 5
      %p244 = por %p242, %p243
      %p245 = scmp.ne.s32.totalorder %s234, %s235
      %p246 = scmp.eq.s32.totalorder %s32, 0
      %p247 = por %p245, %p246
      %p248 = scmp.ne.s32.totalorder %s234, %s235
      %p249 = scmp.eq.s32.totalorder %s33, 5
      %p250 = por %p248, %p249
      %p252 = scmp.ne.s32.totalorder %s235, %s251
      %p253 = scmp.eq.s32.totalorder %s33, 0
      %p254 = por %p252, %p253
      %s255 = ssub.s32 %s35, %s42
      %p256 = scmp.eq.s32.totalorder %s255, 0
      %s258 = sadd.s32 %s257, 1
      %s259 = scalar_select %p256, %s257, %s258
      %p262 = pneg %p256
      %p263 = scmp.eq.s32.totalorder %s27, 5
      %p264 = por %p262, %p263
      %p265 = scmp.ne.s32.totalorder %s257, %s260
      %p266 = scmp.eq.s32.totalorder %s27, 0
      %p267 = por %p265, %p266
      %p268 = scmp.ne.s32.totalorder %s257, %s260
      %p269 = scmp.eq.s32.totalorder %s32, 5
      %p270 = por %p268, %p269
      %p271 = scmp.ne.s32.totalorder %s260, %s261
      %p272 = scmp.eq.s32.totalorder %s32, 0
      %p273 = por %p271, %p272
      %p274 = scmp.ne.s32.totalorder %s260, %s261
      %p275 = scmp.eq.s32.totalorder %s33, 5
      %p276 = por %p274, %p275
      %p278 = scmp.ne.s32.totalorder %s261, %s277
      %p279 = scmp.eq.s32.totalorder %s33, 0
      %p280 = por %p278, %p279
      %s281 = ssub.s32 %s35, %s42
      %p282 = scmp.eq.s32.totalorder %s281, 0
      %s284 = sadd.s32 %s283, 1
      %s285 = scalar_select %p282, %s283, %s284
      %p288 = pneg %p282
      %p289 = scmp.eq.s32.totalorder %s27, 5
      %p290 = por %p288, %p289
      %p291 = scmp.ne.s32.totalorder %s283, %s286
      %p292 = scmp.eq.s32.totalorder %s27, 0
      %p293 = por %p291, %p292
      %p294 = scmp.ne.s32.totalorder %s283, %s286
      %p295 = scmp.eq.s32.totalorder %s32, 5
      %p296 = por %p294, %p295
      %p297 = scmp.ne.s32.totalorder %s286, %s287
      %p298 = scmp.eq.s32.totalorder %s32, 0
      %p299 = por %p297, %p298
      %p300 = scmp.ne.s32.totalorder %s286, %s287
      %p301 = scmp.eq.s32.totalorder %s33, 5
      %p302 = por %p300, %p301
      %p304 = scmp.ne.s32.totalorder %s287, %s303
      %p305 = scmp.eq.s32.totalorder %s33, 0
      %p306 = por %p304, %p305
      %s307 = ssub.s32 %s35, %s42
      %p308 = scmp.eq.s32.totalorder %s307, 0
      %s310 = sadd.s32 %s309, 1
      %s311 = scalar_select %p308, %s309, %s310
      %p314 = pneg %p308
      %p315 = scmp.eq.s32.totalorder %s27, 5
      %p316 = por %p314, %p315
      %p317 = scmp.ne.s32.totalorder %s309, %s312
      %p318 = scmp.eq.s32.totalorder %s27, 0
      %p319 = por %p317, %p318
      %p320 = scmp.ne.s32.totalorder %s309, %s312
      %p321 = scmp.eq.s32.totalorder %s32, 5
      %p322 = por %p320, %p321
      %p323 = scmp.ne.s32.totalorder %s312, %s313
      %p324 = scmp.eq.s32.totalorder %s32, 0
      %p325 = por %p323, %p324
      %p326 = scmp.ne.s32.totalorder %s312, %s313
      %p327 = scmp.eq.s32.totalorder %s33, 5
      %p328 = por %p326, %p327
      %p330 = scmp.ne.s32.totalorder %s313, %s329
      %p331 = scmp.eq.s32.totalorder %s33, 0
      %p332 = por %p330, %p331
      %s333 = ssub.s32 %s35, %s42
      %p334 = scmp.eq.s32.totalorder %s333, 0
      %s336 = sadd.s32 %s335, 1
      %s337 = scalar_select %p334, %s335, %s336
      %p340 = pneg %p334
      %p341 = scmp.eq.s32.totalorder %s27, 5
      %p342 = por %p340, %p341
      %p343 = scmp.ne.s32.totalorder %s335, %s338
      %p344 = scmp.eq.s32.totalorder %s27, 0
      %p345 = por %p343, %p344
      %p346 = scmp.ne.s32.totalorder %s335, %s338
      %p347 = scmp.eq.s32.totalorder %s32, 5
      %p348 = por %p346, %p347
      %p349 = scmp.ne.s32.totalorder %s338, %s339
      %p350 = scmp.eq.s32.totalorder %s32, 0
      %p351 = por %p349, %p350
      %p352 = scmp.ne.s32.totalorder %s338, %s339
      %p353 = scmp.eq.s32.totalorder %s33, 5
      %p354 = por %p352, %p353
      %p356 = scmp.ne.s32.totalorder %s339, %s355
      %p357 = scmp.eq.s32.totalorder %s33, 0
      %p358 = por %p356, %p357
      %s359 = ssub.s32 %s35, %s42
      %p360 = scmp.eq.s32.totalorder %s359, 0
      %s362 = sadd.s32 %s361, 1
      %s363 = scalar_select %p360, %s361, %s362
      %p366 = pneg %p360
      %p367 = scmp.eq.s32.totalorder %s27, 5
      %p368 = por %p366, %p367
      %p369 = scmp.ne.s32.totalorder %s361, %s364
      %p370 = scmp.eq.s32.totalorder %s27, 0
      %p371 = por %p369, %p370
      %p372 = scmp.ne.s32.totalorder %s361, %s364
      %p373 = scmp.eq.s32.totalorder %s32, 5
      %p374 = por %p372, %p373
      %p375 = scmp.ne.s32.totalorder %s364, %s365
      %p376 = scmp.eq.s32.totalorder %s32, 0
      %p377 = por %p375, %p376
      %p378 = scmp.ne.s32.totalorder %s364, %s365
      %p379 = scmp.eq.s32.totalorder %s33, 5
      %p380 = por %p378, %p379
      %p382 = scmp.ne.s32.totalorder %s365, %s381
      %p383 = scmp.eq.s32.totalorder %s33, 0
      %p384 = por %p382, %p383
      %s385 = ssub.s32 %s35, %s42
      %p386 = scmp.eq.s32.totalorder %s385, 0
      %s388 = sadd.s32 %s387, 1
      %s389 = scalar_select %p386, %s387, %s388
      %p392 = pneg %p386
      %p393 = scmp.eq.s32.totalorder %s27, 5
      %p394 = por %p392, %p393
      %p395 = scmp.ne.s32.totalorder %s387, %s390
      %p396 = scmp.eq.s32.totalorder %s27, 0
      %p397 = por %p395, %p396
      %p398 = scmp.ne.s32.totalorder %s387, %s390
      %p399 = scmp.eq.s32.totalorder %s32, 5
      %p400 = por %p398, %p399
      %p401 = scmp.ne.s32.totalorder %s390, %s391
      %p402 = scmp.eq.s32.totalorder %s32, 0
      %p403 = por %p401, %p402
      %p404 = scmp.ne.s32.totalorder %s390, %s391
      %p405 = scmp.eq.s32.totalorder %s33, 5
      %p406 = por %p404, %p405
      %p408 = scmp.ne.s32.totalorder %s391, %s407
      %p409 = scmp.eq.s32.totalorder %s33, 0
      %p410 = por %p408, %p409
      %s411 = ssub.s32 %s35, %s42
      %p412 = scmp.eq.s32.totalorder %s411, 0
      %s414 = sadd.s32 %s413, 1
      %s415 = scalar_select %p412, %s413, %s414
      %p418 = pneg %p412
      %p419 = scmp.eq.s32.totalorder %s27, 5
      %p420 = por %p418, %p419
      %p421 = scmp.ne.s32.totalorder %s413, %s416
      %p422 = scmp.eq.s32.totalorder %s27, 0
      %p423 = por %p421, %p422
      %p424 = scmp.ne.s32.totalorder %s413, %s416
      %p425 = scmp.eq.s32.totalorder %s32, 5
      %p426 = por %p424, %p425
      %p427 = scmp.ne.s32.totalorder %s416, %s417
      %p428 = scmp.eq.s32.totalorder %s32, 0
      %p429 = por %p427, %p428
      %p430 = scmp.ne.s32.totalorder %s416, %s417
      %p431 = scmp.eq.s32.totalorder %s33, 5
      %p432 = por %p430, %p431
      %p434 = scmp.ne.s32.totalorder %s417, %s433
      %p435 = scmp.eq.s32.totalorder %s33, 0
      %p436 = por %p434, %p435
      %s437 = ssub.s32 %s35, %s42
      %p438 = scmp.eq.s32.totalorder %s437, 0
      %s440 = sadd.s32 %s439, 1
      %s441 = scalar_select %p438, %s439, %s440
      %p444 = pneg %p438
      %p445 = scmp.eq.s32.totalorder %s27, 5
      %p446 = por %p444, %p445
      %p447 = scmp.ne.s32.totalorder %s439, %s442
      %p448 = scmp.eq.s32.totalorder %s27, 0
      %p449 = por %p447, %p448
      %p450 = scmp.ne.s32.totalorder %s439, %s442
      %p451 = scmp.eq.s32.totalorder %s32, 5
      %p452 = por %p450, %p451
      %p453 = scmp.ne.s32.totalorder %s442, %s443
      %p454 = scmp.eq.s32.totalorder %s32, 0
      %p455 = por %p453, %p454
      %p456 = scmp.ne.s32.totalorder %s442, %s443
      %p457 = scmp.eq.s32.totalorder %s33, 5
      %p458 = por %p456, %p457
      %p460 = scmp.ne.s32.totalorder %s443, %s459
      %p461 = scmp.eq.s32.totalorder %s33, 0
      %p462 = por %p460, %p461
      %s463 = ssub.s32 %s35, %s42
      %p464 = scmp.eq.s32.totalorder %s463, 0
      %s466 = sadd.s32 %s465, 1
      %s467 = scalar_select %p464, %s465, %s466
      %p470 = pneg %p464
      %p471 = scmp.eq.s32.totalorder %s27, 5
      %p472 = por %p470, %p471
      %p473 = scmp.ne.s32.totalorder %s465, %s468
      %p474 = scmp.eq.s32.totalorder %s27, 0
      %p475 = por %p473, %p474
      %p476 = scmp.ne.s32.totalorder %s465, %s468
      %p477 = scmp.eq.s32.totalorder %s32, 5
      %p478 = por %p476, %p477
      %p479 = scmp.ne.s32.totalorder %s468, %s469
      %p480 = scmp.eq.s32.totalorder %s32, 0
      %p481 = por %p479, %p480
      %p482 = scmp.ne.s32.totalorder %s468, %s469
      %p483 = scmp.eq.s32.totalorder %s33, 5
      %p484 = por %p482, %p483
      %p486 = scmp.ne.s32.totalorder %s469, %s485
      %p487 = scmp.eq.s32.totalorder %s33, 0
      %p488 = por %p486, %p487
      %s489 = ssub.s32 %s35, %s42
      %p490 = scmp.eq.s32.totalorder %s489, 0
      %s492 = sadd.s32 %s491, 1
      %s493 = scalar_select %p490, %s491, %s492
      %p496 = pneg %p490
      %p497 = scmp.eq.s32.totalorder %s27, 5
      %p498 = por %p496, %p497
      %p499 = scmp.ne.s32.totalorder %s491, %s494
      %p500 = scmp.eq.s32.totalorder %s27, 0
      %p501 = por %p499, %p500
      %p502 = scmp.ne.s32.totalorder %s491, %s494
      %p503 = scmp.eq.s32.totalorder %s32, 5
      %p504 = por %p502, %p503
      %p505 = scmp.ne.s32.totalorder %s494, %s495
      %p506 = scmp.eq.s32.totalorder %s32, 0
      %p507 = por %p505, %p506
      %p508 = scmp.ne.s32.totalorder %s494, %s495
      %p509 = scmp.eq.s32.totalorder %s33, 5
      %p510 = por %p508, %p509
      %p512 = scmp.ne.s32.totalorder %s495, %s511
      %p513 = scmp.eq.s32.totalorder %s33, 0
      %p514 = por %p512, %p513
      %s515 = ssub.s32 %s34, %s46
      %p516 = scmp.eq.s32.totalorder %s515, 0
      %s518 = sadd.s32 %s517, 1
      %s519 = scalar_select %p516, %s517, %s518
      %p522 = pneg %p516
      %p523 = scmp.eq.s32.totalorder %s27, 5
      %p524 = por %p522, %p523
      %p525 = scmp.ne.s32.totalorder %s517, %s520
      %p526 = scmp.eq.s32.totalorder %s27, 0
      %p527 = por %p525, %p526
      %p528 = scmp.ne.s32.totalorder %s517, %s520
      %p529 = scmp.eq.s32.totalorder %s32, 5
      %p530 = por %p528, %p529
      %p531 = scmp.ne.s32.totalorder %s520, %s521
      %p532 = scmp.eq.s32.totalorder %s32, 0
      %p533 = por %p531, %p532
      %p534 = scmp.ne.s32.totalorder %s520, %s521
      %p535 = scmp.eq.s32.totalorder %s33, 5
      %p536 = por %p534, %p535
      %p538 = scmp.ne.s32.totalorder %s521, %s537
      %p539 = scmp.eq.s32.totalorder %s33, 0
      %p540 = por %p538, %p539
      %p541 = scmp.le.s32.totalorder 1, %s27
      %p542 = scmp.lt.s32.totalorder %s27, 7
      %p543 = pnand %p541, %p542
      %p544 = pneg %p543
      // Predicated region
      $region9: #{egnn_net_pallas.1} parent=5 // pred_check
        _
      $region10: #{egnn_net_pallas.1} parent=5 // pred_check_branch
        %546 = sbr.rel (%p543) target = $region12
      $region11: #{egnn_net_pallas.1} parent=5 // pred_region
        %s547 = ssub.s32 %s27, 1
      $region12: #{egnn_net_pallas.1} parent=5 // pred_fallthru
        _
      %p548 = scmp.lt.s32.totalorder %s27, 6
      // Predicated region
      $region13: #{egnn_net_pallas.1} parent=5 // pred_check
        %p549 = pneg %p548
      $region14: #{egnn_net_pallas.1} parent=5 // pred_check_branch
        %551 = sbr.rel (%p549) target = $region16
      $region15: #{egnn_net_pallas.1} parent=5 // pred_region
        // Predicated region
        $region17: #{egnn_net_pallas.1} parent=15 // pred_check
          %p552 = pneg %p59
        $region18: #{egnn_net_pallas.1} parent=15 // pred_check_branch
          %554 = sbr.rel (%p552) target = $region20
        $region19: #{egnn_net_pallas.1} parent=15 // pred_region
          %p555 = scmp.lt.s32.totalorder %s34, 1
          %s556 = scalar_select %p555, %s34, 1
          %s557 = smul.addr %s556, 4
          %s558 = smul.addr %s557, 8
          %s559 = scalar_lea.vmem %s0, %s558
        $region20: #{egnn_net_pallas.1} parent=15 // pred_fallthru
          _
        // Predicated region
        $region21: #{egnn_net_pallas.1} parent=15 // pred_check
          %p560 = pneg %p85
        $region22: #{egnn_net_pallas.1} parent=15 // pred_check_branch
          %562 = sbr.rel (%p560) target = $region24
        $region23: #{egnn_net_pallas.1} parent=15 // pred_region
          %p563 = scmp.lt.s32.totalorder %s34, 1
          %s564 = scalar_select %p563, %s34, 1
          %s565 = smul.addr %s564, 128
          %s566 = smul.addr %s565, 8
          %s567 = scalar_lea.vmem %s1, %s566
        $region24: #{egnn_net_pallas.1} parent=15 // pred_fallthru
          _
        // Predicated region
        $region25: #{egnn_net_pallas.1} parent=15 // pred_check
          %p568 = pneg %p111
        $region26: #{egnn_net_pallas.1} parent=15 // pred_check_branch
          %570 = sbr.rel (%p568) target = $region28
        $region27: #{egnn_net_pallas.1} parent=15 // pred_region
          %p571 = scmp.lt.s32.totalorder %s34, 1
          %s572 = scalar_select %p571, %s34, 1
          %s573 = smul.addr %s572, 32
          %s574 = smul.addr %s573, 4
          %s575 = scalar_lea.vmem %s2, %s574
        $region28: #{egnn_net_pallas.1} parent=15 // pred_fallthru
          _
        // Predicated region
        $region29: #{egnn_net_pallas.1} parent=15 // pred_check
          %p576 = pneg %p137
        $region30: #{egnn_net_pallas.1} parent=15 // pred_check_branch
          %578 = sbr.rel (%p576) target = $region32
        $region31: #{egnn_net_pallas.1} parent=15 // pred_region
          %p579 = scmp.lt.s32.totalorder %s35, 2
          %s580 = scalar_select %p579, %s35, 2
          %s581 = smul.addr %s580, 24
          %s582 = smul.addr %s581, 8
          %s583 = scalar_lea.vmem %s3, %s582
        $region32: #{egnn_net_pallas.1} parent=15 // pred_fallthru
          _
        // Predicated region
        $region33: #{egnn_net_pallas.1} parent=15 // pred_check
          %p584 = pneg %p163
        $region34: #{egnn_net_pallas.1} parent=15 // pred_check_branch
          %586 = sbr.rel (%p584) target = $region36
        $region35: #{egnn_net_pallas.1} parent=15 // pred_region
          %p587 = scmp.lt.s32.totalorder %s35, 2
          %s588 = scalar_select %p587, %s35, 2
          %s589 = smul.addr %s588, 3
          %s590 = scalar_lea.vmem %s4, %s589
        $region36: #{egnn_net_pallas.1} parent=15 // pred_fallthru
          _
        // Predicated region
        $region37: #{egnn_net_pallas.1} parent=15 // pred_check
          %p591 = pneg %p189
        $region38: #{egnn_net_pallas.1} parent=15 // pred_check_branch
          %593 = sbr.rel (%p591) target = $region40
        $region39: #{egnn_net_pallas.1} parent=15 // pred_region
          %p594 = scmp.lt.s32.totalorder %s35, 2
          %s595 = scalar_select %p594, %s35, 2
          %s596 = smul.addr %s595, 24
          %s597 = smul.addr %s596, 8
          %s598 = scalar_lea.vmem %s5, %s597
        $region40: #{egnn_net_pallas.1} parent=15 // pred_fallthru
          _
        // Predicated region
        $region41: #{egnn_net_pallas.1} parent=15 // pred_check
          %p599 = pneg %p215
        $region42: #{egnn_net_pallas.1} parent=15 // pred_check_branch
          %601 = sbr.rel (%p599) target = $region44
        $region43: #{egnn_net_pallas.1} parent=15 // pred_region
          %p602 = scmp.lt.s32.totalorder %s35, 2
          %s603 = scalar_select %p602, %s35, 2
          %s604 = smul.addr %s603, 3
          %s605 = scalar_lea.vmem %s6, %s604
        $region44: #{egnn_net_pallas.1} parent=15 // pred_fallthru
          _
        // Predicated region
        $region45: #{egnn_net_pallas.1} parent=15 // pred_check
          %p606 = pneg %p241
        $region46: #{egnn_net_pallas.1} parent=15 // pred_check_branch
          %608 = sbr.rel (%p606) target = $region48
        $region47: #{egnn_net_pallas.1} parent=15 // pred_region
          %p609 = scmp.lt.s32.totalorder %s35, 2
          %s610 = scalar_select %p609, %s35, 2
          %s611 = smul.addr %s610, 48
          %s612 = smul.addr %s611, 4
          %s613 = scalar_lea.vmem %s7, %s612
        $region48: #{egnn_net_pallas.1} parent=15 // pred_fallthru
          _
        // Predicated region
        $region49: #{egnn_net_pallas.1} parent=15 // pred_check
          %p614 = pneg %p267
        $region50: #{egnn_net_pallas.1} parent=15 // pred_check_branch
          %616 = sbr.rel (%p614) target = $region52
        $region51: #{egnn_net_pallas.1} parent=15 // pred_region
          %p617 = scmp.lt.s32.totalorder %s35, 2
          %s618 = scalar_select %p617, %s35, 2
          %s619 = scalar_lea.vmem %s8, %s618
        $region52: #{egnn_net_pallas.1} parent=15 // pred_fallthru
          _
        // Predicated region
        $region53: #{egnn_net_pallas.1} parent=15 // pred_check
          %p620 = pneg %p293
        $region54: #{egnn_net_pallas.1} parent=15 // pred_check_branch
          %622 = sbr.rel (%p620) target = $region56
        $region55: #{egnn_net_pallas.1} parent=15 // pred_region
          %p623 = scmp.lt.s32.totalorder %s35, 2
          %s624 = scalar_select %p623, %s35, 2
          %s625 = smul.addr %s624, 16
          %s626 = smul.addr %s625, 8
          %s627 = scalar_lea.vmem %s9, %s626
        $region56: #{egnn_net_pallas.1} parent=15 // pred_fallthru
          _
        // Predicated region
        $region57: #{egnn_net_pallas.1} parent=15 // pred_check
          %p628 = pneg %p319
        $region58: #{egnn_net_pallas.1} parent=15 // pred_check_branch
          %630 = sbr.rel (%p628) target = $region60
        $region59: #{egnn_net_pallas.1} parent=15 // pred_region
          %p631 = scmp.lt.s32.totalorder %s35, 2
          %s632 = scalar_select %p631, %s35, 2
          %s633 = scalar_lea.vmem %s10, %s632
        $region60: #{egnn_net_pallas.1} parent=15 // pred_fallthru
          _
        // Predicated region
        $region61: #{egnn_net_pallas.1} parent=15 // pred_check
          %p634 = pneg %p345
        $region62: #{egnn_net_pallas.1} parent=15 // pred_check_branch
          %636 = sbr.rel (%p634) target = $region64
        $region63: #{egnn_net_pallas.1} parent=15 // pred_region
          %p637 = scmp.lt.s32.totalorder %s35, 2
          %s638 = scalar_select %p637, %s35, 2
          %s639 = scalar_lea.vmem %s11, %s638
        $region64: #{egnn_net_pallas.1} parent=15 // pred_fallthru
          _
        // Predicated region
        $region65: #{egnn_net_pallas.1} parent=15 // pred_check
          %p640 = pneg %p371
        $region66: #{egnn_net_pallas.1} parent=15 // pred_check_branch
          %642 = sbr.rel (%p640) target = $region68
        $region67: #{egnn_net_pallas.1} parent=15 // pred_region
          %p643 = scmp.lt.s32.totalorder %s35, 2
          %s644 = scalar_select %p643, %s35, 2
          %s645 = scalar_lea.vmem %s12, %s644
        $region68: #{egnn_net_pallas.1} parent=15 // pred_fallthru
          _
        // Predicated region
        $region69: #{egnn_net_pallas.1} parent=15 // pred_check
          %p646 = pneg %p397
        $region70: #{egnn_net_pallas.1} parent=15 // pred_check_branch
          %648 = sbr.rel (%p646) target = $region72
        $region71: #{egnn_net_pallas.1} parent=15 // pred_region
          %p649 = scmp.lt.s32.totalorder %s35, 2
          %s650 = scalar_select %p649, %s35, 2
          %s651 = smul.addr %s650, 8
          %s652 = smul.addr %s651, 8
          %s653 = scalar_lea.vmem %s13, %s652
        $region72: #{egnn_net_pallas.1} parent=15 // pred_fallthru
          _
        // Predicated region
        $region73: #{egnn_net_pallas.1} parent=15 // pred_check
          %p654 = pneg %p423
        $region74: #{egnn_net_pallas.1} parent=15 // pred_check_branch
          %656 = sbr.rel (%p654) target = $region76
        $region75: #{egnn_net_pallas.1} parent=15 // pred_region
          %p657 = scmp.lt.s32.totalorder %s35, 2
          %s658 = scalar_select %p657, %s35, 2
          %s659 = smul.addr %s658, 16
          %s660 = smul.addr %s659, 8
          %s661 = scalar_lea.vmem %s14, %s660
        $region76: #{egnn_net_pallas.1} parent=15 // pred_fallthru
          _
        // Predicated region
        $region77: #{egnn_net_pallas.1} parent=15 // pred_check
          %p662 = pneg %p449
        $region78: #{egnn_net_pallas.1} parent=15 // pred_check_branch
          %664 = sbr.rel (%p662) target = $region80
        $region79: #{egnn_net_pallas.1} parent=15 // pred_region
          %p665 = scmp.lt.s32.totalorder %s35, 2
          %s666 = scalar_select %p665, %s35, 2
          %s667 = scalar_lea.vmem %s15, %s666
        $region80: #{egnn_net_pallas.1} parent=15 // pred_fallthru
          _
        // Predicated region
        $region81: #{egnn_net_pallas.1} parent=15 // pred_check
          %p668 = pneg %p475
        $region82: #{egnn_net_pallas.1} parent=15 // pred_check_branch
          %670 = sbr.rel (%p668) target = $region84
        $region83: #{egnn_net_pallas.1} parent=15 // pred_region
          %p671 = scmp.lt.s32.totalorder %s35, 2
          %s672 = scalar_select %p671, %s35, 2
          %s673 = smul.addr %s672, 16
          %s674 = smul.addr %s673, 8
          %s675 = scalar_lea.vmem %s16, %s674
        $region84: #{egnn_net_pallas.1} parent=15 // pred_fallthru
          _
        // Predicated region
        $region85: #{egnn_net_pallas.1} parent=15 // pred_check
          %p676 = pneg %p501
        $region86: #{egnn_net_pallas.1} parent=15 // pred_check_branch
          %678 = sbr.rel (%p676) target = $region88
        $region87: #{egnn_net_pallas.1} parent=15 // pred_region
          %p679 = scmp.lt.s32.totalorder %s35, 2
          %s680 = scalar_select %p679, %s35, 2
          %s681 = scalar_lea.vmem %s17, %s680
        $region88: #{egnn_net_pallas.1} parent=15 // pred_fallthru
          _
      $region16: #{egnn_net_pallas.1} parent=5 // pred_fallthru
        _
      %p682 = scmp.le.s32.totalorder 1, %s27
      %p683 = scmp.lt.s32.totalorder %s27, 7
      %p684 = pnand %p682, %p683
      %p685 = pneg %p684
      // Predicated region
      $region89: #{egnn_net_pallas.1} parent=5 // pred_check
        _
      $region90: #{egnn_net_pallas.1} parent=5 // pred_check_branch
        %687 = sbr.rel (%p684) target = $region92
      $region91: #{egnn_net_pallas.1} parent=5 // pred_region
        %s688 = ssub.s32 %s27, 1
        %p689 = scmp.lt.s32.totalorder %s36, 1
        %s690 = scalar_select %p689, %s36, 1
        %s691 = smul.addr %s690, 4
        %s692 = smul.addr %s691, 8
        %s693 = scalar_lea.vmem %s0, %s692
        %p694 = pneg %p65
        %p695 = pneg %p62
        %p696 = scmp.lt.s32.totalorder %s36, 1
        %s697 = scalar_select %p696, %s36, 1
        %s698 = smul.addr %s697, 128
        %s699 = smul.addr %s698, 8
        %s700 = scalar_lea.vmem %s1, %s699
        %p701 = pneg %p91
        %p702 = pneg %p88
        %p703 = scmp.lt.s32.totalorder %s36, 1
        %s704 = scalar_select %p703, %s36, 1
        %s705 = smul.addr %s704, 32
        %s706 = smul.addr %s705, 4
        %s707 = scalar_lea.vmem %s2, %s706
        %p708 = pneg %p117
        %p709 = pneg %p114
        %p710 = scmp.lt.s32.totalorder %s37, 2
        %s711 = scalar_select %p710, %s37, 2
        %s712 = smul.addr %s711, 24
        %s713 = smul.addr %s712, 8
        %s714 = scalar_lea.vmem %s3, %s713
        %p715 = pneg %p143
        %p716 = pneg %p140
        %p717 = scmp.lt.s32.totalorder %s37, 2
        %s718 = scalar_select %p717, %s37, 2
        %s719 = smul.addr %s718, 3
        %s720 = scalar_lea.vmem %s4, %s719
        %p721 = pneg %p169
        %p722 = pneg %p166
        %p723 = scmp.lt.s32.totalorder %s37, 2
        %s724 = scalar_select %p723, %s37, 2
        %s725 = smul.addr %s724, 24
        %s726 = smul.addr %s725, 8
        %s727 = scalar_lea.vmem %s5, %s726
        %p728 = pneg %p195
        %p729 = pneg %p192
        %p730 = scmp.lt.s32.totalorder %s37, 2
        %s731 = scalar_select %p730, %s37, 2
        %s732 = smul.addr %s731, 3
        %s733 = scalar_lea.vmem %s6, %s732
        %p734 = pneg %p221
        %p735 = pneg %p218
        %p736 = scmp.lt.s32.totalorder %s37, 2
        %s737 = scalar_select %p736, %s37, 2
        %s738 = smul.addr %s737, 48
        %s739 = smul.addr %s738, 4
        %s740 = scalar_lea.vmem %s7, %s739
        %p741 = pneg %p247
        %p742 = pneg %p244
        %p743 = scmp.lt.s32.totalorder %s37, 2
        %s744 = scalar_select %p743, %s37, 2
        %s745 = scalar_lea.vmem %s8, %s744
        %p746 = pneg %p273
        %p747 = pneg %p270
        %p748 = scmp.lt.s32.totalorder %s37, 2
        %s749 = scalar_select %p748, %s37, 2
        %s750 = smul.addr %s749, 16
        %s751 = smul.addr %s750, 8
        %s752 = scalar_lea.vmem %s9, %s751
        %p753 = pneg %p299
        %p754 = pneg %p296
        %p755 = scmp.lt.s32.totalorder %s37, 2
        %s756 = scalar_select %p755, %s37, 2
        %s757 = scalar_lea.vmem %s10, %s756
        %p758 = pneg %p325
        %p759 = pneg %p322
        %p760 = scmp.lt.s32.totalorder %s37, 2
        %s761 = scalar_select %p760, %s37, 2
        %s762 = scalar_lea.vmem %s11, %s761
        %p763 = pneg %p351
        %p764 = pneg %p348
        %p765 = scmp.lt.s32.totalorder %s37, 2
        %s766 = scalar_select %p765, %s37, 2
        %s767 = scalar_lea.vmem %s12, %s766
        %p768 = pneg %p377
        %p769 = pneg %p374
        %p770 = scmp.lt.s32.totalorder %s37, 2
        %s771 = scalar_select %p770, %s37, 2
        %s772 = smul.addr %s771, 8
        %s773 = smul.addr %s772, 8
        %s774 = scalar_lea.vmem %s13, %s773
        %p775 = pneg %p403
        %p776 = pneg %p400
        %p777 = scmp.lt.s32.totalorder %s37, 2
        %s778 = scalar_select %p777, %s37, 2
        %s779 = smul.addr %s778, 16
        %s780 = smul.addr %s779, 8
        %s781 = scalar_lea.vmem %s14, %s780
        %p782 = pneg %p429
        %p783 = pneg %p426
        %p784 = scmp.lt.s32.totalorder %s37, 2
        %s785 = scalar_select %p784, %s37, 2
        %s786 = scalar_lea.vmem %s15, %s785
        %p787 = pneg %p455
        %p788 = pneg %p452
        %p789 = scmp.lt.s32.totalorder %s37, 2
        %s790 = scalar_select %p789, %s37, 2
        %s791 = smul.addr %s790, 16
        %s792 = smul.addr %s791, 8
        %s793 = scalar_lea.vmem %s16, %s792
        %p794 = pneg %p481
        %p795 = pneg %p478
        %p796 = scmp.lt.s32.totalorder %s37, 2
        %s797 = scalar_select %p796, %s37, 2
        %s798 = scalar_lea.vmem %s17, %s797
        %p799 = pneg %p507
        %p800 = pneg %p504
        %p801 = pneg %p533
        %p802 = pneg %p530
        %s803 = sand.u32 %s520, 1
        %s804 = scalar_lea.sflag [#allocation4], %s803
        %s805 = sand.u32 %s520, 1
        %s806 = smul.addr %s805, 32
        %s807 = scalar_lea.vmem [#allocation3], %s806
        %p808 = scmp.lt.s32.totalorder %s36, 1
        %s809 = scalar_select %p808, %s36, 1
        %s810 = smul.addr %s809, 4
        %s811 = smul.addr %s810, 8
        %s812 = scalar_lea.vmem %s0, %s811
        %p813 = scmp.lt.s32.totalorder %s36, 1
        %s814 = scalar_select %p813, %s36, 1
        %s815 = smul.addr %s814, 128
        %s816 = smul.addr %s815, 8
        %s817 = scalar_lea.vmem %s1, %s816
        %p818 = scmp.lt.s32.totalorder %s36, 1
        %s819 = scalar_select %p818, %s36, 1
        %s820 = smul.addr %s819, 32
        %s821 = smul.addr %s820, 4
        %s822 = scalar_lea.vmem %s2, %s821
        %p823 = scmp.lt.s32.totalorder %s37, 2
        %s824 = scalar_select %p823, %s37, 2
        %s825 = smul.addr %s824, 24
        %s826 = smul.addr %s825, 8
        %s827 = scalar_lea.vmem %s3, %s826
        %p828 = scmp.lt.s32.totalorder %s37, 2
        %s829 = scalar_select %p828, %s37, 2
        %s830 = smul.addr %s829, 3
        %s831 = scalar_lea.vmem %s4, %s830
        %p832 = scmp.lt.s32.totalorder %s37, 2
        %s833 = scalar_select %p832, %s37, 2
        %s834 = smul.addr %s833, 24
        %s835 = smul.addr %s834, 8
        %s836 = scalar_lea.vmem %s5, %s835
        %p837 = scmp.lt.s32.totalorder %s37, 2
        %s838 = scalar_select %p837, %s37, 2
        %s839 = smul.addr %s838, 3
        %s840 = scalar_lea.vmem %s6, %s839
        %p841 = scmp.lt.s32.totalorder %s37, 2
        %s842 = scalar_select %p841, %s37, 2
        %s843 = smul.addr %s842, 48
        %s844 = smul.addr %s843, 4
        %s845 = scalar_lea.vmem %s7, %s844
        %p846 = scmp.lt.s32.totalorder %s37, 2
        %s847 = scalar_select %p846, %s37, 2
        %s848 = scalar_lea.vmem %s8, %s847
        %p849 = scmp.lt.s32.totalorder %s37, 2
        %s850 = scalar_select %p849, %s37, 2
        %s851 = smul.addr %s850, 16
        %s852 = smul.addr %s851, 8
        %s853 = scalar_lea.vmem %s9, %s852
        %p854 = scmp.lt.s32.totalorder %s37, 2
        %s855 = scalar_select %p854, %s37, 2
        %s856 = scalar_lea.vmem %s10, %s855
        %p857 = scmp.lt.s32.totalorder %s37, 2
        %s858 = scalar_select %p857, %s37, 2
        %s859 = scalar_lea.vmem %s11, %s858
        %p860 = scmp.lt.s32.totalorder %s37, 2
        %s861 = scalar_select %p860, %s37, 2
        %s862 = scalar_lea.vmem %s12, %s861
        %p863 = scmp.lt.s32.totalorder %s37, 2
        %s864 = scalar_select %p863, %s37, 2
        %s865 = smul.addr %s864, 8
        %s866 = smul.addr %s865, 8
        %s867 = scalar_lea.vmem %s13, %s866
        %p868 = scmp.lt.s32.totalorder %s37, 2
        %s869 = scalar_select %p868, %s37, 2
        %s870 = smul.addr %s869, 16
        %s871 = smul.addr %s870, 8
        %s872 = scalar_lea.vmem %s14, %s871
        %p873 = scmp.lt.s32.totalorder %s37, 2
        %s874 = scalar_select %p873, %s37, 2
        %s875 = scalar_lea.vmem %s15, %s874
        %p876 = scmp.lt.s32.totalorder %s37, 2
        %s877 = scalar_select %p876, %s37, 2
        %s878 = smul.addr %s877, 16
        %s879 = smul.addr %s878, 8
        %s880 = scalar_lea.vmem %s16, %s879
        %p881 = scmp.lt.s32.totalorder %s37, 2
        %s882 = scalar_select %p881, %s37, 2
        %s883 = scalar_lea.vmem %s17, %s882
        %p885 = scmp.eq.s32.totalorder %s37, 0
        // Predicated region
        $region93: #{egnn_net_pallas.1} parent=91 // pred_check
          %p886 = pneg %p885
        $region94: #{egnn_net_pallas.1} parent=91 // pred_check_branch
          %888 = sbr.rel (%p886) target = $region96
        $region95: #{egnn_net_pallas.1} parent=91 // pred_region
          %v889 = vld [vmem:[%s812] sm:$0xff]
          %v890 = vld [vmem:[%s812 + $0x8] sm:$0xff]
          %v891 = vld [vmem:[%s812 + $0x10] sm:$0xff]
          %v892 = vld [vmem:[%s812 + $0x18] sm:$0xff]
          %vm893 = vcmask 523264
          %894 = vst.msk [vmem:[%s807] sm:$0xff] %vm893, %v889
          %895 = vst.msk [vmem:[%s807 + $0x8] sm:$0xff] %vm893, %v890
          %896 = vst.msk [vmem:[%s807 + $0x10] sm:$0xff] %vm893, %v891
          %897 = vst.msk [vmem:[%s807 + $0x18] sm:$0xff] %vm893, %v892
        $region96: #{egnn_net_pallas.1} parent=91 // pred_fallthru
          _
        %v898 = vld [vmem:[%s807] sm:$0xff]
        %v899 = vld [vmem:[%s807 + $0x8] sm:$0xff]
        %v900 = vld [vmem:[%s807 + $0x10] sm:$0xff]
        %v901 = vld [vmem:[%s807 + $0x18] sm:$0xff]
        %v902 = vld [vmem:[%s827] sm:$0xff]
        %v903 = vld [vmem:[%s827 + $0x8] sm:$0xff]
        %v904 = vld [vmem:[%s827 + $0x10] sm:$0xff]
        %v905 = vld [vmem:[%s827 + $0x18] sm:$0xff]
        %v906 = vld [vmem:[%s827 + $0x20] sm:$0xff]
        %v907 = vld [vmem:[%s827 + $0x28] sm:$0xff]
        %v908 = vld [vmem:[%s827 + $0x30] sm:$0xff]
        %v909 = vld [vmem:[%s827 + $0x38] sm:$0xff]
        %v910 = vld [vmem:[%s827 + $0x40] sm:$0xff]
        %v911 = vld [vmem:[%s827 + $0x48] sm:$0xff]
        %v912 = vld [vmem:[%s827 + $0x50] sm:$0xff]
        %v913 = vld [vmem:[%s827 + $0x58] sm:$0xff]
        %v914 = vld [vmem:[%s827 + $0x60] sm:$0xff]
        %v915 = vld [vmem:[%s827 + $0x68] sm:$0xff]
        %v916 = vld [vmem:[%s827 + $0x70] sm:$0xff]
        %v917 = vld [vmem:[%s827 + $0x78] sm:$0xff]
        %v918 = vld [vmem:[%s827 + $0x80] sm:$0xff]
        %v919 = vld [vmem:[%s827 + $0x88] sm:$0xff]
        %v920 = vld [vmem:[%s827 + $0x90] sm:$0xff]
        %v921 = vld [vmem:[%s827 + $0x98] sm:$0xff]
        %v922 = vld [vmem:[%s827 + $0xa0] sm:$0xff]
        %v923 = vld [vmem:[%s827 + $0xa8] sm:$0xff]
        %v924 = vld [vmem:[%s827 + $0xb0] sm:$0xff]
        %v925 = vld [vmem:[%s827 + $0xb8] sm:$0xff]
        %v926 = vld [vmem:[%s831] sm:$0x7]
        %v928 = vlaneseq
        %v929 = vshrl.u32 %v928, 7
        %v930 = vsub.s32 0, %v929
        %v931 = vrot.slane %v926, %v930
        %v932 = vlaneseq
        %v933 = vshrl.u32 %v932, 7
        %v934 = vsub.s32 1, %v933
        %v935 = vrot.slane %v926, %v934
        %v936 = vlaneseq
        %v937 = vshrl.u32 %v936, 7
        %v938 = vsub.s32 2, %v937
        %v939 = vrot.slane %v926, %v938
        %vm943 = vcmask 523264
        %v945 = vsel %vm943, %v898, 0
        %v948 = vsel %vm943, %v899, 0
        %v951 = vsel %vm943, %v900, 0
        %v954 = vsel %vm943, %v901, 0
        %956 = vmatprep.subr.mxu0 %v903
        %957 = vmatpush1.msra.mxu0 %v902
        %958 = vmatprep.subr.mxu0 %v906
        %959 = vmatpush1.msra.mxu0 %v905
        %960 = vmatprep.subr.mxu0 %v909
        %961 = vmatpush1.msra.mxu0 %v908
        %962 = vmatprep.subr.mxu0 %v912
        %963 = vmatpush1.msra.mxu0 %v911
        %964 = vmatprep.subr.mxu0 %v915
        %965 = vmatpush1.msra.mxu0 %v914
        %966 = vmatprep.subr.mxu0 %v918
        %967 = vmatpush1.msra.mxu0 %v917
        %968 = vmatprep.subr.mxu0 %v921
        %969 = vmatpush1.msra.mxu0 %v920
        %970 = vmatprep.subr.mxu0 %v924
        %971 = vmatpush1.msra.mxu0 %v923
        %972 = vmatprep.subr.mxu0 0.0
        %973 = vmatpush1.msra.mxu0 0.0
        %974 = vmatprep.subr.mxu0 0.0
        %975 = vmatpush1.msra.mxu0 0.0
        %976 = vmatprep.subr.mxu0 0.0
        %977 = vmatpush1.msra.mxu0 0.0
        %978 = vmatprep.subr.mxu0 0.0
        %979 = vmatpush1.msra.mxu0 0.0
        %980 = vmatprep.subr.mxu0 0.0
        %981 = vmatpush1.msra.mxu0 0.0
        %982 = vmatprep.subr.mxu0 0.0
        %983 = vmatpush1.msra.mxu0 0.0
        %984 = vmatprep.subr.mxu0 0.0
        %985 = vmatpush1.msra.mxu0 0.0
        %986 = vmatprep.subr.mxu0 0.0
        %987 = vmatpush1.msra.mxu0 0.0
        %988 = vmatprep.subr.mxu0 0.0
        %989 = vmatpush1.msra.mxu0 0.0
        %990 = vmatprep.subr.mxu0 0.0
        %991 = vmatpush1.msra.mxu0 0.0
        %992 = vmatprep.subr.mxu0 0.0
        %993 = vmatpush1.msra.mxu0 0.0
        %994 = vmatprep.subr.mxu0 0.0
        %995 = vmatpush1.msra.mxu0 0.0
        %996 = vmatprep.subr.mxu0 0.0
        %997 = vmatpush1.msra.mxu0 0.0
        %998 = vmatprep.subr.mxu0 0.0
        %999 = vmatpush1.msra.mxu0 0.0
        %1000 = vmatprep.subr.mxu0 0.0
        %1001 = vmatpush1.msra.mxu0 0.0
        %1002 = vmatprep.subr.mxu0 0.0
        %1003 = vmatpush1.msra.mxu0 0.0
        %1004 = vmatprep.subr.mxu0 0.0
        %1005 = vmatpush1.msra.mxu0 0.0
        %1006 = vmatprep.subr.mxu0 0.0
        %1007 = vmatpush1.msra.mxu0 0.0
        %1008 = vmatprep.subr.mxu0 0.0
        %1009 = vmatpush1.msra.mxu0 0.0
        %1010 = vmatprep.subr.mxu0 0.0
        %1011 = vmatpush1.msra.mxu0 0.0
        %1012 = vmatprep.subr.mxu0 0.0
        %1013 = vmatpush1.msra.mxu0 0.0
        %1014 = vmatprep.subr.mxu0 0.0
        %1015 = vmatpush1.msra.mxu0 0.0
        %1016 = vmatprep.subr.mxu0 0.0
        %1017 = vmatpush1.msra.mxu0 0.0
        %1018 = vmatprep.subr.mxu0 0.0
        %1019 = vmatpush1.msra.mxu0 0.0
        %1020 = vmatprep.mubr.f32.mxu0 0.0
        %1021 = vmatmul.mubr.f32.gmra.mrb[0].mxu0 %v945
        %v1022 = vpop.f32.mrb[0].mxu0
        %v1023 = vadd.f32 %v931, %v1022
        %v1024 = vpop.f32.mrb[0].mxu0
        %v1025 = vadd.f32 %v935, %v1024
        %1026 = vmatprep.mubr.f32.mxu0 0.0
        %1027 = vmatmul.mubr.f32.gmra.mrb[0].mxu0 %v948
        %v1028 = vpop.f32.mrb[0].mxu0
        %v1029 = vadd.f32 %v931, %v1028
        %v1030 = vpop.f32.mrb[0].mxu0
        %v1031 = vadd.f32 %v935, %v1030
        %1032 = vmatprep.mubr.f32.mxu0 0.0
        %1033 = vmatmul.mubr.f32.gmra.mrb[0].mxu0 %v951
        %v1034 = vpop.f32.mrb[0].mxu0
        %v1035 = vadd.f32 %v931, %v1034
        %v1036 = vpop.f32.mrb[0].mxu0
        %v1037 = vadd.f32 %v935, %v1036
        %1038 = vmatprep.mubr.f32.mxu0 0.0
        %1039 = vmatmul.mubr.f32.gmra.mrb[0].mxu0 %v954
        %v1040 = vpop.f32.mrb[0].mxu0
        %v1041 = vadd.f32 %v931, %v1040
        %v1042 = vpop.f32.mrb[0].mxu0
        %v1043 = vadd.f32 %v935, %v1042
        %1044 = vdwg.mxu0
        %1045 = vmatprep.subr.mxu0 0.0
        %1046 = vmatpush1.msra.mxu0 %v904
        %1047 = vmatprep.subr.mxu0 0.0
        %1048 = vmatpush1.msra.mxu0 %v907
        %1049 = vmatprep.subr.mxu0 0.0
        %1050 = vmatpush1.msra.mxu0 %v910
        %1051 = vmatprep.subr.mxu0 0.0
        %1052 = vmatpush1.msra.mxu0 %v913
        %1053 = vmatprep.subr.mxu0 0.0
        %1054 = vmatpush1.msra.mxu0 %v916
        %1055 = vmatprep.subr.mxu0 0.0
        %1056 = vmatpush1.msra.mxu0 %v919
        %1057 = vmatprep.subr.mxu0 0.0
        %1058 = vmatpush1.msra.mxu0 %v922
        %1059 = vmatprep.subr.mxu0 0.0
        %1060 = vmatpush1.msra.mxu0 %v925
        %1061 = vmatprep.subr.mxu0 0.0
        %1062 = vmatpush1.msra.mxu0 0.0
        %1063 = vmatprep.subr.mxu0 0.0
        %1064 = vmatpush1.msra.mxu0 0.0
        %1065 = vmatprep.subr.mxu0 0.0
        %1066 = vmatpush1.msra.mxu0 0.0
        %1067 = vmatprep.subr.mxu0 0.0
        %1068 = vmatpush1.msra.mxu0 0.0
        %1069 = vmatprep.subr.mxu0 0.0
        %1070 = vmatpush1.msra.mxu0 0.0
        %1071 = vmatprep.subr.mxu0 0.0
        %1072 = vmatpush1.msra.mxu0 0.0
        %1073 = vmatprep.subr.mxu0 0.0
        %1074 = vmatpush1.msra.mxu0 0.0
        %1075 = vmatprep.subr.mxu0 0.0
        %1076 = vmatpush1.msra.mxu0 0.0
        %1077 = vmatprep.subr.mxu0 0.0
        %1078 = vmatpush1.msra.mxu0 0.0
        %1079 = vmatprep.subr.mxu0 0.0
        %1080 = vmatpush1.msra.mxu0 0.0
        %1081 = vmatprep.subr.mxu0 0.0
        %1082 = vmatpush1.msra.mxu0 0.0
        %1083 = vmatprep.subr.mxu0 0.0
        %1084 = vmatpush1.msra.mxu0 0.0
        %1085 = vmatprep.subr.mxu0 0.0
        %1086 = vmatpush1.msra.mxu0 0.0
        %1087 = vmatprep.subr.mxu0 0.0
        %1088 = vmatpush1.msra.mxu0 0.0
        %1089 = vmatprep.subr.mxu0 0.0
        %1090 = vmatpush1.msra.mxu0 0.0
        %1091 = vmatprep.subr.mxu0 0.0
        %1092 = vmatpush1.msra.mxu0 0.0
        %1093 = vmatprep.subr.mxu0 0.0
        %1094 = vmatpush1.msra.mxu0 0.0
        %1095 = vmatprep.subr.mxu0 0.0
        %1096 = vmatpush1.msra.mxu0 0.0
        %1097 = vmatprep.subr.mxu0 0.0
        %1098 = vmatpush1.msra.mxu0 0.0
        %1099 = vmatprep.subr.mxu0 0.0
        %1100 = vmatpush1.msra.mxu0 0.0
        %1101 = vmatprep.subr.mxu0 0.0
        %1102 = vmatpush1.msra.mxu0 0.0
        %1103 = vmatprep.subr.mxu0 0.0
        %1104 = vmatpush1.msra.mxu0 0.0
        %1105 = vmatprep.subr.mxu0 0.0
        %1106 = vmatpush1.msra.mxu0 0.0
        %1107 = vmatprep.subr.mxu0 0.0
        %1108 = vmatpush1.msra.mxu0 0.0
        %1109 = vmatprep.mubr.f32.mxu0 0.0
        %1110 = vmatmul.mubr.f32.gmra.mrb[0].mxu0 %v945
        %v1111 = vpop.f32.mrb[0].mxu0
        %v1112 = vadd.f32 %v939, %v1111
        %v1113 = vpop.f32.mrb[0].mxu0
        %1114 = vmatprep.mubr.f32.mxu0 0.0
        %1115 = vmatmul.mubr.f32.gmra.mrb[0].mxu0 %v948
        %v1116 = vpop.f32.mrb[0].mxu0
        %v1117 = vadd.f32 %v939, %v1116
        %v1118 = vpop.f32.mrb[0].mxu0
        %1119 = vmatprep.mubr.f32.mxu0 0.0
        %1120 = vmatmul.mubr.f32.gmra.mrb[0].mxu0 %v951
        %v1121 = vpop.f32.mrb[0].mxu0
        %v1122 = vadd.f32 %v939, %v1121
        %v1123 = vpop.f32.mrb[0].mxu0
        %1124 = vmatprep.mubr.f32.mxu0 0.0
        %1125 = vmatmul.mubr.f32.gmra.mrb[0].mxu0 %v954
        %v1126 = vpop.f32.mrb[0].mxu0
        %v1127 = vadd.f32 %v939, %v1126
        %v1128 = vpop.f32.mrb[0].mxu0
        %1129 = vdwg.mxu0
        %1130 = vst [vmem:[#allocation2] sm:$0xff] 0.0
        %1131 = vst [vmem:[#allocation2 + $0x8] sm:$0xff] 0.0
        %1132 = vst [vmem:[#allocation2 + $0x10] sm:$0xff] 0.0
        %1133 = vst [vmem:[#allocation2 + $0x18] sm:$0xff] 0.0
        %1134 = vst [vmem:[#allocation2 + $0x20] sm:$0xff] 0.0
        %1135 = vst [vmem:[#allocation2 + $0x28] sm:$0xff] 0.0
        %1136 = vst [vmem:[#allocation2 + $0x30] sm:$0xff] 0.0
        %1137 = vst [vmem:[#allocation2 + $0x38] sm:$0xff] 0.0
        %1138 = vst [vmem:[#allocation2 + $0x40] sm:$0xff] 0.0
        %1139 = vst [vmem:[#allocation2 + $0x48] sm:$0xff] 0.0
        %1140 = vst [vmem:[#allocation2 + $0x50] sm:$0xff] 0.0
        %1141 = vst [vmem:[#allocation2 + $0x58] sm:$0xff] 0.0
        %1142 = vst [vmem:[#allocation2 + $0x60] sm:$0xff] 0.0
        %1143 = vst [vmem:[#allocation2 + $0x68] sm:$0xff] 0.0
        %1144 = vst [vmem:[#allocation2 + $0x70] sm:$0xff] 0.0
        %v1145 = vld [vmem:[%s836] sm:$0xff]
        %v1146 = vld [vmem:[%s836 + $0x8] sm:$0xff]
        %v1147 = vld [vmem:[%s836 + $0x10] sm:$0xff]
        %v1148 = vld [vmem:[%s836 + $0x18] sm:$0xff]
        %v1149 = vld [vmem:[%s836 + $0x20] sm:$0xff]
        %v1150 = vld [vmem:[%s836 + $0x28] sm:$0xff]
        %v1151 = vld [vmem:[%s836 + $0x30] sm:$0xff]
        %v1152 = vld [vmem:[%s836 + $0x38] sm:$0xff]
        %v1153 = vld [vmem:[%s836 + $0x40] sm:$0xff]
        %v1154 = vld [vmem:[%s836 + $0x48] sm:$0xff]
        %v1155 = vld [vmem:[%s836 + $0x50] sm:$0xff]
        %v1156 = vld [vmem:[%s836 + $0x58] sm:$0xff]
        %v1157 = vld [vmem:[%s836 + $0x60] sm:$0xff]
        %v1158 = vld [vmem:[%s836 + $0x68] sm:$0xff]
        %v1159 = vld [vmem:[%s836 + $0x70] sm:$0xff]
        %v1160 = vld [vmem:[%s836 + $0x78] sm:$0xff]
        %v1161 = vld [vmem:[%s836 + $0x80] sm:$0xff]
        %v1162 = vld [vmem:[%s836 + $0x88] sm:$0xff]
        %v1163 = vld [vmem:[%s836 + $0x90] sm:$0xff]
        %v1164 = vld [vmem:[%s836 + $0x98] sm:$0xff]
        %v1165 = vld [vmem:[%s836 + $0xa0] sm:$0xff]
        %v1166 = vld [vmem:[%s836 + $0xa8] sm:$0xff]
        %v1167 = vld [vmem:[%s836 + $0xb0] sm:$0xff]
        %v1168 = vld [vmem:[%s836 + $0xb8] sm:$0xff]
        %1169 = vmatprep.subr.mxu0 %v1146
        %1170 = vmatpush1.msra.mxu0 %v1145
        %1171 = vmatprep.subr.mxu0 %v1149
        %1172 = vmatpush1.msra.mxu0 %v1148
        %1173 = vmatprep.subr.mxu0 %v1152
        %1174 = vmatpush1.msra.mxu0 %v1151
        %1175 = vmatprep.subr.mxu0 %v1155
        %1176 = vmatpush1.msra.mxu0 %v1154
        %1177 = vmatprep.subr.mxu0 %v1158
        %1178 = vmatpush1.msra.mxu0 %v1157
        %1179 = vmatprep.subr.mxu0 %v1161
        %1180 = vmatpush1.msra.mxu0 %v1160
        %1181 = vmatprep.subr.mxu0 %v1164
        %1182 = vmatpush1.msra.mxu0 %v1163
        %1183 = vmatprep.subr.mxu0 %v1167
        %1184 = vmatpush1.msra.mxu0 %v1166
        %1185 = vmatprep.subr.mxu0 0.0
        %1186 = vmatpush1.msra.mxu0 0.0
        %1187 = vmatprep.subr.mxu0 0.0
        %1188 = vmatpush1.msra.mxu0 0.0
        %1189 = vmatprep.subr.mxu0 0.0
        %1190 = vmatpush1.msra.mxu0 0.0
        %1191 = vmatprep.subr.mxu0 0.0
        %1192 = vmatpush1.msra.mxu0 0.0
        %1193 = vmatprep.subr.mxu0 0.0
        %1194 = vmatpush1.msra.mxu0 0.0
        %1195 = vmatprep.subr.mxu0 0.0
        %1196 = vmatpush1.msra.mxu0 0.0
        %1197 = vmatprep.subr.mxu0 0.0
        %1198 = vmatpush1.msra.mxu0 0.0
        %1199 = vmatprep.subr.mxu0 0.0
        %1200 = vmatpush1.msra.mxu0 0.0
        %1201 = vmatprep.subr.mxu0 0.0
        %1202 = vmatpush1.msra.mxu0 0.0
        %1203 = vmatprep.subr.mxu0 0.0
        %1204 = vmatpush1.msra.mxu0 0.0
        %1205 = vmatprep.subr.mxu0 0.0
        %1206 = vmatpush1.msra.mxu0 0.0
        %1207 = vmatprep.subr.mxu0 0.0
        %1208 = vmatpush1.msra.mxu0 0.0
        %1209 = vmatprep.subr.mxu0 0.0
        %1210 = vmatpush1.msra.mxu0 0.0
        %1211 = vmatprep.subr.mxu0 0.0
        %1212 = vmatpush1.msra.mxu0 0.0
        %1213 = vmatprep.subr.mxu0 0.0
        %1214 = vmatpush1.msra.mxu0 0.0
        %1215 = vmatprep.subr.mxu0 0.0
        %1216 = vmatpush1.msra.mxu0 0.0
        %1217 = vmatprep.subr.mxu0 0.0
        %1218 = vmatpush1.msra.mxu0 0.0
        %1219 = vmatprep.subr.mxu0 0.0
        %1220 = vmatpush1.msra.mxu0 0.0
        %1221 = vmatprep.subr.mxu0 0.0
        %1222 = vmatpush1.msra.mxu0 0.0
        %1223 = vmatprep.subr.mxu0 0.0
        %1224 = vmatpush1.msra.mxu0 0.0
        %1225 = vmatprep.subr.mxu0 0.0
        %1226 = vmatpush1.msra.mxu0 0.0
        %1227 = vmatprep.subr.mxu0 0.0
        %1228 = vmatpush1.msra.mxu0 0.0
        %1229 = vmatprep.subr.mxu0 0.0
        %1230 = vmatpush1.msra.mxu0 0.0
        %1231 = vmatprep.subr.mxu0 0.0
        %1232 = vmatpush1.msra.mxu0 0.0
        %1233 = vmatprep.mubr.f32.mxu0 0.0
        %1234 = vmatmul.mubr.f32.gmra.mrb[0].mxu0 %v945
        %v1235 = vpop.f32.mrb[0].mxu0
        %v1236 = vadd.f32 0.0, %v1235
        %v1237 = vpop.f32.mrb[0].mxu0
        %v1238 = vadd.f32 0.0, %v1237
        %1239 = vmatprep.mubr.f32.mxu0 0.0
        %1240 = vmatmul.mubr.f32.gmra.mrb[0].mxu0 %v948
        %v1241 = vpop.f32.mrb[0].mxu0
        %v1242 = vadd.f32 0.0, %v1241
        %v1243 = vpop.f32.mrb[0].mxu0
        %v1244 = vadd.f32 0.0, %v1243
        %1245 = vmatprep.mubr.f32.mxu0 0.0
        %1246 = vmatmul.mubr.f32.gmra.mrb[0].mxu0 %v951
        %v1247 = vpop.f32.mrb[0].mxu0
        %v1248 = vadd.f32 0.0, %v1247
        %v1249 = vpop.f32.mrb[0].mxu0
        %v1250 = vadd.f32 0.0, %v1249
        %1251 = vmatprep.mubr.f32.mxu0 0.0
        %1252 = vmatmul.mubr.f32.gmra.mrb[0].mxu0 %v954
        %v1253 = vpop.f32.mrb[0].mxu0
        %v1254 = vadd.f32 0.0, %v1253
        %v1255 = vpop.f32.mrb[0].mxu0
        %v1256 = vadd.f32 0.0, %v1255
        %1257 = vdwg.mxu0
        %1258 = vmatprep.subr.mxu0 0.0
        %1259 = vmatpush1.msra.mxu0 %v1147
        %1260 = vmatprep.subr.mxu0 0.0
        %1261 = vmatpush1.msra.mxu0 %v1150
        %1262 = vmatprep.subr.mxu0 0.0
        %1263 = vmatpush1.msra.mxu0 %v1153
        %1264 = vmatprep.subr.mxu0 0.0
        %1265 = vmatpush1.msra.mxu0 %v1156
        %1266 = vmatprep.subr.mxu0 0.0
        %1267 = vmatpush1.msra.mxu0 %v1159
        %1268 = vmatprep.subr.mxu0 0.0
        %1269 = vmatpush1.msra.mxu0 %v1162
        %1270 = vmatprep.subr.mxu0 0.0
        %1271 = vmatpush1.msra.mxu0 %v1165
        %1272 = vmatprep.subr.mxu0 0.0
        %1273 = vmatpush1.msra.mxu0 %v1168
        %1274 = vmatprep.subr.mxu0 0.0
        %1275 = vmatpush1.msra.mxu0 0.0
        %1276 = vmatprep.subr.mxu0 0.0
        %1277 = vmatpush1.msra.mxu0 0.0
        %1278 = vmatprep.subr.mxu0 0.0
        %1279 = vmatpush1.msra.mxu0 0.0
        %1280 = vmatprep.subr.mxu0 0.0
        %1281 = vmatpush1.msra.mxu0 0.0
        %1282 = vmatprep.subr.mxu0 0.0
        %1283 = vmatpush1.msra.mxu0 0.0
        %1284 = vmatprep.subr.mxu0 0.0
        %1285 = vmatpush1.msra.mxu0 0.0
        %1286 = vmatprep.subr.mxu0 0.0
        %1287 = vmatpush1.msra.mxu0 0.0
        %1288 = vmatprep.subr.mxu0 0.0
        %1289 = vmatpush1.msra.mxu0 0.0
        %1290 = vmatprep.subr.mxu0 0.0
        %1291 = vmatpush1.msra.mxu0 0.0
        %1292 = vmatprep.subr.mxu0 0.0
        %1293 = vmatpush1.msra.mxu0 0.0
        %1294 = vmatprep.subr.mxu0 0.0
        %1295 = vmatpush1.msra.mxu0 0.0
        %1296 = vmatprep.subr.mxu0 0.0
        %1297 = vmatpush1.msra.mxu0 0.0
        %1298 = vmatprep.subr.mxu0 0.0
        %1299 = vmatpush1.msra.mxu0 0.0
        %1300 = vmatprep.subr.mxu0 0.0
        %1301 = vmatpush1.msra.mxu0 0.0
        %1302 = vmatprep.subr.mxu0 0.0
        %1303 = vmatpush1.msra.mxu0 0.0
        %1304 = vmatprep.subr.mxu0 0.0
        %1305 = vmatpush1.msra.mxu0 0.0
        %1306 = vmatprep.subr.mxu0 0.0
        %1307 = vmatpush1.msra.mxu0 0.0
        %1308 = vmatprep.subr.mxu0 0.0
        %1309 = vmatpush1.msra.mxu0 0.0
        %1310 = vmatprep.subr.mxu0 0.0
        %1311 = vmatpush1.msra.mxu0 0.0
        %1312 = vmatprep.subr.mxu0 0.0
        %1313 = vmatpush1.msra.mxu0 0.0
        %1314 = vmatprep.subr.mxu0 0.0
        %1315 = vmatpush1.msra.mxu0 0.0
        %1316 = vmatprep.subr.mxu0 0.0
        %1317 = vmatpush1.msra.mxu0 0.0
        %1318 = vmatprep.subr.mxu0 0.0
        %1319 = vmatpush1.msra.mxu0 0.0
        %1320 = vmatprep.subr.mxu0 0.0
        %1321 = vmatpush1.msra.mxu0 0.0
        %1322 = vmatprep.mubr.f32.mxu0 0.0
        %1323 = vmatmul.mubr.f32.gmra.mrb[0].mxu0 %v945
        %v1324 = vpop.f32.mrb[0].mxu0
        %v1325 = vadd.f32 0.0, %v1324
        %v1326 = vpop.f32.mrb[0].mxu0
        %1327 = vmatprep.mubr.f32.mxu0 0.0
        %1328 = vmatmul.mubr.f32.gmra.mrb[0].mxu0 %v948
        %v1329 = vpop.f32.mrb[0].mxu0
        %v1330 = vadd.f32 0.0, %v1329
        %v1331 = vpop.f32.mrb[0].mxu0
        %1332 = vmatprep.mubr.f32.mxu0 0.0
        %1333 = vmatmul.mubr.f32.gmra.mrb[0].mxu0 %v951
        %v1334 = vpop.f32.mrb[0].mxu0
        %v1335 = vadd.f32 0.0, %v1334
        %v1336 = vpop.f32.mrb[0].mxu0
        %1337 = vmatprep.mubr.f32.mxu0 0.0
        %1338 = vmatmul.mubr.f32.gmra.mrb[0].mxu0 %v954
        %v1339 = vpop.f32.mrb[0].mxu0
        %v1340 = vadd.f32 0.0, %v1339
        %v1341 = vpop.f32.mrb[0].mxu0
        %1342 = vdwg.mxu0
        %1343 = vst [vmem:[#allocation2] sm:$0xff] %v1236
        %1344 = vst [vmem:[#allocation2 + $0x8] sm:$0xff] %v1238
        %1345 = vst [vmem:[#allocation2 + $0x10] sm:$0xff] %v1325
        %1346 = vst [vmem:[#allocation2 + $0x18] sm:$0xff] %v1242
        %1347 = vst [vmem:[#allocation2 + $0x20] sm:$0xff] %v1244
        %1348 = vst [vmem:[#allocation2 + $0x28] sm:$0xff] %v1330
        %1349 = vst [vmem:[#allocation2 + $0x30] sm:$0xff] %v1248
        %1350 = vst [vmem:[#allocation2 + $0x38] sm:$0xff] %v1250
        %1351 = vst [vmem:[#allocation2 + $0x40] sm:$0xff] %v1335
        %1352 = vst [vmem:[#allocation2 + $0x48] sm:$0xff] %v1254
        %1353 = vst [vmem:[#allocation2 + $0x50] sm:$0xff] %v1256
        %1354 = vst [vmem:[#allocation2 + $0x58] sm:$0xff] %v1340
        %v1355 = vld [vmem:[%s840] sm:$0x7]
        %v1356 = vlaneseq
        %vm1357 = vcmp.ge.s32.totalorder %v1356, 0
        %vm1358 = vcmp.lt.s32.totalorder %v1356, 384
        %vm1359 = vmand %vm1357, %vm1358
        %s1360 = scalar_lea.vmem [#allocation2], 96
        %1361 = vst.msk [vmem:[%s1360] ss:$8 sm:$0x7] %vm1359, %v1355
        %1362 = vst.msk [vmem:[%s1360] ss:$8 sm:$0x0] %vm1359, %v1355
        %v1363 = vld [vmem:[%s817] sm:$0xff]
        %v1364 = vld [vmem:[%s817 + $0x8] sm:$0xff]
        %v1365 = vld [vmem:[%s817 + $0x10] sm:$0xff]
        %v1366 = vld [vmem:[%s817 + $0x18] sm:$0xff]
        %v1367 = vld [vmem:[%s817 + $0x20] sm:$0xff]
        %v1368 = vld [vmem:[%s817 + $0x28] sm:$0xff]
        %v1369 = vld [vmem:[%s817 + $0x30] sm:$0xff]
        %v1370 = vld [vmem:[%s817 + $0x38] sm:$0xff]
        %v1371 = vld [vmem:[%s817 + $0x40] sm:$0xff]
        %v1372 = vld [vmem:[%s817 + $0x48] sm:$0xff]
        %v1373 = vld [vmem:[%s817 + $0x50] sm:$0xff]
        %v1374 = vld [vmem:[%s817 + $0x58] sm:$0xff]
        %v1375 = vld [vmem:[%s817 + $0x60] sm:$0xff]
        %v1376 = vld [vmem:[%s817 + $0x68] sm:$0xff]
        %v1377 = vld [vmem:[%s817 + $0x70] sm:$0xff]
        %v1378 = vld [vmem:[%s817 + $0x78] sm:$0xff]
        %v1379 = vld [vmem:[%s817 + $0x80] sm:$0xff]
        %v1380 = vld [vmem:[%s817 + $0x88] sm:$0xff]
        %v1381 = vld [vmem:[%s817 + $0x90] sm:$0xff]
        %v1382 = vld [vmem:[%s817 + $0x98] sm:$0xff]
        %v1383 = vld [vmem:[%s817 + $0xa0] sm:$0xff]
        %v1384 = vld [vmem:[%s817 + $0xa8] sm:$0xff]
        %v1385 = vld [vmem:[%s817 + $0xb0] sm:$0xff]
        %v1386 = vld [vmem:[%s817 + $0xb8] sm:$0xff]
        %v1387 = vld [vmem:[%s817 + $0xc0] sm:$0xff]
        %v1388 = vld [vmem:[%s817 + $0xc8] sm:$0xff]
        %v1389 = vld [vmem:[%s817 + $0xd0] sm:$0xff]
        %v1390 = vld [vmem:[%s817 + $0xd8] sm:$0xff]
        %v1391 = vld [vmem:[%s817 + $0xe0] sm:$0xff]
        %v1392 = vld [vmem:[%s817 + $0xe8] sm:$0xff]
        %v1393 = vld [vmem:[%s817 + $0xf0] sm:$0xff]
        %v1394 = vld [vmem:[%s817 + $0xf8] sm:$0xff]
        %v1395 = vld [vmem:[%s817 + $0x100] sm:$0xff]
        %v1396 = vld [vmem:[%s817 + $0x108] sm:$0xff]
        %v1397 = vld [vmem:[%s817 + $0x110] sm:$0xff]
        %v1398 = vld [vmem:[%s817 + $0x118] sm:$0xff]
        %v1399 = vld [vmem:[%s817 + $0x120] sm:$0xff]
        %v1400 = vld [vmem:[%s817 + $0x128] sm:$0xff]
        %v1401 = vld [vmem:[%s817 + $0x130] sm:$0xff]
        %v1402 = vld [vmem:[%s817 + $0x138] sm:$0xff]
        %v1403 = vld [vmem:[%s817 + $0x140] sm:$0xff]
        %v1404 = vld [vmem:[%s817 + $0x148] sm:$0xff]
        %v1405 = vld [vmem:[%s817 + $0x150] sm:$0xff]
        %v1406 = vld [vmem:[%s817 + $0x158] sm:$0xff]
        %v1407 = vld [vmem:[%s817 + $0x160] sm:$0xff]
        %v1408 = vld [vmem:[%s817 + $0x168] sm:$0xff]
        %v1409 = vld [vmem:[%s817 + $0x170] sm:$0xff]
        %v1410 = vld [vmem:[%s817 + $0x178] sm:$0xff]
        %v1411 = vld [vmem:[%s817 + $0x180] sm:$0xff]
        %v1412 = vld [vmem:[%s817 + $0x188] sm:$0xff]
        %v1413 = vld [vmem:[%s817 + $0x190] sm:$0xff]
        %v1414 = vld [vmem:[%s817 + $0x198] sm:$0xff]
        %v1415 = vld [vmem:[%s817 + $0x1a0] sm:$0xff]
        %v1416 = vld [vmem:[%s817 + $0x1a8] sm:$0xff]
        %v1417 = vld [vmem:[%s817 + $0x1b0] sm:$0xff]
        %v1418 = vld [vmem:[%s817 + $0x1b8] sm:$0xff]
        %v1419 = vld [vmem:[%s817 + $0x1c0] sm:$0xff]
        %v1420 = vld [vmem:[%s817 + $0x1c8] sm:$0xff]
        %v1421 = vld [vmem:[%s817 + $0x1d0] sm:$0xff]
        %v1422 = vld [vmem:[%s817 + $0x1d8] sm:$0xff]
        %v1423 = vld [vmem:[%s817 + $0x1e0] sm:$0xff]
        %v1424 = vld [vmem:[%s817 + $0x1e8] sm:$0xff]
        %v1425 = vld [vmem:[%s817 + $0x1f0] sm:$0xff]
        %v1426 = vld [vmem:[%s817 + $0x1f8] sm:$0xff]
        %v1427 = vld [vmem:[%s817 + $0x200] sm:$0xff]
        %v1428 = vld [vmem:[%s817 + $0x208] sm:$0xff]
        %v1429 = vld [vmem:[%s817 + $0x210] sm:$0xff]
        %v1430 = vld [vmem:[%s817 + $0x218] sm:$0xff]
        %v1431 = vld [vmem:[%s817 + $0x220] sm:$0xff]
        %v1432 = vld [vmem:[%s817 + $0x228] sm:$0xff]
        %v1433 = vld [vmem:[%s817 + $0x230] sm:$0xff]
        %v1434 = vld [vmem:[%s817 + $0x238] sm:$0xff]
        %v1435 = vld [vmem:[%s817 + $0x240] sm:$0xff]
        %v1436 = vld [vmem:[%s817 + $0x248] sm:$0xff]
        %v1437 = vld [vmem:[%s817 + $0x250] sm:$0xff]
        %v1438 = vld [vmem:[%s817 + $0x258] sm:$0xff]
        %v1439 = vld [vmem:[%s817 + $0x260] sm:$0xff]
        %v1440 = vld [vmem:[%s817 + $0x268] sm:$0xff]
        %v1441 = vld [vmem:[%s817 + $0x270] sm:$0xff]
        %v1442 = vld [vmem:[%s817 + $0x278] sm:$0xff]
        %v1443 = vld [vmem:[%s817 + $0x280] sm:$0xff]
        %v1444 = vld [vmem:[%s817 + $0x288] sm:$0xff]
        %v1445 = vld [vmem:[%s817 + $0x290] sm:$0xff]
        %v1446 = vld [vmem:[%s817 + $0x298] sm:$0xff]
        %v1447 = vld [vmem:[%s817 + $0x2a0] sm:$0xff]
        %v1448 = vld [vmem:[%s817 + $0x2a8] sm:$0xff]
        %v1449 = vld [vmem:[%s817 + $0x2b0] sm:$0xff]
        %v1450 = vld [vmem:[%s817 + $0x2b8] sm:$0xff]
        %v1451 = vld [vmem:[%s817 + $0x2c0] sm:$0xff]
        %v1452 = vld [vmem:[%s817 + $0x2c8] sm:$0xff]
        %v1453 = vld [vmem:[%s817 + $0x2d0] sm:$0xff]
        %v1454 = vld [vmem:[%s817 + $0x2d8] sm:$0xff]
        %v1455 = vld [vmem:[%s817 + $0x2e0] sm:$0xff]
        %v1456 = vld [vmem:[%s817 + $0x2e8] sm:$0xff]
        %v1457 = vld [vmem:[%s817 + $0x2f0] sm:$0xff]
        %v1458 = vld [vmem:[%s817 + $0x2f8] sm:$0xff]
        %v1459 = vld [vmem:[%s817 + $0x300] sm:$0xff]
        %v1460 = vld [vmem:[%s817 + $0x308] sm:$0xff]
        %v1461 = vld [vmem:[%s817 + $0x310] sm:$0xff]
        %v1462 = vld [vmem:[%s817 + $0x318] sm:$0xff]
        %v1463 = vld [vmem:[%s817 + $0x320] sm:$0xff]
        %v1464 = vld [vmem:[%s817 + $0x328] sm:$0xff]
        %v1465 = vld [vmem:[%s817 + $0x330] sm:$0xff]
        %v1466 = vld [vmem:[%s817 + $0x338] sm:$0xff]
        %v1467 = vld [vmem:[%s817 + $0x340] sm:$0xff]
        %v1468 = vld [vmem:[%s817 + $0x348] sm:$0xff]
        %v1469 = vld [vmem:[%s817 + $0x350] sm:$0xff]
        %v1470 = vld [vmem:[%s817 + $0x358] sm:$0xff]
        %v1471 = vld [vmem:[%s817 + $0x360] sm:$0xff]
        %v1472 = vld [vmem:[%s817 + $0x368] sm:$0xff]
        %v1473 = vld [vmem:[%s817 + $0x370] sm:$0xff]
        %v1474 = vld [vmem:[%s817 + $0x378] sm:$0xff]
        %v1475 = vld [vmem:[%s817 + $0x380] sm:$0xff]
        %v1476 = vld [vmem:[%s817 + $0x388] sm:$0xff]
        %v1477 = vld [vmem:[%s817 + $0x390] sm:$0xff]
        %v1478 = vld [vmem:[%s817 + $0x398] sm:$0xff]
        %v1479 = vld [vmem:[%s817 + $0x3a0] sm:$0xff]
        %v1480 = vld [vmem:[%s817 + $0x3a8] sm:$0xff]
        %v1481 = vld [vmem:[%s817 + $0x3b0] sm:$0xff]
        %v1482 = vld [vmem:[%s817 + $0x3b8] sm:$0xff]
        %v1483 = vld [vmem:[%s817 + $0x3c0] sm:$0xff]
        %v1484 = vld [vmem:[%s817 + $0x3c8] sm:$0xff]
        %v1485 = vld [vmem:[%s817 + $0x3d0] sm:$0xff]
        %v1486 = vld [vmem:[%s817 + $0x3d8] sm:$0xff]
        %v1487 = vld [vmem:[%s817 + $0x3e0] sm:$0xff]
        %v1488 = vld [vmem:[%s817 + $0x3e8] sm:$0xff]
        %v1489 = vld [vmem:[%s817 + $0x3f0] sm:$0xff]
        %v1490 = vld [vmem:[%s817 + $0x3f8] sm:$0xff]
        %v1491 = vld [vmem:[#allocation2] sm:$0xff]
        %v1492 = vld [vmem:[#allocation2 + $0x8] sm:$0xff]
        %v1493 = vld [vmem:[#allocation2 + $0x10] sm:$0xff]
        %v1494 = vld [vmem:[#allocation2 + $0x18] sm:$0xff]
        %v1495 = vld [vmem:[#allocation2 + $0x20] sm:$0xff]
        %v1496 = vld [vmem:[#allocation2 + $0x28] sm:$0xff]
        %v1497 = vld [vmem:[#allocation2 + $0x30] sm:$0xff]
        %v1498 = vld [vmem:[#allocation2 + $0x38] sm:$0xff]
        %v1499 = vld [vmem:[#allocation2 + $0x40] sm:$0xff]
        %v1500 = vld [vmem:[#allocation2 + $0x48] sm:$0xff]
        %v1501 = vld [vmem:[#allocation2 + $0x50] sm:$0xff]
        %v1502 = vld [vmem:[#allocation2 + $0x58] sm:$0xff]
        %v1503 = vld [vmem:[#allocation2 + $0x60] sm:$0xff]
        %v1504 = vld [vmem:[#allocation2 + $0x68] sm:$0xff]
        %v1505 = vld [vmem:[#allocation2 + $0x70] sm:$0xff]
        %vm1506 = vcmask 326656
        %v1508 = vsel %vm1506, %v1363, 0
        %v1511 = vsel %vm1506, %v1364, 0
        %v1514 = vsel %vm1506, %v1365, 0
        %v1517 = vsel %vm1506, %v1366, 0
        %v1520 = vsel %vm1506, %v1367, 0
        %v1523 = vsel %vm1506, %v1368, 0
        %v1526 = vsel %vm1506, %v1369, 0
        %v1529 = vsel %vm1506, %v1370, 0
        %v1532 = vsel %vm1506, %v1371, 0
        %v1535 = vsel %vm1506, %v1372, 0
        %v1538 = vsel %vm1506, %v1373, 0
        %v1541 = vsel %vm1506, %v1374, 0
        %v1544 = vsel %vm1506, %v1375, 0
        %v1547 = vsel %vm1506, %v1376, 0
        %v1550 = vsel %vm1506, %v1377, 0
        %v1553 = vsel %vm1506, %v1378, 0
        %v1556 = vsel %vm1506, %v1379, 0
        %v1559 = vsel %vm1506, %v1380, 0
        %v1562 = vsel %vm1506, %v1381, 0
        %v1565 = vsel %vm1506, %v1382, 0
        %v1568 = vsel %vm1506, %v1383, 0
        %v1571 = vsel %vm1506, %v1384, 0
        %v1574 = vsel %vm1506, %v1385, 0
        %v1577 = vsel %vm1506, %v1386, 0
        %v1580 = vsel %vm1506, %v1387, 0
        %v1583 = vsel %vm1506, %v1388, 0
        %v1586 = vsel %vm1506, %v1389, 0
        %v1589 = vsel %vm1506, %v1390, 0
        %v1592 = vsel %vm1506, %v1391, 0
        %v1595 = vsel %vm1506, %v1392, 0
        %v1598 = vsel %vm1506, %v1393, 0
        %v1601 = vsel %vm1506, %v1394, 0
        %v1604 = vsel %vm1506, %v1395, 0
        %v1607 = vsel %vm1506, %v1396, 0
        %v1610 = vsel %vm1506, %v1397, 0
        %v1613 = vsel %vm1506, %v1398, 0
        %v1616 = vsel %vm1506, %v1399, 0
        %v1619 = vsel %vm1506, %v1400, 0
        %v1622 = vsel %vm1506, %v1401, 0
        %v1625 = vsel %vm1506, %v1402, 0
        %v1628 = vsel %vm1506, %v1403, 0
        %v1631 = vsel %vm1506, %v1404, 0
        %v1634 = vsel %vm1506, %v1405, 0
        %v1637 = vsel %vm1506, %v1406, 0
        %v1640 = vsel %vm1506, %v1407, 0
        %v1643 = vsel %vm1506, %v1408, 0
        %v1646 = vsel %vm1506, %v1409, 0
        %v1649 = vsel %vm1506, %v1410, 0
        %v1652 = vsel %vm1506, %v1411, 0
        %v1655 = vsel %vm1506, %v1412, 0
        %v1658 = vsel %vm1506, %v1413, 0
        %v1661 = vsel %vm1506, %v1414, 0
        %v1664 = vsel %vm1506, %v1415, 0
        %v1667 = vsel %vm1506, %v1416, 0
        %v1670 = vsel %vm1506, %v1417, 0
        %v1673 = vsel %vm1506, %v1418, 0
        %v1676 = vsel %vm1506, %v1419, 0
        %v1679 = vsel %vm1506, %v1420, 0
        %v1682 = vsel %vm1506, %v1421, 0
        %v1685 = vsel %vm1506, %v1422, 0
        %v1688 = vsel %vm1506, %v1423, 0
        %v1691 = vsel %vm1506, %v1424, 0
        %v1694 = vsel %vm1506, %v1425, 0
        %v1697 = vsel %vm1506, %v1426, 0
        %v1700 = vsel %vm1506, %v1427, 0
        %v1703 = vsel %vm1506, %v1428, 0
        %v1706 = vsel %vm1506, %v1429, 0
        %v1709 = vsel %vm1506, %v1430, 0
        %v1712 = vsel %vm1506, %v1431, 0
        %v1715 = vsel %vm1506, %v1432, 0
        %v1718 = vsel %vm1506, %v1433, 0
        %v1721 = vsel %vm1506, %v1434, 0
        %v1724 = vsel %vm1506, %v1435, 0
        %v1727 = vsel %vm1506, %v1436, 0
        %v1730 = vsel %vm1506, %v1437, 0
        %v1733 = vsel %vm1506, %v1438, 0
        %v1736 = vsel %vm1506, %v1439, 0
        %v1739 = vsel %vm1506, %v1440, 0
        %v1742 = vsel %vm1506, %v1441, 0
        %v1745 = vsel %vm1506, %v1442, 0
        %v1748 = vsel %vm1506, %v1443, 0
        %v1751 = vsel %vm1506, %v1444, 0
        %v1754 = vsel %vm1506, %v1445, 0
        %v1757 = vsel %vm1506, %v1446, 0
        %v1760 = vsel %vm1506, %v1447, 0
        %v1763 = vsel %vm1506, %v1448, 0
        %v1766 = vsel %vm1506, %v1449, 0
        %v1769 = vsel %vm1506, %v1450, 0
        %v1772 = vsel %vm1506, %v1451, 0
        %v1775 = vsel %vm1506, %v1452, 0
        %v1778 = vsel %vm1506, %v1453, 0
        %v1781 = vsel %vm1506, %v1454, 0
        %v1784 = vsel %vm1506, %v1455, 0
        %v1787 = vsel %vm1506, %v1456, 0
        %v1790 = vsel %vm1506, %v1457, 0
        %v1793 = vsel %vm1506, %v1458, 0
        %v1796 = vsel %vm1506, %v1459, 0
        %v1799 = vsel %vm1506, %v1460, 0
        %v1802 = vsel %vm1506, %v1461, 0
        %v1805 = vsel %vm1506, %v1462, 0
        %v1808 = vsel %vm1506, %v1463, 0
        %v1811 = vsel %vm1506, %v1464, 0
        %v1814 = vsel %vm1506, %v1465, 0
        %v1817 = vsel %vm1506, %v1466, 0
        %v1820 = vsel %vm1506, %v1467, 0
        %v1823 = vsel %vm1506, %v1468, 0
        %v1826 = vsel %vm1506, %v1469, 0
        %v1829 = vsel %vm1506, %v1470, 0
        %v1832 = vsel %vm1506, %v1471, 0
        %v1835 = vsel %vm1506, %v1472, 0
        %v1838 = vsel %vm1506, %v1473, 0
        %v1841 = vsel %vm1506, %v1474, 0
        %v1844 = vsel %vm1506, %v1475, 0
        %v1847 = vsel %vm1506, %v1476, 0
        %v1850 = vsel %vm1506, %v1477, 0
        %v1853 = vsel %vm1506, %v1478, 0
        %v1856 = vsel %vm1506, %v1479, 0
        %v1859 = vsel %vm1506, %v1480, 0
        %v1862 = vsel %vm1506, %v1481, 0
        %v1865 = vsel %vm1506, %v1482, 0
        %v1868 = vsel %vm1506, %v1483, 0
        %v1871 = vsel %vm1506, %v1484, 0
        %v1874 = vsel %vm1506, %v1485, 0
        %v1877 = vsel %vm1506, %v1486, 0
        %v1880 = vsel %vm1506, %v1487, 0
        %v1883 = vsel %vm1506, %v1488, 0
        %v1886 = vsel %vm1506, %v1489, 0
        %v1889 = vsel %vm1506, %v1490, 0
        %1891 = vmatprep.subr.mxu0 %v1492
        %1892 = vmatpush1.msra.mxu0 %v1491
        %1893 = vmatprep.subr.mxu0 %v1495
        %1894 = vmatpush1.msra.mxu0 %v1494
        %1895 = vmatprep.subr.mxu0 %v1498
        %1896 = vmatpush1.msra.mxu0 %v1497
        %1897 = vmatprep.subr.mxu0 %v1501
        %1898 = vmatpush1.msra.mxu0 %v1500
        %1899 = vmatprep.subr.mxu0 %v1504
        %1900 = vmatpush1.msra.mxu0 %v1503
        %1901 = vmatprep.subr.mxu0 0.0
        %1902 = vmatpush1.msra.mxu0 0.0
        %1903 = vmatprep.subr.mxu0 0.0
        %1904 = vmatpush1.msra.mxu0 0.0
        %1905 = vmatprep.subr.mxu0 0.0
        %1906 = vmatpush1.msra.mxu0 0.0
        %1907 = vmatprep.subr.mxu0 0.0
        %1908 = vmatpush1.msra.mxu0 0.0
        %1909 = vmatprep.subr.mxu0 0.0
        %1910 = vmatpush1.msra.mxu0 0.0
        %1911 = vmatprep.subr.mxu0 0.0
        %1912 = vmatpush1.msra.mxu0 0.0
        %1913 = vmatprep.subr.mxu0 0.0
        %1914 = vmatpush1.msra.mxu0 0.0
        %1915 = vmatprep.subr.mxu0 0.0
        %1916 = vmatpush1.msra.mxu0 0.0
        %1917 = vmatprep.subr.mxu0 0.0
        %1918 = vmatpush1.msra.mxu0 0.0
        %1919 = vmatprep.subr.mxu0 0.0
        %1920 = vmatpush1.msra.mxu0 0.0
        %1921 = vmatprep.subr.mxu0 0.0
        %1922 = vmatpush1.msra.mxu0 0.0
        %1923 = vmatprep.subr.mxu0 0.0
        %1924 = vmatpush1.msra.mxu0 0.0
        %1925 = vmatprep.subr.mxu0 0.0
        %1926 = vmatpush1.msra.mxu0 0.0
        %1927 = vmatprep.subr.mxu0 0.0
        %1928 = vmatpush1.msra.mxu0 0.0
        %1929 = vmatprep.subr.mxu0 0.0
        %1930 = vmatpush1.msra.mxu0 0.0
        %1931 = vmatprep.subr.mxu0 0.0
        %1932 = vmatpush1.msra.mxu0 0.0
        %1933 = vmatprep.subr.mxu0 0.0
        %1934 = vmatpush1.msra.mxu0 0.0
        %1935 = vmatprep.subr.mxu0 0.0
        %1936 = vmatpush1.msra.mxu0 0.0
        %1937 = vmatprep.subr.mxu0 0.0
        %1938 = vmatpush1.msra.mxu0 0.0
        %1939 = vmatprep.subr.mxu0 0.0
        %1940 = vmatpush1.msra.mxu0 0.0
        %1941 = vmatprep.subr.mxu0 0.0
        %1942 = vmatpush1.msra.mxu0 0.0
        %1943 = vmatprep.subr.mxu0 0.0
        %1944 = vmatpush1.msra.mxu0 0.0
        %1945 = vmatprep.subr.mxu0 0.0
        %1946 = vmatpush1.msra.mxu0 0.0
        %1947 = vmatprep.subr.mxu0 0.0
        %1948 = vmatpush1.msra.mxu0 0.0
        %1949 = vmatprep.subr.mxu0 0.0
        %1950 = vmatpush1.msra.mxu0 0.0
        %1951 = vmatprep.subr.mxu0 0.0
        %1952 = vmatpush1.msra.mxu0 0.0
        %1953 = vmatprep.subr.mxu0 0.0
        %1954 = vmatpush1.msra.mxu0 0.0
        %1955 = vmatprep.mubr.f32.mxu0 0.0
        %1956 = vmatmul.mubr.f32.gmra.mrb[0].mxu0 %v1508
        %v1957 = vpop.f32.mrb[0].mxu0
        %v1958 = vadd.f32 0.0, %v1957
        %v1959 = vpop.f32.mrb[0].mxu0
        %v1960 = vadd.f32 0.0, %v1959
        %1961 = vmatprep.mubr.f32.mxu0 0.0
        %1962 = vmatmul.mubr.f32.gmra.mrb[0].mxu0 %v1511
        %v1963 = vpop.f32.mrb[0].mxu0
        %v1964 = vadd.f32 0.0, %v1963
        %v1965 = vpop.f32.mrb[0].mxu0
        %v1966 = vadd.f32 0.0, %v1965
        %1967 = vmatprep.mubr.f32.mxu0 0.0
        %1968 = vmatmul.mubr.f32.gmra.mrb[0].mxu0 %v1514
        %v1969 = vpop.f32.mrb[0].mxu0
        %v1970 = vadd.f32 0.0, %v1969
        %v1971 = vpop.f32.mrb[0].mxu0
        %v1972 = vadd.f32 0.0, %v1971
        %1973 = vmatprep.mubr.f32.mxu0 0.0
        %1974 = vmatmul.mubr.f32.gmra.mrb[0].mxu0 %v1517
        %v1975 = vpop.f32.mrb[0].mxu0
        %v1976 = vadd.f32 0.0, %v1975
        %v1977 = vpop.f32.mrb[0].mxu0
        %v1978 = vadd.f32 0.0, %v1977
        %1979 = vmatprep.mubr.f32.mxu0 0.0
        %1980 = vmatmul.mubr.f32.gmra.mrb[0].mxu0 %v1520
        %v1981 = vpop.f32.mrb[0].mxu0
        %v1982 = vadd.f32 0.0, %v1981
        %v1983 = vpop.f32.mrb[0].mxu0
        %v1984 = vadd.f32 0.0, %v1983
        %1985 = vmatprep.mubr.f32.mxu0 0.0
        %1986 = vmatmul.mubr.f32.gmra.mrb[0].mxu0 %v1523
        %v1987 = vpop.f32.mrb[0].mxu0
        %v1988 = vadd.f32 0.0, %v1987
        %v1989 = vpop.f32.mrb[0].mxu0
        %v1990 = vadd.f32 0.0, %v1989
        %1991 = vmatprep.mubr.f32.mxu0 0.0
        %1992 = vmatmul.mubr.f32.gmra.mrb[0].mxu0 %v1526
        %v1993 = vpop.f32.mrb[0].mxu0
        %v1994 = vadd.f32 0.0, %v1993
        %v1995 = vpop.f32.mrb[0].mxu0
        %v1996 = vadd.f32 0.0, %v1995
        %1997 = vmatprep.mubr.f32.mxu0 0.0
        %1998 = vmatmul.mubr.f32.gmra.mrb[0].mxu0 %v1529
        %v1999 = vpop.f32.mrb[0].mxu0
        %v2000 = vadd.f32 0.0, %v1999
        %v2001 = vpop.f32.mrb[0].mxu0
        %v2002 = vadd.f32 0.0, %v2001
        %2003 = vmatprep.mubr.f32.mxu0 0.0
        %2004 = vmatmul.mubr.f32.gmra.mrb[0].mxu0 %v1532
        %v2005 = vpop.f32.mrb[0].mxu0
        %v2006 = vadd.f32 0.0, %v2005
        %v2007 = vpop.f32.mrb[0].mxu0
        %v2008 = vadd.f32 0.0, %v2007
        %2009 = vmatprep.mubr.f32.mxu0 0.0
        %2010 = vmatmul.mubr.f32.gmra.mrb[0].mxu0 %v1535
        %v2011 = vpop.f32.mrb[0].mxu0
        %v2012 = vadd.f32 0.0, %v2011
        %v2013 = vpop.f32.mrb[0].mxu0
        %v2014 = vadd.f32 0.0, %v2013
        %2015 = vmatprep.mubr.f32.mxu0 0.0
        %2016 = vmatmul.mubr.f32.gmra.mrb[0].mxu0 %v1538
        %v2017 = vpop.f32.mrb[0].mxu0
        %v2018 = vadd.f32 0.0, %v2017
        %v2019 = vpop.f32.mrb[0].mxu0
        %v2020 = vadd.f32 0.0, %v2019
        %2021 = vmatprep.mubr.f32.mxu0 0.0
        %2022 = vmatmul.mubr.f32.gmra.mrb[0].mxu0 %v1541
        %v2023 = vpop.f32.mrb[0].mxu0
        %v2024 = vadd.f32 0.0, %v2023
        %v2025 = vpop.f32.mrb[0].mxu0
        %v2026 = vadd.f32 0.0, %v2025
        %2027 = vmatprep.mubr.f32.mxu0 0.0
        %2028 = vmatmul.mubr.f32.gmra.mrb[0].mxu0 %v1544
        %v2029 = vpop.f32.mrb[0].mxu0
        %v2030 = vadd.f32 0.0, %v2029
        %v2031 = vpop.f32.mrb[0].mxu0
        %v2032 = vadd.f32 0.0, %v2031
        %2033 = vmatprep.mubr.f32.mxu0 0.0
        %2034 = vmatmul.mubr.f32.gmra.mrb[0].mxu0 %v1547
        %v2035 = vpop.f32.mrb[0].mxu0
        %v2036 = vadd.f32 0.0, %v2035
        %v2037 = vpop.f32.mrb[0].mxu0
        %v2038 = vadd.f32 0.0, %v2037
        %2039 = vmatprep.mubr.f32.mxu0 0.0
        %2040 = vmatmul.mubr.f32.gmra.mrb[0].mxu0 %v1550
        %v2041 = vpop.f32.mrb[0].mxu0
        %v2042 = vadd.f32 0.0, %v2041
        %v2043 = vpop.f32.mrb[0].mxu0
        %v2044 = vadd.f32 0.0, %v2043
        %2045 = vmatprep.mubr.f32.mxu0 0.0
        %2046 = vmatmul.mubr.f32.gmra.mrb[0].mxu0 %v1553
        %v2047 = vpop.f32.mrb[0].mxu0
        %v2048 = vadd.f32 0.0, %v2047
        %v2049 = vpop.f32.mrb[0].mxu0
        %v2050 = vadd.f32 0.0, %v2049
        %2051 = vmatprep.mubr.f32.mxu0 0.0
        %2052 = vmatmul.mubr.f32.gmra.mrb[0].mxu0 %v1556
        %v2053 = vpop.f32.mrb[0].mxu0
        %v2054 = vadd.f32 0.0, %v2053
        %v2055 = vpop.f32.mrb[0].mxu0
        %v2056 = vadd.f32 0.0, %v2055
        %2057 = vmatprep.mubr.f32.mxu0 0.0
        %2058 = vmatmul.mubr.f32.gmra.mrb[0].mxu0 %v1559
        %v2059 = vpop.f32.mrb[0].mxu0
        %v2060 = vadd.f32 0.0, %v2059
        %v2061 = vpop.f32.mrb[0].mxu0
        %v2062 = vadd.f32 0.0, %v2061
        %2063 = vmatprep.mubr.f32.mxu0 0.0
        %2064 = vmatmul.mubr.f32.gmra.mrb[0].mxu0 %v1562
        %v2065 = vpop.f32.mrb[0].mxu0
        %v2066 = vadd.f32 0.0, %v2065
        %v2067 = vpop.f32.mrb[0].mxu0
        %v2068 = vadd.f32 0.0, %v2067
        %2069 = vmatprep.mubr.f32.mxu0 0.0
        %2070 = vmatmul.mubr.f32.gmra.mrb[0].mxu0 %v1565
        %v2071 = vpop.f32.mrb[0].mxu0
        %v2072 = vadd.f32 0.0, %v2071
        %v2073 = vpop.f32.mrb[0].mxu0
        %v2074 = vadd.f32 0.0, %v2073
        %2075 = vmatprep.mubr.f32.mxu0 0.0
        %2076 = vmatmul.mubr.f32.gmra.mrb[0].mxu0 %v1568
        %v2077 = vpop.f32.mrb[0].mxu0
        %v2078 = vadd.f32 0.0, %v2077
        %v2079 = vpop.f32.mrb[0].mxu0
        %v2080 = vadd.f32 0.0, %v2079
        %2081 = vmatprep.mubr.f32.mxu0 0.0
        %2082 = vmatmul.mubr.f32.gmra.mrb[0].mxu0 %v1571
        %v2083 = vpop.f32.mrb[0].mxu0
        %v2084 = vadd.f32 0.0, %v2083
        %v2085 = vpop.f32.mrb[0].mxu0
        %v2086 = vadd.f32 0.0, %v2085
        %2087 = vmatprep.mubr.f32.mxu0 0.0
        %2088 = vmatmul.mubr.f32.gmra.mrb[0].mxu0 %v1574
        %v2089 = vpop.f32.mrb[0].mxu0
        %v2090 = vadd.f32 0.0, %v2089
        %v2091 = vpop.f32.mrb[0].mxu0
        %v2092 = vadd.f32 0.0, %v2091
        %2093 = vmatprep.mubr.f32.mxu0 0.0
        %2094 = vmatmul.mubr.f32.gmra.mrb[0].mxu0 %v1577
        %v2095 = vpop.f32.mrb[0].mxu0
        %v2096 = vadd.f32 0.0, %v2095
        %v2097 = vpop.f32.mrb[0].mxu0
        %v2098 = vadd.f32 0.0, %v2097
        %2099 = vmatprep.mubr.f32.mxu0 0.0
        %2100 = vmatmul.mubr.f32.gmra.mrb[0].mxu0 %v1580
        %v2101 = vpop.f32.mrb[0].mxu0
        %v2102 = vadd.f32 0.0, %v2101
        %v2103 = vpop.f32.mrb[0].mxu0
        %v2104 = vadd.f32 0.0, %v2103
        %2105 = vmatprep.mubr.f32.mxu0 0.0
        %2106 = vmatmul.mubr.f32.gmra.mrb[0].mxu0 %v1583
        %v2107 = vpop.f32.mrb[0].mxu0
        %v2108 = vadd.f32 0.0, %v2107
        %v2109 = vpop.f32.mrb[0].mxu0
        %v2110 = vadd.f32 0.0, %v2109
        %2111 = vmatprep.mubr.f32.mxu0 0.0
        %2112 = vmatmul.mubr.f32.gmra.mrb[0].mxu0 %v1586
        %v2113 = vpop.f32.mrb[0].mxu0
        %v2114 = vadd.f32 0.0, %v2113
        %v2115 = vpop.f32.mrb[0].mxu0
        %v2116 = vadd.f32 0.0, %v2115
        %2117 = vmatprep.mubr.f32.mxu0 0.0
        %2118 = vmatmul.mubr.f32.gmra.mrb[0].mxu0 %v1589
        %v2119 = vpop.f32.mrb[0].mxu0
        %v2120 = vadd.f32 0.0, %v2119
        %v2121 = vpop.f32.mrb[0].mxu0
        %v2122 = vadd.f32 0.0, %v2121
        %2123 = vmatprep.mubr.f32.mxu0 0.0
        %2124 = vmatmul.mubr.f32.gmra.mrb[0].mxu0 %v1592
        %v2125 = vpop.f32.mrb[0].mxu0
        %v2126 = vadd.f32 0.0, %v2125
        %v2127 = vpop.f32.mrb[0].mxu0
        %v2128 = vadd.f32 0.0, %v2127
        %2129 = vmatprep.mubr.f32.mxu0 0.0
        %2130 = vmatmul.mubr.f32.gmra.mrb[0].mxu0 %v1595
        %v2131 = vpop.f32.mrb[0].mxu0
        %v2132 = vadd.f32 0.0, %v2131
        %v2133 = vpop.f32.mrb[0].mxu0
        %v2134 = vadd.f32 0.0, %v2133
        %2135 = vmatprep.mubr.f32.mxu0 0.0
        %2136 = vmatmul.mubr.f32.gmra.mrb[0].mxu0 %v1598
        %v2137 = vpop.f32.mrb[0].mxu0
        %v2138 = vadd.f32 0.0, %v2137
        %v2139 = vpop.f32.mrb[0].mxu0
        %v2140 = vadd.f32 0.0, %v2139
        %2141 = vmatprep.mubr.f32.mxu0 0.0
        %2142 = vmatmul.mubr.f32.gmra.mrb[0].mxu0 %v1601
        %v2143 = vpop.f32.mrb[0].mxu0
        %v2144 = vadd.f32 0.0, %v2143
        %v2145 = vpop.f32.mrb[0].mxu0
        %v2146 = vadd.f32 0.0, %v2145
        %2147 = vmatprep.mubr.f32.mxu0 0.0
        %2148 = vmatmul.mubr.f32.gmra.mrb[0].mxu0 %v1604
        %v2149 = vpop.f32.mrb[0].mxu0
        %v2150 = vadd.f32 0.0, %v2149
        %v2151 = vpop.f32.mrb[0].mxu0
        %v2152 = vadd.f32 0.0, %v2151
        %2153 = vmatprep.mubr.f32.mxu0 0.0
        %2154 = vmatmul.mubr.f32.gmra.mrb[0].mxu0 %v1607
        %v2155 = vpop.f32.mrb[0].mxu0
        %v2156 = vadd.f32 0.0, %v2155
        %v2157 = vpop.f32.mrb[0].mxu0
        %v2158 = vadd.f32 0.0, %v2157
        %2159 = vmatprep.mubr.f32.mxu0 0.0
        %2160 = vmatmul.mubr.f32.gmra.mrb[0].mxu0 %v1610
        %v2161 = vpop.f32.mrb[0].mxu0
        %v2162 = vadd.f32 0.0, %v2161
        %v2163 = vpop.f32.mrb[0].mxu0
        %v2164 = vadd.f32 0.0, %v2163
        %2165 = vmatprep.mubr.f32.mxu0 0.0
        %2166 = vmatmul.mubr.f32.gmra.mrb[0].mxu0 %v1613
        %v2167 = vpop.f32.mrb[0].mxu0
        %v2168 = vadd.f32 0.0, %v2167
        %v2169 = vpop.f32.mrb[0].mxu0
        %v2170 = vadd.f32 0.0, %v2169
        %2171 = vmatprep.mubr.f32.mxu0 0.0
        %2172 = vmatmul.mubr.f32.gmra.mrb[0].mxu0 %v1616
        %v2173 = vpop.f32.mrb[0].mxu0
        %v2174 = vadd.f32 0.0, %v2173
        %v2175 = vpop.f32.mrb[0].mxu0
        %v2176 = vadd.f32 0.0, %v2175
        %2177 = vmatprep.mubr.f32.mxu0 0.0
        %2178 = vmatmul.mubr.f32.gmra.mrb[0].mxu0 %v1619
        %v2179 = vpop.f32.mrb[0].mxu0
        %v2180 = vadd.f32 0.0, %v2179
        %v2181 = vpop.f32.mrb[0].mxu0
        %v2182 = vadd.f32 0.0, %v2181
        %2183 = vmatprep.mubr.f32.mxu0 0.0
        %2184 = vmatmul.mubr.f32.gmra.mrb[0].mxu0 %v1622
        %v2185 = vpop.f32.mrb[0].mxu0
        %v2186 = vadd.f32 0.0, %v2185
        %v2187 = vpop.f32.mrb[0].mxu0
        %v2188 = vadd.f32 0.0, %v2187
        %2189 = vmatprep.mubr.f32.mxu0 0.0
        %2190 = vmatmul.mubr.f32.gmra.mrb[0].mxu0 %v1625
        %v2191 = vpop.f32.mrb[0].mxu0
        %v2192 = vadd.f32 0.0, %v2191
        %v2193 = vpop.f32.mrb[0].mxu0
        %v2194 = vadd.f32 0.0, %v2193
        %2195 = vmatprep.mubr.f32.mxu0 0.0
        %2196 = vmatmul.mubr.f32.gmra.mrb[0].mxu0 %v1628
        %v2197 = vpop.f32.mrb[0].mxu0
        %v2198 = vadd.f32 0.0, %v2197
        %v2199 = vpop.f32.mrb[0].mxu0
        %v2200 = vadd.f32 0.0, %v2199
        %2201 = vmatprep.mubr.f32.mxu0 0.0
        %2202 = vmatmul.mubr.f32.gmra.mrb[0].mxu0 %v1631
        %v2203 = vpop.f32.mrb[0].mxu0
        %v2204 = vadd.f32 0.0, %v2203
        %v2205 = vpop.f32.mrb[0].mxu0
        %v2206 = vadd.f32 0.0, %v2205
        %2207 = vmatprep.mubr.f32.mxu0 0.0
        %2208 = vmatmul.mubr.f32.gmra.mrb[0].mxu0 %v1634
        %v2209 = vpop.f32.mrb[0].mxu0
        %v2210 = vadd.f32 0.0, %v2209
        %v2211 = vpop.f32.mrb[0].mxu0
        %v2212 = vadd.f32 0.0, %v2211
        %2213 = vmatprep.mubr.f32.mxu0 0.0
        %2214 = vmatmul.mubr.f32.gmra.mrb[0].mxu0 %v1637
        %v2215 = vpop.f32.mrb[0].mxu0
        %v2216 = vadd.f32 0.0, %v2215
        %v2217 = vpop.f32.mrb[0].mxu0
        %v2218 = vadd.f32 0.0, %v2217
        %2219 = vmatprep.mubr.f32.mxu0 0.0
        %2220 = vmatmul.mubr.f32.gmra.mrb[0].mxu0 %v1640
        %v2221 = vpop.f32.mrb[0].mxu0
        %v2222 = vadd.f32 0.0, %v2221
        %v2223 = vpop.f32.mrb[0].mxu0
        %v2224 = vadd.f32 0.0, %v2223
        %2225 = vmatprep.mubr.f32.mxu0 0.0
        %2226 = vmatmul.mubr.f32.gmra.mrb[0].mxu0 %v1643
        %v2227 = vpop.f32.mrb[0].mxu0
        %v2228 = vadd.f32 0.0, %v2227
        %v2229 = vpop.f32.mrb[0].mxu0
        %v2230 = vadd.f32 0.0, %v2229
        %2231 = vmatprep.mubr.f32.mxu0 0.0
        %2232 = vmatmul.mubr.f32.gmra.mrb[0].mxu0 %v1646
        %v2233 = vpop.f32.mrb[0].mxu0
        %v2234 = vadd.f32 0.0, %v2233
        %v2235 = vpop.f32.mrb[0].mxu0
        %v2236 = vadd.f32 0.0, %v2235
        %2237 = vmatprep.mubr.f32.mxu0 0.0
        %2238 = vmatmul.mubr.f32.gmra.mrb[0].mxu0 %v1649
        %v2239 = vpop.f32.mrb[0].mxu0
        %v2240 = vadd.f32 0.0, %v2239
        %v2241 = vpop.f32.mrb[0].mxu0
        %v2242 = vadd.f32 0.0, %v2241
        %2243 = vmatprep.mubr.f32.mxu0 0.0
        %2244 = vmatmul.mubr.f32.gmra.mrb[0].mxu0 %v1652
        %v2245 = vpop.f32.mrb[0].mxu0
        %v2246 = vadd.f32 0.0, %v2245
        %v2247 = vpop.f32.mrb[0].mxu0
        %v2248 = vadd.f32 0.0, %v2247
        %2249 = vmatprep.mubr.f32.mxu0 0.0
        %2250 = vmatmul.mubr.f32.gmra.mrb[0].mxu0 %v1655
        %v2251 = vpop.f32.mrb[0].mxu0
        %v2252 = vadd.f32 0.0, %v2251
        %v2253 = vpop.f32.mrb[0].mxu0
        %v2254 = vadd.f32 0.0, %v2253
        %2255 = vmatprep.mubr.f32.mxu0 0.0
        %2256 = vmatmul.mubr.f32.gmra.mrb[0].mxu0 %v1658
        %v2257 = vpop.f32.mrb[0].mxu0
        %v2258 = vadd.f32 0.0, %v2257
        %v2259 = vpop.f32.mrb[0].mxu0
        %v2260 = vadd.f32 0.0, %v2259
        %2261 = vmatprep.mubr.f32.mxu0 0.0
        %2262 = vmatmul.mubr.f32.gmra.mrb[0].mxu0 %v1661
        %v2263 = vpop.f32.mrb[0].mxu0
        %v2264 = vadd.f32 0.0, %v2263
        %v2265 = vpop.f32.mrb[0].mxu0
        %v2266 = vadd.f32 0.0, %v2265
        %2267 = vmatprep.mubr.f32.mxu0 0.0
        %2268 = vmatmul.mubr.f32.gmra.mrb[0].mxu0 %v1664
        %v2269 = vpop.f32.mrb[0].mxu0
        %v2270 = vadd.f32 0.0, %v2269
        %v2271 = vpop.f32.mrb[0].mxu0
        %v2272 = vadd.f32 0.0, %v2271
        %2273 = vmatprep.mubr.f32.mxu0 0.0
        %2274 = vmatmul.mubr.f32.gmra.mrb[0].mxu0 %v1667
        %v2275 = vpop.f32.mrb[0].mxu0
        %v2276 = vadd.f32 0.0, %v2275
        %v2277 = vpop.f32.mrb[0].mxu0
        %v2278 = vadd.f32 0.0, %v2277
        %2279 = vmatprep.mubr.f32.mxu0 0.0
        %2280 = vmatmul.mubr.f32.gmra.mrb[0].mxu0 %v1670
        %v2281 = vpop.f32.mrb[0].mxu0
        %v2282 = vadd.f32 0.0, %v2281
        %v2283 = vpop.f32.mrb[0].mxu0
        %v2284 = vadd.f32 0.0, %v2283
        %2285 = vmatprep.mubr.f32.mxu0 0.0
        %2286 = vmatmul.mubr.f32.gmra.mrb[0].mxu0 %v1673
        %v2287 = vpop.f32.mrb[0].mxu0
        %v2288 = vadd.f32 0.0, %v2287
        %v2289 = vpop.f32.mrb[0].mxu0
        %v2290 = vadd.f32 0.0, %v2289
        %2291 = vmatprep.mubr.f32.mxu0 0.0
        %2292 = vmatmul.mubr.f32.gmra.mrb[0].mxu0 %v1676
        %v2293 = vpop.f32.mrb[0].mxu0
        %v2294 = vadd.f32 0.0, %v2293
        %v2295 = vpop.f32.mrb[0].mxu0
        %v2296 = vadd.f32 0.0, %v2295
        %2297 = vmatprep.mubr.f32.mxu0 0.0
        %2298 = vmatmul.mubr.f32.gmra.mrb[0].mxu0 %v1679
        %v2299 = vpop.f32.mrb[0].mxu0
        %v2300 = vadd.f32 0.0, %v2299
        %v2301 = vpop.f32.mrb[0].mxu0
        %v2302 = vadd.f32 0.0, %v2301
        %2303 = vmatprep.mubr.f32.mxu0 0.0
        %2304 = vmatmul.mubr.f32.gmra.mrb[0].mxu0 %v1682
        %v2305 = vpop.f32.mrb[0].mxu0
        %v2306 = vadd.f32 0.0, %v2305
        %v2307 = vpop.f32.mrb[0].mxu0
        %v2308 = vadd.f32 0.0, %v2307
        %2309 = vmatprep.mubr.f32.mxu0 0.0
        %2310 = vmatmul.mubr.f32.gmra.mrb[0].mxu0 %v1685
        %v2311 = vpop.f32.mrb[0].mxu0
        %v2312 = vadd.f32 0.0, %v2311
        %v2313 = vpop.f32.mrb[0].mxu0
        %v2314 = vadd.f32 0.0, %v2313
        %2315 = vmatprep.mubr.f32.mxu0 0.0
        %2316 = vmatmul.mubr.f32.gmra.mrb[0].mxu0 %v1688
        %v2317 = vpop.f32.mrb[0].mxu0
        %v2318 = vadd.f32 0.0, %v2317
        %v2319 = vpop.f32.mrb[0].mxu0
        %v2320 = vadd.f32 0.0, %v2319
        %2321 = vmatprep.mubr.f32.mxu0 0.0
        %2322 = vmatmul.mubr.f32.gmra.mrb[0].mxu0 %v1691
        %v2323 = vpop.f32.mrb[0].mxu0
        %v2324 = vadd.f32 0.0, %v2323
        %v2325 = vpop.f32.mrb[0].mxu0
        %v2326 = vadd.f32 0.0, %v2325
        %2327 = vmatprep.mubr.f32.mxu0 0.0
        %2328 = vmatmul.mubr.f32.gmra.mrb[0].mxu0 %v1694
        %v2329 = vpop.f32.mrb[0].mxu0
        %v2330 = vadd.f32 0.0, %v2329
        %v2331 = vpop.f32.mrb[0].mxu0
        %v2332 = vadd.f32 0.0, %v2331
        %2333 = vmatprep.mubr.f32.mxu0 0.0
        %2334 = vmatmul.mubr.f32.gmra.mrb[0].mxu0 %v1697
        %v2335 = vpop.f32.mrb[0].mxu0
        %v2336 = vadd.f32 0.0, %v2335
        %v2337 = vpop.f32.mrb[0].mxu0
        %v2338 = vadd.f32 0.0, %v2337
        %2339 = vmatprep.mubr.f32.mxu0 0.0
        %2340 = vmatmul.mubr.f32.gmra.mrb[0].mxu0 %v1700
        %v2341 = vpop.f32.mrb[0].mxu0
        %v2342 = vadd.f32 0.0, %v2341
        %v2343 = vpop.f32.mrb[0].mxu0
        %v2344 = vadd.f32 0.0, %v2343
        %2345 = vmatprep.mubr.f32.mxu0 0.0
        %2346 = vmatmul.mubr.f32.gmra.mrb[0].mxu0 %v1703
        %v2347 = vpop.f32.mrb[0].mxu0
        %v2348 = vadd.f32 0.0, %v2347
        %v2349 = vpop.f32.mrb[0].mxu0
        %v2350 = vadd.f32 0.0, %v2349
        %2351 = vmatprep.mubr.f32.mxu0 0.0
        %2352 = vmatmul.mubr.f32.gmra.mrb[0].mxu0 %v1706
        %v2353 = vpop.f32.mrb[0].mxu0
        %v2354 = vadd.f32 0.0, %v2353
        %v2355 = vpop.f32.mrb[0].mxu0
        %v2356 = vadd.f32 0.0, %v2355
        %2357 = vmatprep.mubr.f32.mxu0 0.0
        %2358 = vmatmul.mubr.f32.gmra.mrb[0].mxu0 %v1709
        %v2359 = vpop.f32.mrb[0].mxu0
        %v2360 = vadd.f32 0.0, %v2359
        %v2361 = vpop.f32.mrb[0].mxu0
        %v2362 = vadd.f32 0.0, %v2361
        %2363 = vmatprep.mubr.f32.mxu0 0.0
        %2364 = vmatmul.mubr.f32.gmra.mrb[0].mxu0 %v1712
        %v2365 = vpop.f32.mrb[0].mxu0
        %v2366 = vadd.f32 0.0, %v2365
        %v2367 = vpop.f32.mrb[0].mxu0
        %v2368 = vadd.f32 0.0, %v2367
        %2369 = vmatprep.mubr.f32.mxu0 0.0
        %2370 = vmatmul.mubr.f32.gmra.mrb[0].mxu0 %v1715
        %v2371 = vpop.f32.mrb[0].mxu0
        %v2372 = vadd.f32 0.0, %v2371
        %v2373 = vpop.f32.mrb[0].mxu0
        %v2374 = vadd.f32 0.0, %v2373
        %2375 = vmatprep.mubr.f32.mxu0 0.0
        %2376 = vmatmul.mubr.f32.gmra.mrb[0].mxu0 %v1718
        %v2377 = vpop.f32.mrb[0].mxu0
        %v2378 = vadd.f32 0.0, %v2377
        %v2379 = vpop.f32.mrb[0].mxu0
        %v2380 = vadd.f32 0.0, %v2379
        %2381 = vmatprep.mubr.f32.mxu0 0.0
        %2382 = vmatmul.mubr.f32.gmra.mrb[0].mxu0 %v1721
        %v2383 = vpop.f32.mrb[0].mxu0
        %v2384 = vadd.f32 0.0, %v2383
        %v2385 = vpop.f32.mrb[0].mxu0
        %v2386 = vadd.f32 0.0, %v2385
        %2387 = vmatprep.mubr.f32.mxu0 0.0
        %2388 = vmatmul.mubr.f32.gmra.mrb[0].mxu0 %v1724
        %v2389 = vpop.f32.mrb[0].mxu0
        %v2390 = vadd.f32 0.0, %v2389
        %v2391 = vpop.f32.mrb[0].mxu0
        %v2392 = vadd.f32 0.0, %v2391
        %2393 = vmatprep.mubr.f32.mxu0 0.0
        %2394 = vmatmul.mubr.f32.gmra.mrb[0].mxu0 %v1727
        %v2395 = vpop.f32.mrb[0].mxu0
        %v2396 = vadd.f32 0.0, %v2395
        %v2397 = vpop.f32.mrb[0].mxu0
        %v2398 = vadd.f32 0.0, %v2397
        %2399 = vmatprep.mubr.f32.mxu0 0.0
        %2400 = vmatmul.mubr.f32.gmra.mrb[0].mxu0 %v1730
        %v2401 = vpop.f32.mrb[0].mxu0
        %v2402 = vadd.f32 0.0, %v2401
        %v2403 = vpop.f32.mrb[0].mxu0
        %v2404 = vadd.f32 0.0, %v2403
        %2405 = vmatprep.mubr.f32.mxu0 0.0
        %2406 = vmatmul.mubr.f32.gmra.mrb[0].mxu0 %v1733
        %v2407 = vpop.f32.mrb[0].mxu0
        %v2408 = vadd.f32 0.0, %v2407
        %v2409 = vpop.f32.mrb[0].mxu0
        %v2410 = vadd.f32 0.0, %v2409
        %2411 = vmatprep.mubr.f32.mxu0 0.0
        %2412 = vmatmul.mubr.f32.gmra.mrb[0].mxu0 %v1736
        %v2413 = vpop.f32.mrb[0].mxu0
        %v2414 = vadd.f32 0.0, %v2413
        %v2415 = vpop.f32.mrb[0].mxu0
        %v2416 = vadd.f32 0.0, %v2415
        %2417 = vmatprep.mubr.f32.mxu0 0.0
        %2418 = vmatmul.mubr.f32.gmra.mrb[0].mxu0 %v1739
        %v2419 = vpop.f32.mrb[0].mxu0
        %v2420 = vadd.f32 0.0, %v2419
        %v2421 = vpop.f32.mrb[0].mxu0
        %v2422 = vadd.f32 0.0, %v2421
        %2423 = vmatprep.mubr.f32.mxu0 0.0
        %2424 = vmatmul.mubr.f32.gmra.mrb[0].mxu0 %v1742
        %v2425 = vpop.f32.mrb[0].mxu0
        %v2426 = vadd.f32 0.0, %v2425
        %v2427 = vpop.f32.mrb[0].mxu0
        %v2428 = vadd.f32 0.0, %v2427
        %2429 = vmatprep.mubr.f32.mxu0 0.0
        %2430 = vmatmul.mubr.f32.gmra.mrb[0].mxu0 %v1745
        %v2431 = vpop.f32.mrb[0].mxu0
        %v2432 = vadd.f32 0.0, %v2431
        %v2433 = vpop.f32.mrb[0].mxu0
        %v2434 = vadd.f32 0.0, %v2433
        %2435 = vmatprep.mubr.f32.mxu0 0.0
        %2436 = vmatmul.mubr.f32.gmra.mrb[0].mxu0 %v1748
        %v2437 = vpop.f32.mrb[0].mxu0
        %v2438 = vadd.f32 0.0, %v2437
        %v2439 = vpop.f32.mrb[0].mxu0
        %v2440 = vadd.f32 0.0, %v2439
        %2441 = vmatprep.mubr.f32.mxu0 0.0
        %2442 = vmatmul.mubr.f32.gmra.mrb[0].mxu0 %v1751
        %v2443 = vpop.f32.mrb[0].mxu0
        %v2444 = vadd.f32 0.0, %v2443
        %v2445 = vpop.f32.mrb[0].mxu0
        %v2446 = vadd.f32 0.0, %v2445
        %2447 = vmatprep.mubr.f32.mxu0 0.0
        %2448 = vmatmul.mubr.f32.gmra.mrb[0].mxu0 %v1754
        %v2449 = vpop.f32.mrb[0].mxu0
        %v2450 = vadd.f32 0.0, %v2449
        %v2451 = vpop.f32.mrb[0].mxu0
        %v2452 = vadd.f32 0.0, %v2451
        %2453 = vmatprep.mubr.f32.mxu0 0.0
        %2454 = vmatmul.mubr.f32.gmra.mrb[0].mxu0 %v1757
        %v2455 = vpop.f32.mrb[0].mxu0
        %v2456 = vadd.f32 0.0, %v2455
        %v2457 = vpop.f32.mrb[0].mxu0
        %v2458 = vadd.f32 0.0, %v2457
        %2459 = vmatprep.mubr.f32.mxu0 0.0
        %2460 = vmatmul.mubr.f32.gmra.mrb[0].mxu0 %v1760
        %v2461 = vpop.f32.mrb[0].mxu0
        %v2462 = vadd.f32 0.0, %v2461
        %v2463 = vpop.f32.mrb[0].mxu0
        %v2464 = vadd.f32 0.0, %v2463
        %2465 = vmatprep.mubr.f32.mxu0 0.0
        %2466 = vmatmul.mubr.f32.gmra.mrb[0].mxu0 %v1763
        %v2467 = vpop.f32.mrb[0].mxu0
        %v2468 = vadd.f32 0.0, %v2467
        %v2469 = vpop.f32.mrb[0].mxu0
        %v2470 = vadd.f32 0.0, %v2469
        %2471 = vmatprep.mubr.f32.mxu0 0.0
        %2472 = vmatmul.mubr.f32.gmra.mrb[0].mxu0 %v1766
        %v2473 = vpop.f32.mrb[0].mxu0
        %v2474 = vadd.f32 0.0, %v2473
        %v2475 = vpop.f32.mrb[0].mxu0
        %v2476 = vadd.f32 0.0, %v2475
        %2477 = vmatprep.mubr.f32.mxu0 0.0
        %2478 = vmatmul.mubr.f32.gmra.mrb[0].mxu0 %v1769
        %v2479 = vpop.f32.mrb[0].mxu0
        %v2480 = vadd.f32 0.0, %v2479
        %v2481 = vpop.f32.mrb[0].mxu0
        %v2482 = vadd.f32 0.0, %v2481
        %2483 = vmatprep.mubr.f32.mxu0 0.0
        %2484 = vmatmul.mubr.f32.gmra.mrb[0].mxu0 %v1772
        %v2485 = vpop.f32.mrb[0].mxu0
        %v2486 = vadd.f32 0.0, %v2485
        %v2487 = vpop.f32.mrb[0].mxu0
        %v2488 = vadd.f32 0.0, %v2487
        %2489 = vmatprep.mubr.f32.mxu0 0.0
        %2490 = vmatmul.mubr.f32.gmra.mrb[0].mxu0 %v1775
        %v2491 = vpop.f32.mrb[0].mxu0
        %v2492 = vadd.f32 0.0, %v2491
        %v2493 = vpop.f32.mrb[0].mxu0
        %v2494 = vadd.f32 0.0, %v2493
        %2495 = vmatprep.mubr.f32.mxu0 0.0
        %2496 = vmatmul.mubr.f32.gmra.mrb[0].mxu0 %v1778
        %v2497 = vpop.f32.mrb[0].mxu0
        %v2498 = vadd.f32 0.0, %v2497
        %v2499 = vpop.f32.mrb[0].mxu0
        %v2500 = vadd.f32 0.0, %v2499
        %2501 = vmatprep.mubr.f32.mxu0 0.0
        %2502 = vmatmul.mubr.f32.gmra.mrb[0].mxu0 %v1781
        %v2503 = vpop.f32.mrb[0].mxu0
        %v2504 = vadd.f32 0.0, %v2503
        %v2505 = vpop.f32.mrb[0].mxu0
        %v2506 = vadd.f32 0.0, %v2505
        %2507 = vmatprep.mubr.f32.mxu0 0.0
        %2508 = vmatmul.mubr.f32.gmra.mrb[0].mxu0 %v1784
        %v2509 = vpop.f32.mrb[0].mxu0
        %v2510 = vadd.f32 0.0, %v2509
        %v2511 = vpop.f32.mrb[0].mxu0
        %v2512 = vadd.f32 0.0, %v2511
        %2513 = vmatprep.mubr.f32.mxu0 0.0
        %2514 = vmatmul.mubr.f32.gmra.mrb[0].mxu0 %v1787
        %v2515 = vpop.f32.mrb[0].mxu0
        %v2516 = vadd.f32 0.0, %v2515
        %v2517 = vpop.f32.mrb[0].mxu0
        %v2518 = vadd.f32 0.0, %v2517
        %2519 = vmatprep.mubr.f32.mxu0 0.0
        %2520 = vmatmul.mubr.f32.gmra.mrb[0].mxu0 %v1790
        %v2521 = vpop.f32.mrb[0].mxu0
        %v2522 = vadd.f32 0.0, %v2521
        %v2523 = vpop.f32.mrb[0].mxu0
        %v2524 = vadd.f32 0.0, %v2523
        %2525 = vmatprep.mubr.f32.mxu0 0.0
        %2526 = vmatmul.mubr.f32.gmra.mrb[0].mxu0 %v1793
        %v2527 = vpop.f32.mrb[0].mxu0
        %v2528 = vadd.f32 0.0, %v2527
        %v2529 = vpop.f32.mrb[0].mxu0
        %v2530 = vadd.f32 0.0, %v2529
        %2531 = vmatprep.mubr.f32.mxu0 0.0
        %2532 = vmatmul.mubr.f32.gmra.mrb[0].mxu0 %v1796
        %v2533 = vpop.f32.mrb[0].mxu0
        %v2534 = vadd.f32 0.0, %v2533
        %v2535 = vpop.f32.mrb[0].mxu0
        %v2536 = vadd.f32 0.0, %v2535
        %2537 = vmatprep.mubr.f32.mxu0 0.0
        %2538 = vmatmul.mubr.f32.gmra.mrb[0].mxu0 %v1799
        %v2539 = vpop.f32.mrb[0].mxu0
        %v2540 = vadd.f32 0.0, %v2539
        %v2541 = vpop.f32.mrb[0].mxu0
        %v2542 = vadd.f32 0.0, %v2541
        %2543 = vmatprep.mubr.f32.mxu0 0.0
        %2544 = vmatmul.mubr.f32.gmra.mrb[0].mxu0 %v1802
        %v2545 = vpop.f32.mrb[0].mxu0
        %v2546 = vadd.f32 0.0, %v2545
        %v2547 = vpop.f32.mrb[0].mxu0
        %v2548 = vadd.f32 0.0, %v2547
        %2549 = vmatprep.mubr.f32.mxu0 0.0
        %2550 = vmatmul.mubr.f32.gmra.mrb[0].mxu0 %v1805
        %v2551 = vpop.f32.mrb[0].mxu0
        %v2552 = vadd.f32 0.0, %v2551
        %v2553 = vpop.f32.mrb[0].mxu0
        %v2554 = vadd.f32 0.0, %v2553
        %2555 = vmatprep.mubr.f32.mxu0 0.0
        %2556 = vmatmul.mubr.f32.gmra.mrb[0].mxu0 %v1808
        %v2557 = vpop.f32.mrb[0].mxu0
        %v2558 = vadd.f32 0.0, %v2557
        %v2559 = vpop.f32.mrb[0].mxu0
        %v2560 = vadd.f32 0.0, %v2559
        %2561 = vmatprep.mubr.f32.mxu0 0.0
        %2562 = vmatmul.mubr.f32.gmra.mrb[0].mxu0 %v1811
        %v2563 = vpop.f32.mrb[0].mxu0
        %v2564 = vadd.f32 0.0, %v2563
        %v2565 = vpop.f32.mrb[0].mxu0
        %v2566 = vadd.f32 0.0, %v2565
        %2567 = vmatprep.mubr.f32.mxu0 0.0
        %2568 = vmatmul.mubr.f32.gmra.mrb[0].mxu0 %v1814
        %v2569 = vpop.f32.mrb[0].mxu0
        %v2570 = vadd.f32 0.0, %v2569
        %v2571 = vpop.f32.mrb[0].mxu0
        %v2572 = vadd.f32 0.0, %v2571
        %2573 = vmatprep.mubr.f32.mxu0 0.0
        %2574 = vmatmul.mubr.f32.gmra.mrb[0].mxu0 %v1817
        %v2575 = vpop.f32.mrb[0].mxu0
        %v2576 = vadd.f32 0.0, %v2575
        %v2577 = vpop.f32.mrb[0].mxu0
        %v2578 = vadd.f32 0.0, %v2577
        %2579 = vmatprep.mubr.f32.mxu0 0.0
        %2580 = vmatmul.mubr.f32.gmra.mrb[0].mxu0 %v1820
        %v2581 = vpop.f32.mrb[0].mxu0
        %v2582 = vadd.f32 0.0, %v2581
        %v2583 = vpop.f32.mrb[0].mxu0
        %v2584 = vadd.f32 0.0, %v2583
        %2585 = vmatprep.mubr.f32.mxu0 0.0
        %2586 = vmatmul.mubr.f32.gmra.mrb[0].mxu0 %v1823
        %v2587 = vpop.f32.mrb[0].mxu0
        %v2588 = vadd.f32 0.0, %v2587
        %v2589 = vpop.f32.mrb[0].mxu0
        %v2590 = vadd.f32 0.0, %v2589
        %2591 = vmatprep.mubr.f32.mxu0 0.0
        %2592 = vmatmul.mubr.f32.gmra.mrb[0].mxu0 %v1826
        %v2593 = vpop.f32.mrb[0].mxu0
        %v2594 = vadd.f32 0.0, %v2593
        %v2595 = vpop.f32.mrb[0].mxu0
        %v2596 = vadd.f32 0.0, %v2595
        %2597 = vmatprep.mubr.f32.mxu0 0.0
        %2598 = vmatmul.mubr.f32.gmra.mrb[0].mxu0 %v1829
        %v2599 = vpop.f32.mrb[0].mxu0
        %v2600 = vadd.f32 0.0, %v2599
        %v2601 = vpop.f32.mrb[0].mxu0
        %v2602 = vadd.f32 0.0, %v2601
        %2603 = vmatprep.mubr.f32.mxu0 0.0
        %2604 = vmatmul.mubr.f32.gmra.mrb[0].mxu0 %v1832
        %v2605 = vpop.f32.mrb[0].mxu0
        %v2606 = vadd.f32 0.0, %v2605
        %v2607 = vpop.f32.mrb[0].mxu0
        %v2608 = vadd.f32 0.0, %v2607
        %2609 = vmatprep.mubr.f32.mxu0 0.0
        %2610 = vmatmul.mubr.f32.gmra.mrb[0].mxu0 %v1835
        %v2611 = vpop.f32.mrb[0].mxu0
        %v2612 = vadd.f32 0.0, %v2611
        %v2613 = vpop.f32.mrb[0].mxu0
        %v2614 = vadd.f32 0.0, %v2613
        %2615 = vmatprep.mubr.f32.mxu0 0.0
        %2616 = vmatmul.mubr.f32.gmra.mrb[0].mxu0 %v1838
        %v2617 = vpop.f32.mrb[0].mxu0
        %v2618 = vadd.f32 0.0, %v2617
        %v2619 = vpop.f32.mrb[0].mxu0
        %v2620 = vadd.f32 0.0, %v2619
        %2621 = vmatprep.mubr.f32.mxu0 0.0
        %2622 = vmatmul.mubr.f32.gmra.mrb[0].mxu0 %v1841
        %v2623 = vpop.f32.mrb[0].mxu0
        %v2624 = vadd.f32 0.0, %v2623
        %v2625 = vpop.f32.mrb[0].mxu0
        %v2626 = vadd.f32 0.0, %v2625
        %2627 = vmatprep.mubr.f32.mxu0 0.0
        %2628 = vmatmul.mubr.f32.gmra.mrb[0].mxu0 %v1844
        %v2629 = vpop.f32.mrb[0].mxu0
        %v2630 = vadd.f32 0.0, %v2629
        %v2631 = vpop.f32.mrb[0].mxu0
        %v2632 = vadd.f32 0.0, %v2631
        %2633 = vmatprep.mubr.f32.mxu0 0.0
        %2634 = vmatmul.mubr.f32.gmra.mrb[0].mxu0 %v1847
        %v2635 = vpop.f32.mrb[0].mxu0
        %v2636 = vadd.f32 0.0, %v2635
        %v2637 = vpop.f32.mrb[0].mxu0
        %v2638 = vadd.f32 0.0, %v2637
        %2639 = vmatprep.mubr.f32.mxu0 0.0
        %2640 = vmatmul.mubr.f32.gmra.mrb[0].mxu0 %v1850
        %v2641 = vpop.f32.mrb[0].mxu0
        %v2642 = vadd.f32 0.0, %v2641
        %v2643 = vpop.f32.mrb[0].mxu0
        %v2644 = vadd.f32 0.0, %v2643
        %2645 = vmatprep.mubr.f32.mxu0 0.0
        %2646 = vmatmul.mubr.f32.gmra.mrb[0].mxu0 %v1853
        %v2647 = vpop.f32.mrb[0].mxu0
        %v2648 = vadd.f32 0.0, %v2647
        %v2649 = vpop.f32.mrb[0].mxu0
        %v2650 = vadd.f32 0.0, %v2649
        %2651 = vmatprep.mubr.f32.mxu0 0.0
        %2652 = vmatmul.mubr.f32.gmra.mrb[0].mxu0 %v1856
        %v2653 = vpop.f32.mrb[0].mxu0
        %v2654 = vadd.f32 0.0, %v2653
        %v2655 = vpop.f32.mrb[0].mxu0
        %v2656 = vadd.f32 0.0, %v2655
        %2657 = vmatprep.mubr.f32.mxu0 0.0
        %2658 = vmatmul.mubr.f32.gmra.mrb[0].mxu0 %v1859
        %v2659 = vpop.f32.mrb[0].mxu0
        %v2660 = vadd.f32 0.0, %v2659
        %v2661 = vpop.f32.mrb[0].mxu0
        %v2662 = vadd.f32 0.0, %v2661
        %2663 = vmatprep.mubr.f32.mxu0 0.0
        %2664 = vmatmul.mubr.f32.gmra.mrb[0].mxu0 %v1862
        %v2665 = vpop.f32.mrb[0].mxu0
        %v2666 = vadd.f32 0.0, %v2665
        %v2667 = vpop.f32.mrb[0].mxu0
        %v2668 = vadd.f32 0.0, %v2667
        %2669 = vmatprep.mubr.f32.mxu0 0.0
        %2670 = vmatmul.mubr.f32.gmra.mrb[0].mxu0 %v1865
        %v2671 = vpop.f32.mrb[0].mxu0
        %v2672 = vadd.f32 0.0, %v2671
        %v2673 = vpop.f32.mrb[0].mxu0
        %v2674 = vadd.f32 0.0, %v2673
        %2675 = vmatprep.mubr.f32.mxu0 0.0
        %2676 = vmatmul.mubr.f32.gmra.mrb[0].mxu0 %v1868
        %v2677 = vpop.f32.mrb[0].mxu0
        %v2678 = vadd.f32 0.0, %v2677
        %v2679 = vpop.f32.mrb[0].mxu0
        %v2680 = vadd.f32 0.0, %v2679
        %2681 = vmatprep.mubr.f32.mxu0 0.0
        %2682 = vmatmul.mubr.f32.gmra.mrb[0].mxu0 %v1871
        %v2683 = vpop.f32.mrb[0].mxu0
        %v2684 = vadd.f32 0.0, %v2683
        %v2685 = vpop.f32.mrb[0].mxu0
        %v2686 = vadd.f32 0.0, %v2685
        %2687 = vmatprep.mubr.f32.mxu0 0.0
        %2688 = vmatmul.mubr.f32.gmra.mrb[0].mxu0 %v1874
        %v2689 = vpop.f32.mrb[0].mxu0
        %v2690 = vadd.f32 0.0, %v2689
        %v2691 = vpop.f32.mrb[0].mxu0
        %v2692 = vadd.f32 0.0, %v2691
        %2693 = vmatprep.mubr.f32.mxu0 0.0
        %2694 = vmatmul.mubr.f32.gmra.mrb[0].mxu0 %v1877
        %v2695 = vpop.f32.mrb[0].mxu0
        %v2696 = vadd.f32 0.0, %v2695
        %v2697 = vpop.f32.mrb[0].mxu0
        %v2698 = vadd.f32 0.0, %v2697
        %2699 = vmatprep.mubr.f32.mxu0 0.0
        %2700 = vmatmul.mubr.f32.gmra.mrb[0].mxu0 %v1880
        %v2701 = vpop.f32.mrb[0].mxu0
        %v2702 = vadd.f32 0.0, %v2701
        %v2703 = vpop.f32.mrb[0].mxu0
        %v2704 = vadd.f32 0.0, %v2703
        %2705 = vmatprep.mubr.f32.mxu0 0.0
        %2706 = vmatmul.mubr.f32.gmra.mrb[0].mxu0 %v1883
        %v2707 = vpop.f32.mrb[0].mxu0
        %v2708 = vadd.f32 0.0, %v2707
        %v2709 = vpop.f32.mrb[0].mxu0
        %v2710 = vadd.f32 0.0, %v2709
        %2711 = vmatprep.mubr.f32.mxu0 0.0
        %2712 = vmatmul.mubr.f32.gmra.mrb[0].mxu0 %v1886
        %v2713 = vpop.f32.mrb[0].mxu0
        %v2714 = vadd.f32 0.0, %v2713
        %v2715 = vpop.f32.mrb[0].mxu0
        %v2716 = vadd.f32 0.0, %v2715
        %2717 = vmatprep.mubr.f32.mxu0 0.0
        %2718 = vmatmul.mubr.f32.gmra.mrb[0].mxu0 %v1889
        %v2719 = vpop.f32.mrb[0].mxu0
        %v2720 = vadd.f32 0.0, %v2719
        %v2721 = vpop.f32.mrb[0].mxu0
        %v2722 = vadd.f32 0.0, %v2721
        %2723 = vdwg.mxu0
        %2724 = vmatprep.subr.mxu0 0.0
        %2725 = vmatpush1.msra.mxu0 %v1493
        %2726 = vmatprep.subr.mxu0 0.0
        %2727 = vmatpush1.msra.mxu0 %v1496
        %2728 = vmatprep.subr.mxu0 0.0
        %2729 = vmatpush1.msra.mxu0 %v1499
        %2730 = vmatprep.subr.mxu0 0.0
        %2731 = vmatpush1.msra.mxu0 %v1502
        %2732 = vmatprep.subr.mxu0 0.0
        %2733 = vmatpush1.msra.mxu0 %v1505
        %2734 = vmatprep.subr.mxu0 0.0
        %2735 = vmatpush1.msra.mxu0 0.0
        %2736 = vmatprep.subr.mxu0 0.0
        %2737 = vmatpush1.msra.mxu0 0.0
        %2738 = vmatprep.subr.mxu0 0.0
        %2739 = vmatpush1.msra.mxu0 0.0
        %2740 = vmatprep.subr.mxu0 0.0
        %2741 = vmatpush1.msra.mxu0 0.0
        %2742 = vmatprep.subr.mxu0 0.0
        %2743 = vmatpush1.msra.mxu0 0.0
        %2744 = vmatprep.subr.mxu0 0.0
        %2745 = vmatpush1.msra.mxu0 0.0
        %2746 = vmatprep.subr.mxu0 0.0
        %2747 = vmatpush1.msra.mxu0 0.0
        %2748 = vmatprep.subr.mxu0 0.0
        %2749 = vmatpush1.msra.mxu0 0.0
        %2750 = vmatprep.subr.mxu0 0.0
        %2751 = vmatpush1.msra.mxu0 0.0
        %2752 = vmatprep.subr.mxu0 0.0
        %2753 = vmatpush1.msra.mxu0 0.0
        %2754 = vmatprep.subr.mxu0 0.0
        %2755 = vmatpush1.msra.mxu0 0.0
        %2756 = vmatprep.subr.mxu0 0.0
        %2757 = vmatpush1.msra.mxu0 0.0
        %2758 = vmatprep.subr.mxu0 0.0
        %2759 = vmatpush1.msra.mxu0 0.0
        %2760 = vmatprep.subr.mxu0 0.0
        %2761 = vmatpush1.msra.mxu0 0.0
        %2762 = vmatprep.subr.mxu0 0.0
        %2763 = vmatpush1.msra.mxu0 0.0
        %2764 = vmatprep.subr.mxu0 0.0
        %2765 = vmatpush1.msra.mxu0 0.0
        %2766 = vmatprep.subr.mxu0 0.0
        %2767 = vmatpush1.msra.mxu0 0.0
        %2768 = vmatprep.subr.mxu0 0.0
        %2769 = vmatpush1.msra.mxu0 0.0
        %2770 = vmatprep.subr.mxu0 0.0
        %2771 = vmatpush1.msra.mxu0 0.0
        %2772 = vmatprep.subr.mxu0 0.0
        %2773 = vmatpush1.msra.mxu0 0.0
        %2774 = vmatprep.subr.mxu0 0.0
        %2775 = vmatpush1.msra.mxu0 0.0
        %2776 = vmatprep.subr.mxu0 0.0
        %2777 = vmatpush1.msra.mxu0 0.0
        %2778 = vmatprep.subr.mxu0 0.0
        %2779 = vmatpush1.msra.mxu0 0.0
        %2780 = vmatprep.subr.mxu0 0.0
        %2781 = vmatpush1.msra.mxu0 0.0
        %2782 = vmatprep.subr.mxu0 0.0
        %2783 = vmatpush1.msra.mxu0 0.0
        %2784 = vmatprep.subr.mxu0 0.0
        %2785 = vmatpush1.msra.mxu0 0.0
        %2786 = vmatprep.subr.mxu0 0.0
        %2787 = vmatpush1.msra.mxu0 0.0
        %2788 = vmatprep.mubr.f32.mxu0 0.0
        %2789 = vmatmul.mubr.f32.gmra.mrb[0].mxu0 %v1508
        %v2790 = vpop.f32.mrb[0].mxu0
        %v2791 = vadd.f32 0.0, %v2790
        %v2792 = vpop.f32.mrb[0].mxu0
        %2793 = vmatprep.mubr.f32.mxu0 0.0
        %2794 = vmatmul.mubr.f32.gmra.mrb[0].mxu0 %v1511
        %v2795 = vpop.f32.mrb[0].mxu0
        %v2796 = vadd.f32 0.0, %v2795
        %v2797 = vpop.f32.mrb[0].mxu0
        %2798 = vmatprep.mubr.f32.mxu0 0.0
        %2799 = vmatmul.mubr.f32.gmra.mrb[0].mxu0 %v1514
        %v2800 = vpop.f32.mrb[0].mxu0
        %v2801 = vadd.f32 0.0, %v2800
        %v2802 = vpop.f32.mrb[0].mxu0
        %2803 = vmatprep.mubr.f32.mxu0 0.0
        %2804 = vmatmul.mubr.f32.gmra.mrb[0].mxu0 %v1517
        %v2805 = vpop.f32.mrb[0].mxu0
        %v2806 = vadd.f32 0.0, %v2805
        %v2807 = vpop.f32.mrb[0].mxu0
        %2808 = vmatprep.mubr.f32.mxu0 0.0
        %2809 = vmatmul.mubr.f32.gmra.mrb[0].mxu0 %v1520
        %v2810 = vpop.f32.mrb[0].mxu0
        %v2811 = vadd.f32 0.0, %v2810
        %v2812 = vpop.f32.mrb[0].mxu0
        %2813 = vmatprep.mubr.f32.mxu0 0.0
        %2814 = vmatmul.mubr.f32.gmra.mrb[0].mxu0 %v1523
        %v2815 = vpop.f32.mrb[0].mxu0
        %v2816 = vadd.f32 0.0, %v2815
        %v2817 = vpop.f32.mrb[0].mxu0
        %2818 = vmatprep.mubr.f32.mxu0 0.0
        %2819 = vmatmul.mubr.f32.gmra.mrb[0].mxu0 %v1526
        %v2820 = vpop.f32.mrb[0].mxu0
        %v2821 = vadd.f32 0.0, %v2820
        %v2822 = vpop.f32.mrb[0].mxu0
        %2823 = vmatprep.mubr.f32.mxu0 0.0
        %2824 = vmatmul.mubr.f32.gmra.mrb[0].mxu0 %v1529
        %v2825 = vpop.f32.mrb[0].mxu0
        %v2826 = vadd.f32 0.0, %v2825
        %v2827 = vpop.f32.mrb[0].mxu0
        %2828 = vmatprep.mubr.f32.mxu0 0.0
        %2829 = vmatmul.mubr.f32.gmra.mrb[0].mxu0 %v1532
        %v2830 = vpop.f32.mrb[0].mxu0
        %v2831 = vadd.f32 0.0, %v2830
        %v2832 = vpop.f32.mrb[0].mxu0
        %2833 = vmatprep.mubr.f32.mxu0 0.0
        %2834 = vmatmul.mubr.f32.gmra.mrb[0].mxu0 %v1535
        %v2835 = vpop.f32.mrb[0].mxu0
        %v2836 = vadd.f32 0.0, %v2835
        %v2837 = vpop.f32.mrb[0].mxu0
        %2838 = vmatprep.mubr.f32.mxu0 0.0
        %2839 = vmatmul.mubr.f32.gmra.mrb[0].mxu0 %v1538
        %v2840 = vpop.f32.mrb[0].mxu0
        %v2841 = vadd.f32 0.0, %v2840
        %v2842 = vpop.f32.mrb[0].mxu0
        %2843 = vmatprep.mubr.f32.mxu0 0.0
        %2844 = vmatmul.mubr.f32.gmra.mrb[0].mxu0 %v1541
        %v2845 = vpop.f32.mrb[0].mxu0
        %v2846 = vadd.f32 0.0, %v2845
        %v2847 = vpop.f32.mrb[0].mxu0
        %2848 = vmatprep.mubr.f32.mxu0 0.0
        %2849 = vmatmul.mubr.f32.gmra.mrb[0].mxu0 %v1544
        %v2850 = vpop.f32.mrb[0].mxu0
        %v2851 = vadd.f32 0.0, %v2850
        %v2852 = vpop.f32.mrb[0].mxu0
        %2853 = vmatprep.mubr.f32.mxu0 0.0
        %2854 = vmatmul.mubr.f32.gmra.mrb[0].mxu0 %v1547
        %v2855 = vpop.f32.mrb[0].mxu0
        %v2856 = vadd.f32 0.0, %v2855
        %v2857 = vpop.f32.mrb[0].mxu0
        %2858 = vmatprep.mubr.f32.mxu0 0.0
        %2859 = vmatmul.mubr.f32.gmra.mrb[0].mxu0 %v1550
        %v2860 = vpop.f32.mrb[0].mxu0
        %v2861 = vadd.f32 0.0, %v2860
        %v2862 = vpop.f32.mrb[0].mxu0
        %2863 = vmatprep.mubr.f32.mxu0 0.0
        %2864 = vmatmul.mubr.f32.gmra.mrb[0].mxu0 %v1553
        %v2865 = vpop.f32.mrb[0].mxu0
        %v2866 = vadd.f32 0.0, %v2865
        %v2867 = vpop.f32.mrb[0].mxu0
        %2868 = vmatprep.mubr.f32.mxu0 0.0
        %2869 = vmatmul.mubr.f32.gmra.mrb[0].mxu0 %v1556
        %v2870 = vpop.f32.mrb[0].mxu0
        %v2871 = vadd.f32 0.0, %v2870
        %v2872 = vpop.f32.mrb[0].mxu0
        %2873 = vmatprep.mubr.f32.mxu0 0.0
        %2874 = vmatmul.mubr.f32.gmra.mrb[0].mxu0 %v1559
        %v2875 = vpop.f32.mrb[0].mxu0
        %v2876 = vadd.f32 0.0, %v2875
        %v2877 = vpop.f32.mrb[0].mxu0
        %2878 = vmatprep.mubr.f32.mxu0 0.0
        %2879 = vmatmul.mubr.f32.gmra.mrb[0].mxu0 %v1562
        %v2880 = vpop.f32.mrb[0].mxu0
        %v2881 = vadd.f32 0.0, %v2880
        %v2882 = vpop.f32.mrb[0].mxu0
        %2883 = vmatprep.mubr.f32.mxu0 0.0
        %2884 = vmatmul.mubr.f32.gmra.mrb[0].mxu0 %v1565
        %v2885 = vpop.f32.mrb[0].mxu0
        %v2886 = vadd.f32 0.0, %v2885
        %v2887 = vpop.f32.mrb[0].mxu0
        %2888 = vmatprep.mubr.f32.mxu0 0.0
        %2889 = vmatmul.mubr.f32.gmra.mrb[0].mxu0 %v1568
        %v2890 = vpop.f32.mrb[0].mxu0
        %v2891 = vadd.f32 0.0, %v2890
        %v2892 = vpop.f32.mrb[0].mxu0
        %2893 = vmatprep.mubr.f32.mxu0 0.0
        %2894 = vmatmul.mubr.f32.gmra.mrb[0].mxu0 %v1571
        %v2895 = vpop.f32.mrb[0].mxu0
        %v2896 = vadd.f32 0.0, %v2895
        %v2897 = vpop.f32.mrb[0].mxu0
        %2898 = vmatprep.mubr.f32.mxu0 0.0
        %2899 = vmatmul.mubr.f32.gmra.mrb[0].mxu0 %v1574
        %v2900 = vpop.f32.mrb[0].mxu0
        %v2901 = vadd.f32 0.0, %v2900
        %v2902 = vpop.f32.mrb[0].mxu0
        %2903 = vmatprep.mubr.f32.mxu0 0.0
        %2904 = vmatmul.mubr.f32.gmra.mrb[0].mxu0 %v1577
        %v2905 = vpop.f32.mrb[0].mxu0
        %v2906 = vadd.f32 0.0, %v2905
        %v2907 = vpop.f32.mrb[0].mxu0
        %2908 = vmatprep.mubr.f32.mxu0 0.0
        %2909 = vmatmul.mubr.f32.gmra.mrb[0].mxu0 %v1580
        %v2910 = vpop.f32.mrb[0].mxu0
        %v2911 = vadd.f32 0.0, %v2910
        %v2912 = vpop.f32.mrb[0].mxu0
        %2913 = vmatprep.mubr.f32.mxu0 0.0
        %2914 = vmatmul.mubr.f32.gmra.mrb[0].mxu0 %v1583
        %v2915 = vpop.f32.mrb[0].mxu0
        %v2916 = vadd.f32 0.0, %v2915
        %v2917 = vpop.f32.mrb[0].mxu0
        %2918 = vmatprep.mubr.f32.mxu0 0.0
        %2919 = vmatmul.mubr.f32.gmra.mrb[0].mxu0 %v1586
        %v2920 = vpop.f32.mrb[0].mxu0
        %v2921 = vadd.f32 0.0, %v2920
        %v2922 = vpop.f32.mrb[0].mxu0
        %2923 = vmatprep.mubr.f32.mxu0 0.0
        %2924 = vmatmul.mubr.f32.gmra.mrb[0].mxu0 %v1589
        %v2925 = vpop.f32.mrb[0].mxu0
        %v2926 = vadd.f32 0.0, %v2925
        %v2927 = vpop.f32.mrb[0].mxu0
        %2928 = vmatprep.mubr.f32.mxu0 0.0
        %2929 = vmatmul.mubr.f32.gmra.mrb[0].mxu0 %v1592
        %v2930 = vpop.f32.mrb[0].mxu0
        %v2931 = vadd.f32 0.0, %v2930
        %v2932 = vpop.f32.mrb[0].mxu0
        %2933 = vmatprep.mubr.f32.mxu0 0.0
        %2934 = vmatmul.mubr.f32.gmra.mrb[0].mxu0 %v1595
        %v2935 = vpop.f32.mrb[0].mxu0
        %v2936 = vadd.f32 0.0, %v2935
        %v2937 = vpop.f32.mrb[0].mxu0
        %2938 = vmatprep.mubr.f32.mxu0 0.0
        %2939 = vmatmul.mubr.f32.gmra.mrb[0].mxu0 %v1598
        %v2940 = vpop.f32.mrb[0].mxu0
        %v2941 = vadd.f32 0.0, %v2940
        %v2942 = vpop.f32.mrb[0].mxu0
        %2943 = vmatprep.mubr.f32.mxu0 0.0
        %2944 = vmatmul.mubr.f32.gmra.mrb[0].mxu0 %v1601
        %v2945 = vpop.f32.mrb[0].mxu0
        %v2946 = vadd.f32 0.0, %v2945
        %v2947 = vpop.f32.mrb[0].mxu0
        %2948 = vmatprep.mubr.f32.mxu0 0.0
        %2949 = vmatmul.mubr.f32.gmra.mrb[0].mxu0 %v1604
        %v2950 = vpop.f32.mrb[0].mxu0
        %v2951 = vadd.f32 0.0, %v2950
        %v2952 = vpop.f32.mrb[0].mxu0
        %2953 = vmatprep.mubr.f32.mxu0 0.0
        %2954 = vmatmul.mubr.f32.gmra.mrb[0].mxu0 %v1607
        %v2955 = vpop.f32.mrb[0].mxu0
        %v2956 = vadd.f32 0.0, %v2955
        %v2957 = vpop.f32.mrb[0].mxu0
        %2958 = vmatprep.mubr.f32.mxu0 0.0
        %2959 = vmatmul.mubr.f32.gmra.mrb[0].mxu0 %v1610
        %v2960 = vpop.f32.mrb[0].mxu0
        %v2961 = vadd.f32 0.0, %v2960
        %v2962 = vpop.f32.mrb[0].mxu0
        %2963 = vmatprep.mubr.f32.mxu0 0.0
        %2964 = vmatmul.mubr.f32.gmra.mrb[0].mxu0 %v1613
        %v2965 = vpop.f32.mrb[0].mxu0
        %v2966 = vadd.f32 0.0, %v2965
        %v2967 = vpop.f32.mrb[0].mxu0
        %2968 = vmatprep.mubr.f32.mxu0 0.0
        %2969 = vmatmul.mubr.f32.gmra.mrb[0].mxu0 %v1616
        %v2970 = vpop.f32.mrb[0].mxu0
        %v2971 = vadd.f32 0.0, %v2970
        %v2972 = vpop.f32.mrb[0].mxu0
        %2973 = vmatprep.mubr.f32.mxu0 0.0
        %2974 = vmatmul.mubr.f32.gmra.mrb[0].mxu0 %v1619
        %v2975 = vpop.f32.mrb[0].mxu0
        %v2976 = vadd.f32 0.0, %v2975
        %v2977 = vpop.f32.mrb[0].mxu0
        %2978 = vmatprep.mubr.f32.mxu0 0.0
        %2979 = vmatmul.mubr.f32.gmra.mrb[0].mxu0 %v1622
        %v2980 = vpop.f32.mrb[0].mxu0
        %v2981 = vadd.f32 0.0, %v2980
        %v2982 = vpop.f32.mrb[0].mxu0
        %2983 = vmatprep.mubr.f32.mxu0 0.0
        %2984 = vmatmul.mubr.f32.gmra.mrb[0].mxu0 %v1625
        %v2985 = vpop.f32.mrb[0].mxu0
        %v2986 = vadd.f32 0.0, %v2985
        %v2987 = vpop.f32.mrb[0].mxu0
        %2988 = vmatprep.mubr.f32.mxu0 0.0
        %2989 = vmatmul.mubr.f32.gmra.mrb[0].mxu0 %v1628
        %v2990 = vpop.f32.mrb[0].mxu0
        %v2991 = vadd.f32 0.0, %v2990
        %v2992 = vpop.f32.mrb[0].mxu0
        %2993 = vmatprep.mubr.f32.mxu0 0.0
        %2994 = vmatmul.mubr.f32.gmra.mrb[0].mxu0 %v1631
        %v2995 = vpop.f32.mrb[0].mxu0
        %v2996 = vadd.f32 0.0, %v2995
        %v2997 = vpop.f32.mrb[0].mxu0
        %2998 = vmatprep.mubr.f32.mxu0 0.0
        %2999 = vmatmul.mubr.f32.gmra.mrb[0].mxu0 %v1634
        %v3000 = vpop.f32.mrb[0].mxu0
        %v3001 = vadd.f32 0.0, %v3000
        %v3002 = vpop.f32.mrb[0].mxu0
        %3003 = vmatprep.mubr.f32.mxu0 0.0
        %3004 = vmatmul.mubr.f32.gmra.mrb[0].mxu0 %v1637
        %v3005 = vpop.f32.mrb[0].mxu0
        %v3006 = vadd.f32 0.0, %v3005
        %v3007 = vpop.f32.mrb[0].mxu0
        %3008 = vmatprep.mubr.f32.mxu0 0.0
        %3009 = vmatmul.mubr.f32.gmra.mrb[0].mxu0 %v1640
        %v3010 = vpop.f32.mrb[0].mxu0
        %v3011 = vadd.f32 0.0, %v3010
        %v3012 = vpop.f32.mrb[0].mxu0
        %3013 = vmatprep.mubr.f32.mxu0 0.0
        %3014 = vmatmul.mubr.f32.gmra.mrb[0].mxu0 %v1643
        %v3015 = vpop.f32.mrb[0].mxu0
        %v3016 = vadd.f32 0.0, %v3015
        %v3017 = vpop.f32.mrb[0].mxu0
        %3018 = vmatprep.mubr.f32.mxu0 0.0
        %3019 = vmatmul.mubr.f32.gmra.mrb[0].mxu0 %v1646
        %v3020 = vpop.f32.mrb[0].mxu0
        %v3021 = vadd.f32 0.0, %v3020
        %v3022 = vpop.f32.mrb[0].mxu0
        %3023 = vmatprep.mubr.f32.mxu0 0.0
        %3024 = vmatmul.mubr.f32.gmra.mrb[0].mxu0 %v1649
        %v3025 = vpop.f32.mrb[0].mxu0
        %v3026 = vadd.f32 0.0, %v3025
        %v3027 = vpop.f32.mrb[0].mxu0
        %3028 = vmatprep.mubr.f32.mxu0 0.0
        %3029 = vmatmul.mubr.f32.gmra.mrb[0].mxu0 %v1652
        %v3030 = vpop.f32.mrb[0].mxu0
        %v3031 = vadd.f32 0.0, %v3030
        %v3032 = vpop.f32.mrb[0].mxu0
        %3033 = vmatprep.mubr.f32.mxu0 0.0
        %3034 = vmatmul.mubr.f32.gmra.mrb[0].mxu0 %v1655
        %v3035 = vpop.f32.mrb[0].mxu0
        %v3036 = vadd.f32 0.0, %v3035
        %v3037 = vpop.f32.mrb[0].mxu0
        %3038 = vmatprep.mubr.f32.mxu0 0.0
        %3039 = vmatmul.mubr.f32.gmra.mrb[0].mxu0 %v1658
        %v3040 = vpop.f32.mrb[0].mxu0
        %v3041 = vadd.f32 0.0, %v3040
        %v3042 = vpop.f32.mrb[0].mxu0
        %3043 = vmatprep.mubr.f32.mxu0 0.0
        %3044 = vmatmul.mubr.f32.gmra.mrb[0].mxu0 %v1661
        %v3045 = vpop.f32.mrb[0].mxu0
        %v3046 = vadd.f32 0.0, %v3045
        %v3047 = vpop.f32.mrb[0].mxu0
        %3048 = vmatprep.mubr.f32.mxu0 0.0
        %3049 = vmatmul.mubr.f32.gmra.mrb[0].mxu0 %v1664
        %v3050 = vpop.f32.mrb[0].mxu0
        %v3051 = vadd.f32 0.0, %v3050
        %v3052 = vpop.f32.mrb[0].mxu0
        %3053 = vmatprep.mubr.f32.mxu0 0.0
        %3054 = vmatmul.mubr.f32.gmra.mrb[0].mxu0 %v1667
        %v3055 = vpop.f32.mrb[0].mxu0
        %v3056 = vadd.f32 0.0, %v3055
        %v3057 = vpop.f32.mrb[0].mxu0
        %3058 = vmatprep.mubr.f32.mxu0 0.0
        %3059 = vmatmul.mubr.f32.gmra.mrb[0].mxu0 %v1670
        %v3060 = vpop.f32.mrb[0].mxu0
        %v3061 = vadd.f32 0.0, %v3060
        %v3062 = vpop.f32.mrb[0].mxu0
        %3063 = vmatprep.mubr.f32.mxu0 0.0
        %3064 = vmatmul.mubr.f32.gmra.mrb[0].mxu0 %v1673
        %v3065 = vpop.f32.mrb[0].mxu0
        %v3066 = vadd.f32 0.0, %v3065
        %v3067 = vpop.f32.mrb[0].mxu0
        %3068 = vmatprep.mubr.f32.mxu0 0.0
        %3069 = vmatmul.mubr.f32.gmra.mrb[0].mxu0 %v1676
        %v3070 = vpop.f32.mrb[0].mxu0
        %v3071 = vadd.f32 0.0, %v3070
        %v3072 = vpop.f32.mrb[0].mxu0
        %3073 = vmatprep.mubr.f32.mxu0 0.0
        %3074 = vmatmul.mubr.f32.gmra.mrb[0].mxu0 %v1679
        %v3075 = vpop.f32.mrb[0].mxu0
        %v3076 = vadd.f32 0.0, %v3075
        %v3077 = vpop.f32.mrb[0].mxu0
        %3078 = vmatprep.mubr.f32.mxu0 0.0
        %3079 = vmatmul.mubr.f32.gmra.mrb[0].mxu0 %v1682
        %v3080 = vpop.f32.mrb[0].mxu0
        %v3081 = vadd.f32 0.0, %v3080
        %v3082 = vpop.f32.mrb[0].mxu0
        %3083 = vmatprep.mubr.f32.mxu0 0.0
        %3084 = vmatmul.mubr.f32.gmra.mrb[0].mxu0 %v1685
        %v3085 = vpop.f32.mrb[0].mxu0
        %v3086 = vadd.f32 0.0, %v3085
        %v3087 = vpop.f32.mrb[0].mxu0
        %3088 = vmatprep.mubr.f32.mxu0 0.0
        %3089 = vmatmul.mubr.f32.gmra.mrb[0].mxu0 %v1688
        %v3090 = vpop.f32.mrb[0].mxu0
        %v3091 = vadd.f32 0.0, %v3090
        %v3092 = vpop.f32.mrb[0].mxu0
        %3093 = vmatprep.mubr.f32.mxu0 0.0
        %3094 = vmatmul.mubr.f32.gmra.mrb[0].mxu0 %v1691
        %v3095 = vpop.f32.mrb[0].mxu0
        %v3096 = vadd.f32 0.0, %v3095
        %v3097 = vpop.f32.mrb[0].mxu0
        %3098 = vmatprep.mubr.f32.mxu0 0.0
        %3099 = vmatmul.mubr.f32.gmra.mrb[0].mxu0 %v1694
        %v3100 = vpop.f32.mrb[0].mxu0
        %v3101 = vadd.f32 0.0, %v3100
        %v3102 = vpop.f32.mrb[0].mxu0
        %3103 = vmatprep.mubr.f32.mxu0 0.0
        %3104 = vmatmul.mubr.f32.gmra.mrb[0].mxu0 %v1697
        %v3105 = vpop.f32.mrb[0].mxu0
        %v3106 = vadd.f32 0.0, %v3105
        %v3107 = vpop.f32.mrb[0].mxu0
        %3108 = vmatprep.mubr.f32.mxu0 0.0
        %3109 = vmatmul.mubr.f32.gmra.mrb[0].mxu0 %v1700
        %v3110 = vpop.f32.mrb[0].mxu0
        %v3111 = vadd.f32 0.0, %v3110
        %v3112 = vpop.f32.mrb[0].mxu0
        %3113 = vmatprep.mubr.f32.mxu0 0.0
        %3114 = vmatmul.mubr.f32.gmra.mrb[0].mxu0 %v1703
        %v3115 = vpop.f32.mrb[0].mxu0
        %v3116 = vadd.f32 0.0, %v3115
        %v3117 = vpop.f32.mrb[0].mxu0
        %3118 = vmatprep.mubr.f32.mxu0 0.0
        %3119 = vmatmul.mubr.f32.gmra.mrb[0].mxu0 %v1706
        %v3120 = vpop.f32.mrb[0].mxu0
        %v3121 = vadd.f32 0.0, %v3120
        %v3122 = vpop.f32.mrb[0].mxu0
        %3123 = vmatprep.mubr.f32.mxu0 0.0
        %3124 = vmatmul.mubr.f32.gmra.mrb[0].mxu0 %v1709
        %v3125 = vpop.f32.mrb[0].mxu0
        %v3126 = vadd.f32 0.0, %v3125
        %v3127 = vpop.f32.mrb[0].mxu0
        %3128 = vmatprep.mubr.f32.mxu0 0.0
        %3129 = vmatmul.mubr.f32.gmra.mrb[0].mxu0 %v1712
        %v3130 = vpop.f32.mrb[0].mxu0
        %v3131 = vadd.f32 0.0, %v3130
        %v3132 = vpop.f32.mrb[0].mxu0
        %3133 = vmatprep.mubr.f32.mxu0 0.0
        %3134 = vmatmul.mubr.f32.gmra.mrb[0].mxu0 %v1715
        %v3135 = vpop.f32.mrb[0].mxu0
        %v3136 = vadd.f32 0.0, %v3135
        %v3137 = vpop.f32.mrb[0].mxu0
        %3138 = vmatprep.mubr.f32.mxu0 0.0
        %3139 = vmatmul.mubr.f32.gmra.mrb[0].mxu0 %v1718
        %v3140 = vpop.f32.mrb[0].mxu0
        %v3141 = vadd.f32 0.0, %v3140
        %v3142 = vpop.f32.mrb[0].mxu0
        %3143 = vmatprep.mubr.f32.mxu0 0.0
        %3144 = vmatmul.mubr.f32.gmra.mrb[0].mxu0 %v1721
        %v3145 = vpop.f32.mrb[0].mxu0
        %v3146 = vadd.f32 0.0, %v3145
        %v3147 = vpop.f32.mrb[0].mxu0
        %3148 = vmatprep.mubr.f32.mxu0 0.0
        %3149 = vmatmul.mubr.f32.gmra.mrb[0].mxu0 %v1724
        %v3150 = vpop.f32.mrb[0].mxu0
        %v3151 = vadd.f32 0.0, %v3150
        %v3152 = vpop.f32.mrb[0].mxu0
        %3153 = vmatprep.mubr.f32.mxu0 0.0
        %3154 = vmatmul.mubr.f32.gmra.mrb[0].mxu0 %v1727
        %v3155 = vpop.f32.mrb[0].mxu0
        %v3156 = vadd.f32 0.0, %v3155
        %v3157 = vpop.f32.mrb[0].mxu0
        %3158 = vmatprep.mubr.f32.mxu0 0.0
        %3159 = vmatmul.mubr.f32.gmra.mrb[0].mxu0 %v1730
        %v3160 = vpop.f32.mrb[0].mxu0
        %v3161 = vadd.f32 0.0, %v3160
        %v3162 = vpop.f32.mrb[0].mxu0
        %3163 = vmatprep.mubr.f32.mxu0 0.0
        %3164 = vmatmul.mubr.f32.gmra.mrb[0].mxu0 %v1733
        %v3165 = vpop.f32.mrb[0].mxu0
        %v3166 = vadd.f32 0.0, %v3165
        %v3167 = vpop.f32.mrb[0].mxu0
        %3168 = vmatprep.mubr.f32.mxu0 0.0
        %3169 = vmatmul.mubr.f32.gmra.mrb[0].mxu0 %v1736
        %v3170 = vpop.f32.mrb[0].mxu0
        %v3171 = vadd.f32 0.0, %v3170
        %v3172 = vpop.f32.mrb[0].mxu0
        %3173 = vmatprep.mubr.f32.mxu0 0.0
        %3174 = vmatmul.mubr.f32.gmra.mrb[0].mxu0 %v1739
        %v3175 = vpop.f32.mrb[0].mxu0
        %v3176 = vadd.f32 0.0, %v3175
        %v3177 = vpop.f32.mrb[0].mxu0
        %3178 = vmatprep.mubr.f32.mxu0 0.0
        %3179 = vmatmul.mubr.f32.gmra.mrb[0].mxu0 %v1742
        %v3180 = vpop.f32.mrb[0].mxu0
        %v3181 = vadd.f32 0.0, %v3180
        %v3182 = vpop.f32.mrb[0].mxu0
        %3183 = vmatprep.mubr.f32.mxu0 0.0
        %3184 = vmatmul.mubr.f32.gmra.mrb[0].mxu0 %v1745
        %v3185 = vpop.f32.mrb[0].mxu0
        %v3186 = vadd.f32 0.0, %v3185
        %v3187 = vpop.f32.mrb[0].mxu0
        %3188 = vmatprep.mubr.f32.mxu0 0.0
        %3189 = vmatmul.mubr.f32.gmra.mrb[0].mxu0 %v1748
        %v3190 = vpop.f32.mrb[0].mxu0
        %v3191 = vadd.f32 0.0, %v3190
        %v3192 = vpop.f32.mrb[0].mxu0
        %3193 = vmatprep.mubr.f32.mxu0 0.0
        %3194 = vmatmul.mubr.f32.gmra.mrb[0].mxu0 %v1751
        %v3195 = vpop.f32.mrb[0].mxu0
        %v3196 = vadd.f32 0.0, %v3195
        %v3197 = vpop.f32.mrb[0].mxu0
        %3198 = vmatprep.mubr.f32.mxu0 0.0
        %3199 = vmatmul.mubr.f32.gmra.mrb[0].mxu0 %v1754
        %v3200 = vpop.f32.mrb[0].mxu0
        %v3201 = vadd.f32 0.0, %v3200
        %v3202 = vpop.f32.mrb[0].mxu0
        %3203 = vmatprep.mubr.f32.mxu0 0.0
        %3204 = vmatmul.mubr.f32.gmra.mrb[0].mxu0 %v1757
        %v3205 = vpop.f32.mrb[0].mxu0
        %v3206 = vadd.f32 0.0, %v3205
        %v3207 = vpop.f32.mrb[0].mxu0
        %3208 = vmatprep.mubr.f32.mxu0 0.0
        %3209 = vmatmul.mubr.f32.gmra.mrb[0].mxu0 %v1760
        %v3210 = vpop.f32.mrb[0].mxu0
        %v3211 = vadd.f32 0.0, %v3210
        %v3212 = vpop.f32.mrb[0].mxu0
        %3213 = vmatprep.mubr.f32.mxu0 0.0
        %3214 = vmatmul.mubr.f32.gmra.mrb[0].mxu0 %v1763
        %v3215 = vpop.f32.mrb[0].mxu0
        %v3216 = vadd.f32 0.0, %v3215
        %v3217 = vpop.f32.mrb[0].mxu0
        %3218 = vmatprep.mubr.f32.mxu0 0.0
        %3219 = vmatmul.mubr.f32.gmra.mrb[0].mxu0 %v1766
        %v3220 = vpop.f32.mrb[0].mxu0
        %v3221 = vadd.f32 0.0, %v3220
        %v3222 = vpop.f32.mrb[0].mxu0
        %3223 = vmatprep.mubr.f32.mxu0 0.0
        %3224 = vmatmul.mubr.f32.gmra.mrb[0].mxu0 %v1769
        %v3225 = vpop.f32.mrb[0].mxu0
        %v3226 = vadd.f32 0.0, %v3225
        %v3227 = vpop.f32.mrb[0].mxu0
        %3228 = vmatprep.mubr.f32.mxu0 0.0
        %3229 = vmatmul.mubr.f32.gmra.mrb[0].mxu0 %v1772
        %v3230 = vpop.f32.mrb[0].mxu0
        %v3231 = vadd.f32 0.0, %v3230
        %v3232 = vpop.f32.mrb[0].mxu0
        %3233 = vmatprep.mubr.f32.mxu0 0.0
        %3234 = vmatmul.mubr.f32.gmra.mrb[0].mxu0 %v1775
        %v3235 = vpop.f32.mrb[0].mxu0
        %v3236 = vadd.f32 0.0, %v3235
        %v3237 = vpop.f32.mrb[0].mxu0
        %3238 = vmatprep.mubr.f32.mxu0 0.0
        %3239 = vmatmul.mubr.f32.gmra.mrb[0].mxu0 %v1778
        %v3240 = vpop.f32.mrb[0].mxu0
        %v3241 = vadd.f32 0.0, %v3240
        %v3242 = vpop.f32.mrb[0].mxu0
        %3243 = vmatprep.mubr.f32.mxu0 0.0
        %3244 = vmatmul.mubr.f32.gmra.mrb[0].mxu0 %v1781
        %v3245 = vpop.f32.mrb[0].mxu0
        %v3246 = vadd.f32 0.0, %v3245
        %v3247 = vpop.f32.mrb[0].mxu0
        %3248 = vmatprep.mubr.f32.mxu0 0.0
        %3249 = vmatmul.mubr.f32.gmra.mrb[0].mxu0 %v1784
        %v3250 = vpop.f32.mrb[0].mxu0
        %v3251 = vadd.f32 0.0, %v3250
        %v3252 = vpop.f32.mrb[0].mxu0
        %3253 = vmatprep.mubr.f32.mxu0 0.0
        %3254 = vmatmul.mubr.f32.gmra.mrb[0].mxu0 %v1787
        %v3255 = vpop.f32.mrb[0].mxu0
        %v3256 = vadd.f32 0.0, %v3255
        %v3257 = vpop.f32.mrb[0].mxu0
        %3258 = vmatprep.mubr.f32.mxu0 0.0
        %3259 = vmatmul.mubr.f32.gmra.mrb[0].mxu0 %v1790
        %v3260 = vpop.f32.mrb[0].mxu0
        %v3261 = vadd.f32 0.0, %v3260
        %v3262 = vpop.f32.mrb[0].mxu0
        %3263 = vmatprep.mubr.f32.mxu0 0.0
        %3264 = vmatmul.mubr.f32.gmra.mrb[0].mxu0 %v1793
        %v3265 = vpop.f32.mrb[0].mxu0
        %v3266 = vadd.f32 0.0, %v3265
        %v3267 = vpop.f32.mrb[0].mxu0
        %3268 = vmatprep.mubr.f32.mxu0 0.0
        %3269 = vmatmul.mubr.f32.gmra.mrb[0].mxu0 %v1796
        %v3270 = vpop.f32.mrb[0].mxu0
        %v3271 = vadd.f32 0.0, %v3270
        %v3272 = vpop.f32.mrb[0].mxu0
        %3273 = vmatprep.mubr.f32.mxu0 0.0
        %3274 = vmatmul.mubr.f32.gmra.mrb[0].mxu0 %v1799
        %v3275 = vpop.f32.mrb[0].mxu0
        %v3276 = vadd.f32 0.0, %v3275
        %v3277 = vpop.f32.mrb[0].mxu0
        %3278 = vmatprep.mubr.f32.mxu0 0.0
        %3279 = vmatmul.mubr.f32.gmra.mrb[0].mxu0 %v1802
        %v3280 = vpop.f32.mrb[0].mxu0
        %v3281 = vadd.f32 0.0, %v3280
        %v3282 = vpop.f32.mrb[0].mxu0
        %3283 = vmatprep.mubr.f32.mxu0 0.0
        %3284 = vmatmul.mubr.f32.gmra.mrb[0].mxu0 %v1805
        %v3285 = vpop.f32.mrb[0].mxu0
        %v3286 = vadd.f32 0.0, %v3285
        %v3287 = vpop.f32.mrb[0].mxu0
        %3288 = vmatprep.mubr.f32.mxu0 0.0
        %3289 = vmatmul.mubr.f32.gmra.mrb[0].mxu0 %v1808
        %v3290 = vpop.f32.mrb[0].mxu0
        %v3291 = vadd.f32 0.0, %v3290
        %v3292 = vpop.f32.mrb[0].mxu0
        %3293 = vmatprep.mubr.f32.mxu0 0.0
        %3294 = vmatmul.mubr.f32.gmra.mrb[0].mxu0 %v1811
        %v3295 = vpop.f32.mrb[0].mxu0
        %v3296 = vadd.f32 0.0, %v3295
        %v3297 = vpop.f32.mrb[0].mxu0
        %3298 = vmatprep.mubr.f32.mxu0 0.0
        %3299 = vmatmul.mubr.f32.gmra.mrb[0].mxu0 %v1814
        %v3300 = vpop.f32.mrb[0].mxu0
        %v3301 = vadd.f32 0.0, %v3300
        %v3302 = vpop.f32.mrb[0].mxu0
        %3303 = vmatprep.mubr.f32.mxu0 0.0
        %3304 = vmatmul.mubr.f32.gmra.mrb[0].mxu0 %v1817
        %v3305 = vpop.f32.mrb[0].mxu0
        %v3306 = vadd.f32 0.0, %v3305
        %v3307 = vpop.f32.mrb[0].mxu0
        %3308 = vmatprep.mubr.f32.mxu0 0.0
        %3309 = vmatmul.mubr.f32.gmra.mrb[0].mxu0 %v1820
        %v3310 = vpop.f32.mrb[0].mxu0
        %v3311 = vadd.f32 0.0, %v3310
        %v3312 = vpop.f32.mrb[0].mxu0
        %3313 = vmatprep.mubr.f32.mxu0 0.0
        %3314 = vmatmul.mubr.f32.gmra.mrb[0].mxu0 %v1823
        %v3315 = vpop.f32.mrb[0].mxu0
        %v3316 = vadd.f32 0.0, %v3315
        %v3317 = vpop.f32.mrb[0].mxu0
        %3318 = vmatprep.mubr.f32.mxu0 0.0
        %3319 = vmatmul.mubr.f32.gmra.mrb[0].mxu0 %v1826
        %v3320 = vpop.f32.mrb[0].mxu0
        %v3321 = vadd.f32 0.0, %v3320
        %v3322 = vpop.f32.mrb[0].mxu0
        %3323 = vmatprep.mubr.f32.mxu0 0.0
        %3324 = vmatmul.mubr.f32.gmra.mrb[0].mxu0 %v1829
        %v3325 = vpop.f32.mrb[0].mxu0
        %v3326 = vadd.f32 0.0, %v3325
        %v3327 = vpop.f32.mrb[0].mxu0
        %3328 = vmatprep.mubr.f32.mxu0 0.0
        %3329 = vmatmul.mubr.f32.gmra.mrb[0].mxu0 %v1832
        %v3330 = vpop.f32.mrb[0].mxu0
        %v3331 = vadd.f32 0.0, %v3330
        %v3332 = vpop.f32.mrb[0].mxu0
        %3333 = vmatprep.mubr.f32.mxu0 0.0
        %3334 = vmatmul.mubr.f32.gmra.mrb[0].mxu0 %v1835
        %v3335 = vpop.f32.mrb[0].mxu0
        %v3336 = vadd.f32 0.0, %v3335
        %v3337 = vpop.f32.mrb[0].mxu0
        %3338 = vmatprep.mubr.f32.mxu0 0.0
        %3339 = vmatmul.mubr.f32.gmra.mrb[0].mxu0 %v1838
        %v3340 = vpop.f32.mrb[0].mxu0
        %v3341 = vadd.f32 0.0, %v3340
        %v3342 = vpop.f32.mrb[0].mxu0
        %3343 = vmatprep.mubr.f32.mxu0 0.0
        %3344 = vmatmul.mubr.f32.gmra.mrb[0].mxu0 %v1841
        %v3345 = vpop.f32.mrb[0].mxu0
        %v3346 = vadd.f32 0.0, %v3345
        %v3347 = vpop.f32.mrb[0].mxu0
        %3348 = vmatprep.mubr.f32.mxu0 0.0
        %3349 = vmatmul.mubr.f32.gmra.mrb[0].mxu0 %v1844
        %v3350 = vpop.f32.mrb[0].mxu0
        %v3351 = vadd.f32 0.0, %v3350
        %v3352 = vpop.f32.mrb[0].mxu0
        %3353 = vmatprep.mubr.f32.mxu0 0.0
        %3354 = vmatmul.mubr.f32.gmra.mrb[0].mxu0 %v1847
        %v3355 = vpop.f32.mrb[0].mxu0
        %v3356 = vadd.f32 0.0, %v3355
        %v3357 = vpop.f32.mrb[0].mxu0
        %3358 = vmatprep.mubr.f32.mxu0 0.0
        %3359 = vmatmul.mubr.f32.gmra.mrb[0].mxu0 %v1850
        %v3360 = vpop.f32.mrb[0].mxu0
        %v3361 = vadd.f32 0.0, %v3360
        %v3362 = vpop.f32.mrb[0].mxu0
        %3363 = vmatprep.mubr.f32.mxu0 0.0
        %3364 = vmatmul.mubr.f32.gmra.mrb[0].mxu0 %v1853
        %v3365 = vpop.f32.mrb[0].mxu0
        %v3366 = vadd.f32 0.0, %v3365
        %v3367 = vpop.f32.mrb[0].mxu0
        %3368 = vmatprep.mubr.f32.mxu0 0.0
        %3369 = vmatmul.mubr.f32.gmra.mrb[0].mxu0 %v1856
        %v3370 = vpop.f32.mrb[0].mxu0
        %v3371 = vadd.f32 0.0, %v3370
        %v3372 = vpop.f32.mrb[0].mxu0
        %3373 = vmatprep.mubr.f32.mxu0 0.0
        %3374 = vmatmul.mubr.f32.gmra.mrb[0].mxu0 %v1859
        %v3375 = vpop.f32.mrb[0].mxu0
        %v3376 = vadd.f32 0.0, %v3375
        %v3377 = vpop.f32.mrb[0].mxu0
        %3378 = vmatprep.mubr.f32.mxu0 0.0
        %3379 = vmatmul.mubr.f32.gmra.mrb[0].mxu0 %v1862
        %v3380 = vpop.f32.mrb[0].mxu0
        %v3381 = vadd.f32 0.0, %v3380
        %v3382 = vpop.f32.mrb[0].mxu0
        %3383 = vmatprep.mubr.f32.mxu0 0.0
        %3384 = vmatmul.mubr.f32.gmra.mrb[0].mxu0 %v1865
        %v3385 = vpop.f32.mrb[0].mxu0
        %v3386 = vadd.f32 0.0, %v3385
        %v3387 = vpop.f32.mrb[0].mxu0
        %3388 = vmatprep.mubr.f32.mxu0 0.0
        %3389 = vmatmul.mubr.f32.gmra.mrb[0].mxu0 %v1868
        %v3390 = vpop.f32.mrb[0].mxu0
        %v3391 = vadd.f32 0.0, %v3390
        %v3392 = vpop.f32.mrb[0].mxu0
        %3393 = vmatprep.mubr.f32.mxu0 0.0
        %3394 = vmatmul.mubr.f32.gmra.mrb[0].mxu0 %v1871
        %v3395 = vpop.f32.mrb[0].mxu0
        %v3396 = vadd.f32 0.0, %v3395
        %v3397 = vpop.f32.mrb[0].mxu0
        %3398 = vmatprep.mubr.f32.mxu0 0.0
        %3399 = vmatmul.mubr.f32.gmra.mrb[0].mxu0 %v1874
        %v3400 = vpop.f32.mrb[0].mxu0
        %v3401 = vadd.f32 0.0, %v3400
        %v3402 = vpop.f32.mrb[0].mxu0
        %3403 = vmatprep.mubr.f32.mxu0 0.0
        %3404 = vmatmul.mubr.f32.gmra.mrb[0].mxu0 %v1877
        %v3405 = vpop.f32.mrb[0].mxu0
        %v3406 = vadd.f32 0.0, %v3405
        %v3407 = vpop.f32.mrb[0].mxu0
        %3408 = vmatprep.mubr.f32.mxu0 0.0
        %3409 = vmatmul.mubr.f32.gmra.mrb[0].mxu0 %v1880
        %v3410 = vpop.f32.mrb[0].mxu0
        %v3411 = vadd.f32 0.0, %v3410
        %v3412 = vpop.f32.mrb[0].mxu0
        %3413 = vmatprep.mubr.f32.mxu0 0.0
        %3414 = vmatmul.mubr.f32.gmra.mrb[0].mxu0 %v1883
        %v3415 = vpop.f32.mrb[0].mxu0
        %v3416 = vadd.f32 0.0, %v3415
        %v3417 = vpop.f32.mrb[0].mxu0
        %3418 = vmatprep.mubr.f32.mxu0 0.0
        %3419 = vmatmul.mubr.f32.gmra.mrb[0].mxu0 %v1886
        %v3420 = vpop.f32.mrb[0].mxu0
        %v3421 = vadd.f32 0.0, %v3420
        %v3422 = vpop.f32.mrb[0].mxu0
        %3423 = vmatprep.mubr.f32.mxu0 0.0
        %3424 = vmatmul.mubr.f32.gmra.mrb[0].mxu0 %v1889
        %v3425 = vpop.f32.mrb[0].mxu0
        %v3426 = vadd.f32 0.0, %v3425
        %v3427 = vpop.f32.mrb[0].mxu0
        %3428 = vdwg.mxu0
        %v3441 = vcombine.low %v1023, %v1025
        %v3442 = vcombine.high %v1023, %v1025
        %v3443 = vcombine.high %v1112, %v1112
        %v3445 = vunpack.c.l.s4 1966171168
        %v3446 = vunpack.c.0.s8 %v3445
        %v3447 = vlaneseq
        %v3448 = vshrl.u32 %v3447, 7
        %v3449 = vsub.s32 %v3446, %v3448
        %v3450 = vrot.slane %v3441, %v3449
        %v3452 = vunpack.c.l.s4 1966171168
        %v3453 = vunpack.c.0.s8 %v3452
        %v3454 = vlaneseq
        %v3455 = vshrl.u32 %v3454, 7
        %v3456 = vsub.s32 %v3453, %v3455
        %v3457 = vrot.slane %v3442, %v3456
        %v3459 = vunpack.c.l.s4 1966171168
        %v3460 = vunpack.c.0.s8 %v3459
        %v3461 = vlaneseq
        %v3462 = vshrl.u32 %v3461, 7
        %v3463 = vsub.s32 %v3460, %v3462
        %v3464 = vrot.slane %v1112, %v3463
        %v3466 = vunpack.c.l.s4 1966171168
        %v3467 = vunpack.c.0.s8 %v3466
        %v3468 = vlaneseq
        %v3469 = vshrl.u32 %v3468, 7
        %v3470 = vsub.s32 %v3467, %v3469
        %v3471 = vrot.slane %v3443, %v3470
        %v3472 = vcombine.low %v3450, %v3464
        %v3473 = vcombine.high %v3450, %v3464
        %v3474 = vcombine.low %v3457, %v3471
        %v3475 = vcombine.high %v3457, %v3471
        %v3477 = vunpack.c.l.s4 1966171168
        %v3478 = vunpack.c.0.s8 %v3477
        %v3479 = vlaneseq
        %v3480 = vshrl.u32 %v3479, 7
        %v3481 = vsub.s32 %v3478, %v3480
        %v3482 = vrot.slane %v3472, %v3481
        %v3484 = vunpack.c.l.s4 1966171168
        %v3485 = vunpack.c.0.s8 %v3484
        %v3486 = vlaneseq
        %v3487 = vshrl.u32 %v3486, 7
        %v3488 = vsub.s32 %v3485, %v3487
        %v3489 = vrot.slane %v3474, %v3488
        %v3491 = vunpack.c.l.s4 1966171168
        %v3492 = vunpack.c.0.s8 %v3491
        %v3493 = vlaneseq
        %v3494 = vshrl.u32 %v3493, 7
        %v3495 = vsub.s32 %v3492, %v3494
        %v3496 = vrot.slane %v3473, %v3495
        %v3498 = vunpack.c.l.s4 1966171168
        %v3499 = vunpack.c.0.s8 %v3498
        %v3500 = vlaneseq
        %v3501 = vshrl.u32 %v3500, 7
        %v3502 = vsub.s32 %v3499, %v3501
        %v3503 = vrot.slane %v3475, %v3502
        %v3504 = vcombine.high %v3482, %v3482
        %v3505 = vcombine.high %v3489, %v3489
        %v3506 = vcombine.high %v3496, %v3496
        %v3507 = vcombine.high %v3503, %v3503
        %v3508 = vcombine.low %v1029, %v1031
        %v3509 = vcombine.high %v1029, %v1031
        %v3510 = vcombine.high %v1117, %v1117
        %v3512 = vunpack.c.l.s4 1966171168
        %v3513 = vunpack.c.0.s8 %v3512
        %v3514 = vlaneseq
        %v3515 = vshrl.u32 %v3514, 7
        %v3516 = vsub.s32 %v3513, %v3515
        %v3517 = vrot.slane %v3508, %v3516
        %v3519 = vunpack.c.l.s4 1966171168
        %v3520 = vunpack.c.0.s8 %v3519
        %v3521 = vlaneseq
        %v3522 = vshrl.u32 %v3521, 7
        %v3523 = vsub.s32 %v3520, %v3522
        %v3524 = vrot.slane %v3509, %v3523
        %v3526 = vunpack.c.l.s4 1966171168
        %v3527 = vunpack.c.0.s8 %v3526
        %v3528 = vlaneseq
        %v3529 = vshrl.u32 %v3528, 7
        %v3530 = vsub.s32 %v3527, %v3529
        %v3531 = vrot.slane %v1117, %v3530
        %v3533 = vunpack.c.l.s4 1966171168
        %v3534 = vunpack.c.0.s8 %v3533
        %v3535 = vlaneseq
        %v3536 = vshrl.u32 %v3535, 7
        %v3537 = vsub.s32 %v3534, %v3536
        %v3538 = vrot.slane %v3510, %v3537
        %v3539 = vcombine.low %v3517, %v3531
        %v3540 = vcombine.high %v3517, %v3531
        %v3541 = vcombine.low %v3524, %v3538
        %v3542 = vcombine.high %v3524, %v3538
        %v3544 = vunpack.c.l.s4 1966171168
        %v3545 = vunpack.c.0.s8 %v3544
        %v3546 = vlaneseq
        %v3547 = vshrl.u32 %v3546, 7
        %v3548 = vsub.s32 %v3545, %v3547
        %v3549 = vrot.slane %v3539, %v3548
        %v3551 = vunpack.c.l.s4 1966171168
        %v3552 = vunpack.c.0.s8 %v3551
        %v3553 = vlaneseq
        %v3554 = vshrl.u32 %v3553, 7
        %v3555 = vsub.s32 %v3552, %v3554
        %v3556 = vrot.slane %v3541, %v3555
        %v3558 = vunpack.c.l.s4 1966171168
        %v3559 = vunpack.c.0.s8 %v3558
        %v3560 = vlaneseq
        %v3561 = vshrl.u32 %v3560, 7
        %v3562 = vsub.s32 %v3559, %v3561
        %v3563 = vrot.slane %v3540, %v3562
        %v3565 = vunpack.c.l.s4 1966171168
        %v3566 = vunpack.c.0.s8 %v3565
        %v3567 = vlaneseq
        %v3568 = vshrl.u32 %v3567, 7
        %v3569 = vsub.s32 %v3566, %v3568
        %v3570 = vrot.slane %v3542, %v3569
        %v3571 = vcombine.high %v3549, %v3549
        %v3572 = vcombine.high %v3556, %v3556
        %v3573 = vcombine.high %v3563, %v3563
        %v3574 = vcombine.high %v3570, %v3570
        %v3575 = vcombine.low %v1035, %v1037
        %v3576 = vcombine.high %v1035, %v1037
        %v3577 = vcombine.high %v1122, %v1122
        %v3579 = vunpack.c.l.s4 1966171168
        %v3580 = vunpack.c.0.s8 %v3579
        %v3581 = vlaneseq
        %v3582 = vshrl.u32 %v3581, 7
        %v3583 = vsub.s32 %v3580, %v3582
        %v3584 = vrot.slane %v3575, %v3583
        %v3586 = vunpack.c.l.s4 1966171168
        %v3587 = vunpack.c.0.s8 %v3586
        %v3588 = vlaneseq
        %v3589 = vshrl.u32 %v3588, 7
        %v3590 = vsub.s32 %v3587, %v3589
        %v3591 = vrot.slane %v3576, %v3590
        %v3593 = vunpack.c.l.s4 1966171168
        %v3594 = vunpack.c.0.s8 %v3593
        %v3595 = vlaneseq
        %v3596 = vshrl.u32 %v3595, 7
        %v3597 = vsub.s32 %v3594, %v3596
        %v3598 = vrot.slane %v1122, %v3597
        %v3600 = vunpack.c.l.s4 1966171168
        %v3601 = vunpack.c.0.s8 %v3600
        %v3602 = vlaneseq
        %v3603 = vshrl.u32 %v3602, 7
        %v3604 = vsub.s32 %v3601, %v3603
        %v3605 = vrot.slane %v3577, %v3604
        %v3606 = vcombine.low %v3584, %v3598
        %v3607 = vcombine.high %v3584, %v3598
        %v3608 = vcombine.low %v3591, %v3605
        %v3609 = vcombine.high %v3591, %v3605
        %v3611 = vunpack.c.l.s4 1966171168
        %v3612 = vunpack.c.0.s8 %v3611
        %v3613 = vlaneseq
        %v3614 = vshrl.u32 %v3613, 7
        %v3615 = vsub.s32 %v3612, %v3614
        %v3616 = vrot.slane %v3606, %v3615
        %v3618 = vunpack.c.l.s4 1966171168
        %v3619 = vunpack.c.0.s8 %v3618
        %v3620 = vlaneseq
        %v3621 = vshrl.u32 %v3620, 7
        %v3622 = vsub.s32 %v3619, %v3621
        %v3623 = vrot.slane %v3608, %v3622
        %v3625 = vunpack.c.l.s4 1966171168
        %v3626 = vunpack.c.0.s8 %v3625
        %v3627 = vlaneseq
        %v3628 = vshrl.u32 %v3627, 7
        %v3629 = vsub.s32 %v3626, %v3628
        %v3630 = vrot.slane %v3607, %v3629
        %v3632 = vunpack.c.l.s4 1966171168
        %v3633 = vunpack.c.0.s8 %v3632
        %v3634 = vlaneseq
        %v3635 = vshrl.u32 %v3634, 7
        %v3636 = vsub.s32 %v3633, %v3635
        %v3637 = vrot.slane %v3609, %v3636
        %v3638 = vcombine.high %v3616, %v3616
        %v3639 = vcombine.high %v3623, %v3623
        %v3640 = vcombine.high %v3630, %v3630
        %v3641 = vcombine.high %v3637, %v3637
        %v3642 = vcombine.low %v1041, %v1043
        %v3643 = vcombine.high %v1041, %v1043
        %v3644 = vcombine.high %v1127, %v1127
        %v3646 = vunpack.c.l.s4 1966171168
        %v3647 = vunpack.c.0.s8 %v3646
        %v3648 = vlaneseq
        %v3649 = vshrl.u32 %v3648, 7
        %v3650 = vsub.s32 %v3647, %v3649
        %v3651 = vrot.slane %v3642, %v3650
        %v3653 = vunpack.c.l.s4 1966171168
        %v3654 = vunpack.c.0.s8 %v3653
        %v3655 = vlaneseq
        %v3656 = vshrl.u32 %v3655, 7
        %v3657 = vsub.s32 %v3654, %v3656
        %v3658 = vrot.slane %v3643, %v3657
        %v3660 = vunpack.c.l.s4 1966171168
        %v3661 = vunpack.c.0.s8 %v3660
        %v3662 = vlaneseq
        %v3663 = vshrl.u32 %v3662, 7
        %v3664 = vsub.s32 %v3661, %v3663
        %v3665 = vrot.slane %v1127, %v3664
        %v3667 = vunpack.c.l.s4 1966171168
        %v3668 = vunpack.c.0.s8 %v3667
        %v3669 = vlaneseq
        %v3670 = vshrl.u32 %v3669, 7
        %v3671 = vsub.s32 %v3668, %v3670
        %v3672 = vrot.slane %v3644, %v3671
        %v3673 = vcombine.low %v3651, %v3665
        %v3674 = vcombine.high %v3651, %v3665
        %v3675 = vcombine.low %v3658, %v3672
        %v3676 = vcombine.high %v3658, %v3672
        %v3678 = vunpack.c.l.s4 1966171168
        %v3679 = vunpack.c.0.s8 %v3678
        %v3680 = vlaneseq
        %v3681 = vshrl.u32 %v3680, 7
        %v3682 = vsub.s32 %v3679, %v3681
        %v3683 = vrot.slane %v3673, %v3682
        %v3685 = vunpack.c.l.s4 1966171168
        %v3686 = vunpack.c.0.s8 %v3685
        %v3687 = vlaneseq
        %v3688 = vshrl.u32 %v3687, 7
        %v3689 = vsub.s32 %v3686, %v3688
        %v3690 = vrot.slane %v3675, %v3689
        %v3692 = vunpack.c.l.s4 1966171168
        %v3693 = vunpack.c.0.s8 %v3692
        %v3694 = vlaneseq
        %v3695 = vshrl.u32 %v3694, 7
        %v3696 = vsub.s32 %v3693, %v3695
        %v3697 = vrot.slane %v3674, %v3696
        %v3699 = vunpack.c.l.s4 1966171168
        %v3700 = vunpack.c.0.s8 %v3699
        %v3701 = vlaneseq
        %v3702 = vshrl.u32 %v3701, 7
        %v3703 = vsub.s32 %v3700, %v3702
        %v3704 = vrot.slane %v3676, %v3703
        %v3705 = vcombine.high %v3683, %v3683
        %v3706 = vcombine.high %v3690, %v3690
        %v3707 = vcombine.high %v3697, %v3697
        %v3708 = vcombine.high %v3704, %v3704
        %v3709 = vlaneseq
        %v3710 = vshrl.u32 %v3709, 7
        %v3711 = vsub.s32 0, %v3710
        %v3712 = vrot.slane %v3482, %v3711
        %v3713 = vlaneseq
        %v3714 = vshrl.u32 %v3713, 7
        %v3715 = vsub.s32 1, %v3714
        %v3716 = vrot.slane %v3482, %v3715
        %v3717 = vlaneseq
        %v3718 = vshrl.u32 %v3717, 7
        %v3719 = vsub.s32 2, %v3718
        %v3720 = vrot.slane %v3482, %v3719
        %v3721 = vlaneseq
        %v3722 = vshrl.u32 %v3721, 7
        %v3723 = vsub.s32 0, %v3722
        %v3724 = vrot.slane %v3496, %v3723
        %v3725 = vlaneseq
        %v3726 = vshrl.u32 %v3725, 7
        %v3727 = vsub.s32 1, %v3726
        %v3728 = vrot.slane %v3496, %v3727
        %v3729 = vlaneseq
        %v3730 = vshrl.u32 %v3729, 7
        %v3731 = vsub.s32 2, %v3730
        %v3732 = vrot.slane %v3496, %v3731
        %v3733 = vlaneseq
        %v3734 = vshrl.u32 %v3733, 7
        %v3735 = vsub.s32 0, %v3734
        %v3736 = vrot.slane %v3504, %v3735
        %v3737 = vlaneseq
        %v3738 = vshrl.u32 %v3737, 7
        %v3739 = vsub.s32 1, %v3738
        %v3740 = vrot.slane %v3504, %v3739
        %v3741 = vlaneseq
        %v3742 = vshrl.u32 %v3741, 7
        %v3743 = vsub.s32 2, %v3742
        %v3744 = vrot.slane %v3504, %v3743
        %v3745 = vlaneseq
        %v3746 = vshrl.u32 %v3745, 7
        %v3747 = vsub.s32 0, %v3746
        %v3748 = vrot.slane %v3506, %v3747
        %v3749 = vlaneseq
        %v3750 = vshrl.u32 %v3749, 7
        %v3751 = vsub.s32 1, %v3750
        %v3752 = vrot.slane %v3506, %v3751
        %v3753 = vlaneseq
        %v3754 = vshrl.u32 %v3753, 7
        %v3755 = vsub.s32 2, %v3754
        %v3756 = vrot.slane %v3506, %v3755
        %v3757 = vlaneseq
        %v3758 = vshrl.u32 %v3757, 7
        %v3759 = vsub.s32 0, %v3758
        %v3760 = vrot.slane %v3489, %v3759
        %v3761 = vlaneseq
        %v3762 = vshrl.u32 %v3761, 7
        %v3763 = vsub.s32 1, %v3762
        %v3764 = vrot.slane %v3489, %v3763
        %v3765 = vlaneseq
        %v3766 = vshrl.u32 %v3765, 7
        %v3767 = vsub.s32 2, %v3766
        %v3768 = vrot.slane %v3489, %v3767
        %v3769 = vlaneseq
        %v3770 = vshrl.u32 %v3769, 7
        %v3771 = vsub.s32 0, %v3770
        %v3772 = vrot.slane %v3503, %v3771
        %v3773 = vlaneseq
        %v3774 = vshrl.u32 %v3773, 7
        %v3775 = vsub.s32 1, %v3774
        %v3776 = vrot.slane %v3503, %v3775
        %v3777 = vlaneseq
        %v3778 = vshrl.u32 %v3777, 7
        %v3779 = vsub.s32 2, %v3778
        %v3780 = vrot.slane %v3503, %v3779
        %v3781 = vlaneseq
        %v3782 = vshrl.u32 %v3781, 7
        %v3783 = vsub.s32 0, %v3782
        %v3784 = vrot.slane %v3505, %v3783
        %v3785 = vlaneseq
        %v3786 = vshrl.u32 %v3785, 7
        %v3787 = vsub.s32 1, %v3786
        %v3788 = vrot.slane %v3505, %v3787
        %v3789 = vlaneseq
        %v3790 = vshrl.u32 %v3789, 7
        %v3791 = vsub.s32 2, %v3790
        %v3792 = vrot.slane %v3505, %v3791
        %v3793 = vlaneseq
        %v3794 = vshrl.u32 %v3793, 7
        %v3795 = vsub.s32 0, %v3794
        %v3796 = vrot.slane %v3507, %v3795
        %v3797 = vlaneseq
        %v3798 = vshrl.u32 %v3797, 7
        %v3799 = vsub.s32 1, %v3798
        %v3800 = vrot.slane %v3507, %v3799
        %v3801 = vlaneseq
        %v3802 = vshrl.u32 %v3801, 7
        %v3803 = vsub.s32 2, %v3802
        %v3804 = vrot.slane %v3507, %v3803
        %v3805 = vlaneseq
        %v3806 = vshrl.u32 %v3805, 7
        %v3807 = vsub.s32 0, %v3806
        %v3808 = vrot.slane %v3549, %v3807
        %v3809 = vlaneseq
        %v3810 = vshrl.u32 %v3809, 7
        %v3811 = vsub.s32 1, %v3810
        %v3812 = vrot.slane %v3549, %v3811
        %v3813 = vlaneseq
        %v3814 = vshrl.u32 %v3813, 7
        %v3815 = vsub.s32 2, %v3814
        %v3816 = vrot.slane %v3549, %v3815
        %v3817 = vlaneseq
        %v3818 = vshrl.u32 %v3817, 7
        %v3819 = vsub.s32 0, %v3818
        %v3820 = vrot.slane %v3563, %v3819
        %v3821 = vlaneseq
        %v3822 = vshrl.u32 %v3821, 7
        %v3823 = vsub.s32 1, %v3822
        %v3824 = vrot.slane %v3563, %v3823
        %v3825 = vlaneseq
        %v3826 = vshrl.u32 %v3825, 7
        %v3827 = vsub.s32 2, %v3826
        %v3828 = vrot.slane %v3563, %v3827
        %v3829 = vlaneseq
        %v3830 = vshrl.u32 %v3829, 7
        %v3831 = vsub.s32 0, %v3830
        %v3832 = vrot.slane %v3571, %v3831
        %v3833 = vlaneseq
        %v3834 = vshrl.u32 %v3833, 7
        %v3835 = vsub.s32 1, %v3834
        %v3836 = vrot.slane %v3571, %v3835
        %v3837 = vlaneseq
        %v3838 = vshrl.u32 %v3837, 7
        %v3839 = vsub.s32 2, %v3838
        %v3840 = vrot.slane %v3571, %v3839
        %v3841 = vlaneseq
        %v3842 = vshrl.u32 %v3841, 7
        %v3843 = vsub.s32 0, %v3842
        %v3844 = vrot.slane %v3573, %v3843
        %v3845 = vlaneseq
        %v3846 = vshrl.u32 %v3845, 7
        %v3847 = vsub.s32 1, %v3846
        %v3848 = vrot.slane %v3573, %v3847
        %v3849 = vlaneseq
        %v3850 = vshrl.u32 %v3849, 7
        %v3851 = vsub.s32 2, %v3850
        %v3852 = vrot.slane %v3573, %v3851
        %v3853 = vlaneseq
        %v3854 = vshrl.u32 %v3853, 7
        %v3855 = vsub.s32 0, %v3854
        %v3856 = vrot.slane %v3556, %v3855
        %v3857 = vlaneseq
        %v3858 = vshrl.u32 %v3857, 7
        %v3859 = vsub.s32 1, %v3858
        %v3860 = vrot.slane %v3556, %v3859
        %v3861 = vlaneseq
        %v3862 = vshrl.u32 %v3861, 7
        %v3863 = vsub.s32 2, %v3862
        %v3864 = vrot.slane %v3556, %v3863
        %v3865 = vlaneseq
        %v3866 = vshrl.u32 %v3865, 7
        %v3867 = vsub.s32 0, %v3866
        %v3868 = vrot.slane %v3570, %v3867
        %v3869 = vlaneseq
        %v3870 = vshrl.u32 %v3869, 7
        %v3871 = vsub.s32 1, %v3870
        %v3872 = vrot.slane %v3570, %v3871
        %v3873 = vlaneseq
        %v3874 = vshrl.u32 %v3873, 7
        %v3875 = vsub.s32 2, %v3874
        %v3876 = vrot.slane %v3570, %v3875
        %v3877 = vlaneseq
        %v3878 = vshrl.u32 %v3877, 7
        %v3879 = vsub.s32 0, %v3878
        %v3880 = vrot.slane %v3572, %v3879
        %v3881 = vlaneseq
        %v3882 = vshrl.u32 %v3881, 7
        %v3883 = vsub.s32 1, %v3882
        %v3884 = vrot.slane %v3572, %v3883
        %v3885 = vlaneseq
        %v3886 = vshrl.u32 %v3885, 7
        %v3887 = vsub.s32 2, %v3886
        %v3888 = vrot.slane %v3572, %v3887
        %v3889 = vlaneseq
        %v3890 = vshrl.u32 %v3889, 7
        %v3891 = vsub.s32 0, %v3890
        %v3892 = vrot.slane %v3574, %v3891
        %v3893 = vlaneseq
        %v3894 = vshrl.u32 %v3893, 7
        %v3895 = vsub.s32 1, %v3894
        %v3896 = vrot.slane %v3574, %v3895
        %v3897 = vlaneseq
        %v3898 = vshrl.u32 %v3897, 7
        %v3899 = vsub.s32 2, %v3898
        %v3900 = vrot.slane %v3574, %v3899
        %v3901 = vlaneseq
        %v3902 = vshrl.u32 %v3901, 7
        %v3903 = vsub.s32 0, %v3902
        %v3904 = vrot.slane %v3616, %v3903
        %v3905 = vlaneseq
        %v3906 = vshrl.u32 %v3905, 7
        %v3907 = vsub.s32 1, %v3906
        %v3908 = vrot.slane %v3616, %v3907
        %v3909 = vlaneseq
        %v3910 = vshrl.u32 %v3909, 7
        %v3911 = vsub.s32 2, %v3910
        %v3912 = vrot.slane %v3616, %v3911
        %v3913 = vlaneseq
        %v3914 = vshrl.u32 %v3913, 7
        %v3915 = vsub.s32 0, %v3914
        %v3916 = vrot.slane %v3630, %v3915
        %v3917 = vlaneseq
        %v3918 = vshrl.u32 %v3917, 7
        %v3919 = vsub.s32 1, %v3918
        %v3920 = vrot.slane %v3630, %v3919
        %v3921 = vlaneseq
        %v3922 = vshrl.u32 %v3921, 7
        %v3923 = vsub.s32 2, %v3922
        %v3924 = vrot.slane %v3630, %v3923
        %v3925 = vlaneseq
        %v3926 = vshrl.u32 %v3925, 7
        %v3927 = vsub.s32 0, %v3926
        %v3928 = vrot.slane %v3638, %v3927
        %v3929 = vlaneseq
        %v3930 = vshrl.u32 %v3929, 7
        %v3931 = vsub.s32 1, %v3930
        %v3932 = vrot.slane %v3638, %v3931
        %v3933 = vlaneseq
        %v3934 = vshrl.u32 %v3933, 7
        %v3935 = vsub.s32 2, %v3934
        %v3936 = vrot.slane %v3638, %v3935
        %v3937 = vlaneseq
        %v3938 = vshrl.u32 %v3937, 7
        %v3939 = vsub.s32 0, %v3938
        %v3940 = vrot.slane %v3640, %v3939
        %v3941 = vlaneseq
        %v3942 = vshrl.u32 %v3941, 7
        %v3943 = vsub.s32 1, %v3942
        %v3944 = vrot.slane %v3640, %v3943
        %v3945 = vlaneseq
        %v3946 = vshrl.u32 %v3945, 7
        %v3947 = vsub.s32 2, %v3946
        %v3948 = vrot.slane %v3640, %v3947
        %v3949 = vlaneseq
        %v3950 = vshrl.u32 %v3949, 7
        %v3951 = vsub.s32 0, %v3950
        %v3952 = vrot.slane %v3623, %v3951
        %v3953 = vlaneseq
        %v3954 = vshrl.u32 %v3953, 7
        %v3955 = vsub.s32 1, %v3954
        %v3956 = vrot.slane %v3623, %v3955
        %v3957 = vlaneseq
        %v3958 = vshrl.u32 %v3957, 7
        %v3959 = vsub.s32 2, %v3958
        %v3960 = vrot.slane %v3623, %v3959
        %v3961 = vlaneseq
        %v3962 = vshrl.u32 %v3961, 7
        %v3963 = vsub.s32 0, %v3962
        %v3964 = vrot.slane %v3637, %v3963
        %v3965 = vlaneseq
        %v3966 = vshrl.u32 %v3965, 7
        %v3967 = vsub.s32 1, %v3966
        %v3968 = vrot.slane %v3637, %v3967
        %v3969 = vlaneseq
        %v3970 = vshrl.u32 %v3969, 7
        %v3971 = vsub.s32 2, %v3970
        %v3972 = vrot.slane %v3637, %v3971
        %v3973 = vlaneseq
        %v3974 = vshrl.u32 %v3973, 7
        %v3975 = vsub.s32 0, %v3974
        %v3976 = vrot.slane %v3639, %v3975
        %v3977 = vlaneseq
        %v3978 = vshrl.u32 %v3977, 7
        %v3979 = vsub.s32 1, %v3978
        %v3980 = vrot.slane %v3639, %v3979
        %v3981 = vlaneseq
        %v3982 = vshrl.u32 %v3981, 7
        %v3983 = vsub.s32 2, %v3982
        %v3984 = vrot.slane %v3639, %v3983
        %v3985 = vlaneseq
        %v3986 = vshrl.u32 %v3985, 7
        %v3987 = vsub.s32 0, %v3986
        %v3988 = vrot.slane %v3641, %v3987
        %v3989 = vlaneseq
        %v3990 = vshrl.u32 %v3989, 7
        %v3991 = vsub.s32 1, %v3990
        %v3992 = vrot.slane %v3641, %v3991
        %v3993 = vlaneseq
        %v3994 = vshrl.u32 %v3993, 7
        %v3995 = vsub.s32 2, %v3994
        %v3996 = vrot.slane %v3641, %v3995
        %v3997 = vlaneseq
        %v3998 = vshrl.u32 %v3997, 7
        %v3999 = vsub.s32 0, %v3998
        %v4000 = vrot.slane %v3683, %v3999
        %v4001 = vlaneseq
        %v4002 = vshrl.u32 %v4001, 7
        %v4003 = vsub.s32 1, %v4002
        %v4004 = vrot.slane %v3683, %v4003
        %v4005 = vlaneseq
        %v4006 = vshrl.u32 %v4005, 7
        %v4007 = vsub.s32 2, %v4006
        %v4008 = vrot.slane %v3683, %v4007
        %v4009 = vlaneseq
        %v4010 = vshrl.u32 %v4009, 7
        %v4011 = vsub.s32 0, %v4010
        %v4012 = vrot.slane %v3697, %v4011
        %v4013 = vlaneseq
        %v4014 = vshrl.u32 %v4013, 7
        %v4015 = vsub.s32 1, %v4014
        %v4016 = vrot.slane %v3697, %v4015
        %v4017 = vlaneseq
        %v4018 = vshrl.u32 %v4017, 7
        %v4019 = vsub.s32 2, %v4018
        %v4020 = vrot.slane %v3697, %v4019
        %v4021 = vlaneseq
        %v4022 = vshrl.u32 %v4021, 7
        %v4023 = vsub.s32 0, %v4022
        %v4024 = vrot.slane %v3705, %v4023
        %v4025 = vlaneseq
        %v4026 = vshrl.u32 %v4025, 7
        %v4027 = vsub.s32 1, %v4026
        %v4028 = vrot.slane %v3705, %v4027
        %v4029 = vlaneseq
        %v4030 = vshrl.u32 %v4029, 7
        %v4031 = vsub.s32 2, %v4030
        %v4032 = vrot.slane %v3705, %v4031
        %v4033 = vlaneseq
        %v4034 = vshrl.u32 %v4033, 7
        %v4035 = vsub.s32 0, %v4034
        %v4036 = vrot.slane %v3707, %v4035
        %v4037 = vlaneseq
        %v4038 = vshrl.u32 %v4037, 7
        %v4039 = vsub.s32 1, %v4038
        %v4040 = vrot.slane %v3707, %v4039
        %v4041 = vlaneseq
        %v4042 = vshrl.u32 %v4041, 7
        %v4043 = vsub.s32 2, %v4042
        %v4044 = vrot.slane %v3707, %v4043
        %v4045 = vlaneseq
        %v4046 = vshrl.u32 %v4045, 7
        %v4047 = vsub.s32 0, %v4046
        %v4048 = vrot.slane %v3690, %v4047
        %v4049 = vlaneseq
        %v4050 = vshrl.u32 %v4049, 7
        %v4051 = vsub.s32 1, %v4050
        %v4052 = vrot.slane %v3690, %v4051
        %v4053 = vlaneseq
        %v4054 = vshrl.u32 %v4053, 7
        %v4055 = vsub.s32 2, %v4054
        %v4056 = vrot.slane %v3690, %v4055
        %v4057 = vlaneseq
        %v4058 = vshrl.u32 %v4057, 7
        %v4059 = vsub.s32 0, %v4058
        %v4060 = vrot.slane %v3704, %v4059
        %v4061 = vlaneseq
        %v4062 = vshrl.u32 %v4061, 7
        %v4063 = vsub.s32 1, %v4062
        %v4064 = vrot.slane %v3704, %v4063
        %v4065 = vlaneseq
        %v4066 = vshrl.u32 %v4065, 7
        %v4067 = vsub.s32 2, %v4066
        %v4068 = vrot.slane %v3704, %v4067
        %v4069 = vlaneseq
        %v4070 = vshrl.u32 %v4069, 7
        %v4071 = vsub.s32 0, %v4070
        %v4072 = vrot.slane %v3706, %v4071
        %v4073 = vlaneseq
        %v4074 = vshrl.u32 %v4073, 7
        %v4075 = vsub.s32 1, %v4074
        %v4076 = vrot.slane %v3706, %v4075
        %v4077 = vlaneseq
        %v4078 = vshrl.u32 %v4077, 7
        %v4079 = vsub.s32 2, %v4078
        %v4080 = vrot.slane %v3706, %v4079
        %v4081 = vlaneseq
        %v4082 = vshrl.u32 %v4081, 7
        %v4083 = vsub.s32 0, %v4082
        %v4084 = vrot.slane %v3708, %v4083
        %v4085 = vlaneseq
        %v4086 = vshrl.u32 %v4085, 7
        %v4087 = vsub.s32 1, %v4086
        %v4088 = vrot.slane %v3708, %v4087
        %v4089 = vlaneseq
        %v4090 = vshrl.u32 %v4089, 7
        %v4091 = vsub.s32 2, %v4090
        %v4092 = vrot.slane %v3708, %v4091
        %v4189 = vadd.f32 %v1958, %v3712
        %v4190 = vadd.f32 %v1960, %v3716
        %v4191 = vadd.f32 %v2791, %v3720
        %v4192 = vadd.f32 %v1964, %v3712
        %v4193 = vadd.f32 %v1966, %v3716
        %v4194 = vadd.f32 %v2796, %v3720
        %v4195 = vadd.f32 %v1970, %v3712
        %v4196 = vadd.f32 %v1972, %v3716
        %v4197 = vadd.f32 %v2801, %v3720
        %v4198 = vadd.f32 %v1976, %v3712
        %v4199 = vadd.f32 %v1978, %v3716
        %v4200 = vadd.f32 %v2806, %v3720
        %v4201 = vadd.f32 %v1982, %v3724
        %v4202 = vadd.f32 %v1984, %v3728
        %v4203 = vadd.f32 %v2811, %v3732
        %v4204 = vadd.f32 %v1988, %v3724
        %v4205 = vadd.f32 %v1990, %v3728
        %v4206 = vadd.f32 %v2816, %v3732
        %v4207 = vadd.f32 %v1994, %v3724
        %v4208 = vadd.f32 %v1996, %v3728
        %v4209 = vadd.f32 %v2821, %v3732
        %v4210 = vadd.f32 %v2000, %v3724
        %v4211 = vadd.f32 %v2002, %v3728
        %v4212 = vadd.f32 %v2826, %v3732
        %v4213 = vadd.f32 %v2006, %v3736
        %v4214 = vadd.f32 %v2008, %v3740
        %v4215 = vadd.f32 %v2831, %v3744
        %v4216 = vadd.f32 %v2012, %v3736
        %v4217 = vadd.f32 %v2014, %v3740
        %v4218 = vadd.f32 %v2836, %v3744
        %v4219 = vadd.f32 %v2018, %v3736
        %v4220 = vadd.f32 %v2020, %v3740
        %v4221 = vadd.f32 %v2841, %v3744
        %v4222 = vadd.f32 %v2024, %v3736
        %v4223 = vadd.f32 %v2026, %v3740
        %v4224 = vadd.f32 %v2846, %v3744
        %v4225 = vadd.f32 %v2030, %v3748
        %v4226 = vadd.f32 %v2032, %v3752
        %v4227 = vadd.f32 %v2851, %v3756
        %v4228 = vadd.f32 %v2036, %v3748
        %v4229 = vadd.f32 %v2038, %v3752
        %v4230 = vadd.f32 %v2856, %v3756
        %v4231 = vadd.f32 %v2042, %v3748
        %v4232 = vadd.f32 %v2044, %v3752
        %v4233 = vadd.f32 %v2861, %v3756
        %v4234 = vadd.f32 %v2048, %v3748
        %v4235 = vadd.f32 %v2050, %v3752
        %v4236 = vadd.f32 %v2866, %v3756
        %v4237 = vadd.f32 %v2054, %v3760
        %v4238 = vadd.f32 %v2056, %v3764
        %v4239 = vadd.f32 %v2871, %v3768
        %v4240 = vadd.f32 %v2060, %v3760
        %v4241 = vadd.f32 %v2062, %v3764
        %v4242 = vadd.f32 %v2876, %v3768
        %v4243 = vadd.f32 %v2066, %v3760
        %v4244 = vadd.f32 %v2068, %v3764
        %v4245 = vadd.f32 %v2881, %v3768
        %v4246 = vadd.f32 %v2072, %v3760
        %v4247 = vadd.f32 %v2074, %v3764
        %v4248 = vadd.f32 %v2886, %v3768
        %v4249 = vadd.f32 %v2078, %v3772
        %v4250 = vadd.f32 %v2080, %v3776
        %v4251 = vadd.f32 %v2891, %v3780
        %v4252 = vadd.f32 %v2084, %v3772
        %v4253 = vadd.f32 %v2086, %v3776
        %v4254 = vadd.f32 %v2896, %v3780
        %v4255 = vadd.f32 %v2090, %v3772
        %v4256 = vadd.f32 %v2092, %v3776
        %v4257 = vadd.f32 %v2901, %v3780
        %v4258 = vadd.f32 %v2096, %v3772
        %v4259 = vadd.f32 %v2098, %v3776
        %v4260 = vadd.f32 %v2906, %v3780
        %v4261 = vadd.f32 %v2102, %v3784
        %v4262 = vadd.f32 %v2104, %v3788
        %v4263 = vadd.f32 %v2911, %v3792
        %v4264 = vadd.f32 %v2108, %v3784
        %v4265 = vadd.f32 %v2110, %v3788
        %v4266 = vadd.f32 %v2916, %v3792
        %v4267 = vadd.f32 %v2114, %v3784
        %v4268 = vadd.f32 %v2116, %v3788
        %v4269 = vadd.f32 %v2921, %v3792
        %v4270 = vadd.f32 %v2120, %v3784
        %v4271 = vadd.f32 %v2122, %v3788
        %v4272 = vadd.f32 %v2926, %v3792
        %v4273 = vadd.f32 %v2126, %v3796
        %v4274 = vadd.f32 %v2128, %v3800
        %v4275 = vadd.f32 %v2931, %v3804
        %v4276 = vadd.f32 %v2132, %v3796
        %v4277 = vadd.f32 %v2134, %v3800
        %v4278 = vadd.f32 %v2936, %v3804
        %v4279 = vadd.f32 %v2138, %v3796
        %v4280 = vadd.f32 %v2140, %v3800
        %v4281 = vadd.f32 %v2941, %v3804
        %v4282 = vadd.f32 %v2144, %v3796
        %v4283 = vadd.f32 %v2146, %v3800
        %v4284 = vadd.f32 %v2946, %v3804
        %v4285 = vadd.f32 %v2150, %v3808
        %v4286 = vadd.f32 %v2152, %v3812
        %v4287 = vadd.f32 %v2951, %v3816
        %v4288 = vadd.f32 %v2156, %v3808
        %v4289 = vadd.f32 %v2158, %v3812
        %v4290 = vadd.f32 %v2956, %v3816
        %v4291 = vadd.f32 %v2162, %v3808
        %v4292 = vadd.f32 %v2164, %v3812
        %v4293 = vadd.f32 %v2961, %v3816
        %v4294 = vadd.f32 %v2168, %v3808
        %v4295 = vadd.f32 %v2170, %v3812
        %v4296 = vadd.f32 %v2966, %v3816
        %v4297 = vadd.f32 %v2174, %v3820
        %v4298 = vadd.f32 %v2176, %v3824
        %v4299 = vadd.f32 %v2971, %v3828
        %v4300 = vadd.f32 %v2180, %v3820
        %v4301 = vadd.f32 %v2182, %v3824
        %v4302 = vadd.f32 %v2976, %v3828
        %v4303 = vadd.f32 %v2186, %v3820
        %v4304 = vadd.f32 %v2188, %v3824
        %v4305 = vadd.f32 %v2981, %v3828
        %v4306 = vadd.f32 %v2192, %v3820
        %v4307 = vadd.f32 %v2194, %v3824
        %v4308 = vadd.f32 %v2986, %v3828
        %v4309 = vadd.f32 %v2198, %v3832
        %v4310 = vadd.f32 %v2200, %v3836
        %v4311 = vadd.f32 %v2991, %v3840
        %v4312 = vadd.f32 %v2204, %v3832
        %v4313 = vadd.f32 %v2206, %v3836
        %v4314 = vadd.f32 %v2996, %v3840
        %v4315 = vadd.f32 %v2210, %v3832
        %v4316 = vadd.f32 %v2212, %v3836
        %v4317 = vadd.f32 %v3001, %v3840
        %v4318 = vadd.f32 %v2216, %v3832
        %v4319 = vadd.f32 %v2218, %v3836
        %v4320 = vadd.f32 %v3006, %v3840
        %v4321 = vadd.f32 %v2222, %v3844
        %v4322 = vadd.f32 %v2224, %v3848
        %v4323 = vadd.f32 %v3011, %v3852
        %v4324 = vadd.f32 %v2228, %v3844
        %v4325 = vadd.f32 %v2230, %v3848
        %v4326 = vadd.f32 %v3016, %v3852
        %v4327 = vadd.f32 %v2234, %v3844
        %v4328 = vadd.f32 %v2236, %v3848
        %v4329 = vadd.f32 %v3021, %v3852
        %v4330 = vadd.f32 %v2240, %v3844
        %v4331 = vadd.f32 %v2242, %v3848
        %v4332 = vadd.f32 %v3026, %v3852
        %v4333 = vadd.f32 %v2246, %v3856
        %v4334 = vadd.f32 %v2248, %v3860
        %v4335 = vadd.f32 %v3031, %v3864
        %v4336 = vadd.f32 %v2252, %v3856
        %v4337 = vadd.f32 %v2254, %v3860
        %v4338 = vadd.f32 %v3036, %v3864
        %v4339 = vadd.f32 %v2258, %v3856
        %v4340 = vadd.f32 %v2260, %v3860
        %v4341 = vadd.f32 %v3041, %v3864
        %v4342 = vadd.f32 %v2264, %v3856
        %v4343 = vadd.f32 %v2266, %v3860
        %v4344 = vadd.f32 %v3046, %v3864
        %v4345 = vadd.f32 %v2270, %v3868
        %v4346 = vadd.f32 %v2272, %v3872
        %v4347 = vadd.f32 %v3051, %v3876
        %v4348 = vadd.f32 %v2276, %v3868
        %v4349 = vadd.f32 %v2278, %v3872
        %v4350 = vadd.f32 %v3056, %v3876
        %v4351 = vadd.f32 %v2282, %v3868
        %v4352 = vadd.f32 %v2284, %v3872
        %v4353 = vadd.f32 %v3061, %v3876
        %v4354 = vadd.f32 %v2288, %v3868
        %v4355 = vadd.f32 %v2290, %v3872
        %v4356 = vadd.f32 %v3066, %v3876
        %v4357 = vadd.f32 %v2294, %v3880
        %v4358 = vadd.f32 %v2296, %v3884
        %v4359 = vadd.f32 %v3071, %v3888
        %v4360 = vadd.f32 %v2300, %v3880
        %v4361 = vadd.f32 %v2302, %v3884
        %v4362 = vadd.f32 %v3076, %v3888
        %v4363 = vadd.f32 %v2306, %v3880
        %v4364 = vadd.f32 %v2308, %v3884
        %v4365 = vadd.f32 %v3081, %v3888
        %v4366 = vadd.f32 %v2312, %v3880
        %v4367 = vadd.f32 %v2314, %v3884
        %v4368 = vadd.f32 %v3086, %v3888
        %v4369 = vadd.f32 %v2318, %v3892
        %v4370 = vadd.f32 %v2320, %v3896
        %v4371 = vadd.f32 %v3091, %v3900
        %v4372 = vadd.f32 %v2324, %v3892
        %v4373 = vadd.f32 %v2326, %v3896
        %v4374 = vadd.f32 %v3096, %v3900
        %v4375 = vadd.f32 %v2330, %v3892
        %v4376 = vadd.f32 %v2332, %v3896
        %v4377 = vadd.f32 %v3101, %v3900
        %v4378 = vadd.f32 %v2336, %v3892
        %v4379 = vadd.f32 %v2338, %v3896
        %v4380 = vadd.f32 %v3106, %v3900
        %v4381 = vadd.f32 %v2342, %v3904
        %v4382 = vadd.f32 %v2344, %v3908
        %v4383 = vadd.f32 %v3111, %v3912
        %v4384 = vadd.f32 %v2348, %v3904
        %v4385 = vadd.f32 %v2350, %v3908
        %v4386 = vadd.f32 %v3116, %v3912
        %v4387 = vadd.f32 %v2354, %v3904
        %v4388 = vadd.f32 %v2356, %v3908
        %v4389 = vadd.f32 %v3121, %v3912
        %v4390 = vadd.f32 %v2360, %v3904
        %v4391 = vadd.f32 %v2362, %v3908
        %v4392 = vadd.f32 %v3126, %v3912
        %v4393 = vadd.f32 %v2366, %v3916
        %v4394 = vadd.f32 %v2368, %v3920
        %v4395 = vadd.f32 %v3131, %v3924
        %v4396 = vadd.f32 %v2372, %v3916
        %v4397 = vadd.f32 %v2374, %v3920
        %v4398 = vadd.f32 %v3136, %v3924
        %v4399 = vadd.f32 %v2378, %v3916
        %v4400 = vadd.f32 %v2380, %v3920
        %v4401 = vadd.f32 %v3141, %v3924
        %v4402 = vadd.f32 %v2384, %v3916
        %v4403 = vadd.f32 %v2386, %v3920
        %v4404 = vadd.f32 %v3146, %v3924
        %v4405 = vadd.f32 %v2390, %v3928
        %v4406 = vadd.f32 %v2392, %v3932
        %v4407 = vadd.f32 %v3151, %v3936
        %v4408 = vadd.f32 %v2396, %v3928
        %v4409 = vadd.f32 %v2398, %v3932
        %v4410 = vadd.f32 %v3156, %v3936
        %v4411 = vadd.f32 %v2402, %v3928
        %v4412 = vadd.f32 %v2404, %v3932
        %v4413 = vadd.f32 %v3161, %v3936
        %v4414 = vadd.f32 %v2408, %v3928
        %v4415 = vadd.f32 %v2410, %v3932
        %v4416 = vadd.f32 %v3166, %v3936
        %v4417 = vadd.f32 %v2414, %v3940
        %v4418 = vadd.f32 %v2416, %v3944
        %v4419 = vadd.f32 %v3171, %v3948
        %v4420 = vadd.f32 %v2420, %v3940
        %v4421 = vadd.f32 %v2422, %v3944
        %v4422 = vadd.f32 %v3176, %v3948
        %v4423 = vadd.f32 %v2426, %v3940
        %v4424 = vadd.f32 %v2428, %v3944
        %v4425 = vadd.f32 %v3181, %v3948
        %v4426 = vadd.f32 %v2432, %v3940
        %v4427 = vadd.f32 %v2434, %v3944
        %v4428 = vadd.f32 %v3186, %v3948
        %v4429 = vadd.f32 %v2438, %v3952
        %v4430 = vadd.f32 %v2440, %v3956
        %v4431 = vadd.f32 %v3191, %v3960
        %v4432 = vadd.f32 %v2444, %v3952
        %v4433 = vadd.f32 %v2446, %v3956
        %v4434 = vadd.f32 %v3196, %v3960
        %v4435 = vadd.f32 %v2450, %v3952
        %v4436 = vadd.f32 %v2452, %v3956
        %v4437 = vadd.f32 %v3201, %v3960
        %v4438 = vadd.f32 %v2456, %v3952
        %v4439 = vadd.f32 %v2458, %v3956
        %v4440 = vadd.f32 %v3206, %v3960
        %v4441 = vadd.f32 %v2462, %v3964
        %v4442 = vadd.f32 %v2464, %v3968
        %v4443 = vadd.f32 %v3211, %v3972
        %v4444 = vadd.f32 %v2468, %v3964
        %v4445 = vadd.f32 %v2470, %v3968
        %v4446 = vadd.f32 %v3216, %v3972
        %v4447 = vadd.f32 %v2474, %v3964
        %v4448 = vadd.f32 %v2476, %v3968
        %v4449 = vadd.f32 %v3221, %v3972
        %v4450 = vadd.f32 %v2480, %v3964
        %v4451 = vadd.f32 %v2482, %v3968
        %v4452 = vadd.f32 %v3226, %v3972
        %v4453 = vadd.f32 %v2486, %v3976
        %v4454 = vadd.f32 %v2488, %v3980
        %v4455 = vadd.f32 %v3231, %v3984
        %v4456 = vadd.f32 %v2492, %v3976
        %v4457 = vadd.f32 %v2494, %v3980
        %v4458 = vadd.f32 %v3236, %v3984
        %v4459 = vadd.f32 %v2498, %v3976
        %v4460 = vadd.f32 %v2500, %v3980
        %v4461 = vadd.f32 %v3241, %v3984
        %v4462 = vadd.f32 %v2504, %v3976
        %v4463 = vadd.f32 %v2506, %v3980
        %v4464 = vadd.f32 %v3246, %v3984
        %v4465 = vadd.f32 %v2510, %v3988
        %v4466 = vadd.f32 %v2512, %v3992
        %v4467 = vadd.f32 %v3251, %v3996
        %v4468 = vadd.f32 %v2516, %v3988
        %v4469 = vadd.f32 %v2518, %v3992
        %v4470 = vadd.f32 %v3256, %v3996
        %v4471 = vadd.f32 %v2522, %v3988
        %v4472 = vadd.f32 %v2524, %v3992
        %v4473 = vadd.f32 %v3261, %v3996
        %v4474 = vadd.f32 %v2528, %v3988
        %v4475 = vadd.f32 %v2530, %v3992
        %v4476 = vadd.f32 %v3266, %v3996
        %v4477 = vadd.f32 %v2534, %v4000
        %v4478 = vadd.f32 %v2536, %v4004
        %v4479 = vadd.f32 %v3271, %v4008
        %v4480 = vadd.f32 %v2540, %v4000
        %v4481 = vadd.f32 %v2542, %v4004
        %v4482 = vadd.f32 %v3276, %v4008
        %v4483 = vadd.f32 %v2546, %v4000
        %v4484 = vadd.f32 %v2548, %v4004
        %v4485 = vadd.f32 %v3281, %v4008
        %v4486 = vadd.f32 %v2552, %v4000
        %v4487 = vadd.f32 %v2554, %v4004
        %v4488 = vadd.f32 %v3286, %v4008
        %v4489 = vadd.f32 %v2558, %v4012
        %v4490 = vadd.f32 %v2560, %v4016
        %v4491 = vadd.f32 %v3291, %v4020
        %v4492 = vadd.f32 %v2564, %v4012
        %v4493 = vadd.f32 %v2566, %v4016
        %v4494 = vadd.f32 %v3296, %v4020
        %v4495 = vadd.f32 %v2570, %v4012
        %v4496 = vadd.f32 %v2572, %v4016
        %v4497 = vadd.f32 %v3301, %v4020
        %v4498 = vadd.f32 %v2576, %v4012
        %v4499 = vadd.f32 %v2578, %v4016
        %v4500 = vadd.f32 %v3306, %v4020
        %v4501 = vadd.f32 %v2582, %v4024
        %v4502 = vadd.f32 %v2584, %v4028
        %v4503 = vadd.f32 %v3311, %v4032
        %v4504 = vadd.f32 %v2588, %v4024
        %v4505 = vadd.f32 %v2590, %v4028
        %v4506 = vadd.f32 %v3316, %v4032
        %v4507 = vadd.f32 %v2594, %v4024
        %v4508 = vadd.f32 %v2596, %v4028
        %v4509 = vadd.f32 %v3321, %v4032
        %v4510 = vadd.f32 %v2600, %v4024
        %v4511 = vadd.f32 %v2602, %v4028
        %v4512 = vadd.f32 %v3326, %v4032
        %v4513 = vadd.f32 %v2606, %v4036
        %v4514 = vadd.f32 %v2608, %v4040
        %v4515 = vadd.f32 %v3331, %v4044
        %v4516 = vadd.f32 %v2612, %v4036
        %v4517 = vadd.f32 %v2614, %v4040
        %v4518 = vadd.f32 %v3336, %v4044
        %v4519 = vadd.f32 %v2618, %v4036
        %v4520 = vadd.f32 %v2620, %v4040
        %v4521 = vadd.f32 %v3341, %v4044
        %v4522 = vadd.f32 %v2624, %v4036
        %v4523 = vadd.f32 %v2626, %v4040
        %v4524 = vadd.f32 %v3346, %v4044
        %v4525 = vadd.f32 %v2630, %v4048
        %v4526 = vadd.f32 %v2632, %v4052
        %v4527 = vadd.f32 %v3351, %v4056
        %v4528 = vadd.f32 %v2636, %v4048
        %v4529 = vadd.f32 %v2638, %v4052
        %v4530 = vadd.f32 %v3356, %v4056
        %v4531 = vadd.f32 %v2642, %v4048
        %v4532 = vadd.f32 %v2644, %v4052
        %v4533 = vadd.f32 %v3361, %v4056
        %v4534 = vadd.f32 %v2648, %v4048
        %v4535 = vadd.f32 %v2650, %v4052
        %v4536 = vadd.f32 %v3366, %v4056
        %v4537 = vadd.f32 %v2654, %v4060
        %v4538 = vadd.f32 %v2656, %v4064
        %v4539 = vadd.f32 %v3371, %v4068
        %v4540 = vadd.f32 %v2660, %v4060
        %v4541 = vadd.f32 %v2662, %v4064
        %v4542 = vadd.f32 %v3376, %v4068
        %v4543 = vadd.f32 %v2666, %v4060
        %v4544 = vadd.f32 %v2668, %v4064
        %v4545 = vadd.f32 %v3381, %v4068
        %v4546 = vadd.f32 %v2672, %v4060
        %v4547 = vadd.f32 %v2674, %v4064
        %v4548 = vadd.f32 %v3386, %v4068
        %v4549 = vadd.f32 %v2678, %v4072
        %v4550 = vadd.f32 %v2680, %v4076
        %v4551 = vadd.f32 %v3391, %v4080
        %v4552 = vadd.f32 %v2684, %v4072
        %v4553 = vadd.f32 %v2686, %v4076
        %v4554 = vadd.f32 %v3396, %v4080
        %v4555 = vadd.f32 %v2690, %v4072
        %v4556 = vadd.f32 %v2692, %v4076
        %v4557 = vadd.f32 %v3401, %v4080
        %v4558 = vadd.f32 %v2696, %v4072
        %v4559 = vadd.f32 %v2698, %v4076
        %v4560 = vadd.f32 %v3406, %v4080
        %v4561 = vadd.f32 %v2702, %v4084
        %v4562 = vadd.f32 %v2704, %v4088
        %v4563 = vadd.f32 %v3411, %v4092
        %v4564 = vadd.f32 %v2708, %v4084
        %v4565 = vadd.f32 %v2710, %v4088
        %v4566 = vadd.f32 %v3416, %v4092
        %v4567 = vadd.f32 %v2714, %v4084
        %v4568 = vadd.f32 %v2716, %v4088
        %v4569 = vadd.f32 %v3421, %v4092
        %v4570 = vadd.f32 %v2720, %v4084
        %v4571 = vadd.f32 %v2722, %v4088
        %v4572 = vadd.f32 %v3426, %v4092
        %v4573 = vmul.f32 %v4189, 0.5
        %v4574 = vmul.f32 %v4190, 0.5
        %v4575 = vmul.f32 %v4191, 0.5
        %v4576 = vmul.f32 %v4192, 0.5
        %v4577 = vmul.f32 %v4193, 0.5
        %v4578 = vmul.f32 %v4194, 0.5
        %v4579 = vmul.f32 %v4195, 0.5
        %v4580 = vmul.f32 %v4196, 0.5
        %v4581 = vmul.f32 %v4197, 0.5
        %v4582 = vmul.f32 %v4198, 0.5
        %v4583 = vmul.f32 %v4199, 0.5
        %v4584 = vmul.f32 %v4200, 0.5
        %v4585 = vmul.f32 %v4201, 0.5
        %v4586 = vmul.f32 %v4202, 0.5
        %v4587 = vmul.f32 %v4203, 0.5
        %v4588 = vmul.f32 %v4204, 0.5
        %v4589 = vmul.f32 %v4205, 0.5
        %v4590 = vmul.f32 %v4206, 0.5
        %v4591 = vmul.f32 %v4207, 0.5
        %v4592 = vmul.f32 %v4208, 0.5
        %v4593 = vmul.f32 %v4209, 0.5
        %v4594 = vmul.f32 %v4210, 0.5
        %v4595 = vmul.f32 %v4211, 0.5
        %v4596 = vmul.f32 %v4212, 0.5
        %v4597 = vmul.f32 %v4213, 0.5
        %v4598 = vmul.f32 %v4214, 0.5
        %v4599 = vmul.f32 %v4215, 0.5
        %v4600 = vmul.f32 %v4216, 0.5
        %v4601 = vmul.f32 %v4217, 0.5
        %v4602 = vmul.f32 %v4218, 0.5
        %v4603 = vmul.f32 %v4219, 0.5
        %v4604 = vmul.f32 %v4220, 0.5
        %v4605 = vmul.f32 %v4221, 0.5
        %v4606 = vmul.f32 %v4222, 0.5
        %v4607 = vmul.f32 %v4223, 0.5
        %v4608 = vmul.f32 %v4224, 0.5
        %v4609 = vmul.f32 %v4225, 0.5
        %v4610 = vmul.f32 %v4226, 0.5
        %v4611 = vmul.f32 %v4227, 0.5
        %v4612 = vmul.f32 %v4228, 0.5
        %v4613 = vmul.f32 %v4229, 0.5
        %v4614 = vmul.f32 %v4230, 0.5
        %v4615 = vmul.f32 %v4231, 0.5
        %v4616 = vmul.f32 %v4232, 0.5
        %v4617 = vmul.f32 %v4233, 0.5
        %v4618 = vmul.f32 %v4234, 0.5
        %v4619 = vmul.f32 %v4235, 0.5
        %v4620 = vmul.f32 %v4236, 0.5
        %v4621 = vmul.f32 %v4237, 0.5
        %v4622 = vmul.f32 %v4238, 0.5
        %v4623 = vmul.f32 %v4239, 0.5
        %v4624 = vmul.f32 %v4240, 0.5
        %v4625 = vmul.f32 %v4241, 0.5
        %v4626 = vmul.f32 %v4242, 0.5
        %v4627 = vmul.f32 %v4243, 0.5
        %v4628 = vmul.f32 %v4244, 0.5
        %v4629 = vmul.f32 %v4245, 0.5
        %v4630 = vmul.f32 %v4246, 0.5
        %v4631 = vmul.f32 %v4247, 0.5
        %v4632 = vmul.f32 %v4248, 0.5
        %v4633 = vmul.f32 %v4249, 0.5
        %v4634 = vmul.f32 %v4250, 0.5
        %v4635 = vmul.f32 %v4251, 0.5
        %v4636 = vmul.f32 %v4252, 0.5
        %v4637 = vmul.f32 %v4253, 0.5
        %v4638 = vmul.f32 %v4254, 0.5
        %v4639 = vmul.f32 %v4255, 0.5
        %v4640 = vmul.f32 %v4256, 0.5
        %v4641 = vmul.f32 %v4257, 0.5
        %v4642 = vmul.f32 %v4258, 0.5
        %v4643 = vmul.f32 %v4259, 0.5
        %v4644 = vmul.f32 %v4260, 0.5
        %v4645 = vmul.f32 %v4261, 0.5
        %v4646 = vmul.f32 %v4262, 0.5
        %v4647 = vmul.f32 %v4263, 0.5
        %v4648 = vmul.f32 %v4264, 0.5
        %v4649 = vmul.f32 %v4265, 0.5
        %v4650 = vmul.f32 %v4266, 0.5
        %v4651 = vmul.f32 %v4267, 0.5
        %v4652 = vmul.f32 %v4268, 0.5
        %v4653 = vmul.f32 %v4269, 0.5
        %v4654 = vmul.f32 %v4270, 0.5
        %v4655 = vmul.f32 %v4271, 0.5
        %v4656 = vmul.f32 %v4272, 0.5
        %v4657 = vmul.f32 %v4273, 0.5
        %v4658 = vmul.f32 %v4274, 0.5
        %v4659 = vmul.f32 %v4275, 0.5
        %v4660 = vmul.f32 %v4276, 0.5
        %v4661 = vmul.f32 %v4277, 0.5
        %v4662 = vmul.f32 %v4278, 0.5
        %v4663 = vmul.f32 %v4279, 0.5
        %v4664 = vmul.f32 %v4280, 0.5
        %v4665 = vmul.f32 %v4281, 0.5
        %v4666 = vmul.f32 %v4282, 0.5
        %v4667 = vmul.f32 %v4283, 0.5
        %v4668 = vmul.f32 %v4284, 0.5
        %v4669 = vmul.f32 %v4285, 0.5
        %v4670 = vmul.f32 %v4286, 0.5
        %v4671 = vmul.f32 %v4287, 0.5
        %v4672 = vmul.f32 %v4288, 0.5
        %v4673 = vmul.f32 %v4289, 0.5
        %v4674 = vmul.f32 %v4290, 0.5
        %v4675 = vmul.f32 %v4291, 0.5
        %v4676 = vmul.f32 %v4292, 0.5
        %v4677 = vmul.f32 %v4293, 0.5
        %v4678 = vmul.f32 %v4294, 0.5
        %v4679 = vmul.f32 %v4295, 0.5
        %v4680 = vmul.f32 %v4296, 0.5
        %v4681 = vmul.f32 %v4297, 0.5
        %v4682 = vmul.f32 %v4298, 0.5
        %v4683 = vmul.f32 %v4299, 0.5
        %v4684 = vmul.f32 %v4300, 0.5
        %v4685 = vmul.f32 %v4301, 0.5
        %v4686 = vmul.f32 %v4302, 0.5
        %v4687 = vmul.f32 %v4303, 0.5
        %v4688 = vmul.f32 %v4304, 0.5
        %v4689 = vmul.f32 %v4305, 0.5
        %v4690 = vmul.f32 %v4306, 0.5
        %v4691 = vmul.f32 %v4307, 0.5
        %v4692 = vmul.f32 %v4308, 0.5
        %v4693 = vmul.f32 %v4309, 0.5
        %v4694 = vmul.f32 %v4310, 0.5
        %v4695 = vmul.f32 %v4311, 0.5
        %v4696 = vmul.f32 %v4312, 0.5
        %v4697 = vmul.f32 %v4313, 0.5
        %v4698 = vmul.f32 %v4314, 0.5
        %v4699 = vmul.f32 %v4315, 0.5
        %v4700 = vmul.f32 %v4316, 0.5
        %v4701 = vmul.f32 %v4317, 0.5
        %v4702 = vmul.f32 %v4318, 0.5
        %v4703 = vmul.f32 %v4319, 0.5
        %v4704 = vmul.f32 %v4320, 0.5
        %v4705 = vmul.f32 %v4321, 0.5
        %v4706 = vmul.f32 %v4322, 0.5
        %v4707 = vmul.f32 %v4323, 0.5
        %v4708 = vmul.f32 %v4324, 0.5
        %v4709 = vmul.f32 %v4325, 0.5
        %v4710 = vmul.f32 %v4326, 0.5
        %v4711 = vmul.f32 %v4327, 0.5
        %v4712 = vmul.f32 %v4328, 0.5
        %v4713 = vmul.f32 %v4329, 0.5
        %v4714 = vmul.f32 %v4330, 0.5
        %v4715 = vmul.f32 %v4331, 0.5
        %v4716 = vmul.f32 %v4332, 0.5
        %v4717 = vmul.f32 %v4333, 0.5
        %v4718 = vmul.f32 %v4334, 0.5
        %v4719 = vmul.f32 %v4335, 0.5
        %v4720 = vmul.f32 %v4336, 0.5
        %v4721 = vmul.f32 %v4337, 0.5
        %v4722 = vmul.f32 %v4338, 0.5
        %v4723 = vmul.f32 %v4339, 0.5
        %v4724 = vmul.f32 %v4340, 0.5
        %v4725 = vmul.f32 %v4341, 0.5
        %v4726 = vmul.f32 %v4342, 0.5
        %v4727 = vmul.f32 %v4343, 0.5
        %v4728 = vmul.f32 %v4344, 0.5
        %v4729 = vmul.f32 %v4345, 0.5
        %v4730 = vmul.f32 %v4346, 0.5
        %v4731 = vmul.f32 %v4347, 0.5
        %v4732 = vmul.f32 %v4348, 0.5
        %v4733 = vmul.f32 %v4349, 0.5
        %v4734 = vmul.f32 %v4350, 0.5
        %v4735 = vmul.f32 %v4351, 0.5
        %v4736 = vmul.f32 %v4352, 0.5
        %v4737 = vmul.f32 %v4353, 0.5
        %v4738 = vmul.f32 %v4354, 0.5
        %v4739 = vmul.f32 %v4355, 0.5
        %v4740 = vmul.f32 %v4356, 0.5
        %v4741 = vmul.f32 %v4357, 0.5
        %v4742 = vmul.f32 %v4358, 0.5
        %v4743 = vmul.f32 %v4359, 0.5
        %v4744 = vmul.f32 %v4360, 0.5
        %v4745 = vmul.f32 %v4361, 0.5
        %v4746 = vmul.f32 %v4362, 0.5
        %v4747 = vmul.f32 %v4363, 0.5
        %v4748 = vmul.f32 %v4364, 0.5
        %v4749 = vmul.f32 %v4365, 0.5
        %v4750 = vmul.f32 %v4366, 0.5
        %v4751 = vmul.f32 %v4367, 0.5
        %v4752 = vmul.f32 %v4368, 0.5
        %v4753 = vmul.f32 %v4369, 0.5
        %v4754 = vmul.f32 %v4370, 0.5
        %v4755 = vmul.f32 %v4371, 0.5
        %v4756 = vmul.f32 %v4372, 0.5
        %v4757 = vmul.f32 %v4373, 0.5
        %v4758 = vmul.f32 %v4374, 0.5
        %v4759 = vmul.f32 %v4375, 0.5
        %v4760 = vmul.f32 %v4376, 0.5
        %v4761 = vmul.f32 %v4377, 0.5
        %v4762 = vmul.f32 %v4378, 0.5
        %v4763 = vmul.f32 %v4379, 0.5
        %v4764 = vmul.f32 %v4380, 0.5
        %v4765 = vmul.f32 %v4381, 0.5
        %v4766 = vmul.f32 %v4382, 0.5
        %v4767 = vmul.f32 %v4383, 0.5
        %v4768 = vmul.f32 %v4384, 0.5
        %v4769 = vmul.f32 %v4385, 0.5
        %v4770 = vmul.f32 %v4386, 0.5
        %v4771 = vmul.f32 %v4387, 0.5
        %v4772 = vmul.f32 %v4388, 0.5
        %v4773 = vmul.f32 %v4389, 0.5
        %v4774 = vmul.f32 %v4390, 0.5
        %v4775 = vmul.f32 %v4391, 0.5
        %v4776 = vmul.f32 %v4392, 0.5
        %v4777 = vmul.f32 %v4393, 0.5
        %v4778 = vmul.f32 %v4394, 0.5
        %v4779 = vmul.f32 %v4395, 0.5
        %v4780 = vmul.f32 %v4396, 0.5
        %v4781 = vmul.f32 %v4397, 0.5
        %v4782 = vmul.f32 %v4398, 0.5
        %v4783 = vmul.f32 %v4399, 0.5
        %v4784 = vmul.f32 %v4400, 0.5
        %v4785 = vmul.f32 %v4401, 0.5
        %v4786 = vmul.f32 %v4402, 0.5
        %v4787 = vmul.f32 %v4403, 0.5
        %v4788 = vmul.f32 %v4404, 0.5
        %v4789 = vmul.f32 %v4405, 0.5
        %v4790 = vmul.f32 %v4406, 0.5
        %v4791 = vmul.f32 %v4407, 0.5
        %v4792 = vmul.f32 %v4408, 0.5
        %v4793 = vmul.f32 %v4409, 0.5
        %v4794 = vmul.f32 %v4410, 0.5
        %v4795 = vmul.f32 %v4411, 0.5
        %v4796 = vmul.f32 %v4412, 0.5
        %v4797 = vmul.f32 %v4413, 0.5
        %v4798 = vmul.f32 %v4414, 0.5
        %v4799 = vmul.f32 %v4415, 0.5
        %v4800 = vmul.f32 %v4416, 0.5
        %v4801 = vmul.f32 %v4417, 0.5
        %v4802 = vmul.f32 %v4418, 0.5
        %v4803 = vmul.f32 %v4419, 0.5
        %v4804 = vmul.f32 %v4420, 0.5
        %v4805 = vmul.f32 %v4421, 0.5
        %v4806 = vmul.f32 %v4422, 0.5
        %v4807 = vmul.f32 %v4423, 0.5
        %v4808 = vmul.f32 %v4424, 0.5
        %v4809 = vmul.f32 %v4425, 0.5
        %v4810 = vmul.f32 %v4426, 0.5
        %v4811 = vmul.f32 %v4427, 0.5
        %v4812 = vmul.f32 %v4428, 0.5
        %v4813 = vmul.f32 %v4429, 0.5
        %v4814 = vmul.f32 %v4430, 0.5
        %v4815 = vmul.f32 %v4431, 0.5
        %v4816 = vmul.f32 %v4432, 0.5
        %v4817 = vmul.f32 %v4433, 0.5
        %v4818 = vmul.f32 %v4434, 0.5
        %v4819 = vmul.f32 %v4435, 0.5
        %v4820 = vmul.f32 %v4436, 0.5
        %v4821 = vmul.f32 %v4437, 0.5
        %v4822 = vmul.f32 %v4438, 0.5
        %v4823 = vmul.f32 %v4439, 0.5
        %v4824 = vmul.f32 %v4440, 0.5
        %v4825 = vmul.f32 %v4441, 0.5
        %v4826 = vmul.f32 %v4442, 0.5
        %v4827 = vmul.f32 %v4443, 0.5
        %v4828 = vmul.f32 %v4444, 0.5
        %v4829 = vmul.f32 %v4445, 0.5
        %v4830 = vmul.f32 %v4446, 0.5
        %v4831 = vmul.f32 %v4447, 0.5
        %v4832 = vmul.f32 %v4448, 0.5
        %v4833 = vmul.f32 %v4449, 0.5
        %v4834 = vmul.f32 %v4450, 0.5
        %v4835 = vmul.f32 %v4451, 0.5
        %v4836 = vmul.f32 %v4452, 0.5
        %v4837 = vmul.f32 %v4453, 0.5
        %v4838 = vmul.f32 %v4454, 0.5
        %v4839 = vmul.f32 %v4455, 0.5
        %v4840 = vmul.f32 %v4456, 0.5
        %v4841 = vmul.f32 %v4457, 0.5
        %v4842 = vmul.f32 %v4458, 0.5
        %v4843 = vmul.f32 %v4459, 0.5
        %v4844 = vmul.f32 %v4460, 0.5
        %v4845 = vmul.f32 %v4461, 0.5
        %v4846 = vmul.f32 %v4462, 0.5
        %v4847 = vmul.f32 %v4463, 0.5
        %v4848 = vmul.f32 %v4464, 0.5
        %v4849 = vmul.f32 %v4465, 0.5
        %v4850 = vmul.f32 %v4466, 0.5
        %v4851 = vmul.f32 %v4467, 0.5
        %v4852 = vmul.f32 %v4468, 0.5
        %v4853 = vmul.f32 %v4469, 0.5
        %v4854 = vmul.f32 %v4470, 0.5
        %v4855 = vmul.f32 %v4471, 0.5
        %v4856 = vmul.f32 %v4472, 0.5
        %v4857 = vmul.f32 %v4473, 0.5
        %v4858 = vmul.f32 %v4474, 0.5
        %v4859 = vmul.f32 %v4475, 0.5
        %v4860 = vmul.f32 %v4476, 0.5
        %v4861 = vmul.f32 %v4477, 0.5
        %v4862 = vmul.f32 %v4478, 0.5
        %v4863 = vmul.f32 %v4479, 0.5
        %v4864 = vmul.f32 %v4480, 0.5
        %v4865 = vmul.f32 %v4481, 0.5
        %v4866 = vmul.f32 %v4482, 0.5
        %v4867 = vmul.f32 %v4483, 0.5
        %v4868 = vmul.f32 %v4484, 0.5
        %v4869 = vmul.f32 %v4485, 0.5
        %v4870 = vmul.f32 %v4486, 0.5
        %v4871 = vmul.f32 %v4487, 0.5
        %v4872 = vmul.f32 %v4488, 0.5
        %v4873 = vmul.f32 %v4489, 0.5
        %v4874 = vmul.f32 %v4490, 0.5
        %v4875 = vmul.f32 %v4491, 0.5
        %v4876 = vmul.f32 %v4492, 0.5
        %v4877 = vmul.f32 %v4493, 0.5
        %v4878 = vmul.f32 %v4494, 0.5
        %v4879 = vmul.f32 %v4495, 0.5
        %v4880 = vmul.f32 %v4496, 0.5
        %v4881 = vmul.f32 %v4497, 0.5
        %v4882 = vmul.f32 %v4498, 0.5
        %v4883 = vmul.f32 %v4499, 0.5
        %v4884 = vmul.f32 %v4500, 0.5
        %v4885 = vmul.f32 %v4501, 0.5
        %v4886 = vmul.f32 %v4502, 0.5
        %v4887 = vmul.f32 %v4503, 0.5
        %v4888 = vmul.f32 %v4504, 0.5
        %v4889 = vmul.f32 %v4505, 0.5
        %v4890 = vmul.f32 %v4506, 0.5
        %v4891 = vmul.f32 %v4507, 0.5
        %v4892 = vmul.f32 %v4508, 0.5
        %v4893 = vmul.f32 %v4509, 0.5
        %v4894 = vmul.f32 %v4510, 0.5
        %v4895 = vmul.f32 %v4511, 0.5
        %v4896 = vmul.f32 %v4512, 0.5
        %v4897 = vmul.f32 %v4513, 0.5
        %v4898 = vmul.f32 %v4514, 0.5
        %v4899 = vmul.f32 %v4515, 0.5
        %v4900 = vmul.f32 %v4516, 0.5
        %v4901 = vmul.f32 %v4517, 0.5
        %v4902 = vmul.f32 %v4518, 0.5
        %v4903 = vmul.f32 %v4519, 0.5
        %v4904 = vmul.f32 %v4520, 0.5
        %v4905 = vmul.f32 %v4521, 0.5
        %v4906 = vmul.f32 %v4522, 0.5
        %v4907 = vmul.f32 %v4523, 0.5
        %v4908 = vmul.f32 %v4524, 0.5
        %v4909 = vmul.f32 %v4525, 0.5
        %v4910 = vmul.f32 %v4526, 0.5
        %v4911 = vmul.f32 %v4527, 0.5
        %v4912 = vmul.f32 %v4528, 0.5
        %v4913 = vmul.f32 %v4529, 0.5
        %v4914 = vmul.f32 %v4530, 0.5
        %v4915 = vmul.f32 %v4531, 0.5
        %v4916 = vmul.f32 %v4532, 0.5
        %v4917 = vmul.f32 %v4533, 0.5
        %v4918 = vmul.f32 %v4534, 0.5
        %v4919 = vmul.f32 %v4535, 0.5
        %v4920 = vmul.f32 %v4536, 0.5
        %v4921 = vmul.f32 %v4537, 0.5
        %v4922 = vmul.f32 %v4538, 0.5
        %v4923 = vmul.f32 %v4539, 0.5
        %v4924 = vmul.f32 %v4540, 0.5
        %v4925 = vmul.f32 %v4541, 0.5
        %v4926 = vmul.f32 %v4542, 0.5
        %v4927 = vmul.f32 %v4543, 0.5
        %v4928 = vmul.f32 %v4544, 0.5
        %v4929 = vmul.f32 %v4545, 0.5
        %v4930 = vmul.f32 %v4546, 0.5
        %v4931 = vmul.f32 %v4547, 0.5
        %v4932 = vmul.f32 %v4548, 0.5
        %v4933 = vmul.f32 %v4549, 0.5
        %v4934 = vmul.f32 %v4550, 0.5
        %v4935 = vmul.f32 %v4551, 0.5
        %v4936 = vmul.f32 %v4552, 0.5
        %v4937 = vmul.f32 %v4553, 0.5
        %v4938 = vmul.f32 %v4554, 0.5
        %v4939 = vmul.f32 %v4555, 0.5
        %v4940 = vmul.f32 %v4556, 0.5
        %v4941 = vmul.f32 %v4557, 0.5
        %v4942 = vmul.f32 %v4558, 0.5
        %v4943 = vmul.f32 %v4559, 0.5
        %v4944 = vmul.f32 %v4560, 0.5
        %v4945 = vmul.f32 %v4561, 0.5
        %v4946 = vmul.f32 %v4562, 0.5
        %v4947 = vmul.f32 %v4563, 0.5
        %v4948 = vmul.f32 %v4564, 0.5
        %v4949 = vmul.f32 %v4565, 0.5
        %v4950 = vmul.f32 %v4566, 0.5
        %v4951 = vmul.f32 %v4567, 0.5
        %v4952 = vmul.f32 %v4568, 0.5
        %v4953 = vmul.f32 %v4569, 0.5
        %v4954 = vmul.f32 %v4570, 0.5
        %v4955 = vmul.f32 %v4571, 0.5
        %v4956 = vmul.f32 %v4572, 0.5
        %v4957 = vtanh.pop %v4573
        %v4958 = vtanh.pop %v4574
        %v4959 = vtanh.pop %v4575
        %v4960 = vtanh.pop %v4576
        %v4961 = vtanh.pop %v4577
        %v4962 = vtanh.pop %v4578
        %v4963 = vtanh.pop %v4579
        %v4964 = vtanh.pop %v4580
        %v4965 = vtanh.pop %v4581
        %v4966 = vtanh.pop %v4582
        %v4967 = vtanh.pop %v4583
        %v4968 = vtanh.pop %v4584
        %v4969 = vtanh.pop %v4585
        %v4970 = vtanh.pop %v4586
        %v4971 = vtanh.pop %v4587
        %v4972 = vtanh.pop %v4588
        %v4973 = vtanh.pop %v4589
        %v4974 = vtanh.pop %v4590
        %v4975 = vtanh.pop %v4591
        %v4976 = vtanh.pop %v4592
        %v4977 = vtanh.pop %v4593
        %v4978 = vtanh.pop %v4594
        %v4979 = vtanh.pop %v4595
        %v4980 = vtanh.pop %v4596
        %v4981 = vtanh.pop %v4597
        %v4982 = vtanh.pop %v4598
        %v4983 = vtanh.pop %v4599
        %v4984 = vtanh.pop %v4600
        %v4985 = vtanh.pop %v4601
        %v4986 = vtanh.pop %v4602
        %v4987 = vtanh.pop %v4603
        %v4988 = vtanh.pop %v4604
        %v4989 = vtanh.pop %v4605
        %v4990 = vtanh.pop %v4606
        %v4991 = vtanh.pop %v4607
        %v4992 = vtanh.pop %v4608
        %v4993 = vtanh.pop %v4609
        %v4994 = vtanh.pop %v4610
        %v4995 = vtanh.pop %v4611
        %v4996 = vtanh.pop %v4612
        %v4997 = vtanh.pop %v4613
        %v4998 = vtanh.pop %v4614
        %v4999 = vtanh.pop %v4615
        %v5000 = vtanh.pop %v4616
        %v5001 = vtanh.pop %v4617
        %v5002 = vtanh.pop %v4618
        %v5003 = vtanh.pop %v4619
        %v5004 = vtanh.pop %v4620
        %v5005 = vtanh.pop %v4621
        %v5006 = vtanh.pop %v4622
        %v5007 = vtanh.pop %v4623
        %v5008 = vtanh.pop %v4624
        %v5009 = vtanh.pop %v4625
        %v5010 = vtanh.pop %v4626
        %v5011 = vtanh.pop %v4627
        %v5012 = vtanh.pop %v4628
        %v5013 = vtanh.pop %v4629
        %v5014 = vtanh.pop %v4630
        %v5015 = vtanh.pop %v4631
        %v5016 = vtanh.pop %v4632
        %v5017 = vtanh.pop %v4633
        %v5018 = vtanh.pop %v4634
        %v5019 = vtanh.pop %v4635
        %v5020 = vtanh.pop %v4636
        %v5021 = vtanh.pop %v4637
        %v5022 = vtanh.pop %v4638
        %v5023 = vtanh.pop %v4639
        %v5024 = vtanh.pop %v4640
        %v5025 = vtanh.pop %v4641
        %v5026 = vtanh.pop %v4642
        %v5027 = vtanh.pop %v4643
        %v5028 = vtanh.pop %v4644
        %v5029 = vtanh.pop %v4645
        %v5030 = vtanh.pop %v4646
        %v5031 = vtanh.pop %v4647
        %v5032 = vtanh.pop %v4648
        %v5033 = vtanh.pop %v4649
        %v5034 = vtanh.pop %v4650
        %v5035 = vtanh.pop %v4651
        %v5036 = vtanh.pop %v4652
        %v5037 = vtanh.pop %v4653
        %v5038 = vtanh.pop %v4654
        %v5039 = vtanh.pop %v4655
        %v5040 = vtanh.pop %v4656
        %v5041 = vtanh.pop %v4657
        %v5042 = vtanh.pop %v4658
        %v5043 = vtanh.pop %v4659
        %v5044 = vtanh.pop %v4660
        %v5045 = vtanh.pop %v4661
        %v5046 = vtanh.pop %v4662
        %v5047 = vtanh.pop %v4663
        %v5048 = vtanh.pop %v4664
        %v5049 = vtanh.pop %v4665
        %v5050 = vtanh.pop %v4666
        %v5051 = vtanh.pop %v4667
        %v5052 = vtanh.pop %v4668
        %v5053 = vtanh.pop %v4669
        %v5054 = vtanh.pop %v4670
        %v5055 = vtanh.pop %v4671
        %v5056 = vtanh.pop %v4672
        %v5057 = vtanh.pop %v4673
        %v5058 = vtanh.pop %v4674
        %v5059 = vtanh.pop %v4675
        %v5060 = vtanh.pop %v4676
        %v5061 = vtanh.pop %v4677
        %v5062 = vtanh.pop %v4678
        %v5063 = vtanh.pop %v4679
        %v5064 = vtanh.pop %v4680
        %v5065 = vtanh.pop %v4681
        %v5066 = vtanh.pop %v4682
        %v5067 = vtanh.pop %v4683
        %v5068 = vtanh.pop %v4684
        %v5069 = vtanh.pop %v4685
        %v5070 = vtanh.pop %v4686
        %v5071 = vtanh.pop %v4687
        %v5072 = vtanh.pop %v4688
        %v5073 = vtanh.pop %v4689
        %v5074 = vtanh.pop %v4690
        %v5075 = vtanh.pop %v4691
        %v5076 = vtanh.pop %v4692
        %v5077 = vtanh.pop %v4693
        %v5078 = vtanh.pop %v4694
        %v5079 = vtanh.pop %v4695
        %v5080 = vtanh.pop %v4696
        %v5081 = vtanh.pop %v4697
        %v5082 = vtanh.pop %v4698
        %v5083 = vtanh.pop %v4699
        %v5084 = vtanh.pop %v4700
        %v5085 = vtanh.pop %v4701
        %v5086 = vtanh.pop %v4702
        %v5087 = vtanh.pop %v4703
        %v5088 = vtanh.pop %v4704
        %v5089 = vtanh.pop %v4705
        %v5090 = vtanh.pop %v4706
        %v5091 = vtanh.pop %v4707
        %v5092 = vtanh.pop %v4708
        %v5093 = vtanh.pop %v4709
        %v5094 = vtanh.pop %v4710
        %v5095 = vtanh.pop %v4711
        %v5096 = vtanh.pop %v4712
        %v5097 = vtanh.pop %v4713
        %v5098 = vtanh.pop %v4714
        %v5099 = vtanh.pop %v4715
        %v5100 = vtanh.pop %v4716
        %v5101 = vtanh.pop %v4717
        %v5102 = vtanh.pop %v4718
        %v5103 = vtanh.pop %v4719
        %v5104 = vtanh.pop %v4720
        %v5105 = vtanh.pop %v4721
        %v5106 = vtanh.pop %v4722
        %v5107 = vtanh.pop %v4723
        %v5108 = vtanh.pop %v4724
        %v5109 = vtanh.pop %v4725
        %v5110 = vtanh.pop %v4726
        %v5111 = vtanh.pop %v4727
        %v5112 = vtanh.pop %v4728
        %v5113 = vtanh.pop %v4729
        %v5114 = vtanh.pop %v4730
        %v5115 = vtanh.pop %v4731
        %v5116 = vtanh.pop %v4732
        %v5117 = vtanh.pop %v4733
        %v5118 = vtanh.pop %v4734
        %v5119 = vtanh.pop %v4735
        %v5120 = vtanh.pop %v4736
        %v5121 = vtanh.pop %v4737
        %v5122 = vtanh.pop %v4738
        %v5123 = vtanh.pop %v4739
        %v5124 = vtanh.pop %v4740
        %v5125 = vtanh.pop %v4741
        %v5126 = vtanh.pop %v4742
        %v5127 = vtanh.pop %v4743
        %v5128 = vtanh.pop %v4744
        %v5129 = vtanh.pop %v4745
        %v5130 = vtanh.pop %v4746
        %v5131 = vtanh.pop %v4747
        %v5132 = vtanh.pop %v4748
        %v5133 = vtanh.pop %v4749
        %v5134 = vtanh.pop %v4750
        %v5135 = vtanh.pop %v4751
        %v5136 = vtanh.pop %v4752
        %v5137 = vtanh.pop %v4753
        %v5138 = vtanh.pop %v4754
        %v5139 = vtanh.pop %v4755
        %v5140 = vtanh.pop %v4756
        %v5141 = vtanh.pop %v4757
        %v5142 = vtanh.pop %v4758
        %v5143 = vtanh.pop %v4759
        %v5144 = vtanh.pop %v4760
        %v5145 = vtanh.pop %v4761
        %v5146 = vtanh.pop %v4762
        %v5147 = vtanh.pop %v4763
        %v5148 = vtanh.pop %v4764
        %v5149 = vtanh.pop %v4765
        %v5150 = vtanh.pop %v4766
        %v5151 = vtanh.pop %v4767
        %v5152 = vtanh.pop %v4768
        %v5153 = vtanh.pop %v4769
        %v5154 = vtanh.pop %v4770
        %v5155 = vtanh.pop %v4771
        %v5156 = vtanh.pop %v4772
        %v5157 = vtanh.pop %v4773
        %v5158 = vtanh.pop %v4774
        %v5159 = vtanh.pop %v4775
        %v5160 = vtanh.pop %v4776
        %v5161 = vtanh.pop %v4777
        %v5162 = vtanh.pop %v4778
        %v5163 = vtanh.pop %v4779
        %v5164 = vtanh.pop %v4780
        %v5165 = vtanh.pop %v4781
        %v5166 = vtanh.pop %v4782
        %v5167 = vtanh.pop %v4783
        %v5168 = vtanh.pop %v4784
        %v5169 = vtanh.pop %v4785
        %v5170 = vtanh.pop %v4786
        %v5171 = vtanh.pop %v4787
        %v5172 = vtanh.pop %v4788
        %v5173 = vtanh.pop %v4789
        %v5174 = vtanh.pop %v4790
        %v5175 = vtanh.pop %v4791
        %v5176 = vtanh.pop %v4792
        %v5177 = vtanh.pop %v4793
        %v5178 = vtanh.pop %v4794
        %v5179 = vtanh.pop %v4795
        %v5180 = vtanh.pop %v4796
        %v5181 = vtanh.pop %v4797
        %v5182 = vtanh.pop %v4798
        %v5183 = vtanh.pop %v4799
        %v5184 = vtanh.pop %v4800
        %v5185 = vtanh.pop %v4801
        %v5186 = vtanh.pop %v4802
        %v5187 = vtanh.pop %v4803
        %v5188 = vtanh.pop %v4804
        %v5189 = vtanh.pop %v4805
        %v5190 = vtanh.pop %v4806
        %v5191 = vtanh.pop %v4807
        %v5192 = vtanh.pop %v4808
        %v5193 = vtanh.pop %v4809
        %v5194 = vtanh.pop %v4810
        %v5195 = vtanh.pop %v4811
        %v5196 = vtanh.pop %v4812
        %v5197 = vtanh.pop %v4813
        %v5198 = vtanh.pop %v4814
        %v5199 = vtanh.pop %v4815
        %v5200 = vtanh.pop %v4816
        %v5201 = vtanh.pop %v4817
        %v5202 = vtanh.pop %v4818
        %v5203 = vtanh.pop %v4819
        %v5204 = vtanh.pop %v4820
        %v5205 = vtanh.pop %v4821
        %v5206 = vtanh.pop %v4822
        %v5207 = vtanh.pop %v4823
        %v5208 = vtanh.pop %v4824
        %v5209 = vtanh.pop %v4825
        %v5210 = vtanh.pop %v4826
        %v5211 = vtanh.pop %v4827
        %v5212 = vtanh.pop %v4828
        %v5213 = vtanh.pop %v4829
        %v5214 = vtanh.pop %v4830
        %v5215 = vtanh.pop %v4831
        %v5216 = vtanh.pop %v4832
        %v5217 = vtanh.pop %v4833
        %v5218 = vtanh.pop %v4834
        %v5219 = vtanh.pop %v4835
        %v5220 = vtanh.pop %v4836
        %v5221 = vtanh.pop %v4837
        %v5222 = vtanh.pop %v4838
        %v5223 = vtanh.pop %v4839
        %v5224 = vtanh.pop %v4840
        %v5225 = vtanh.pop %v4841
        %v5226 = vtanh.pop %v4842
        %v5227 = vtanh.pop %v4843
        %v5228 = vtanh.pop %v4844
        %v5229 = vtanh.pop %v4845
        %v5230 = vtanh.pop %v4846
        %v5231 = vtanh.pop %v4847
        %v5232 = vtanh.pop %v4848
        %v5233 = vtanh.pop %v4849
        %v5234 = vtanh.pop %v4850
        %v5235 = vtanh.pop %v4851
        %v5236 = vtanh.pop %v4852
        %v5237 = vtanh.pop %v4853
        %v5238 = vtanh.pop %v4854
        %v5239 = vtanh.pop %v4855
        %v5240 = vtanh.pop %v4856
        %v5241 = vtanh.pop %v4857
        %v5242 = vtanh.pop %v4858
        %v5243 = vtanh.pop %v4859
        %v5244 = vtanh.pop %v4860
        %v5245 = vtanh.pop %v4861
        %v5246 = vtanh.pop %v4862
        %v5247 = vtanh.pop %v4863
        %v5248 = vtanh.pop %v4864
        %v5249 = vtanh.pop %v4865
        %v5250 = vtanh.pop %v4866
        %v5251 = vtanh.pop %v4867
        %v5252 = vtanh.pop %v4868
        %v5253 = vtanh.pop %v4869
        %v5254 = vtanh.pop %v4870
        %v5255 = vtanh.pop %v4871
        %v5256 = vtanh.pop %v4872
        %v5257 = vtanh.pop %v4873
        %v5258 = vtanh.pop %v4874
        %v5259 = vtanh.pop %v4875
        %v5260 = vtanh.pop %v4876
        %v5261 = vtanh.pop %v4877
        %v5262 = vtanh.pop %v4878
        %v5263 = vtanh.pop %v4879
        %v5264 = vtanh.pop %v4880
        %v5265 = vtanh.pop %v4881
        %v5266 = vtanh.pop %v4882
        %v5267 = vtanh.pop %v4883
        %v5268 = vtanh.pop %v4884
        %v5269 = vtanh.pop %v4885
        %v5270 = vtanh.pop %v4886
        %v5271 = vtanh.pop %v4887
        %v5272 = vtanh.pop %v4888
        %v5273 = vtanh.pop %v4889
        %v5274 = vtanh.pop %v4890
        %v5275 = vtanh.pop %v4891
        %v5276 = vtanh.pop %v4892
        %v5277 = vtanh.pop %v4893
        %v5278 = vtanh.pop %v4894
        %v5279 = vtanh.pop %v4895
        %v5280 = vtanh.pop %v4896
        %v5281 = vtanh.pop %v4897
        %v5282 = vtanh.pop %v4898
        %v5283 = vtanh.pop %v4899
        %v5284 = vtanh.pop %v4900
        %v5285 = vtanh.pop %v4901
        %v5286 = vtanh.pop %v4902
        %v5287 = vtanh.pop %v4903
        %v5288 = vtanh.pop %v4904
        %v5289 = vtanh.pop %v4905
        %v5290 = vtanh.pop %v4906
        %v5291 = vtanh.pop %v4907
        %v5292 = vtanh.pop %v4908
        %v5293 = vtanh.pop %v4909
        %v5294 = vtanh.pop %v4910
        %v5295 = vtanh.pop %v4911
        %v5296 = vtanh.pop %v4912
        %v5297 = vtanh.pop %v4913
        %v5298 = vtanh.pop %v4914
        %v5299 = vtanh.pop %v4915
        %v5300 = vtanh.pop %v4916
        %v5301 = vtanh.pop %v4917
        %v5302 = vtanh.pop %v4918
        %v5303 = vtanh.pop %v4919
        %v5304 = vtanh.pop %v4920
        %v5305 = vtanh.pop %v4921
        %v5306 = vtanh.pop %v4922
        %v5307 = vtanh.pop %v4923
        %v5308 = vtanh.pop %v4924
        %v5309 = vtanh.pop %v4925
        %v5310 = vtanh.pop %v4926
        %v5311 = vtanh.pop %v4927
        %v5312 = vtanh.pop %v4928
        %v5313 = vtanh.pop %v4929
        %v5314 = vtanh.pop %v4930
        %v5315 = vtanh.pop %v4931
        %v5316 = vtanh.pop %v4932
        %v5317 = vtanh.pop %v4933
        %v5318 = vtanh.pop %v4934
        %v5319 = vtanh.pop %v4935
        %v5320 = vtanh.pop %v4936
        %v5321 = vtanh.pop %v4937
        %v5322 = vtanh.pop %v4938
        %v5323 = vtanh.pop %v4939
        %v5324 = vtanh.pop %v4940
        %v5325 = vtanh.pop %v4941
        %v5326 = vtanh.pop %v4942
        %v5327 = vtanh.pop %v4943
        %v5328 = vtanh.pop %v4944
        %v5329 = vtanh.pop %v4945
        %v5330 = vtanh.pop %v4946
        %v5331 = vtanh.pop %v4947
        %v5332 = vtanh.pop %v4948
        %v5333 = vtanh.pop %v4949
        %v5334 = vtanh.pop %v4950
        %v5335 = vtanh.pop %v4951
        %v5336 = vtanh.pop %v4952
        %v5337 = vtanh.pop %v4953
        %v5338 = vtanh.pop %v4954
        %v5339 = vtanh.pop %v4955
        %v5340 = vtanh.pop %v4956
        %v5341 = vadd.f32 %v4957, 1.0
        %v5342 = vadd.f32 %v4958, 1.0
        %v5343 = vadd.f32 %v4959, 1.0
        %v5344 = vadd.f32 %v4960, 1.0
        %v5345 = vadd.f32 %v4961, 1.0
        %v5346 = vadd.f32 %v4962, 1.0
        %v5347 = vadd.f32 %v4963, 1.0
        %v5348 = vadd.f32 %v4964, 1.0
        %v5349 = vadd.f32 %v4965, 1.0
        %v5350 = vadd.f32 %v4966, 1.0
        %v5351 = vadd.f32 %v4967, 1.0
        %v5352 = vadd.f32 %v4968, 1.0
        %v5353 = vadd.f32 %v4969, 1.0
        %v5354 = vadd.f32 %v4970, 1.0
        %v5355 = vadd.f32 %v4971, 1.0
        %v5356 = vadd.f32 %v4972, 1.0
        %v5357 = vadd.f32 %v4973, 1.0
        %v5358 = vadd.f32 %v4974, 1.0
        %v5359 = vadd.f32 %v4975, 1.0
        %v5360 = vadd.f32 %v4976, 1.0
        %v5361 = vadd.f32 %v4977, 1.0
        %v5362 = vadd.f32 %v4978, 1.0
        %v5363 = vadd.f32 %v4979, 1.0
        %v5364 = vadd.f32 %v4980, 1.0
        %v5365 = vadd.f32 %v4981, 1.0
        %v5366 = vadd.f32 %v4982, 1.0
        %v5367 = vadd.f32 %v4983, 1.0
        %v5368 = vadd.f32 %v4984, 1.0
        %v5369 = vadd.f32 %v4985, 1.0
        %v5370 = vadd.f32 %v4986, 1.0
        %v5371 = vadd.f32 %v4987, 1.0
        %v5372 = vadd.f32 %v4988, 1.0
        %v5373 = vadd.f32 %v4989, 1.0
        %v5374 = vadd.f32 %v4990, 1.0
        %v5375 = vadd.f32 %v4991, 1.0
        %v5376 = vadd.f32 %v4992, 1.0
        %v5377 = vadd.f32 %v4993, 1.0
        %v5378 = vadd.f32 %v4994, 1.0
        %v5379 = vadd.f32 %v4995, 1.0
        %v5380 = vadd.f32 %v4996, 1.0
        %v5381 = vadd.f32 %v4997, 1.0
        %v5382 = vadd.f32 %v4998, 1.0
        %v5383 = vadd.f32 %v4999, 1.0
        %v5384 = vadd.f32 %v5000, 1.0
        %v5385 = vadd.f32 %v5001, 1.0
        %v5386 = vadd.f32 %v5002, 1.0
        %v5387 = vadd.f32 %v5003, 1.0
        %v5388 = vadd.f32 %v5004, 1.0
        %v5389 = vadd.f32 %v5005, 1.0
        %v5390 = vadd.f32 %v5006, 1.0
        %v5391 = vadd.f32 %v5007, 1.0
        %v5392 = vadd.f32 %v5008, 1.0
        %v5393 = vadd.f32 %v5009, 1.0
        %v5394 = vadd.f32 %v5010, 1.0
        %v5395 = vadd.f32 %v5011, 1.0
        %v5396 = vadd.f32 %v5012, 1.0
        %v5397 = vadd.f32 %v5013, 1.0
        %v5398 = vadd.f32 %v5014, 1.0
        %v5399 = vadd.f32 %v5015, 1.0
        %v5400 = vadd.f32 %v5016, 1.0
        %v5401 = vadd.f32 %v5017, 1.0
        %v5402 = vadd.f32 %v5018, 1.0
        %v5403 = vadd.f32 %v5019, 1.0
        %v5404 = vadd.f32 %v5020, 1.0
        %v5405 = vadd.f32 %v5021, 1.0
        %v5406 = vadd.f32 %v5022, 1.0
        %v5407 = vadd.f32 %v5023, 1.0
        %v5408 = vadd.f32 %v5024, 1.0
        %v5409 = vadd.f32 %v5025, 1.0
        %v5410 = vadd.f32 %v5026, 1.0
        %v5411 = vadd.f32 %v5027, 1.0
        %v5412 = vadd.f32 %v5028, 1.0
        %v5413 = vadd.f32 %v5029, 1.0
        %v5414 = vadd.f32 %v5030, 1.0
        %v5415 = vadd.f32 %v5031, 1.0
        %v5416 = vadd.f32 %v5032, 1.0
        %v5417 = vadd.f32 %v5033, 1.0
        %v5418 = vadd.f32 %v5034, 1.0
        %v5419 = vadd.f32 %v5035, 1.0
        %v5420 = vadd.f32 %v5036, 1.0
        %v5421 = vadd.f32 %v5037, 1.0
        %v5422 = vadd.f32 %v5038, 1.0
        %v5423 = vadd.f32 %v5039, 1.0
        %v5424 = vadd.f32 %v5040, 1.0
        %v5425 = vadd.f32 %v5041, 1.0
        %v5426 = vadd.f32 %v5042, 1.0
        %v5427 = vadd.f32 %v5043, 1.0
        %v5428 = vadd.f32 %v5044, 1.0
        %v5429 = vadd.f32 %v5045, 1.0
        %v5430 = vadd.f32 %v5046, 1.0
        %v5431 = vadd.f32 %v5047, 1.0
        %v5432 = vadd.f32 %v5048, 1.0
        %v5433 = vadd.f32 %v5049, 1.0
        %v5434 = vadd.f32 %v5050, 1.0
        %v5435 = vadd.f32 %v5051, 1.0
        %v5436 = vadd.f32 %v5052, 1.0
        %v5437 = vadd.f32 %v5053, 1.0
        %v5438 = vadd.f32 %v5054, 1.0
        %v5439 = vadd.f32 %v5055, 1.0
        %v5440 = vadd.f32 %v5056, 1.0
        %v5441 = vadd.f32 %v5057, 1.0
        %v5442 = vadd.f32 %v5058, 1.0
        %v5443 = vadd.f32 %v5059, 1.0
        %v5444 = vadd.f32 %v5060, 1.0
        %v5445 = vadd.f32 %v5061, 1.0
        %v5446 = vadd.f32 %v5062, 1.0
        %v5447 = vadd.f32 %v5063, 1.0
        %v5448 = vadd.f32 %v5064, 1.0
        %v5449 = vadd.f32 %v5065, 1.0
        %v5450 = vadd.f32 %v5066, 1.0
        %v5451 = vadd.f32 %v5067, 1.0
        %v5452 = vadd.f32 %v5068, 1.0
        %v5453 = vadd.f32 %v5069, 1.0
        %v5454 = vadd.f32 %v5070, 1.0
        %v5455 = vadd.f32 %v5071, 1.0
        %v5456 = vadd.f32 %v5072, 1.0
        %v5457 = vadd.f32 %v5073, 1.0
        %v5458 = vadd.f32 %v5074, 1.0
        %v5459 = vadd.f32 %v5075, 1.0
        %v5460 = vadd.f32 %v5076, 1.0
        %v5461 = vadd.f32 %v5077, 1.0
        %v5462 = vadd.f32 %v5078, 1.0
        %v5463 = vadd.f32 %v5079, 1.0
        %v5464 = vadd.f32 %v5080, 1.0
        %v5465 = vadd.f32 %v5081, 1.0
        %v5466 = vadd.f32 %v5082, 1.0
        %v5467 = vadd.f32 %v5083, 1.0
        %v5468 = vadd.f32 %v5084, 1.0
        %v5469 = vadd.f32 %v5085, 1.0
        %v5470 = vadd.f32 %v5086, 1.0
        %v5471 = vadd.f32 %v5087, 1.0
        %v5472 = vadd.f32 %v5088, 1.0
        %v5473 = vadd.f32 %v5089, 1.0
        %v5474 = vadd.f32 %v5090, 1.0
        %v5475 = vadd.f32 %v5091, 1.0
        %v5476 = vadd.f32 %v5092, 1.0
        %v5477 = vadd.f32 %v5093, 1.0
        %v5478 = vadd.f32 %v5094, 1.0
        %v5479 = vadd.f32 %v5095, 1.0
        %v5480 = vadd.f32 %v5096, 1.0
        %v5481 = vadd.f32 %v5097, 1.0
        %v5482 = vadd.f32 %v5098, 1.0
        %v5483 = vadd.f32 %v5099, 1.0
        %v5484 = vadd.f32 %v5100, 1.0
        %v5485 = vadd.f32 %v5101, 1.0
        %v5486 = vadd.f32 %v5102, 1.0
        %v5487 = vadd.f32 %v5103, 1.0
        %v5488 = vadd.f32 %v5104, 1.0
        %v5489 = vadd.f32 %v5105, 1.0
        %v5490 = vadd.f32 %v5106, 1.0
        %v5491 = vadd.f32 %v5107, 1.0
        %v5492 = vadd.f32 %v5108, 1.0
        %v5493 = vadd.f32 %v5109, 1.0
        %v5494 = vadd.f32 %v5110, 1.0
        %v5495 = vadd.f32 %v5111, 1.0
        %v5496 = vadd.f32 %v5112, 1.0
        %v5497 = vadd.f32 %v5113, 1.0
        %v5498 = vadd.f32 %v5114, 1.0
        %v5499 = vadd.f32 %v5115, 1.0
        %v5500 = vadd.f32 %v5116, 1.0
        %v5501 = vadd.f32 %v5117, 1.0
        %v5502 = vadd.f32 %v5118, 1.0
        %v5503 = vadd.f32 %v5119, 1.0
        %v5504 = vadd.f32 %v5120, 1.0
        %v5505 = vadd.f32 %v5121, 1.0
        %v5506 = vadd.f32 %v5122, 1.0
        %v5507 = vadd.f32 %v5123, 1.0
        %v5508 = vadd.f32 %v5124, 1.0
        %v5509 = vadd.f32 %v5125, 1.0
        %v5510 = vadd.f32 %v5126, 1.0
        %v5511 = vadd.f32 %v5127, 1.0
        %v5512 = vadd.f32 %v5128, 1.0
        %v5513 = vadd.f32 %v5129, 1.0
        %v5514 = vadd.f32 %v5130, 1.0
        %v5515 = vadd.f32 %v5131, 1.0
        %v5516 = vadd.f32 %v5132, 1.0
        %v5517 = vadd.f32 %v5133, 1.0
        %v5518 = vadd.f32 %v5134, 1.0
        %v5519 = vadd.f32 %v5135, 1.0
        %v5520 = vadd.f32 %v5136, 1.0
        %v5521 = vadd.f32 %v5137, 1.0
        %v5522 = vadd.f32 %v5138, 1.0
        %v5523 = vadd.f32 %v5139, 1.0
        %v5524 = vadd.f32 %v5140, 1.0
        %v5525 = vadd.f32 %v5141, 1.0
        %v5526 = vadd.f32 %v5142, 1.0
        %v5527 = vadd.f32 %v5143, 1.0
        %v5528 = vadd.f32 %v5144, 1.0
        %v5529 = vadd.f32 %v5145, 1.0
        %v5530 = vadd.f32 %v5146, 1.0
        %v5531 = vadd.f32 %v5147, 1.0
        %v5532 = vadd.f32 %v5148, 1.0
        %v5533 = vadd.f32 %v5149, 1.0
        %v5534 = vadd.f32 %v5150, 1.0
        %v5535 = vadd.f32 %v5151, 1.0
        %v5536 = vadd.f32 %v5152, 1.0
        %v5537 = vadd.f32 %v5153, 1.0
        %v5538 = vadd.f32 %v5154, 1.0
        %v5539 = vadd.f32 %v5155, 1.0
        %v5540 = vadd.f32 %v5156, 1.0
        %v5541 = vadd.f32 %v5157, 1.0
        %v5542 = vadd.f32 %v5158, 1.0
        %v5543 = vadd.f32 %v5159, 1.0
        %v5544 = vadd.f32 %v5160, 1.0
        %v5545 = vadd.f32 %v5161, 1.0
        %v5546 = vadd.f32 %v5162, 1.0
        %v5547 = vadd.f32 %v5163, 1.0
        %v5548 = vadd.f32 %v5164, 1.0
        %v5549 = vadd.f32 %v5165, 1.0
        %v5550 = vadd.f32 %v5166, 1.0
        %v5551 = vadd.f32 %v5167, 1.0
        %v5552 = vadd.f32 %v5168, 1.0
        %v5553 = vadd.f32 %v5169, 1.0
        %v5554 = vadd.f32 %v5170, 1.0
        %v5555 = vadd.f32 %v5171, 1.0
        %v5556 = vadd.f32 %v5172, 1.0
        %v5557 = vadd.f32 %v5173, 1.0
        %v5558 = vadd.f32 %v5174, 1.0
        %v5559 = vadd.f32 %v5175, 1.0
        %v5560 = vadd.f32 %v5176, 1.0
        %v5561 = vadd.f32 %v5177, 1.0
        %v5562 = vadd.f32 %v5178, 1.0
        %v5563 = vadd.f32 %v5179, 1.0
        %v5564 = vadd.f32 %v5180, 1.0
        %v5565 = vadd.f32 %v5181, 1.0
        %v5566 = vadd.f32 %v5182, 1.0
        %v5567 = vadd.f32 %v5183, 1.0
        %v5568 = vadd.f32 %v5184, 1.0
        %v5569 = vadd.f32 %v5185, 1.0
        %v5570 = vadd.f32 %v5186, 1.0
        %v5571 = vadd.f32 %v5187, 1.0
        %v5572 = vadd.f32 %v5188, 1.0
        %v5573 = vadd.f32 %v5189, 1.0
        %v5574 = vadd.f32 %v5190, 1.0
        %v5575 = vadd.f32 %v5191, 1.0
        %v5576 = vadd.f32 %v5192, 1.0
        %v5577 = vadd.f32 %v5193, 1.0
        %v5578 = vadd.f32 %v5194, 1.0
        %v5579 = vadd.f32 %v5195, 1.0
        %v5580 = vadd.f32 %v5196, 1.0
        %v5581 = vadd.f32 %v5197, 1.0
        %v5582 = vadd.f32 %v5198, 1.0
        %v5583 = vadd.f32 %v5199, 1.0
        %v5584 = vadd.f32 %v5200, 1.0
        %v5585 = vadd.f32 %v5201, 1.0
        %v5586 = vadd.f32 %v5202, 1.0
        %v5587 = vadd.f32 %v5203, 1.0
        %v5588 = vadd.f32 %v5204, 1.0
        %v5589 = vadd.f32 %v5205, 1.0
        %v5590 = vadd.f32 %v5206, 1.0
        %v5591 = vadd.f32 %v5207, 1.0
        %v5592 = vadd.f32 %v5208, 1.0
        %v5593 = vadd.f32 %v5209, 1.0
        %v5594 = vadd.f32 %v5210, 1.0
        %v5595 = vadd.f32 %v5211, 1.0
        %v5596 = vadd.f32 %v5212, 1.0
        %v5597 = vadd.f32 %v5213, 1.0
        %v5598 = vadd.f32 %v5214, 1.0
        %v5599 = vadd.f32 %v5215, 1.0
        %v5600 = vadd.f32 %v5216, 1.0
        %v5601 = vadd.f32 %v5217, 1.0
        %v5602 = vadd.f32 %v5218, 1.0
        %v5603 = vadd.f32 %v5219, 1.0
        %v5604 = vadd.f32 %v5220, 1.0
        %v5605 = vadd.f32 %v5221, 1.0
        %v5606 = vadd.f32 %v5222, 1.0
        %v5607 = vadd.f32 %v5223, 1.0
        %v5608 = vadd.f32 %v5224, 1.0
        %v5609 = vadd.f32 %v5225, 1.0
        %v5610 = vadd.f32 %v5226, 1.0
        %v5611 = vadd.f32 %v5227, 1.0
        %v5612 = vadd.f32 %v5228, 1.0
        %v5613 = vadd.f32 %v5229, 1.0
        %v5614 = vadd.f32 %v5230, 1.0
        %v5615 = vadd.f32 %v5231, 1.0
        %v5616 = vadd.f32 %v5232, 1.0
        %v5617 = vadd.f32 %v5233, 1.0
        %v5618 = vadd.f32 %v5234, 1.0
        %v5619 = vadd.f32 %v5235, 1.0
        %v5620 = vadd.f32 %v5236, 1.0
        %v5621 = vadd.f32 %v5237, 1.0
        %v5622 = vadd.f32 %v5238, 1.0
        %v5623 = vadd.f32 %v5239, 1.0
        %v5624 = vadd.f32 %v5240, 1.0
        %v5625 = vadd.f32 %v5241, 1.0
        %v5626 = vadd.f32 %v5242, 1.0
        %v5627 = vadd.f32 %v5243, 1.0
        %v5628 = vadd.f32 %v5244, 1.0
        %v5629 = vadd.f32 %v5245, 1.0
        %v5630 = vadd.f32 %v5246, 1.0
        %v5631 = vadd.f32 %v5247, 1.0
        %v5632 = vadd.f32 %v5248, 1.0
        %v5633 = vadd.f32 %v5249, 1.0
        %v5634 = vadd.f32 %v5250, 1.0
        %v5635 = vadd.f32 %v5251, 1.0
        %v5636 = vadd.f32 %v5252, 1.0
        %v5637 = vadd.f32 %v5253, 1.0
        %v5638 = vadd.f32 %v5254, 1.0
        %v5639 = vadd.f32 %v5255, 1.0
        %v5640 = vadd.f32 %v5256, 1.0
        %v5641 = vadd.f32 %v5257, 1.0
        %v5642 = vadd.f32 %v5258, 1.0
        %v5643 = vadd.f32 %v5259, 1.0
        %v5644 = vadd.f32 %v5260, 1.0
        %v5645 = vadd.f32 %v5261, 1.0
        %v5646 = vadd.f32 %v5262, 1.0
        %v5647 = vadd.f32 %v5263, 1.0
        %v5648 = vadd.f32 %v5264, 1.0
        %v5649 = vadd.f32 %v5265, 1.0
        %v5650 = vadd.f32 %v5266, 1.0
        %v5651 = vadd.f32 %v5267, 1.0
        %v5652 = vadd.f32 %v5268, 1.0
        %v5653 = vadd.f32 %v5269, 1.0
        %v5654 = vadd.f32 %v5270, 1.0
        %v5655 = vadd.f32 %v5271, 1.0
        %v5656 = vadd.f32 %v5272, 1.0
        %v5657 = vadd.f32 %v5273, 1.0
        %v5658 = vadd.f32 %v5274, 1.0
        %v5659 = vadd.f32 %v5275, 1.0
        %v5660 = vadd.f32 %v5276, 1.0
        %v5661 = vadd.f32 %v5277, 1.0
        %v5662 = vadd.f32 %v5278, 1.0
        %v5663 = vadd.f32 %v5279, 1.0
        %v5664 = vadd.f32 %v5280, 1.0
        %v5665 = vadd.f32 %v5281, 1.0
        %v5666 = vadd.f32 %v5282, 1.0
        %v5667 = vadd.f32 %v5283, 1.0
        %v5668 = vadd.f32 %v5284, 1.0
        %v5669 = vadd.f32 %v5285, 1.0
        %v5670 = vadd.f32 %v5286, 1.0
        %v5671 = vadd.f32 %v5287, 1.0
        %v5672 = vadd.f32 %v5288, 1.0
        %v5673 = vadd.f32 %v5289, 1.0
        %v5674 = vadd.f32 %v5290, 1.0
        %v5675 = vadd.f32 %v5291, 1.0
        %v5676 = vadd.f32 %v5292, 1.0
        %v5677 = vadd.f32 %v5293, 1.0
        %v5678 = vadd.f32 %v5294, 1.0
        %v5679 = vadd.f32 %v5295, 1.0
        %v5680 = vadd.f32 %v5296, 1.0
        %v5681 = vadd.f32 %v5297, 1.0
        %v5682 = vadd.f32 %v5298, 1.0
        %v5683 = vadd.f32 %v5299, 1.0
        %v5684 = vadd.f32 %v5300, 1.0
        %v5685 = vadd.f32 %v5301, 1.0
        %v5686 = vadd.f32 %v5302, 1.0
        %v5687 = vadd.f32 %v5303, 1.0
        %v5688 = vadd.f32 %v5304, 1.0
        %v5689 = vadd.f32 %v5305, 1.0
        %v5690 = vadd.f32 %v5306, 1.0
        %v5691 = vadd.f32 %v5307, 1.0
        %v5692 = vadd.f32 %v5308, 1.0
        %v5693 = vadd.f32 %v5309, 1.0
        %v5694 = vadd.f32 %v5310, 1.0
        %v5695 = vadd.f32 %v5311, 1.0
        %v5696 = vadd.f32 %v5312, 1.0
        %v5697 = vadd.f32 %v5313, 1.0
        %v5698 = vadd.f32 %v5314, 1.0
        %v5699 = vadd.f32 %v5315, 1.0
        %v5700 = vadd.f32 %v5316, 1.0
        %v5701 = vadd.f32 %v5317, 1.0
        %v5702 = vadd.f32 %v5318, 1.0
        %v5703 = vadd.f32 %v5319, 1.0
        %v5704 = vadd.f32 %v5320, 1.0
        %v5705 = vadd.f32 %v5321, 1.0
        %v5706 = vadd.f32 %v5322, 1.0
        %v5707 = vadd.f32 %v5323, 1.0
        %v5708 = vadd.f32 %v5324, 1.0
        %v5709 = vadd.f32 %v5325, 1.0
        %v5710 = vadd.f32 %v5326, 1.0
        %v5711 = vadd.f32 %v5327, 1.0
        %v5712 = vadd.f32 %v5328, 1.0
        %v5713 = vadd.f32 %v5329, 1.0
        %v5714 = vadd.f32 %v5330, 1.0
        %v5715 = vadd.f32 %v5331, 1.0
        %v5716 = vadd.f32 %v5332, 1.0
        %v5717 = vadd.f32 %v5333, 1.0
        %v5718 = vadd.f32 %v5334, 1.0
        %v5719 = vadd.f32 %v5335, 1.0
        %v5720 = vadd.f32 %v5336, 1.0
        %v5721 = vadd.f32 %v5337, 1.0
        %v5722 = vadd.f32 %v5338, 1.0
        %v5723 = vadd.f32 %v5339, 1.0
        %v5724 = vadd.f32 %v5340, 1.0
        %v5725 = vmul.f32 %v5341, 0.5
        %v5726 = vmul.f32 %v5342, 0.5
        %v5727 = vmul.f32 %v5343, 0.5
        %v5728 = vmul.f32 %v5344, 0.5
        %v5729 = vmul.f32 %v5345, 0.5
        %v5730 = vmul.f32 %v5346, 0.5
        %v5731 = vmul.f32 %v5347, 0.5
        %v5732 = vmul.f32 %v5348, 0.5
        %v5733 = vmul.f32 %v5349, 0.5
        %v5734 = vmul.f32 %v5350, 0.5
        %v5735 = vmul.f32 %v5351, 0.5
        %v5736 = vmul.f32 %v5352, 0.5
        %v5737 = vmul.f32 %v5353, 0.5
        %v5738 = vmul.f32 %v5354, 0.5
        %v5739 = vmul.f32 %v5355, 0.5
        %v5740 = vmul.f32 %v5356, 0.5
        %v5741 = vmul.f32 %v5357, 0.5
        %v5742 = vmul.f32 %v5358, 0.5
        %v5743 = vmul.f32 %v5359, 0.5
        %v5744 = vmul.f32 %v5360, 0.5
        %v5745 = vmul.f32 %v5361, 0.5
        %v5746 = vmul.f32 %v5362, 0.5
        %v5747 = vmul.f32 %v5363, 0.5
        %v5748 = vmul.f32 %v5364, 0.5
        %v5749 = vmul.f32 %v5365, 0.5
        %v5750 = vmul.f32 %v5366, 0.5
        %v5751 = vmul.f32 %v5367, 0.5
        %v5752 = vmul.f32 %v5368, 0.5
        %v5753 = vmul.f32 %v5369, 0.5
        %v5754 = vmul.f32 %v5370, 0.5
        %v5755 = vmul.f32 %v5371, 0.5
        %v5756 = vmul.f32 %v5372, 0.5
        %v5757 = vmul.f32 %v5373, 0.5
        %v5758 = vmul.f32 %v5374, 0.5
        %v5759 = vmul.f32 %v5375, 0.5
        %v5760 = vmul.f32 %v5376, 0.5
        %v5761 = vmul.f32 %v5377, 0.5
        %v5762 = vmul.f32 %v5378, 0.5
        %v5763 = vmul.f32 %v5379, 0.5
        %v5764 = vmul.f32 %v5380, 0.5
        %v5765 = vmul.f32 %v5381, 0.5
        %v5766 = vmul.f32 %v5382, 0.5
        %v5767 = vmul.f32 %v5383, 0.5
        %v5768 = vmul.f32 %v5384, 0.5
        %v5769 = vmul.f32 %v5385, 0.5
        %v5770 = vmul.f32 %v5386, 0.5
        %v5771 = vmul.f32 %v5387, 0.5
        %v5772 = vmul.f32 %v5388, 0.5
        %v5773 = vmul.f32 %v5389, 0.5
        %v5774 = vmul.f32 %v5390, 0.5
        %v5775 = vmul.f32 %v5391, 0.5
        %v5776 = vmul.f32 %v5392, 0.5
        %v5777 = vmul.f32 %v5393, 0.5
        %v5778 = vmul.f32 %v5394, 0.5
        %v5779 = vmul.f32 %v5395, 0.5
        %v5780 = vmul.f32 %v5396, 0.5
        %v5781 = vmul.f32 %v5397, 0.5
        %v5782 = vmul.f32 %v5398, 0.5
        %v5783 = vmul.f32 %v5399, 0.5
        %v5784 = vmul.f32 %v5400, 0.5
        %v5785 = vmul.f32 %v5401, 0.5
        %v5786 = vmul.f32 %v5402, 0.5
        %v5787 = vmul.f32 %v5403, 0.5
        %v5788 = vmul.f32 %v5404, 0.5
        %v5789 = vmul.f32 %v5405, 0.5
        %v5790 = vmul.f32 %v5406, 0.5
        %v5791 = vmul.f32 %v5407, 0.5
        %v5792 = vmul.f32 %v5408, 0.5
        %v5793 = vmul.f32 %v5409, 0.5
        %v5794 = vmul.f32 %v5410, 0.5
        %v5795 = vmul.f32 %v5411, 0.5
        %v5796 = vmul.f32 %v5412, 0.5
        %v5797 = vmul.f32 %v5413, 0.5
        %v5798 = vmul.f32 %v5414, 0.5
        %v5799 = vmul.f32 %v5415, 0.5
        %v5800 = vmul.f32 %v5416, 0.5
        %v5801 = vmul.f32 %v5417, 0.5
        %v5802 = vmul.f32 %v5418, 0.5
        %v5803 = vmul.f32 %v5419, 0.5
        %v5804 = vmul.f32 %v5420, 0.5
        %v5805 = vmul.f32 %v5421, 0.5
        %v5806 = vmul.f32 %v5422, 0.5
        %v5807 = vmul.f32 %v5423, 0.5
        %v5808 = vmul.f32 %v5424, 0.5
        %v5809 = vmul.f32 %v5425, 0.5
        %v5810 = vmul.f32 %v5426, 0.5
        %v5811 = vmul.f32 %v5427, 0.5
        %v5812 = vmul.f32 %v5428, 0.5
        %v5813 = vmul.f32 %v5429, 0.5
        %v5814 = vmul.f32 %v5430, 0.5
        %v5815 = vmul.f32 %v5431, 0.5
        %v5816 = vmul.f32 %v5432, 0.5
        %v5817 = vmul.f32 %v5433, 0.5
        %v5818 = vmul.f32 %v5434, 0.5
        %v5819 = vmul.f32 %v5435, 0.5
        %v5820 = vmul.f32 %v5436, 0.5
        %v5821 = vmul.f32 %v5437, 0.5
        %v5822 = vmul.f32 %v5438, 0.5
        %v5823 = vmul.f32 %v5439, 0.5
        %v5824 = vmul.f32 %v5440, 0.5
        %v5825 = vmul.f32 %v5441, 0.5
        %v5826 = vmul.f32 %v5442, 0.5
        %v5827 = vmul.f32 %v5443, 0.5
        %v5828 = vmul.f32 %v5444, 0.5
        %v5829 = vmul.f32 %v5445, 0.5
        %v5830 = vmul.f32 %v5446, 0.5
        %v5831 = vmul.f32 %v5447, 0.5
        %v5832 = vmul.f32 %v5448, 0.5
        %v5833 = vmul.f32 %v5449, 0.5
        %v5834 = vmul.f32 %v5450, 0.5
        %v5835 = vmul.f32 %v5451, 0.5
        %v5836 = vmul.f32 %v5452, 0.5
        %v5837 = vmul.f32 %v5453, 0.5
        %v5838 = vmul.f32 %v5454, 0.5
        %v5839 = vmul.f32 %v5455, 0.5
        %v5840 = vmul.f32 %v5456, 0.5
        %v5841 = vmul.f32 %v5457, 0.5
        %v5842 = vmul.f32 %v5458, 0.5
        %v5843 = vmul.f32 %v5459, 0.5
        %v5844 = vmul.f32 %v5460, 0.5
        %v5845 = vmul.f32 %v5461, 0.5
        %v5846 = vmul.f32 %v5462, 0.5
        %v5847 = vmul.f32 %v5463, 0.5
        %v5848 = vmul.f32 %v5464, 0.5
        %v5849 = vmul.f32 %v5465, 0.5
        %v5850 = vmul.f32 %v5466, 0.5
        %v5851 = vmul.f32 %v5467, 0.5
        %v5852 = vmul.f32 %v5468, 0.5
        %v5853 = vmul.f32 %v5469, 0.5
        %v5854 = vmul.f32 %v5470, 0.5
        %v5855 = vmul.f32 %v5471, 0.5
        %v5856 = vmul.f32 %v5472, 0.5
        %v5857 = vmul.f32 %v5473, 0.5
        %v5858 = vmul.f32 %v5474, 0.5
        %v5859 = vmul.f32 %v5475, 0.5
        %v5860 = vmul.f32 %v5476, 0.5
        %v5861 = vmul.f32 %v5477, 0.5
        %v5862 = vmul.f32 %v5478, 0.5
        %v5863 = vmul.f32 %v5479, 0.5
        %v5864 = vmul.f32 %v5480, 0.5
        %v5865 = vmul.f32 %v5481, 0.5
        %v5866 = vmul.f32 %v5482, 0.5
        %v5867 = vmul.f32 %v5483, 0.5
        %v5868 = vmul.f32 %v5484, 0.5
        %v5869 = vmul.f32 %v5485, 0.5
        %v5870 = vmul.f32 %v5486, 0.5
        %v5871 = vmul.f32 %v5487, 0.5
        %v5872 = vmul.f32 %v5488, 0.5
        %v5873 = vmul.f32 %v5489, 0.5
        %v5874 = vmul.f32 %v5490, 0.5
        %v5875 = vmul.f32 %v5491, 0.5
        %v5876 = vmul.f32 %v5492, 0.5
        %v5877 = vmul.f32 %v5493, 0.5
        %v5878 = vmul.f32 %v5494, 0.5
        %v5879 = vmul.f32 %v5495, 0.5
        %v5880 = vmul.f32 %v5496, 0.5
        %v5881 = vmul.f32 %v5497, 0.5
        %v5882 = vmul.f32 %v5498, 0.5
        %v5883 = vmul.f32 %v5499, 0.5
        %v5884 = vmul.f32 %v5500, 0.5
        %v5885 = vmul.f32 %v5501, 0.5
        %v5886 = vmul.f32 %v5502, 0.5
        %v5887 = vmul.f32 %v5503, 0.5
        %v5888 = vmul.f32 %v5504, 0.5
        %v5889 = vmul.f32 %v5505, 0.5
        %v5890 = vmul.f32 %v5506, 0.5
        %v5891 = vmul.f32 %v5507, 0.5
        %v5892 = vmul.f32 %v5508, 0.5
        %v5893 = vmul.f32 %v5509, 0.5
        %v5894 = vmul.f32 %v5510, 0.5
        %v5895 = vmul.f32 %v5511, 0.5
        %v5896 = vmul.f32 %v5512, 0.5
        %v5897 = vmul.f32 %v5513, 0.5
        %v5898 = vmul.f32 %v5514, 0.5
        %v5899 = vmul.f32 %v5515, 0.5
        %v5900 = vmul.f32 %v5516, 0.5
        %v5901 = vmul.f32 %v5517, 0.5
        %v5902 = vmul.f32 %v5518, 0.5
        %v5903 = vmul.f32 %v5519, 0.5
        %v5904 = vmul.f32 %v5520, 0.5
        %v5905 = vmul.f32 %v5521, 0.5
        %v5906 = vmul.f32 %v5522, 0.5
        %v5907 = vmul.f32 %v5523, 0.5
        %v5908 = vmul.f32 %v5524, 0.5
        %v5909 = vmul.f32 %v5525, 0.5
        %v5910 = vmul.f32 %v5526, 0.5
        %v5911 = vmul.f32 %v5527, 0.5
        %v5912 = vmul.f32 %v5528, 0.5
        %v5913 = vmul.f32 %v5529, 0.5
        %v5914 = vmul.f32 %v5530, 0.5
        %v5915 = vmul.f32 %v5531, 0.5
        %v5916 = vmul.f32 %v5532, 0.5
        %v5917 = vmul.f32 %v5533, 0.5
        %v5918 = vmul.f32 %v5534, 0.5
        %v5919 = vmul.f32 %v5535, 0.5
        %v5920 = vmul.f32 %v5536, 0.5
        %v5921 = vmul.f32 %v5537, 0.5
        %v5922 = vmul.f32 %v5538, 0.5
        %v5923 = vmul.f32 %v5539, 0.5
        %v5924 = vmul.f32 %v5540, 0.5
        %v5925 = vmul.f32 %v5541, 0.5
        %v5926 = vmul.f32 %v5542, 0.5
        %v5927 = vmul.f32 %v5543, 0.5
        %v5928 = vmul.f32 %v5544, 0.5
        %v5929 = vmul.f32 %v5545, 0.5
        %v5930 = vmul.f32 %v5546, 0.5
        %v5931 = vmul.f32 %v5547, 0.5
        %v5932 = vmul.f32 %v5548, 0.5
        %v5933 = vmul.f32 %v5549, 0.5
        %v5934 = vmul.f32 %v5550, 0.5
        %v5935 = vmul.f32 %v5551, 0.5
        %v5936 = vmul.f32 %v5552, 0.5
        %v5937 = vmul.f32 %v5553, 0.5
        %v5938 = vmul.f32 %v5554, 0.5
        %v5939 = vmul.f32 %v5555, 0.5
        %v5940 = vmul.f32 %v5556, 0.5
        %v5941 = vmul.f32 %v5557, 0.5
        %v5942 = vmul.f32 %v5558, 0.5
        %v5943 = vmul.f32 %v5559, 0.5
        %v5944 = vmul.f32 %v5560, 0.5
        %v5945 = vmul.f32 %v5561, 0.5
        %v5946 = vmul.f32 %v5562, 0.5
        %v5947 = vmul.f32 %v5563, 0.5
        %v5948 = vmul.f32 %v5564, 0.5
        %v5949 = vmul.f32 %v5565, 0.5
        %v5950 = vmul.f32 %v5566, 0.5
        %v5951 = vmul.f32 %v5567, 0.5
        %v5952 = vmul.f32 %v5568, 0.5
        %v5953 = vmul.f32 %v5569, 0.5
        %v5954 = vmul.f32 %v5570, 0.5
        %v5955 = vmul.f32 %v5571, 0.5
        %v5956 = vmul.f32 %v5572, 0.5
        %v5957 = vmul.f32 %v5573, 0.5
        %v5958 = vmul.f32 %v5574, 0.5
        %v5959 = vmul.f32 %v5575, 0.5
        %v5960 = vmul.f32 %v5576, 0.5
        %v5961 = vmul.f32 %v5577, 0.5
        %v5962 = vmul.f32 %v5578, 0.5
        %v5963 = vmul.f32 %v5579, 0.5
        %v5964 = vmul.f32 %v5580, 0.5
        %v5965 = vmul.f32 %v5581, 0.5
        %v5966 = vmul.f32 %v5582, 0.5
        %v5967 = vmul.f32 %v5583, 0.5
        %v5968 = vmul.f32 %v5584, 0.5
        %v5969 = vmul.f32 %v5585, 0.5
        %v5970 = vmul.f32 %v5586, 0.5
        %v5971 = vmul.f32 %v5587, 0.5
        %v5972 = vmul.f32 %v5588, 0.5
        %v5973 = vmul.f32 %v5589, 0.5
        %v5974 = vmul.f32 %v5590, 0.5
        %v5975 = vmul.f32 %v5591, 0.5
        %v5976 = vmul.f32 %v5592, 0.5
        %v5977 = vmul.f32 %v5593, 0.5
        %v5978 = vmul.f32 %v5594, 0.5
        %v5979 = vmul.f32 %v5595, 0.5
        %v5980 = vmul.f32 %v5596, 0.5
        %v5981 = vmul.f32 %v5597, 0.5
        %v5982 = vmul.f32 %v5598, 0.5
        %v5983 = vmul.f32 %v5599, 0.5
        %v5984 = vmul.f32 %v5600, 0.5
        %v5985 = vmul.f32 %v5601, 0.5
        %v5986 = vmul.f32 %v5602, 0.5
        %v5987 = vmul.f32 %v5603, 0.5
        %v5988 = vmul.f32 %v5604, 0.5
        %v5989 = vmul.f32 %v5605, 0.5
        %v5990 = vmul.f32 %v5606, 0.5
        %v5991 = vmul.f32 %v5607, 0.5
        %v5992 = vmul.f32 %v5608, 0.5
        %v5993 = vmul.f32 %v5609, 0.5
        %v5994 = vmul.f32 %v5610, 0.5
        %v5995 = vmul.f32 %v5611, 0.5
        %v5996 = vmul.f32 %v5612, 0.5
        %v5997 = vmul.f32 %v5613, 0.5
        %v5998 = vmul.f32 %v5614, 0.5
        %v5999 = vmul.f32 %v5615, 0.5
        %v6000 = vmul.f32 %v5616, 0.5
        %v6001 = vmul.f32 %v5617, 0.5
        %v6002 = vmul.f32 %v5618, 0.5
        %v6003 = vmul.f32 %v5619, 0.5
        %v6004 = vmul.f32 %v5620, 0.5
        %v6005 = vmul.f32 %v5621, 0.5
        %v6006 = vmul.f32 %v5622, 0.5
        %v6007 = vmul.f32 %v5623, 0.5
        %v6008 = vmul.f32 %v5624, 0.5
        %v6009 = vmul.f32 %v5625, 0.5
        %v6010 = vmul.f32 %v5626, 0.5
        %v6011 = vmul.f32 %v5627, 0.5
        %v6012 = vmul.f32 %v5628, 0.5
        %v6013 = vmul.f32 %v5629, 0.5
        %v6014 = vmul.f32 %v5630, 0.5
        %v6015 = vmul.f32 %v5631, 0.5
        %v6016 = vmul.f32 %v5632, 0.5
        %v6017 = vmul.f32 %v5633, 0.5
        %v6018 = vmul.f32 %v5634, 0.5
        %v6019 = vmul.f32 %v5635, 0.5
        %v6020 = vmul.f32 %v5636, 0.5
        %v6021 = vmul.f32 %v5637, 0.5
        %v6022 = vmul.f32 %v5638, 0.5
        %v6023 = vmul.f32 %v5639, 0.5
        %v6024 = vmul.f32 %v5640, 0.5
        %v6025 = vmul.f32 %v5641, 0.5
        %v6026 = vmul.f32 %v5642, 0.5
        %v6027 = vmul.f32 %v5643, 0.5
        %v6028 = vmul.f32 %v5644, 0.5
        %v6029 = vmul.f32 %v5645, 0.5
        %v6030 = vmul.f32 %v5646, 0.5
        %v6031 = vmul.f32 %v5647, 0.5
        %v6032 = vmul.f32 %v5648, 0.5
        %v6033 = vmul.f32 %v5649, 0.5
        %v6034 = vmul.f32 %v5650, 0.5
        %v6035 = vmul.f32 %v5651, 0.5
        %v6036 = vmul.f32 %v5652, 0.5
        %v6037 = vmul.f32 %v5653, 0.5
        %v6038 = vmul.f32 %v5654, 0.5
        %v6039 = vmul.f32 %v5655, 0.5
        %v6040 = vmul.f32 %v5656, 0.5
        %v6041 = vmul.f32 %v5657, 0.5
        %v6042 = vmul.f32 %v5658, 0.5
        %v6043 = vmul.f32 %v5659, 0.5
        %v6044 = vmul.f32 %v5660, 0.5
        %v6045 = vmul.f32 %v5661, 0.5
        %v6046 = vmul.f32 %v5662, 0.5
        %v6047 = vmul.f32 %v5663, 0.5
        %v6048 = vmul.f32 %v5664, 0.5
        %v6049 = vmul.f32 %v5665, 0.5
        %v6050 = vmul.f32 %v5666, 0.5
        %v6051 = vmul.f32 %v5667, 0.5
        %v6052 = vmul.f32 %v5668, 0.5
        %v6053 = vmul.f32 %v5669, 0.5
        %v6054 = vmul.f32 %v5670, 0.5
        %v6055 = vmul.f32 %v5671, 0.5
        %v6056 = vmul.f32 %v5672, 0.5
        %v6057 = vmul.f32 %v5673, 0.5
        %v6058 = vmul.f32 %v5674, 0.5
        %v6059 = vmul.f32 %v5675, 0.5
        %v6060 = vmul.f32 %v5676, 0.5
        %v6061 = vmul.f32 %v5677, 0.5
        %v6062 = vmul.f32 %v5678, 0.5
        %v6063 = vmul.f32 %v5679, 0.5
        %v6064 = vmul.f32 %v5680, 0.5
        %v6065 = vmul.f32 %v5681, 0.5
        %v6066 = vmul.f32 %v5682, 0.5
        %v6067 = vmul.f32 %v5683, 0.5
        %v6068 = vmul.f32 %v5684, 0.5
        %v6069 = vmul.f32 %v5685, 0.5
        %v6070 = vmul.f32 %v5686, 0.5
        %v6071 = vmul.f32 %v5687, 0.5
        %v6072 = vmul.f32 %v5688, 0.5
        %v6073 = vmul.f32 %v5689, 0.5
        %v6074 = vmul.f32 %v5690, 0.5
        %v6075 = vmul.f32 %v5691, 0.5
        %v6076 = vmul.f32 %v5692, 0.5
        %v6077 = vmul.f32 %v5693, 0.5
        %v6078 = vmul.f32 %v5694, 0.5
        %v6079 = vmul.f32 %v5695, 0.5
        %v6080 = vmul.f32 %v5696, 0.5
        %v6081 = vmul.f32 %v5697, 0.5
        %v6082 = vmul.f32 %v5698, 0.5
        %v6083 = vmul.f32 %v5699, 0.5
        %v6084 = vmul.f32 %v5700, 0.5
        %v6085 = vmul.f32 %v5701, 0.5
        %v6086 = vmul.f32 %v5702, 0.5
        %v6087 = vmul.f32 %v5703, 0.5
        %v6088 = vmul.f32 %v5704, 0.5
        %v6089 = vmul.f32 %v5705, 0.5
        %v6090 = vmul.f32 %v5706, 0.5
        %v6091 = vmul.f32 %v5707, 0.5
        %v6092 = vmul.f32 %v5708, 0.5
        %v6093 = vmul.f32 %v5709, 0.5
        %v6094 = vmul.f32 %v5710, 0.5
        %v6095 = vmul.f32 %v5711, 0.5
        %v6096 = vmul.f32 %v5712, 0.5
        %v6097 = vmul.f32 %v5713, 0.5
        %v6098 = vmul.f32 %v5714, 0.5
        %v6099 = vmul.f32 %v5715, 0.5
        %v6100 = vmul.f32 %v5716, 0.5
        %v6101 = vmul.f32 %v5717, 0.5
        %v6102 = vmul.f32 %v5718, 0.5
        %v6103 = vmul.f32 %v5719, 0.5
        %v6104 = vmul.f32 %v5720, 0.5
        %v6105 = vmul.f32 %v5721, 0.5
        %v6106 = vmul.f32 %v5722, 0.5
        %v6107 = vmul.f32 %v5723, 0.5
        %v6108 = vmul.f32 %v5724, 0.5
        %v6109 = vmul.f32 %v4189, %v5725
        %v6110 = vmul.f32 %v4190, %v5726
        %v6111 = vmul.f32 %v4191, %v5727
        %v6112 = vmul.f32 %v4192, %v5728
        %v6113 = vmul.f32 %v4193, %v5729
        %v6114 = vmul.f32 %v4194, %v5730
        %v6115 = vmul.f32 %v4195, %v5731
        %v6116 = vmul.f32 %v4196, %v5732
        %v6117 = vmul.f32 %v4197, %v5733
        %v6118 = vmul.f32 %v4198, %v5734
        %v6119 = vmul.f32 %v4199, %v5735
        %v6120 = vmul.f32 %v4200, %v5736
        %v6121 = vmul.f32 %v4201, %v5737
        %v6122 = vmul.f32 %v4202, %v5738
        %v6123 = vmul.f32 %v4203, %v5739
        %v6124 = vmul.f32 %v4204, %v5740
        %v6125 = vmul.f32 %v4205, %v5741
        %v6126 = vmul.f32 %v4206, %v5742
        %v6127 = vmul.f32 %v4207, %v5743
        %v6128 = vmul.f32 %v4208, %v5744
        %v6129 = vmul.f32 %v4209, %v5745
        %v6130 = vmul.f32 %v4210, %v5746
        %v6131 = vmul.f32 %v4211, %v5747
        %v6132 = vmul.f32 %v4212, %v5748
        %v6133 = vmul.f32 %v4213, %v5749
        %v6134 = vmul.f32 %v4214, %v5750
        %v6135 = vmul.f32 %v4215, %v5751
        %v6136 = vmul.f32 %v4216, %v5752
        %v6137 = vmul.f32 %v4217, %v5753
        %v6138 = vmul.f32 %v4218, %v5754
        %v6139 = vmul.f32 %v4219, %v5755
        %v6140 = vmul.f32 %v4220, %v5756
        %v6141 = vmul.f32 %v4221, %v5757
        %v6142 = vmul.f32 %v4222, %v5758
        %v6143 = vmul.f32 %v4223, %v5759
        %v6144 = vmul.f32 %v4224, %v5760
        %v6145 = vmul.f32 %v4225, %v5761
        %v6146 = vmul.f32 %v4226, %v5762
        %v6147 = vmul.f32 %v4227, %v5763
        %v6148 = vmul.f32 %v4228, %v5764
        %v6149 = vmul.f32 %v4229, %v5765
        %v6150 = vmul.f32 %v4230, %v5766
        %v6151 = vmul.f32 %v4231, %v5767
        %v6152 = vmul.f32 %v4232, %v5768
        %v6153 = vmul.f32 %v4233, %v5769
        %v6154 = vmul.f32 %v4234, %v5770
        %v6155 = vmul.f32 %v4235, %v5771
        %v6156 = vmul.f32 %v4236, %v5772
        %v6157 = vmul.f32 %v4237, %v5773
        %v6158 = vmul.f32 %v4238, %v5774
        %v6159 = vmul.f32 %v4239, %v5775
        %v6160 = vmul.f32 %v4240, %v5776
        %v6161 = vmul.f32 %v4241, %v5777
        %v6162 = vmul.f32 %v4242, %v5778
        %v6163 = vmul.f32 %v4243, %v5779
        %v6164 = vmul.f32 %v4244, %v5780
        %v6165 = vmul.f32 %v4245, %v5781
        %v6166 = vmul.f32 %v4246, %v5782
        %v6167 = vmul.f32 %v4247, %v5783
        %v6168 = vmul.f32 %v4248, %v5784
        %v6169 = vmul.f32 %v4249, %v5785
        %v6170 = vmul.f32 %v4250, %v5786
        %v6171 = vmul.f32 %v4251, %v5787
        %v6172 = vmul.f32 %v4252, %v5788
        %v6173 = vmul.f32 %v4253, %v5789
        %v6174 = vmul.f32 %v4254, %v5790
        %v6175 = vmul.f32 %v4255, %v5791
        %v6176 = vmul.f32 %v4256, %v5792
        %v6177 = vmul.f32 %v4257, %v5793
        %v6178 = vmul.f32 %v4258, %v5794
        %v6179 = vmul.f32 %v4259, %v5795
        %v6180 = vmul.f32 %v4260, %v5796
        %v6181 = vmul.f32 %v4261, %v5797
        %v6182 = vmul.f32 %v4262, %v5798
        %v6183 = vmul.f32 %v4263, %v5799
        %v6184 = vmul.f32 %v4264, %v5800
        %v6185 = vmul.f32 %v4265, %v5801
        %v6186 = vmul.f32 %v4266, %v5802
        %v6187 = vmul.f32 %v4267, %v5803
        %v6188 = vmul.f32 %v4268, %v5804
        %v6189 = vmul.f32 %v4269, %v5805
        %v6190 = vmul.f32 %v4270, %v5806
        %v6191 = vmul.f32 %v4271, %v5807
        %v6192 = vmul.f32 %v4272, %v5808
        %v6193 = vmul.f32 %v4273, %v5809
        %v6194 = vmul.f32 %v4274, %v5810
        %v6195 = vmul.f32 %v4275, %v5811
        %v6196 = vmul.f32 %v4276, %v5812
        %v6197 = vmul.f32 %v4277, %v5813
        %v6198 = vmul.f32 %v4278, %v5814
        %v6199 = vmul.f32 %v4279, %v5815
        %v6200 = vmul.f32 %v4280, %v5816
        %v6201 = vmul.f32 %v4281, %v5817
        %v6202 = vmul.f32 %v4282, %v5818
        %v6203 = vmul.f32 %v4283, %v5819
        %v6204 = vmul.f32 %v4284, %v5820
        %v6205 = vmul.f32 %v4285, %v5821
        %v6206 = vmul.f32 %v4286, %v5822
        %v6207 = vmul.f32 %v4287, %v5823
        %v6208 = vmul.f32 %v4288, %v5824
        %v6209 = vmul.f32 %v4289, %v5825
        %v6210 = vmul.f32 %v4290, %v5826
        %v6211 = vmul.f32 %v4291, %v5827
        %v6212 = vmul.f32 %v4292, %v5828
        %v6213 = vmul.f32 %v4293, %v5829
        %v6214 = vmul.f32 %v4294, %v5830
        %v6215 = vmul.f32 %v4295, %v5831
        %v6216 = vmul.f32 %v4296, %v5832
        %v6217 = vmul.f32 %v4297, %v5833
        %v6218 = vmul.f32 %v4298, %v5834
        %v6219 = vmul.f32 %v4299, %v5835
        %v6220 = vmul.f32 %v4300, %v5836
        %v6221 = vmul.f32 %v4301, %v5837
        %v6222 = vmul.f32 %v4302, %v5838
        %v6223 = vmul.f32 %v4303, %v5839
        %v6224 = vmul.f32 %v4304, %v5840
        %v6225 = vmul.f32 %v4305, %v5841
        %v6226 = vmul.f32 %v4306, %v5842
        %v6227 = vmul.f32 %v4307, %v5843
        %v6228 = vmul.f32 %v4308, %v5844
        %v6229 = vmul.f32 %v4309, %v5845
        %v6230 = vmul.f32 %v4310, %v5846
        %v6231 = vmul.f32 %v4311, %v5847
        %v6232 = vmul.f32 %v4312, %v5848
        %v6233 = vmul.f32 %v4313, %v5849
        %v6234 = vmul.f32 %v4314, %v5850
        %v6235 = vmul.f32 %v4315, %v5851
        %v6236 = vmul.f32 %v4316, %v5852
        %v6237 = vmul.f32 %v4317, %v5853
        %v6238 = vmul.f32 %v4318, %v5854
        %v6239 = vmul.f32 %v4319, %v5855
        %v6240 = vmul.f32 %v4320, %v5856
        %v6241 = vmul.f32 %v4321, %v5857
        %v6242 = vmul.f32 %v4322, %v5858
        %v6243 = vmul.f32 %v4323, %v5859
        %v6244 = vmul.f32 %v4324, %v5860
        %v6245 = vmul.f32 %v4325, %v5861
        %v6246 = vmul.f32 %v4326, %v5862
        %v6247 = vmul.f32 %v4327, %v5863
        %v6248 = vmul.f32 %v4328, %v5864
        %v6249 = vmul.f32 %v4329, %v5865
        %v6250 = vmul.f32 %v4330, %v5866
        %v6251 = vmul.f32 %v4331, %v5867
        %v6252 = vmul.f32 %v4332, %v5868
        %v6253 = vmul.f32 %v4333, %v5869
        %v6254 = vmul.f32 %v4334, %v5870
        %v6255 = vmul.f32 %v4335, %v5871
        %v6256 = vmul.f32 %v4336, %v5872
        %v6257 = vmul.f32 %v4337, %v5873
        %v6258 = vmul.f32 %v4338, %v5874
        %v6259 = vmul.f32 %v4339, %v5875
        %v6260 = vmul.f32 %v4340, %v5876
        %v6261 = vmul.f32 %v4341, %v5877
        %v6262 = vmul.f32 %v4342, %v5878
        %v6263 = vmul.f32 %v4343, %v5879
        %v6264 = vmul.f32 %v4344, %v5880
        %v6265 = vmul.f32 %v4345, %v5881
        %v6266 = vmul.f32 %v4346, %v5882
        %v6267 = vmul.f32 %v4347, %v5883
        %v6268 = vmul.f32 %v4348, %v5884
        %v6269 = vmul.f32 %v4349, %v5885
        %v6270 = vmul.f32 %v4350, %v5886
        %v6271 = vmul.f32 %v4351, %v5887
        %v6272 = vmul.f32 %v4352, %v5888
        %v6273 = vmul.f32 %v4353, %v5889
        %v6274 = vmul.f32 %v4354, %v5890
        %v6275 = vmul.f32 %v4355, %v5891
        %v6276 = vmul.f32 %v4356, %v5892
        %v6277 = vmul.f32 %v4357, %v5893
        %v6278 = vmul.f32 %v4358, %v5894
        %v6279 = vmul.f32 %v4359, %v5895
        %v6280 = vmul.f32 %v4360, %v5896
        %v6281 = vmul.f32 %v4361, %v5897
        %v6282 = vmul.f32 %v4362, %v5898
        %v6283 = vmul.f32 %v4363, %v5899
        %v6284 = vmul.f32 %v4364, %v5900
        %v6285 = vmul.f32 %v4365, %v5901
        %v6286 = vmul.f32 %v4366, %v5902
        %v6287 = vmul.f32 %v4367, %v5903
        %v6288 = vmul.f32 %v4368, %v5904
        %v6289 = vmul.f32 %v4369, %v5905
        %v6290 = vmul.f32 %v4370, %v5906
        %v6291 = vmul.f32 %v4371, %v5907
        %v6292 = vmul.f32 %v4372, %v5908
        %v6293 = vmul.f32 %v4373, %v5909
        %v6294 = vmul.f32 %v4374, %v5910
        %v6295 = vmul.f32 %v4375, %v5911
        %v6296 = vmul.f32 %v4376, %v5912
        %v6297 = vmul.f32 %v4377, %v5913
        %v6298 = vmul.f32 %v4378, %v5914
        %v6299 = vmul.f32 %v4379, %v5915
        %v6300 = vmul.f32 %v4380, %v5916
        %v6301 = vmul.f32 %v4381, %v5917
        %v6302 = vmul.f32 %v4382, %v5918
        %v6303 = vmul.f32 %v4383, %v5919
        %v6304 = vmul.f32 %v4384, %v5920
        %v6305 = vmul.f32 %v4385, %v5921
        %v6306 = vmul.f32 %v4386, %v5922
        %v6307 = vmul.f32 %v4387, %v5923
        %v6308 = vmul.f32 %v4388, %v5924
        %v6309 = vmul.f32 %v4389, %v5925
        %v6310 = vmul.f32 %v4390, %v5926
        %v6311 = vmul.f32 %v4391, %v5927
        %v6312 = vmul.f32 %v4392, %v5928
        %v6313 = vmul.f32 %v4393, %v5929
        %v6314 = vmul.f32 %v4394, %v5930
        %v6315 = vmul.f32 %v4395, %v5931
        %v6316 = vmul.f32 %v4396, %v5932
        %v6317 = vmul.f32 %v4397, %v5933
        %v6318 = vmul.f32 %v4398, %v5934
        %v6319 = vmul.f32 %v4399, %v5935
        %v6320 = vmul.f32 %v4400, %v5936
        %v6321 = vmul.f32 %v4401, %v5937
        %v6322 = vmul.f32 %v4402, %v5938
        %v6323 = vmul.f32 %v4403, %v5939
        %v6324 = vmul.f32 %v4404, %v5940
        %v6325 = vmul.f32 %v4405, %v5941
        %v6326 = vmul.f32 %v4406, %v5942
        %v6327 = vmul.f32 %v4407, %v5943
        %v6328 = vmul.f32 %v4408, %v5944
        %v6329 = vmul.f32 %v4409, %v5945
        %v6330 = vmul.f32 %v4410, %v5946
        %v6331 = vmul.f32 %v4411, %v5947
        %v6332 = vmul.f32 %v4412, %v5948
        %v6333 = vmul.f32 %v4413, %v5949
        %v6334 = vmul.f32 %v4414, %v5950
        %v6335 = vmul.f32 %v4415, %v5951
        %v6336 = vmul.f32 %v4416, %v5952
        %v6337 = vmul.f32 %v4417, %v5953
        %v6338 = vmul.f32 %v4418, %v5954
        %v6339 = vmul.f32 %v4419, %v5955
        %v6340 = vmul.f32 %v4420, %v5956
        %v6341 = vmul.f32 %v4421, %v5957
        %v6342 = vmul.f32 %v4422, %v5958
        %v6343 = vmul.f32 %v4423, %v5959
        %v6344 = vmul.f32 %v4424, %v5960
        %v6345 = vmul.f32 %v4425, %v5961
        %v6346 = vmul.f32 %v4426, %v5962
        %v6347 = vmul.f32 %v4427, %v5963
        %v6348 = vmul.f32 %v4428, %v5964
        %v6349 = vmul.f32 %v4429, %v5965
        %v6350 = vmul.f32 %v4430, %v5966
        %v6351 = vmul.f32 %v4431, %v5967
        %v6352 = vmul.f32 %v4432, %v5968
        %v6353 = vmul.f32 %v4433, %v5969
        %v6354 = vmul.f32 %v4434, %v5970
        %v6355 = vmul.f32 %v4435, %v5971
        %v6356 = vmul.f32 %v4436, %v5972
        %v6357 = vmul.f32 %v4437, %v5973
        %v6358 = vmul.f32 %v4438, %v5974
        %v6359 = vmul.f32 %v4439, %v5975
        %v6360 = vmul.f32 %v4440, %v5976
        %v6361 = vmul.f32 %v4441, %v5977
        %v6362 = vmul.f32 %v4442, %v5978
        %v6363 = vmul.f32 %v4443, %v5979
        %v6364 = vmul.f32 %v4444, %v5980
        %v6365 = vmul.f32 %v4445, %v5981
        %v6366 = vmul.f32 %v4446, %v5982
        %v6367 = vmul.f32 %v4447, %v5983
        %v6368 = vmul.f32 %v4448, %v5984
        %v6369 = vmul.f32 %v4449, %v5985
        %v6370 = vmul.f32 %v4450, %v5986
        %v6371 = vmul.f32 %v4451, %v5987
        %v6372 = vmul.f32 %v4452, %v5988
        %v6373 = vmul.f32 %v4453, %v5989
        %v6374 = vmul.f32 %v4454, %v5990
        %v6375 = vmul.f32 %v4455, %v5991
        %v6376 = vmul.f32 %v4456, %v5992
        %v6377 = vmul.f32 %v4457, %v5993
        %v6378 = vmul.f32 %v4458, %v5994
        %v6379 = vmul.f32 %v4459, %v5995
        %v6380 = vmul.f32 %v4460, %v5996
        %v6381 = vmul.f32 %v4461, %v5997
        %v6382 = vmul.f32 %v4462, %v5998
        %v6383 = vmul.f32 %v4463, %v5999
        %v6384 = vmul.f32 %v4464, %v6000
        %v6385 = vmul.f32 %v4465, %v6001
        %v6386 = vmul.f32 %v4466, %v6002
        %v6387 = vmul.f32 %v4467, %v6003
        %v6388 = vmul.f32 %v4468, %v6004
        %v6389 = vmul.f32 %v4469, %v6005
        %v6390 = vmul.f32 %v4470, %v6006
        %v6391 = vmul.f32 %v4471, %v6007
        %v6392 = vmul.f32 %v4472, %v6008
        %v6393 = vmul.f32 %v4473, %v6009
        %v6394 = vmul.f32 %v4474, %v6010
        %v6395 = vmul.f32 %v4475, %v6011
        %v6396 = vmul.f32 %v4476, %v6012
        %v6397 = vmul.f32 %v4477, %v6013
        %v6398 = vmul.f32 %v4478, %v6014
        %v6399 = vmul.f32 %v4479, %v6015
        %v6400 = vmul.f32 %v4480, %v6016
        %v6401 = vmul.f32 %v4481, %v6017
        %v6402 = vmul.f32 %v4482, %v6018
        %v6403 = vmul.f32 %v4483, %v6019
        %v6404 = vmul.f32 %v4484, %v6020
        %v6405 = vmul.f32 %v4485, %v6021
        %v6406 = vmul.f32 %v4486, %v6022
        %v6407 = vmul.f32 %v4487, %v6023
        %v6408 = vmul.f32 %v4488, %v6024
        %v6409 = vmul.f32 %v4489, %v6025
        %v6410 = vmul.f32 %v4490, %v6026
        %v6411 = vmul.f32 %v4491, %v6027
        %v6412 = vmul.f32 %v4492, %v6028
        %v6413 = vmul.f32 %v4493, %v6029
        %v6414 = vmul.f32 %v4494, %v6030
        %v6415 = vmul.f32 %v4495, %v6031
        %v6416 = vmul.f32 %v4496, %v6032
        %v6417 = vmul.f32 %v4497, %v6033
        %v6418 = vmul.f32 %v4498, %v6034
        %v6419 = vmul.f32 %v4499, %v6035
        %v6420 = vmul.f32 %v4500, %v6036
        %v6421 = vmul.f32 %v4501, %v6037
        %v6422 = vmul.f32 %v4502, %v6038
        %v6423 = vmul.f32 %v4503, %v6039
        %v6424 = vmul.f32 %v4504, %v6040
        %v6425 = vmul.f32 %v4505, %v6041
        %v6426 = vmul.f32 %v4506, %v6042
        %v6427 = vmul.f32 %v4507, %v6043
        %v6428 = vmul.f32 %v4508, %v6044
        %v6429 = vmul.f32 %v4509, %v6045
        %v6430 = vmul.f32 %v4510, %v6046
        %v6431 = vmul.f32 %v4511, %v6047
        %v6432 = vmul.f32 %v4512, %v6048
        %v6433 = vmul.f32 %v4513, %v6049
        %v6434 = vmul.f32 %v4514, %v6050
        %v6435 = vmul.f32 %v4515, %v6051
        %v6436 = vmul.f32 %v4516, %v6052
        %v6437 = vmul.f32 %v4517, %v6053
        %v6438 = vmul.f32 %v4518, %v6054
        %v6439 = vmul.f32 %v4519, %v6055
        %v6440 = vmul.f32 %v4520, %v6056
        %v6441 = vmul.f32 %v4521, %v6057
        %v6442 = vmul.f32 %v4522, %v6058
        %v6443 = vmul.f32 %v4523, %v6059
        %v6444 = vmul.f32 %v4524, %v6060
        %v6445 = vmul.f32 %v4525, %v6061
        %v6446 = vmul.f32 %v4526, %v6062
        %v6447 = vmul.f32 %v4527, %v6063
        %v6448 = vmul.f32 %v4528, %v6064
        %v6449 = vmul.f32 %v4529, %v6065
        %v6450 = vmul.f32 %v4530, %v6066
        %v6451 = vmul.f32 %v4531, %v6067
        %v6452 = vmul.f32 %v4532, %v6068
        %v6453 = vmul.f32 %v4533, %v6069
        %v6454 = vmul.f32 %v4534, %v6070
        %v6455 = vmul.f32 %v4535, %v6071
        %v6456 = vmul.f32 %v4536, %v6072
        %v6457 = vmul.f32 %v4537, %v6073
        %v6458 = vmul.f32 %v4538, %v6074
        %v6459 = vmul.f32 %v4539, %v6075
        %v6460 = vmul.f32 %v4540, %v6076
        %v6461 = vmul.f32 %v4541, %v6077
        %v6462 = vmul.f32 %v4542, %v6078
        %v6463 = vmul.f32 %v4543, %v6079
        %v6464 = vmul.f32 %v4544, %v6080
        %v6465 = vmul.f32 %v4545, %v6081
        %v6466 = vmul.f32 %v4546, %v6082
        %v6467 = vmul.f32 %v4547, %v6083
        %v6468 = vmul.f32 %v4548, %v6084
        %v6469 = vmul.f32 %v4549, %v6085
        %v6470 = vmul.f32 %v4550, %v6086
        %v6471 = vmul.f32 %v4551, %v6087
        %v6472 = vmul.f32 %v4552, %v6088
        %v6473 = vmul.f32 %v4553, %v6089
        %v6474 = vmul.f32 %v4554, %v6090
        %v6475 = vmul.f32 %v4555, %v6091
        %v6476 = vmul.f32 %v4556, %v6092
        %v6477 = vmul.f32 %v4557, %v6093
        %v6478 = vmul.f32 %v4558, %v6094
        %v6479 = vmul.f32 %v4559, %v6095
        %v6480 = vmul.f32 %v4560, %v6096
        %v6481 = vmul.f32 %v4561, %v6097
        %v6482 = vmul.f32 %v4562, %v6098
        %v6483 = vmul.f32 %v4563, %v6099
        %v6484 = vmul.f32 %v4564, %v6100
        %v6485 = vmul.f32 %v4565, %v6101
        %v6486 = vmul.f32 %v4566, %v6102
        %v6487 = vmul.f32 %v4567, %v6103
        %v6488 = vmul.f32 %v4568, %v6104
        %v6489 = vmul.f32 %v4569, %v6105
        %v6490 = vmul.f32 %v4570, %v6106
        %v6491 = vmul.f32 %v4571, %v6107
        %v6492 = vmul.f32 %v4572, %v6108
        %v6493 = vpack.c.bf16 %v6112, %v6109
        %v6494 = vpack.c.bf16 %v6113, %v6110
        %v6495 = vpack.c.bf16 %v6114, %v6111
        %v6496 = vpack.c.bf16 %v6118, %v6115
        %v6497 = vpack.c.bf16 %v6119, %v6116
        %v6498 = vpack.c.bf16 %v6120, %v6117
        %v6499 = vpack.c.bf16 %v6124, %v6121
        %v6500 = vpack.c.bf16 %v6125, %v6122
        %v6501 = vpack.c.bf16 %v6126, %v6123
        %v6502 = vpack.c.bf16 %v6130, %v6127
        %v6503 = vpack.c.bf16 %v6131, %v6128
        %v6504 = vpack.c.bf16 %v6132, %v6129
        %v6505 = vpack.c.bf16 %v6136, %v6133
        %v6506 = vpack.c.bf16 %v6137, %v6134
        %v6507 = vpack.c.bf16 %v6138, %v6135
        %v6508 = vpack.c.bf16 %v6142, %v6139
        %v6509 = vpack.c.bf16 %v6143, %v6140
        %v6510 = vpack.c.bf16 %v6144, %v6141
        %v6511 = vpack.c.bf16 %v6148, %v6145
        %v6512 = vpack.c.bf16 %v6149, %v6146
        %v6513 = vpack.c.bf16 %v6150, %v6147
        %v6514 = vpack.c.bf16 %v6154, %v6151
        %v6515 = vpack.c.bf16 %v6155, %v6152
        %v6516 = vpack.c.bf16 %v6156, %v6153
        %v6517 = vpack.c.bf16 %v6160, %v6157
        %v6518 = vpack.c.bf16 %v6161, %v6158
        %v6519 = vpack.c.bf16 %v6162, %v6159
        %v6520 = vpack.c.bf16 %v6166, %v6163
        %v6521 = vpack.c.bf16 %v6167, %v6164
        %v6522 = vpack.c.bf16 %v6168, %v6165
        %v6523 = vpack.c.bf16 %v6172, %v6169
        %v6524 = vpack.c.bf16 %v6173, %v6170
        %v6525 = vpack.c.bf16 %v6174, %v6171
        %v6526 = vpack.c.bf16 %v6178, %v6175
        %v6527 = vpack.c.bf16 %v6179, %v6176
        %v6528 = vpack.c.bf16 %v6180, %v6177
        %v6529 = vpack.c.bf16 %v6184, %v6181
        %v6530 = vpack.c.bf16 %v6185, %v6182
        %v6531 = vpack.c.bf16 %v6186, %v6183
        %v6532 = vpack.c.bf16 %v6190, %v6187
        %v6533 = vpack.c.bf16 %v6191, %v6188
        %v6534 = vpack.c.bf16 %v6192, %v6189
        %v6535 = vpack.c.bf16 %v6196, %v6193
        %v6536 = vpack.c.bf16 %v6197, %v6194
        %v6537 = vpack.c.bf16 %v6198, %v6195
        %v6538 = vpack.c.bf16 %v6202, %v6199
        %v6539 = vpack.c.bf16 %v6203, %v6200
        %v6540 = vpack.c.bf16 %v6204, %v6201
        %v6541 = vpack.c.bf16 %v6208, %v6205
        %v6542 = vpack.c.bf16 %v6209, %v6206
        %v6543 = vpack.c.bf16 %v6210, %v6207
        %v6544 = vpack.c.bf16 %v6214, %v6211
        %v6545 = vpack.c.bf16 %v6215, %v6212
        %v6546 = vpack.c.bf16 %v6216, %v6213
        %v6547 = vpack.c.bf16 %v6220, %v6217
        %v6548 = vpack.c.bf16 %v6221, %v6218
        %v6549 = vpack.c.bf16 %v6222, %v6219
        %v6550 = vpack.c.bf16 %v6226, %v6223
        %v6551 = vpack.c.bf16 %v6227, %v6224
        %v6552 = vpack.c.bf16 %v6228, %v6225
        %v6553 = vpack.c.bf16 %v6232, %v6229
        %v6554 = vpack.c.bf16 %v6233, %v6230
        %v6555 = vpack.c.bf16 %v6234, %v6231
        %v6556 = vpack.c.bf16 %v6238, %v6235
        %v6557 = vpack.c.bf16 %v6239, %v6236
        %v6558 = vpack.c.bf16 %v6240, %v6237
        %v6559 = vpack.c.bf16 %v6244, %v6241
        %v6560 = vpack.c.bf16 %v6245, %v6242
        %v6561 = vpack.c.bf16 %v6246, %v6243
        %v6562 = vpack.c.bf16 %v6250, %v6247
        %v6563 = vpack.c.bf16 %v6251, %v6248
        %v6564 = vpack.c.bf16 %v6252, %v6249
        %v6565 = vpack.c.bf16 %v6256, %v6253
        %v6566 = vpack.c.bf16 %v6257, %v6254
        %v6567 = vpack.c.bf16 %v6258, %v6255
        %v6568 = vpack.c.bf16 %v6262, %v6259
        %v6569 = vpack.c.bf16 %v6263, %v6260
        %v6570 = vpack.c.bf16 %v6264, %v6261
        %v6571 = vpack.c.bf16 %v6268, %v6265
        %v6572 = vpack.c.bf16 %v6269, %v6266
        %v6573 = vpack.c.bf16 %v6270, %v6267
        %v6574 = vpack.c.bf16 %v6274, %v6271
        %v6575 = vpack.c.bf16 %v6275, %v6272
        %v6576 = vpack.c.bf16 %v6276, %v6273
        %v6577 = vpack.c.bf16 %v6280, %v6277
        %v6578 = vpack.c.bf16 %v6281, %v6278
        %v6579 = vpack.c.bf16 %v6282, %v6279
        %v6580 = vpack.c.bf16 %v6286, %v6283
        %v6581 = vpack.c.bf16 %v6287, %v6284
        %v6582 = vpack.c.bf16 %v6288, %v6285
        %v6583 = vpack.c.bf16 %v6292, %v6289
        %v6584 = vpack.c.bf16 %v6293, %v6290
        %v6585 = vpack.c.bf16 %v6294, %v6291
        %v6586 = vpack.c.bf16 %v6298, %v6295
        %v6587 = vpack.c.bf16 %v6299, %v6296
        %v6588 = vpack.c.bf16 %v6300, %v6297
        %v6589 = vpack.c.bf16 %v6304, %v6301
        %v6590 = vpack.c.bf16 %v6305, %v6302
        %v6591 = vpack.c.bf16 %v6306, %v6303
        %v6592 = vpack.c.bf16 %v6310, %v6307
        %v6593 = vpack.c.bf16 %v6311, %v6308
        %v6594 = vpack.c.bf16 %v6312, %v6309
        %v6595 = vpack.c.bf16 %v6316, %v6313
        %v6596 = vpack.c.bf16 %v6317, %v6314
        %v6597 = vpack.c.bf16 %v6318, %v6315
        %v6598 = vpack.c.bf16 %v6322, %v6319
        %v6599 = vpack.c.bf16 %v6323, %v6320
        %v6600 = vpack.c.bf16 %v6324, %v6321
        %v6601 = vpack.c.bf16 %v6328, %v6325
        %v6602 = vpack.c.bf16 %v6329, %v6326
        %v6603 = vpack.c.bf16 %v6330, %v6327
        %v6604 = vpack.c.bf16 %v6334, %v6331
        %v6605 = vpack.c.bf16 %v6335, %v6332
        %v6606 = vpack.c.bf16 %v6336, %v6333
        %v6607 = vpack.c.bf16 %v6340, %v6337
        %v6608 = vpack.c.bf16 %v6341, %v6338
        %v6609 = vpack.c.bf16 %v6342, %v6339
        %v6610 = vpack.c.bf16 %v6346, %v6343
        %v6611 = vpack.c.bf16 %v6347, %v6344
        %v6612 = vpack.c.bf16 %v6348, %v6345
        %v6613 = vpack.c.bf16 %v6352, %v6349
        %v6614 = vpack.c.bf16 %v6353, %v6350
        %v6615 = vpack.c.bf16 %v6354, %v6351
        %v6616 = vpack.c.bf16 %v6358, %v6355
        %v6617 = vpack.c.bf16 %v6359, %v6356
        %v6618 = vpack.c.bf16 %v6360, %v6357
        %v6619 = vpack.c.bf16 %v6364, %v6361
        %v6620 = vpack.c.bf16 %v6365, %v6362
        %v6621 = vpack.c.bf16 %v6366, %v6363
        %v6622 = vpack.c.bf16 %v6370, %v6367
        %v6623 = vpack.c.bf16 %v6371, %v6368
        %v6624 = vpack.c.bf16 %v6372, %v6369
        %v6625 = vpack.c.bf16 %v6376, %v6373
        %v6626 = vpack.c.bf16 %v6377, %v6374
        %v6627 = vpack.c.bf16 %v6378, %v6375
        %v6628 = vpack.c.bf16 %v6382, %v6379
        %v6629 = vpack.c.bf16 %v6383, %v6380
        %v6630 = vpack.c.bf16 %v6384, %v6381
        %v6631 = vpack.c.bf16 %v6388, %v6385
        %v6632 = vpack.c.bf16 %v6389, %v6386
        %v6633 = vpack.c.bf16 %v6390, %v6387
        %v6634 = vpack.c.bf16 %v6394, %v6391
        %v6635 = vpack.c.bf16 %v6395, %v6392
        %v6636 = vpack.c.bf16 %v6396, %v6393
        %v6637 = vpack.c.bf16 %v6400, %v6397
        %v6638 = vpack.c.bf16 %v6401, %v6398
        %v6639 = vpack.c.bf16 %v6402, %v6399
        %v6640 = vpack.c.bf16 %v6406, %v6403
        %v6641 = vpack.c.bf16 %v6407, %v6404
        %v6642 = vpack.c.bf16 %v6408, %v6405
        %v6643 = vpack.c.bf16 %v6412, %v6409
        %v6644 = vpack.c.bf16 %v6413, %v6410
        %v6645 = vpack.c.bf16 %v6414, %v6411
        %v6646 = vpack.c.bf16 %v6418, %v6415
        %v6647 = vpack.c.bf16 %v6419, %v6416
        %v6648 = vpack.c.bf16 %v6420, %v6417
        %v6649 = vpack.c.bf16 %v6424, %v6421
        %v6650 = vpack.c.bf16 %v6425, %v6422
        %v6651 = vpack.c.bf16 %v6426, %v6423
        %v6652 = vpack.c.bf16 %v6430, %v6427
        %v6653 = vpack.c.bf16 %v6431, %v6428
        %v6654 = vpack.c.bf16 %v6432, %v6429
        %v6655 = vpack.c.bf16 %v6436, %v6433
        %v6656 = vpack.c.bf16 %v6437, %v6434
        %v6657 = vpack.c.bf16 %v6438, %v6435
        %v6658 = vpack.c.bf16 %v6442, %v6439
        %v6659 = vpack.c.bf16 %v6443, %v6440
        %v6660 = vpack.c.bf16 %v6444, %v6441
        %v6661 = vpack.c.bf16 %v6448, %v6445
        %v6662 = vpack.c.bf16 %v6449, %v6446
        %v6663 = vpack.c.bf16 %v6450, %v6447
        %v6664 = vpack.c.bf16 %v6454, %v6451
        %v6665 = vpack.c.bf16 %v6455, %v6452
        %v6666 = vpack.c.bf16 %v6456, %v6453
        %v6667 = vpack.c.bf16 %v6460, %v6457
        %v6668 = vpack.c.bf16 %v6461, %v6458
        %v6669 = vpack.c.bf16 %v6462, %v6459
        %v6670 = vpack.c.bf16 %v6466, %v6463
        %v6671 = vpack.c.bf16 %v6467, %v6464
        %v6672 = vpack.c.bf16 %v6468, %v6465
        %v6673 = vpack.c.bf16 %v6472, %v6469
        %v6674 = vpack.c.bf16 %v6473, %v6470
        %v6675 = vpack.c.bf16 %v6474, %v6471
        %v6676 = vpack.c.bf16 %v6478, %v6475
        %v6677 = vpack.c.bf16 %v6479, %v6476
        %v6678 = vpack.c.bf16 %v6480, %v6477
        %v6679 = vpack.c.bf16 %v6484, %v6481
        %v6680 = vpack.c.bf16 %v6485, %v6482
        %v6681 = vpack.c.bf16 %v6486, %v6483
        %v6682 = vpack.c.bf16 %v6490, %v6487
        %v6683 = vpack.c.bf16 %v6491, %v6488
        %v6684 = vpack.c.bf16 %v6492, %v6489
        %v6685 = vld [vmem:[%s845] sm:$0xf]
        %v6686 = vld [vmem:[%s845 + $0x4] sm:$0xf]
        %v6687 = vld [vmem:[%s845 + $0x8] sm:$0xf]
        %v6688 = vld [vmem:[%s845 + $0xc] sm:$0xf]
        %v6689 = vld [vmem:[%s845 + $0x10] sm:$0xf]
        %v6690 = vld [vmem:[%s845 + $0x14] sm:$0xf]
        %v6691 = vld [vmem:[%s845 + $0x18] sm:$0xf]
        %v6692 = vld [vmem:[%s845 + $0x1c] sm:$0xf]
        %v6693 = vld [vmem:[%s845 + $0x20] sm:$0xf]
        %v6694 = vld [vmem:[%s845 + $0x24] sm:$0xf]
        %v6695 = vld [vmem:[%s845 + $0x28] sm:$0xf]
        %v6696 = vld [vmem:[%s845 + $0x2c] sm:$0xf]
        %v6697 = vld [vmem:[%s845 + $0x30] sm:$0xf]
        %v6698 = vld [vmem:[%s845 + $0x34] sm:$0xf]
        %v6699 = vld [vmem:[%s845 + $0x38] sm:$0xf]
        %v6700 = vld [vmem:[%s845 + $0x3c] sm:$0xf]
        %v6701 = vld [vmem:[%s845 + $0x40] sm:$0xf]
        %v6702 = vld [vmem:[%s845 + $0x44] sm:$0xf]
        %v6703 = vld [vmem:[%s845 + $0x48] sm:$0xf]
        %v6704 = vld [vmem:[%s845 + $0x4c] sm:$0xf]
        %v6705 = vld [vmem:[%s845 + $0x50] sm:$0xf]
        %v6706 = vld [vmem:[%s845 + $0x54] sm:$0xf]
        %v6707 = vld [vmem:[%s845 + $0x58] sm:$0xf]
        %v6708 = vld [vmem:[%s845 + $0x5c] sm:$0xf]
        %v6709 = vld [vmem:[%s845 + $0x60] sm:$0xf]
        %v6710 = vld [vmem:[%s845 + $0x64] sm:$0xf]
        %v6711 = vld [vmem:[%s845 + $0x68] sm:$0xf]
        %v6712 = vld [vmem:[%s845 + $0x6c] sm:$0xf]
        %v6713 = vld [vmem:[%s845 + $0x70] sm:$0xf]
        %v6714 = vld [vmem:[%s845 + $0x74] sm:$0xf]
        %v6715 = vld [vmem:[%s845 + $0x78] sm:$0xf]
        %v6716 = vld [vmem:[%s845 + $0x7c] sm:$0xf]
        %v6717 = vld [vmem:[%s845 + $0x80] sm:$0xf]
        %v6718 = vld [vmem:[%s845 + $0x84] sm:$0xf]
        %v6719 = vld [vmem:[%s845 + $0x88] sm:$0xf]
        %v6720 = vld [vmem:[%s845 + $0x8c] sm:$0xf]
        %v6721 = vld [vmem:[%s845 + $0x90] sm:$0xf]
        %v6722 = vld [vmem:[%s845 + $0x94] sm:$0xf]
        %v6723 = vld [vmem:[%s845 + $0x98] sm:$0xf]
        %v6724 = vld [vmem:[%s845 + $0x9c] sm:$0xf]
        %v6725 = vld [vmem:[%s845 + $0xa0] sm:$0xf]
        %v6726 = vld [vmem:[%s845 + $0xa4] sm:$0xf]
        %v6727 = vld [vmem:[%s845 + $0xa8] sm:$0xf]
        %v6728 = vld [vmem:[%s845 + $0xac] sm:$0xf]
        %v6729 = vld [vmem:[%s845 + $0xb0] sm:$0xf]
        %v6730 = vld [vmem:[%s845 + $0xb4] sm:$0xf]
        %v6731 = vld [vmem:[%s845 + $0xb8] sm:$0xf]
        %v6732 = vld [vmem:[%s845 + $0xbc] sm:$0xf]
        %v6733 = vld [vmem:[%s848] sm:$0x1]
        %v6735 = vlaneseq
        %v6736 = vshrl.u32 %v6735, 7
        %v6737 = vsub.s32 0, %v6736
        %v6738 = vrot.slane %v6733, %v6737
        %v6788 = vunpack.c.l.b16 %v6685
        %v6789 = vunpack.c.l.b16 %v6686
        %v6790 = vunpack.c.l.b16 %v6687
        %v6791 = vunpack.c.l.b16 %v6688
        %v6792 = vunpack.c.l.b16 %v6689
        %v6793 = vunpack.c.l.b16 %v6690
        %v6794 = vunpack.c.l.b16 %v6691
        %v6795 = vunpack.c.l.b16 %v6692
        %v6796 = vunpack.c.l.b16 %v6693
        %v6797 = vunpack.c.l.b16 %v6694
        %v6798 = vunpack.c.l.b16 %v6695
        %v6799 = vunpack.c.l.b16 %v6696
        %v6800 = vunpack.c.l.b16 %v6697
        %v6801 = vunpack.c.l.b16 %v6698
        %v6802 = vunpack.c.l.b16 %v6699
        %v6803 = vunpack.c.l.b16 %v6700
        %v6804 = vunpack.c.l.b16 %v6701
        %v6805 = vunpack.c.l.b16 %v6702
        %v6806 = vunpack.c.l.b16 %v6703
        %v6807 = vunpack.c.l.b16 %v6704
        %v6808 = vunpack.c.l.b16 %v6705
        %v6809 = vunpack.c.l.b16 %v6706
        %v6810 = vunpack.c.l.b16 %v6707
        %v6811 = vunpack.c.l.b16 %v6708
        %v6812 = vunpack.c.l.b16 %v6709
        %v6813 = vunpack.c.l.b16 %v6710
        %v6814 = vunpack.c.l.b16 %v6711
        %v6815 = vunpack.c.l.b16 %v6712
        %v6816 = vunpack.c.l.b16 %v6713
        %v6817 = vunpack.c.l.b16 %v6714
        %v6818 = vunpack.c.l.b16 %v6715
        %v6819 = vunpack.c.l.b16 %v6716
        %v6820 = vunpack.c.l.b16 %v6717
        %v6821 = vunpack.c.l.b16 %v6718
        %v6822 = vunpack.c.l.b16 %v6719
        %v6823 = vunpack.c.l.b16 %v6720
        %v6824 = vunpack.c.l.b16 %v6721
        %v6825 = vunpack.c.l.b16 %v6722
        %v6826 = vunpack.c.l.b16 %v6723
        %v6827 = vunpack.c.l.b16 %v6724
        %v6828 = vunpack.c.l.b16 %v6725
        %v6829 = vunpack.c.l.b16 %v6726
        %v6830 = vunpack.c.l.b16 %v6727
        %v6831 = vunpack.c.l.b16 %v6728
        %v6832 = vunpack.c.l.b16 %v6729
        %v6833 = vunpack.c.l.b16 %v6730
        %v6834 = vunpack.c.l.b16 %v6731
        %v6835 = vunpack.c.l.b16 %v6732
        %v6836 = vpack.c.b16 %v6789, %v6788
        %v6837 = vpack.c.b16 %v6791, %v6790
        %v6838 = vpack.c.b16 %v6793, %v6792
        %v6839 = vpack.c.b16 %v6795, %v6794
        %v6840 = vpack.c.b16 %v6797, %v6796
        %v6841 = vpack.c.b16 %v6799, %v6798
        %v6842 = vpack.c.b16 %v6801, %v6800
        %v6843 = vpack.c.b16 %v6803, %v6802
        %v6844 = vpack.c.b16 %v6805, %v6804
        %v6845 = vpack.c.b16 %v6807, %v6806
        %v6846 = vpack.c.b16 %v6809, %v6808
        %v6847 = vpack.c.b16 %v6811, %v6810
        %v6848 = vpack.c.b16 %v6813, %v6812
        %v6849 = vpack.c.b16 %v6815, %v6814
        %v6850 = vpack.c.b16 %v6817, %v6816
        %v6851 = vpack.c.b16 %v6819, %v6818
        %v6852 = vpack.c.b16 %v6821, %v6820
        %v6853 = vpack.c.b16 %v6823, %v6822
        %v6854 = vpack.c.b16 %v6825, %v6824
        %v6855 = vpack.c.b16 %v6827, %v6826
        %v6856 = vpack.c.b16 %v6829, %v6828
        %v6857 = vpack.c.b16 %v6831, %v6830
        %v6858 = vpack.c.b16 %v6833, %v6832
        %v6859 = vpack.c.b16 %v6835, %v6834
        %6884 = vmatprep.subr.bf16.mxu0 0
        %6885 = vmatpush1.bf16.msra.mxu0 %v6836
        %6886 = vmatprep.subr.bf16.mxu0 0
        %6887 = vmatpush1.bf16.msra.mxu0 %v6837
        %6888 = vmatprep.subr.bf16.mxu0 0
        %6889 = vmatpush1.bf16.msra.mxu0 %v6838
        %6890 = vmatprep.subr.bf16.mxu0 0
        %6891 = vmatpush1.bf16.msra.mxu0 %v6839
        %6892 = vmatprep.subr.bf16.mxu0 0
        %6893 = vmatpush1.bf16.msra.mxu0 %v6840
        %6894 = vmatprep.subr.bf16.mxu0 0
        %6895 = vmatpush1.bf16.msra.mxu0 %v6841
        %6896 = vmatprep.subr.bf16.mxu0 0
        %6897 = vmatpush1.bf16.msra.mxu0 %v6842
        %6898 = vmatprep.subr.bf16.mxu0 0
        %6899 = vmatpush1.bf16.msra.mxu0 %v6843
        %6900 = vmatprep.subr.bf16.mxu0 0
        %6901 = vmatpush1.bf16.msra.mxu0 %v6844
        %6902 = vmatprep.subr.bf16.mxu0 0
        %6903 = vmatpush1.bf16.msra.mxu0 %v6845
        %6904 = vmatprep.subr.bf16.mxu0 0
        %6905 = vmatpush1.bf16.msra.mxu0 %v6846
        %6906 = vmatprep.subr.bf16.mxu0 0
        %6907 = vmatpush1.bf16.msra.mxu0 %v6847
        %6908 = vmatprep.subr.bf16.mxu0 0
        %6909 = vmatpush1.bf16.msra.mxu0 %v6848
        %6910 = vmatprep.subr.bf16.mxu0 0
        %6911 = vmatpush1.bf16.msra.mxu0 %v6849
        %6912 = vmatprep.subr.bf16.mxu0 0
        %6913 = vmatpush1.bf16.msra.mxu0 %v6850
        %6914 = vmatprep.subr.bf16.mxu0 0
        %6915 = vmatpush1.bf16.msra.mxu0 %v6851
        %6916 = vmatprep.mubr.bf16.mxu0 %v6494
        %6917 = vmatmul.mubr.bf16.gmra.mrb[0].mxu0 %v6493
        %v6918 = vpop.f32.mrb[0].mxu0
        %v6919 = vadd.f32 %v6738, %v6918
        %v6920 = vpop.f32.mrb[0].mxu0
        %v6921 = vpop.f32.mrb[0].mxu0
        %v6922 = vadd.f32 %v6738, %v6921
        %v6923 = vpop.f32.mrb[0].mxu0
        %6924 = vmatprep.mubr.bf16.mxu0 %v6497
        %6925 = vmatmul.mubr.bf16.gmra.mrb[0].mxu0 %v6496
        %v6926 = vpop.f32.mrb[0].mxu0
        %v6927 = vadd.f32 %v6738, %v6926
        %v6928 = vpop.f32.mrb[0].mxu0
        %v6929 = vpop.f32.mrb[0].mxu0
        %v6930 = vadd.f32 %v6738, %v6929
        %v6931 = vpop.f32.mrb[0].mxu0
        %6932 = vmatprep.mubr.bf16.mxu0 %v6500
        %6933 = vmatmul.mubr.bf16.gmra.mrb[0].mxu0 %v6499
        %v6934 = vpop.f32.mrb[0].mxu0
        %v6935 = vadd.f32 %v6738, %v6934
        %v6936 = vpop.f32.mrb[0].mxu0
        %v6937 = vpop.f32.mrb[0].mxu0
        %v6938 = vadd.f32 %v6738, %v6937
        %v6939 = vpop.f32.mrb[0].mxu0
        %6940 = vmatprep.mubr.bf16.mxu0 %v6503
        %6941 = vmatmul.mubr.bf16.gmra.mrb[0].mxu0 %v6502
        %v6942 = vpop.f32.mrb[0].mxu0
        %v6943 = vadd.f32 %v6738, %v6942
        %v6944 = vpop.f32.mrb[0].mxu0
        %v6945 = vpop.f32.mrb[0].mxu0
        %v6946 = vadd.f32 %v6738, %v6945
        %v6947 = vpop.f32.mrb[0].mxu0
        %6948 = vmatprep.mubr.bf16.mxu0 %v6506
        %6949 = vmatmul.mubr.bf16.gmra.mrb[0].mxu0 %v6505
        %v6950 = vpop.f32.mrb[0].mxu0
        %v6951 = vadd.f32 %v6738, %v6950
        %v6952 = vpop.f32.mrb[0].mxu0
        %v6953 = vpop.f32.mrb[0].mxu0
        %v6954 = vadd.f32 %v6738, %v6953
        %v6955 = vpop.f32.mrb[0].mxu0
        %6956 = vmatprep.mubr.bf16.mxu0 %v6509
        %6957 = vmatmul.mubr.bf16.gmra.mrb[0].mxu0 %v6508
        %v6958 = vpop.f32.mrb[0].mxu0
        %v6959 = vadd.f32 %v6738, %v6958
        %v6960 = vpop.f32.mrb[0].mxu0
        %v6961 = vpop.f32.mrb[0].mxu0
        %v6962 = vadd.f32 %v6738, %v6961
        %v6963 = vpop.f32.mrb[0].mxu0
        %6964 = vmatprep.mubr.bf16.mxu0 %v6512
        %6965 = vmatmul.mubr.bf16.gmra.mrb[0].mxu0 %v6511
        %v6966 = vpop.f32.mrb[0].mxu0
        %v6967 = vadd.f32 %v6738, %v6966
        %v6968 = vpop.f32.mrb[0].mxu0
        %v6969 = vpop.f32.mrb[0].mxu0
        %v6970 = vadd.f32 %v6738, %v6969
        %v6971 = vpop.f32.mrb[0].mxu0
        %6972 = vmatprep.mubr.bf16.mxu0 %v6515
        %6973 = vmatmul.mubr.bf16.gmra.mrb[0].mxu0 %v6514
        %v6974 = vpop.f32.mrb[0].mxu0
        %v6975 = vadd.f32 %v6738, %v6974
        %v6976 = vpop.f32.mrb[0].mxu0
        %v6977 = vpop.f32.mrb[0].mxu0
        %v6978 = vadd.f32 %v6738, %v6977
        %v6979 = vpop.f32.mrb[0].mxu0
        %6980 = vmatprep.mubr.bf16.mxu0 %v6518
        %6981 = vmatmul.mubr.bf16.gmra.mrb[0].mxu0 %v6517
        %v6982 = vpop.f32.mrb[0].mxu0
        %v6983 = vadd.f32 %v6738, %v6982
        %v6984 = vpop.f32.mrb[0].mxu0
        %v6985 = vpop.f32.mrb[0].mxu0
        %v6986 = vadd.f32 %v6738, %v6985
        %v6987 = vpop.f32.mrb[0].mxu0
        %6988 = vmatprep.mubr.bf16.mxu0 %v6521
        %6989 = vmatmul.mubr.bf16.gmra.mrb[0].mxu0 %v6520
        %v6990 = vpop.f32.mrb[0].mxu0
        %v6991 = vadd.f32 %v6738, %v6990
        %v6992 = vpop.f32.mrb[0].mxu0
        %v6993 = vpop.f32.mrb[0].mxu0
        %v6994 = vadd.f32 %v6738, %v6993
        %v6995 = vpop.f32.mrb[0].mxu0
        %6996 = vmatprep.mubr.bf16.mxu0 %v6524
        %6997 = vmatmul.mubr.bf16.gmra.mrb[0].mxu0 %v6523
        %v6998 = vpop.f32.mrb[0].mxu0
        %v6999 = vadd.f32 %v6738, %v6998
        %v7000 = vpop.f32.mrb[0].mxu0
        %v7001 = vpop.f32.mrb[0].mxu0
        %v7002 = vadd.f32 %v6738, %v7001
        %v7003 = vpop.f32.mrb[0].mxu0
        %7004 = vmatprep.mubr.bf16.mxu0 %v6527
        %7005 = vmatmul.mubr.bf16.gmra.mrb[0].mxu0 %v6526
        %v7006 = vpop.f32.mrb[0].mxu0
        %v7007 = vadd.f32 %v6738, %v7006
        %v7008 = vpop.f32.mrb[0].mxu0
        %v7009 = vpop.f32.mrb[0].mxu0
        %v7010 = vadd.f32 %v6738, %v7009
        %v7011 = vpop.f32.mrb[0].mxu0
        %7012 = vmatprep.mubr.bf16.mxu0 %v6530
        %7013 = vmatmul.mubr.bf16.gmra.mrb[0].mxu0 %v6529
        %v7014 = vpop.f32.mrb[0].mxu0
        %v7015 = vadd.f32 %v6738, %v7014
        %v7016 = vpop.f32.mrb[0].mxu0
        %v7017 = vpop.f32.mrb[0].mxu0
        %v7018 = vadd.f32 %v6738, %v7017
        %v7019 = vpop.f32.mrb[0].mxu0
        %7020 = vmatprep.mubr.bf16.mxu0 %v6533
        %7021 = vmatmul.mubr.bf16.gmra.mrb[0].mxu0 %v6532
        %v7022 = vpop.f32.mrb[0].mxu0
        %v7023 = vadd.f32 %v6738, %v7022
        %v7024 = vpop.f32.mrb[0].mxu0
        %v7025 = vpop.f32.mrb[0].mxu0
        %v7026 = vadd.f32 %v6738, %v7025
        %v7027 = vpop.f32.mrb[0].mxu0
        %7028 = vmatprep.mubr.bf16.mxu0 %v6536
        %7029 = vmatmul.mubr.bf16.gmra.mrb[0].mxu0 %v6535
        %v7030 = vpop.f32.mrb[0].mxu0
        %v7031 = vadd.f32 %v6738, %v7030
        %v7032 = vpop.f32.mrb[0].mxu0
        %v7033 = vpop.f32.mrb[0].mxu0
        %v7034 = vadd.f32 %v6738, %v7033
        %v7035 = vpop.f32.mrb[0].mxu0
        %7036 = vmatprep.mubr.bf16.mxu0 %v6539
        %7037 = vmatmul.mubr.bf16.gmra.mrb[0].mxu0 %v6538
        %v7038 = vpop.f32.mrb[0].mxu0
        %v7039 = vadd.f32 %v6738, %v7038
        %v7040 = vpop.f32.mrb[0].mxu0
        %v7041 = vpop.f32.mrb[0].mxu0
        %v7042 = vadd.f32 %v6738, %v7041
        %v7043 = vpop.f32.mrb[0].mxu0
        %7044 = vmatprep.mubr.bf16.mxu0 %v6542
        %7045 = vmatmul.mubr.bf16.gmra.mrb[0].mxu0 %v6541
        %v7046 = vpop.f32.mrb[0].mxu0
        %v7047 = vadd.f32 %v6738, %v7046
        %v7048 = vpop.f32.mrb[0].mxu0
        %v7049 = vpop.f32.mrb[0].mxu0
        %v7050 = vadd.f32 %v6738, %v7049
        %v7051 = vpop.f32.mrb[0].mxu0
        %7052 = vmatprep.mubr.bf16.mxu0 %v6545
        %7053 = vmatmul.mubr.bf16.gmra.mrb[0].mxu0 %v6544
        %v7054 = vpop.f32.mrb[0].mxu0
        %v7055 = vadd.f32 %v6738, %v7054
        %v7056 = vpop.f32.mrb[0].mxu0
        %v7057 = vpop.f32.mrb[0].mxu0
        %v7058 = vadd.f32 %v6738, %v7057
        %v7059 = vpop.f32.mrb[0].mxu0
        %7060 = vmatprep.mubr.bf16.mxu0 %v6548
        %7061 = vmatmul.mubr.bf16.gmra.mrb[0].mxu0 %v6547
        %v7062 = vpop.f32.mrb[0].mxu0
        %v7063 = vadd.f32 %v6738, %v7062
        %v7064 = vpop.f32.mrb[0].mxu0
        %v7065 = vpop.f32.mrb[0].mxu0
        %v7066 = vadd.f32 %v6738, %v7065
        %v7067 = vpop.f32.mrb[0].mxu0
        %7068 = vmatprep.mubr.bf16.mxu0 %v6551
        %7069 = vmatmul.mubr.bf16.gmra.mrb[0].mxu0 %v6550
        %v7070 = vpop.f32.mrb[0].mxu0
        %v7071 = vadd.f32 %v6738, %v7070
        %v7072 = vpop.f32.mrb[0].mxu0
        %v7073 = vpop.f32.mrb[0].mxu0
        %v7074 = vadd.f32 %v6738, %v7073
        %v7075 = vpop.f32.mrb[0].mxu0
        %7076 = vmatprep.mubr.bf16.mxu0 %v6554
        %7077 = vmatmul.mubr.bf16.gmra.mrb[0].mxu0 %v6553
        %v7078 = vpop.f32.mrb[0].mxu0
        %v7079 = vadd.f32 %v6738, %v7078
        %v7080 = vpop.f32.mrb[0].mxu0
        %v7081 = vpop.f32.mrb[0].mxu0
        %v7082 = vadd.f32 %v6738, %v7081
        %v7083 = vpop.f32.mrb[0].mxu0
        %7084 = vmatprep.mubr.bf16.mxu0 %v6557
        %7085 = vmatmul.mubr.bf16.gmra.mrb[0].mxu0 %v6556
        %v7086 = vpop.f32.mrb[0].mxu0
        %v7087 = vadd.f32 %v6738, %v7086
        %v7088 = vpop.f32.mrb[0].mxu0
        %v7089 = vpop.f32.mrb[0].mxu0
        %v7090 = vadd.f32 %v6738, %v7089
        %v7091 = vpop.f32.mrb[0].mxu0
        %7092 = vmatprep.mubr.bf16.mxu0 %v6560
        %7093 = vmatmul.mubr.bf16.gmra.mrb[0].mxu0 %v6559
        %v7094 = vpop.f32.mrb[0].mxu0
        %v7095 = vadd.f32 %v6738, %v7094
        %v7096 = vpop.f32.mrb[0].mxu0
        %v7097 = vpop.f32.mrb[0].mxu0
        %v7098 = vadd.f32 %v6738, %v7097
        %v7099 = vpop.f32.mrb[0].mxu0
        %7100 = vmatprep.mubr.bf16.mxu0 %v6563
        %7101 = vmatmul.mubr.bf16.gmra.mrb[0].mxu0 %v6562
        %v7102 = vpop.f32.mrb[0].mxu0
        %v7103 = vadd.f32 %v6738, %v7102
        %v7104 = vpop.f32.mrb[0].mxu0
        %v7105 = vpop.f32.mrb[0].mxu0
        %v7106 = vadd.f32 %v6738, %v7105
        %v7107 = vpop.f32.mrb[0].mxu0
        %7108 = vmatprep.mubr.bf16.mxu0 %v6566
        %7109 = vmatmul.mubr.bf16.gmra.mrb[0].mxu0 %v6565
        %v7110 = vpop.f32.mrb[0].mxu0
        %v7111 = vadd.f32 %v6738, %v7110
        %v7112 = vpop.f32.mrb[0].mxu0
        %v7113 = vpop.f32.mrb[0].mxu0
        %v7114 = vadd.f32 %v6738, %v7113
        %v7115 = vpop.f32.mrb[0].mxu0
        %7116 = vmatprep.mubr.bf16.mxu0 %v6569
        %7117 = vmatmul.mubr.bf16.gmra.mrb[0].mxu0 %v6568
        %v7118 = vpop.f32.mrb[0].mxu0
        %v7119 = vadd.f32 %v6738, %v7118
        %v7120 = vpop.f32.mrb[0].mxu0
        %v7121 = vpop.f32.mrb[0].mxu0
        %v7122 = vadd.f32 %v6738, %v7121
        %v7123 = vpop.f32.mrb[0].mxu0
        %7124 = vmatprep.mubr.bf16.mxu0 %v6572
        %7125 = vmatmul.mubr.bf16.gmra.mrb[0].mxu0 %v6571
        %v7126 = vpop.f32.mrb[0].mxu0
        %v7127 = vadd.f32 %v6738, %v7126
        %v7128 = vpop.f32.mrb[0].mxu0
        %v7129 = vpop.f32.mrb[0].mxu0
        %v7130 = vadd.f32 %v6738, %v7129
        %v7131 = vpop.f32.mrb[0].mxu0
        %7132 = vmatprep.mubr.bf16.mxu0 %v6575
        %7133 = vmatmul.mubr.bf16.gmra.mrb[0].mxu0 %v6574
        %v7134 = vpop.f32.mrb[0].mxu0
        %v7135 = vadd.f32 %v6738, %v7134
        %v7136 = vpop.f32.mrb[0].mxu0
        %v7137 = vpop.f32.mrb[0].mxu0
        %v7138 = vadd.f32 %v6738, %v7137
        %v7139 = vpop.f32.mrb[0].mxu0
        %7140 = vmatprep.mubr.bf16.mxu0 %v6578
        %7141 = vmatmul.mubr.bf16.gmra.mrb[0].mxu0 %v6577
        %v7142 = vpop.f32.mrb[0].mxu0
        %v7143 = vadd.f32 %v6738, %v7142
        %v7144 = vpop.f32.mrb[0].mxu0
        %v7145 = vpop.f32.mrb[0].mxu0
        %v7146 = vadd.f32 %v6738, %v7145
        %v7147 = vpop.f32.mrb[0].mxu0
        %7148 = vmatprep.mubr.bf16.mxu0 %v6581
        %7149 = vmatmul.mubr.bf16.gmra.mrb[0].mxu0 %v6580
        %v7150 = vpop.f32.mrb[0].mxu0
        %v7151 = vadd.f32 %v6738, %v7150
        %v7152 = vpop.f32.mrb[0].mxu0
        %v7153 = vpop.f32.mrb[0].mxu0
        %v7154 = vadd.f32 %v6738, %v7153
        %v7155 = vpop.f32.mrb[0].mxu0
        %7156 = vmatprep.mubr.bf16.mxu0 %v6584
        %7157 = vmatmul.mubr.bf16.gmra.mrb[0].mxu0 %v6583
        %v7158 = vpop.f32.mrb[0].mxu0
        %v7159 = vadd.f32 %v6738, %v7158
        %v7160 = vpop.f32.mrb[0].mxu0
        %v7161 = vpop.f32.mrb[0].mxu0
        %v7162 = vadd.f32 %v6738, %v7161
        %v7163 = vpop.f32.mrb[0].mxu0
        %7164 = vmatprep.mubr.bf16.mxu0 %v6587
        %7165 = vmatmul.mubr.bf16.gmra.mrb[0].mxu0 %v6586
        %v7166 = vpop.f32.mrb[0].mxu0
        %v7167 = vadd.f32 %v6738, %v7166
        %v7168 = vpop.f32.mrb[0].mxu0
        %v7169 = vpop.f32.mrb[0].mxu0
        %v7170 = vadd.f32 %v6738, %v7169
        %v7171 = vpop.f32.mrb[0].mxu0
        %7172 = vmatprep.mubr.bf16.mxu0 %v6590
        %7173 = vmatmul.mubr.bf16.gmra.mrb[0].mxu0 %v6589
        %v7174 = vpop.f32.mrb[0].mxu0
        %v7175 = vadd.f32 %v6738, %v7174
        %v7176 = vpop.f32.mrb[0].mxu0
        %v7177 = vpop.f32.mrb[0].mxu0
        %v7178 = vadd.f32 %v6738, %v7177
        %v7179 = vpop.f32.mrb[0].mxu0
        %7180 = vmatprep.mubr.bf16.mxu0 %v6593
        %7181 = vmatmul.mubr.bf16.gmra.mrb[0].mxu0 %v6592
        %v7182 = vpop.f32.mrb[0].mxu0
        %v7183 = vadd.f32 %v6738, %v7182
        %v7184 = vpop.f32.mrb[0].mxu0
        %v7185 = vpop.f32.mrb[0].mxu0
        %v7186 = vadd.f32 %v6738, %v7185
        %v7187 = vpop.f32.mrb[0].mxu0
        %7188 = vmatprep.mubr.bf16.mxu0 %v6596
        %7189 = vmatmul.mubr.bf16.gmra.mrb[0].mxu0 %v6595
        %v7190 = vpop.f32.mrb[0].mxu0
        %v7191 = vadd.f32 %v6738, %v7190
        %v7192 = vpop.f32.mrb[0].mxu0
        %v7193 = vpop.f32.mrb[0].mxu0
        %v7194 = vadd.f32 %v6738, %v7193
        %v7195 = vpop.f32.mrb[0].mxu0
        %7196 = vmatprep.mubr.bf16.mxu0 %v6599
        %7197 = vmatmul.mubr.bf16.gmra.mrb[0].mxu0 %v6598
        %v7198 = vpop.f32.mrb[0].mxu0
        %v7199 = vadd.f32 %v6738, %v7198
        %v7200 = vpop.f32.mrb[0].mxu0
        %v7201 = vpop.f32.mrb[0].mxu0
        %v7202 = vadd.f32 %v6738, %v7201
        %v7203 = vpop.f32.mrb[0].mxu0
        %7204 = vmatprep.mubr.bf16.mxu0 %v6602
        %7205 = vmatmul.mubr.bf16.gmra.mrb[0].mxu0 %v6601
        %v7206 = vpop.f32.mrb[0].mxu0
        %v7207 = vadd.f32 %v6738, %v7206
        %v7208 = vpop.f32.mrb[0].mxu0
        %v7209 = vpop.f32.mrb[0].mxu0
        %v7210 = vadd.f32 %v6738, %v7209
        %v7211 = vpop.f32.mrb[0].mxu0
        %7212 = vmatprep.mubr.bf16.mxu0 %v6605
        %7213 = vmatmul.mubr.bf16.gmra.mrb[0].mxu0 %v6604
        %v7214 = vpop.f32.mrb[0].mxu0
        %v7215 = vadd.f32 %v6738, %v7214
        %v7216 = vpop.f32.mrb[0].mxu0
        %v7217 = vpop.f32.mrb[0].mxu0
        %v7218 = vadd.f32 %v6738, %v7217
        %v7219 = vpop.f32.mrb[0].mxu0
        %7220 = vmatprep.mubr.bf16.mxu0 %v6608
        %7221 = vmatmul.mubr.bf16.gmra.mrb[0].mxu0 %v6607
        %v7222 = vpop.f32.mrb[0].mxu0
        %v7223 = vadd.f32 %v6738, %v7222
        %v7224 = vpop.f32.mrb[0].mxu0
        %v7225 = vpop.f32.mrb[0].mxu0
        %v7226 = vadd.f32 %v6738, %v7225
        %v7227 = vpop.f32.mrb[0].mxu0
        %7228 = vmatprep.mubr.bf16.mxu0 %v6611
        %7229 = vmatmul.mubr.bf16.gmra.mrb[0].mxu0 %v6610
        %v7230 = vpop.f32.mrb[0].mxu0
        %v7231 = vadd.f32 %v6738, %v7230
        %v7232 = vpop.f32.mrb[0].mxu0
        %v7233 = vpop.f32.mrb[0].mxu0
        %v7234 = vadd.f32 %v6738, %v7233
        %v7235 = vpop.f32.mrb[0].mxu0
        %7236 = vmatprep.mubr.bf16.mxu0 %v6614
        %7237 = vmatmul.mubr.bf16.gmra.mrb[0].mxu0 %v6613
        %v7238 = vpop.f32.mrb[0].mxu0
        %v7239 = vadd.f32 %v6738, %v7238
        %v7240 = vpop.f32.mrb[0].mxu0
        %v7241 = vpop.f32.mrb[0].mxu0
        %v7242 = vadd.f32 %v6738, %v7241
        %v7243 = vpop.f32.mrb[0].mxu0
        %7244 = vmatprep.mubr.bf16.mxu0 %v6617
        %7245 = vmatmul.mubr.bf16.gmra.mrb[0].mxu0 %v6616
        %v7246 = vpop.f32.mrb[0].mxu0
        %v7247 = vadd.f32 %v6738, %v7246
        %v7248 = vpop.f32.mrb[0].mxu0
        %v7249 = vpop.f32.mrb[0].mxu0
        %v7250 = vadd.f32 %v6738, %v7249
        %v7251 = vpop.f32.mrb[0].mxu0
        %7252 = vmatprep.mubr.bf16.mxu0 %v6620
        %7253 = vmatmul.mubr.bf16.gmra.mrb[0].mxu0 %v6619
        %v7254 = vpop.f32.mrb[0].mxu0
        %v7255 = vadd.f32 %v6738, %v7254
        %v7256 = vpop.f32.mrb[0].mxu0
        %v7257 = vpop.f32.mrb[0].mxu0
        %v7258 = vadd.f32 %v6738, %v7257
        %v7259 = vpop.f32.mrb[0].mxu0
        %7260 = vmatprep.mubr.bf16.mxu0 %v6623
        %7261 = vmatmul.mubr.bf16.gmra.mrb[0].mxu0 %v6622
        %v7262 = vpop.f32.mrb[0].mxu0
        %v7263 = vadd.f32 %v6738, %v7262
        %v7264 = vpop.f32.mrb[0].mxu0
        %v7265 = vpop.f32.mrb[0].mxu0
        %v7266 = vadd.f32 %v6738, %v7265
        %v7267 = vpop.f32.mrb[0].mxu0
        %7268 = vmatprep.mubr.bf16.mxu0 %v6626
        %7269 = vmatmul.mubr.bf16.gmra.mrb[0].mxu0 %v6625
        %v7270 = vpop.f32.mrb[0].mxu0
        %v7271 = vadd.f32 %v6738, %v7270
        %v7272 = vpop.f32.mrb[0].mxu0
        %v7273 = vpop.f32.mrb[0].mxu0
        %v7274 = vadd.f32 %v6738, %v7273
        %v7275 = vpop.f32.mrb[0].mxu0
        %7276 = vmatprep.mubr.bf16.mxu0 %v6629
        %7277 = vmatmul.mubr.bf16.gmra.mrb[0].mxu0 %v6628
        %v7278 = vpop.f32.mrb[0].mxu0
        %v7279 = vadd.f32 %v6738, %v7278
        %v7280 = vpop.f32.mrb[0].mxu0
        %v7281 = vpop.f32.mrb[0].mxu0
        %v7282 = vadd.f32 %v6738, %v7281
        %v7283 = vpop.f32.mrb[0].mxu0
        %7284 = vmatprep.mubr.bf16.mxu0 %v6632
        %7285 = vmatmul.mubr.bf16.gmra.mrb[0].mxu0 %v6631
        %v7286 = vpop.f32.mrb[0].mxu0
        %v7287 = vadd.f32 %v6738, %v7286
        %v7288 = vpop.f32.mrb[0].mxu0
        %v7289 = vpop.f32.mrb[0].mxu0
        %v7290 = vadd.f32 %v6738, %v7289
        %v7291 = vpop.f32.mrb[0].mxu0
        %7292 = vmatprep.mubr.bf16.mxu0 %v6635
        %7293 = vmatmul.mubr.bf16.gmra.mrb[0].mxu0 %v6634
        %v7294 = vpop.f32.mrb[0].mxu0
        %v7295 = vadd.f32 %v6738, %v7294
        %v7296 = vpop.f32.mrb[0].mxu0
        %v7297 = vpop.f32.mrb[0].mxu0
        %v7298 = vadd.f32 %v6738, %v7297
        %v7299 = vpop.f32.mrb[0].mxu0
        %7300 = vmatprep.mubr.bf16.mxu0 %v6638
        %7301 = vmatmul.mubr.bf16.gmra.mrb[0].mxu0 %v6637
        %v7302 = vpop.f32.mrb[0].mxu0
        %v7303 = vadd.f32 %v6738, %v7302
        %v7304 = vpop.f32.mrb[0].mxu0
        %v7305 = vpop.f32.mrb[0].mxu0
        %v7306 = vadd.f32 %v6738, %v7305
        %v7307 = vpop.f32.mrb[0].mxu0
        %7308 = vmatprep.mubr.bf16.mxu0 %v6641
        %7309 = vmatmul.mubr.bf16.gmra.mrb[0].mxu0 %v6640
        %v7310 = vpop.f32.mrb[0].mxu0
        %v7311 = vadd.f32 %v6738, %v7310
        %v7312 = vpop.f32.mrb[0].mxu0
        %v7313 = vpop.f32.mrb[0].mxu0
        %v7314 = vadd.f32 %v6738, %v7313
        %v7315 = vpop.f32.mrb[0].mxu0
        %7316 = vmatprep.mubr.bf16.mxu0 %v6644
        %7317 = vmatmul.mubr.bf16.gmra.mrb[0].mxu0 %v6643
        %v7318 = vpop.f32.mrb[0].mxu0
        %v7319 = vadd.f32 %v6738, %v7318
        %v7320 = vpop.f32.mrb[0].mxu0
        %v7321 = vpop.f32.mrb[0].mxu0
        %v7322 = vadd.f32 %v6738, %v7321
        %v7323 = vpop.f32.mrb[0].mxu0
        %7324 = vmatprep.mubr.bf16.mxu0 %v6647
        %7325 = vmatmul.mubr.bf16.gmra.mrb[0].mxu0 %v6646
        %v7326 = vpop.f32.mrb[0].mxu0
        %v7327 = vadd.f32 %v6738, %v7326
        %v7328 = vpop.f32.mrb[0].mxu0
        %v7329 = vpop.f32.mrb[0].mxu0
        %v7330 = vadd.f32 %v6738, %v7329
        %v7331 = vpop.f32.mrb[0].mxu0
        %7332 = vmatprep.mubr.bf16.mxu0 %v6650
        %7333 = vmatmul.mubr.bf16.gmra.mrb[0].mxu0 %v6649
        %v7334 = vpop.f32.mrb[0].mxu0
        %v7335 = vadd.f32 %v6738, %v7334
        %v7336 = vpop.f32.mrb[0].mxu0
        %v7337 = vpop.f32.mrb[0].mxu0
        %v7338 = vadd.f32 %v6738, %v7337
        %v7339 = vpop.f32.mrb[0].mxu0
        %7340 = vmatprep.mubr.bf16.mxu0 %v6653
        %7341 = vmatmul.mubr.bf16.gmra.mrb[0].mxu0 %v6652
        %v7342 = vpop.f32.mrb[0].mxu0
        %v7343 = vadd.f32 %v6738, %v7342
        %v7344 = vpop.f32.mrb[0].mxu0
        %v7345 = vpop.f32.mrb[0].mxu0
        %v7346 = vadd.f32 %v6738, %v7345
        %v7347 = vpop.f32.mrb[0].mxu0
        %7348 = vmatprep.mubr.bf16.mxu0 %v6656
        %7349 = vmatmul.mubr.bf16.gmra.mrb[0].mxu0 %v6655
        %v7350 = vpop.f32.mrb[0].mxu0
        %v7351 = vadd.f32 %v6738, %v7350
        %v7352 = vpop.f32.mrb[0].mxu0
        %v7353 = vpop.f32.mrb[0].mxu0
        %v7354 = vadd.f32 %v6738, %v7353
        %v7355 = vpop.f32.mrb[0].mxu0
        %7356 = vmatprep.mubr.bf16.mxu0 %v6659
        %7357 = vmatmul.mubr.bf16.gmra.mrb[0].mxu0 %v6658
        %v7358 = vpop.f32.mrb[0].mxu0
        %v7359 = vadd.f32 %v6738, %v7358
        %v7360 = vpop.f32.mrb[0].mxu0
        %v7361 = vpop.f32.mrb[0].mxu0
        %v7362 = vadd.f32 %v6738, %v7361
        %v7363 = vpop.f32.mrb[0].mxu0
        %7364 = vmatprep.mubr.bf16.mxu0 %v6662
        %7365 = vmatmul.mubr.bf16.gmra.mrb[0].mxu0 %v6661
        %v7366 = vpop.f32.mrb[0].mxu0
        %v7367 = vadd.f32 %v6738, %v7366
        %v7368 = vpop.f32.mrb[0].mxu0
        %v7369 = vpop.f32.mrb[0].mxu0
        %v7370 = vadd.f32 %v6738, %v7369
        %v7371 = vpop.f32.mrb[0].mxu0
        %7372 = vmatprep.mubr.bf16.mxu0 %v6665
        %7373 = vmatmul.mubr.bf16.gmra.mrb[0].mxu0 %v6664
        %v7374 = vpop.f32.mrb[0].mxu0
        %v7375 = vadd.f32 %v6738, %v7374
        %v7376 = vpop.f32.mrb[0].mxu0
        %v7377 = vpop.f32.mrb[0].mxu0
        %v7378 = vadd.f32 %v6738, %v7377
        %v7379 = vpop.f32.mrb[0].mxu0
        %7380 = vmatprep.mubr.bf16.mxu0 %v6668
        %7381 = vmatmul.mubr.bf16.gmra.mrb[0].mxu0 %v6667
        %v7382 = vpop.f32.mrb[0].mxu0
        %v7383 = vadd.f32 %v6738, %v7382
        %v7384 = vpop.f32.mrb[0].mxu0
        %v7385 = vpop.f32.mrb[0].mxu0
        %v7386 = vadd.f32 %v6738, %v7385
        %v7387 = vpop.f32.mrb[0].mxu0
        %7388 = vmatprep.mubr.bf16.mxu0 %v6671
        %7389 = vmatmul.mubr.bf16.gmra.mrb[0].mxu0 %v6670
        %v7390 = vpop.f32.mrb[0].mxu0
        %v7391 = vadd.f32 %v6738, %v7390
        %v7392 = vpop.f32.mrb[0].mxu0
        %v7393 = vpop.f32.mrb[0].mxu0
        %v7394 = vadd.f32 %v6738, %v7393
        %v7395 = vpop.f32.mrb[0].mxu0
        %7396 = vmatprep.mubr.bf16.mxu0 %v6674
        %7397 = vmatmul.mubr.bf16.gmra.mrb[0].mxu0 %v6673
        %v7398 = vpop.f32.mrb[0].mxu0
        %v7399 = vadd.f32 %v6738, %v7398
        %v7400 = vpop.f32.mrb[0].mxu0
        %v7401 = vpop.f32.mrb[0].mxu0
        %v7402 = vadd.f32 %v6738, %v7401
        %v7403 = vpop.f32.mrb[0].mxu0
        %7404 = vmatprep.mubr.bf16.mxu0 %v6677
        %7405 = vmatmul.mubr.bf16.gmra.mrb[0].mxu0 %v6676
        %v7406 = vpop.f32.mrb[0].mxu0
        %v7407 = vadd.f32 %v6738, %v7406
        %v7408 = vpop.f32.mrb[0].mxu0
        %v7409 = vpop.f32.mrb[0].mxu0
        %v7410 = vadd.f32 %v6738, %v7409
        %v7411 = vpop.f32.mrb[0].mxu0
        %7412 = vmatprep.mubr.bf16.mxu0 %v6680
        %7413 = vmatmul.mubr.bf16.gmra.mrb[0].mxu0 %v6679
        %v7414 = vpop.f32.mrb[0].mxu0
        %v7415 = vadd.f32 %v6738, %v7414
        %v7416 = vpop.f32.mrb[0].mxu0
        %v7417 = vpop.f32.mrb[0].mxu0
        %v7418 = vadd.f32 %v6738, %v7417
        %v7419 = vpop.f32.mrb[0].mxu0
        %7420 = vmatprep.mubr.bf16.mxu0 %v6683
        %7421 = vmatmul.mubr.bf16.gmra.mrb[0].mxu0 %v6682
        %v7422 = vpop.f32.mrb[0].mxu0
        %v7423 = vadd.f32 %v6738, %v7422
        %v7424 = vpop.f32.mrb[0].mxu0
        %v7425 = vpop.f32.mrb[0].mxu0
        %v7426 = vadd.f32 %v6738, %v7425
        %v7427 = vpop.f32.mrb[0].mxu0
        %7428 = vdwg.mxu0
        %7429 = vmatprep.subr.bf16.mxu0 0
        %7430 = vmatpush1.bf16.msra.mxu0 %v6852
        %7431 = vmatprep.subr.bf16.mxu0 0
        %7432 = vmatpush1.bf16.msra.mxu0 %v6853
        %7433 = vmatprep.subr.bf16.mxu0 0
        %7434 = vmatpush1.bf16.msra.mxu0 %v6854
        %7435 = vmatprep.subr.bf16.mxu0 0
        %7436 = vmatpush1.bf16.msra.mxu0 %v6855
        %7437 = vmatprep.subr.bf16.mxu0 0
        %7438 = vmatpush1.bf16.msra.mxu0 %v6856
        %7439 = vmatprep.subr.bf16.mxu0 0
        %7440 = vmatpush1.bf16.msra.mxu0 %v6857
        %7441 = vmatprep.subr.bf16.mxu0 0
        %7442 = vmatpush1.bf16.msra.mxu0 %v6858
        %7443 = vmatprep.subr.bf16.mxu0 0
        %7444 = vmatpush1.bf16.msra.mxu0 %v6859
        %7445 = vmatprep.subr.bf16.mxu0 0
        %7446 = vmatpush1.bf16.msra.mxu0 0
        %7447 = vmatprep.subr.bf16.mxu0 0
        %7448 = vmatpush1.bf16.msra.mxu0 0
        %7449 = vmatprep.subr.bf16.mxu0 0
        %7450 = vmatpush1.bf16.msra.mxu0 0
        %7451 = vmatprep.subr.bf16.mxu0 0
        %7452 = vmatpush1.bf16.msra.mxu0 0
        %7453 = vmatprep.subr.bf16.mxu0 0
        %7454 = vmatpush1.bf16.msra.mxu0 0
        %7455 = vmatprep.subr.bf16.mxu0 0
        %7456 = vmatpush1.bf16.msra.mxu0 0
        %7457 = vmatprep.subr.bf16.mxu0 0
        %7458 = vmatpush1.bf16.msra.mxu0 0
        %7459 = vmatprep.subr.bf16.mxu0 0
        %7460 = vmatpush1.bf16.msra.mxu0 0
        %7461 = vmatprep.mubr.bf16.mxu0 0
        %7462 = vmatmul.mubr.bf16.gmra.mrb[0].mxu0 %v6495
        %v7463 = vpop.f32.mrb[0].mxu0
        %v7464 = vadd.f32 %v6919, %v7463
        %v7465 = vpop.f32.mrb[0].mxu0
        %v7466 = vpop.f32.mrb[0].mxu0
        %v7467 = vadd.f32 %v6922, %v7466
        %v7468 = vpop.f32.mrb[0].mxu0
        %7469 = vmatprep.mubr.bf16.mxu0 0
        %7470 = vmatmul.mubr.bf16.gmra.mrb[0].mxu0 %v6498
        %v7471 = vpop.f32.mrb[0].mxu0
        %v7472 = vadd.f32 %v6927, %v7471
        %v7473 = vpop.f32.mrb[0].mxu0
        %v7474 = vpop.f32.mrb[0].mxu0
        %v7475 = vadd.f32 %v6930, %v7474
        %v7476 = vpop.f32.mrb[0].mxu0
        %7477 = vmatprep.mubr.bf16.mxu0 0
        %7478 = vmatmul.mubr.bf16.gmra.mrb[0].mxu0 %v6501
        %v7479 = vpop.f32.mrb[0].mxu0
        %v7480 = vadd.f32 %v6935, %v7479
        %v7481 = vpop.f32.mrb[0].mxu0
        %v7482 = vpop.f32.mrb[0].mxu0
        %v7483 = vadd.f32 %v6938, %v7482
        %v7484 = vpop.f32.mrb[0].mxu0
        %7485 = vmatprep.mubr.bf16.mxu0 0
        %7486 = vmatmul.mubr.bf16.gmra.mrb[0].mxu0 %v6504
        %v7487 = vpop.f32.mrb[0].mxu0
        %v7488 = vadd.f32 %v6943, %v7487
        %v7489 = vpop.f32.mrb[0].mxu0
        %v7490 = vpop.f32.mrb[0].mxu0
        %v7491 = vadd.f32 %v6946, %v7490
        %v7492 = vpop.f32.mrb[0].mxu0
        %7493 = vmatprep.mubr.bf16.mxu0 0
        %7494 = vmatmul.mubr.bf16.gmra.mrb[0].mxu0 %v6507
        %v7495 = vpop.f32.mrb[0].mxu0
        %v7496 = vadd.f32 %v6951, %v7495
        %v7497 = vpop.f32.mrb[0].mxu0
        %v7498 = vpop.f32.mrb[0].mxu0
        %v7499 = vadd.f32 %v6954, %v7498
        %v7500 = vpop.f32.mrb[0].mxu0
        %7501 = vmatprep.mubr.bf16.mxu0 0
        %7502 = vmatmul.mubr.bf16.gmra.mrb[0].mxu0 %v6510
        %v7503 = vpop.f32.mrb[0].mxu0
        %v7504 = vadd.f32 %v6959, %v7503
        %v7505 = vpop.f32.mrb[0].mxu0
        %v7506 = vpop.f32.mrb[0].mxu0
        %v7507 = vadd.f32 %v6962, %v7506
        %v7508 = vpop.f32.mrb[0].mxu0
        %7509 = vmatprep.mubr.bf16.mxu0 0
        %7510 = vmatmul.mubr.bf16.gmra.mrb[0].mxu0 %v6513
        %v7511 = vpop.f32.mrb[0].mxu0
        %v7512 = vadd.f32 %v6967, %v7511
        %v7513 = vpop.f32.mrb[0].mxu0
        %v7514 = vpop.f32.mrb[0].mxu0
        %v7515 = vadd.f32 %v6970, %v7514
        %v7516 = vpop.f32.mrb[0].mxu0
        %7517 = vmatprep.mubr.bf16.mxu0 0
        %7518 = vmatmul.mubr.bf16.gmra.mrb[0].mxu0 %v6516
        %v7519 = vpop.f32.mrb[0].mxu0
        %v7520 = vadd.f32 %v6975, %v7519
        %v7521 = vpop.f32.mrb[0].mxu0
        %v7522 = vpop.f32.mrb[0].mxu0
        %v7523 = vadd.f32 %v6978, %v7522
        %v7524 = vpop.f32.mrb[0].mxu0
        %7525 = vmatprep.mubr.bf16.mxu0 0
        %7526 = vmatmul.mubr.bf16.gmra.mrb[0].mxu0 %v6519
        %v7527 = vpop.f32.mrb[0].mxu0
        %v7528 = vadd.f32 %v6983, %v7527
        %v7529 = vpop.f32.mrb[0].mxu0
        %v7530 = vpop.f32.mrb[0].mxu0
        %v7531 = vadd.f32 %v6986, %v7530
        %v7532 = vpop.f32.mrb[0].mxu0
        %7533 = vmatprep.mubr.bf16.mxu0 0
        %7534 = vmatmul.mubr.bf16.gmra.mrb[0].mxu0 %v6522
        %v7535 = vpop.f32.mrb[0].mxu0
        %v7536 = vadd.f32 %v6991, %v7535
        %v7537 = vpop.f32.mrb[0].mxu0
        %v7538 = vpop.f32.mrb[0].mxu0
        %v7539 = vadd.f32 %v6994, %v7538
        %v7540 = vpop.f32.mrb[0].mxu0
        %7541 = vmatprep.mubr.bf16.mxu0 0
        %7542 = vmatmul.mubr.bf16.gmra.mrb[0].mxu0 %v6525
        %v7543 = vpop.f32.mrb[0].mxu0
        %v7544 = vadd.f32 %v6999, %v7543
        %v7545 = vpop.f32.mrb[0].mxu0
        %v7546 = vpop.f32.mrb[0].mxu0
        %v7547 = vadd.f32 %v7002, %v7546
        %v7548 = vpop.f32.mrb[0].mxu0
        %7549 = vmatprep.mubr.bf16.mxu0 0
        %7550 = vmatmul.mubr.bf16.gmra.mrb[0].mxu0 %v6528
        %v7551 = vpop.f32.mrb[0].mxu0
        %v7552 = vadd.f32 %v7007, %v7551
        %v7553 = vpop.f32.mrb[0].mxu0
        %v7554 = vpop.f32.mrb[0].mxu0
        %v7555 = vadd.f32 %v7010, %v7554
        %v7556 = vpop.f32.mrb[0].mxu0
        %7557 = vmatprep.mubr.bf16.mxu0 0
        %7558 = vmatmul.mubr.bf16.gmra.mrb[0].mxu0 %v6531
        %v7559 = vpop.f32.mrb[0].mxu0
        %v7560 = vadd.f32 %v7015, %v7559
        %v7561 = vpop.f32.mrb[0].mxu0
        %v7562 = vpop.f32.mrb[0].mxu0
        %v7563 = vadd.f32 %v7018, %v7562
        %v7564 = vpop.f32.mrb[0].mxu0
        %7565 = vmatprep.mubr.bf16.mxu0 0
        %7566 = vmatmul.mubr.bf16.gmra.mrb[0].mxu0 %v6534
        %v7567 = vpop.f32.mrb[0].mxu0
        %v7568 = vadd.f32 %v7023, %v7567
        %v7569 = vpop.f32.mrb[0].mxu0
        %v7570 = vpop.f32.mrb[0].mxu0
        %v7571 = vadd.f32 %v7026, %v7570
        %v7572 = vpop.f32.mrb[0].mxu0
        %7573 = vmatprep.mubr.bf16.mxu0 0
        %7574 = vmatmul.mubr.bf16.gmra.mrb[0].mxu0 %v6537
        %v7575 = vpop.f32.mrb[0].mxu0
        %v7576 = vadd.f32 %v7031, %v7575
        %v7577 = vpop.f32.mrb[0].mxu0
        %v7578 = vpop.f32.mrb[0].mxu0
        %v7579 = vadd.f32 %v7034, %v7578
        %v7580 = vpop.f32.mrb[0].mxu0
        %7581 = vmatprep.mubr.bf16.mxu0 0
        %7582 = vmatmul.mubr.bf16.gmra.mrb[0].mxu0 %v6540
        %v7583 = vpop.f32.mrb[0].mxu0
        %v7584 = vadd.f32 %v7039, %v7583
        %v7585 = vpop.f32.mrb[0].mxu0
        %v7586 = vpop.f32.mrb[0].mxu0
        %v7587 = vadd.f32 %v7042, %v7586
        %v7588 = vpop.f32.mrb[0].mxu0
        %7589 = vmatprep.mubr.bf16.mxu0 0
        %7590 = vmatmul.mubr.bf16.gmra.mrb[0].mxu0 %v6543
        %v7591 = vpop.f32.mrb[0].mxu0
        %v7592 = vadd.f32 %v7047, %v7591
        %v7593 = vpop.f32.mrb[0].mxu0
        %v7594 = vpop.f32.mrb[0].mxu0
        %v7595 = vadd.f32 %v7050, %v7594
        %v7596 = vpop.f32.mrb[0].mxu0
        %7597 = vmatprep.mubr.bf16.mxu0 0
        %7598 = vmatmul.mubr.bf16.gmra.mrb[0].mxu0 %v6546
        %v7599 = vpop.f32.mrb[0].mxu0
        %v7600 = vadd.f32 %v7055, %v7599
        %v7601 = vpop.f32.mrb[0].mxu0
        %v7602 = vpop.f32.mrb[0].mxu0
        %v7603 = vadd.f32 %v7058, %v7602
        %v7604 = vpop.f32.mrb[0].mxu0
        %7605 = vmatprep.mubr.bf16.mxu0 0
        %7606 = vmatmul.mubr.bf16.gmra.mrb[0].mxu0 %v6549
        %v7607 = vpop.f32.mrb[0].mxu0
        %v7608 = vadd.f32 %v7063, %v7607
        %v7609 = vpop.f32.mrb[0].mxu0
        %v7610 = vpop.f32.mrb[0].mxu0
        %v7611 = vadd.f32 %v7066, %v7610
        %v7612 = vpop.f32.mrb[0].mxu0
        %7613 = vmatprep.mubr.bf16.mxu0 0
        %7614 = vmatmul.mubr.bf16.gmra.mrb[0].mxu0 %v6552
        %v7615 = vpop.f32.mrb[0].mxu0
        %v7616 = vadd.f32 %v7071, %v7615
        %v7617 = vpop.f32.mrb[0].mxu0
        %v7618 = vpop.f32.mrb[0].mxu0
        %v7619 = vadd.f32 %v7074, %v7618
        %v7620 = vpop.f32.mrb[0].mxu0
        %7621 = vmatprep.mubr.bf16.mxu0 0
        %7622 = vmatmul.mubr.bf16.gmra.mrb[0].mxu0 %v6555
        %v7623 = vpop.f32.mrb[0].mxu0
        %v7624 = vadd.f32 %v7079, %v7623
        %v7625 = vpop.f32.mrb[0].mxu0
        %v7626 = vpop.f32.mrb[0].mxu0
        %v7627 = vadd.f32 %v7082, %v7626
        %v7628 = vpop.f32.mrb[0].mxu0
        %7629 = vmatprep.mubr.bf16.mxu0 0
        %7630 = vmatmul.mubr.bf16.gmra.mrb[0].mxu0 %v6558
        %v7631 = vpop.f32.mrb[0].mxu0
        %v7632 = vadd.f32 %v7087, %v7631
        %v7633 = vpop.f32.mrb[0].mxu0
        %v7634 = vpop.f32.mrb[0].mxu0
        %v7635 = vadd.f32 %v7090, %v7634
        %v7636 = vpop.f32.mrb[0].mxu0
        %7637 = vmatprep.mubr.bf16.mxu0 0
        %7638 = vmatmul.mubr.bf16.gmra.mrb[0].mxu0 %v6561
        %v7639 = vpop.f32.mrb[0].mxu0
        %v7640 = vadd.f32 %v7095, %v7639
        %v7641 = vpop.f32.mrb[0].mxu0
        %v7642 = vpop.f32.mrb[0].mxu0
        %v7643 = vadd.f32 %v7098, %v7642
        %v7644 = vpop.f32.mrb[0].mxu0
        %7645 = vmatprep.mubr.bf16.mxu0 0
        %7646 = vmatmul.mubr.bf16.gmra.mrb[0].mxu0 %v6564
        %v7647 = vpop.f32.mrb[0].mxu0
        %v7648 = vadd.f32 %v7103, %v7647
        %v7649 = vpop.f32.mrb[0].mxu0
        %v7650 = vpop.f32.mrb[0].mxu0
        %v7651 = vadd.f32 %v7106, %v7650
        %v7652 = vpop.f32.mrb[0].mxu0
        %7653 = vmatprep.mubr.bf16.mxu0 0
        %7654 = vmatmul.mubr.bf16.gmra.mrb[0].mxu0 %v6567
        %v7655 = vpop.f32.mrb[0].mxu0
        %v7656 = vadd.f32 %v7111, %v7655
        %v7657 = vpop.f32.mrb[0].mxu0
        %v7658 = vpop.f32.mrb[0].mxu0
        %v7659 = vadd.f32 %v7114, %v7658
        %v7660 = vpop.f32.mrb[0].mxu0
        %7661 = vmatprep.mubr.bf16.mxu0 0
        %7662 = vmatmul.mubr.bf16.gmra.mrb[0].mxu0 %v6570
        %v7663 = vpop.f32.mrb[0].mxu0
        %v7664 = vadd.f32 %v7119, %v7663
        %v7665 = vpop.f32.mrb[0].mxu0
        %v7666 = vpop.f32.mrb[0].mxu0
        %v7667 = vadd.f32 %v7122, %v7666
        %v7668 = vpop.f32.mrb[0].mxu0
        %7669 = vmatprep.mubr.bf16.mxu0 0
        %7670 = vmatmul.mubr.bf16.gmra.mrb[0].mxu0 %v6573
        %v7671 = vpop.f32.mrb[0].mxu0
        %v7672 = vadd.f32 %v7127, %v7671
        %v7673 = vpop.f32.mrb[0].mxu0
        %v7674 = vpop.f32.mrb[0].mxu0
        %v7675 = vadd.f32 %v7130, %v7674
        %v7676 = vpop.f32.mrb[0].mxu0
        %7677 = vmatprep.mubr.bf16.mxu0 0
        %7678 = vmatmul.mubr.bf16.gmra.mrb[0].mxu0 %v6576
        %v7679 = vpop.f32.mrb[0].mxu0
        %v7680 = vadd.f32 %v7135, %v7679
        %v7681 = vpop.f32.mrb[0].mxu0
        %v7682 = vpop.f32.mrb[0].mxu0
        %v7683 = vadd.f32 %v7138, %v7682
        %v7684 = vpop.f32.mrb[0].mxu0
        %7685 = vmatprep.mubr.bf16.mxu0 0
        %7686 = vmatmul.mubr.bf16.gmra.mrb[0].mxu0 %v6579
        %v7687 = vpop.f32.mrb[0].mxu0
        %v7688 = vadd.f32 %v7143, %v7687
        %v7689 = vpop.f32.mrb[0].mxu0
        %v7690 = vpop.f32.mrb[0].mxu0
        %v7691 = vadd.f32 %v7146, %v7690
        %v7692 = vpop.f32.mrb[0].mxu0
        %7693 = vmatprep.mubr.bf16.mxu0 0
        %7694 = vmatmul.mubr.bf16.gmra.mrb[0].mxu0 %v6582
        %v7695 = vpop.f32.mrb[0].mxu0
        %v7696 = vadd.f32 %v7151, %v7695
        %v7697 = vpop.f32.mrb[0].mxu0
        %v7698 = vpop.f32.mrb[0].mxu0
        %v7699 = vadd.f32 %v7154, %v7698
        %v7700 = vpop.f32.mrb[0].mxu0
        %7701 = vmatprep.mubr.bf16.mxu0 0
        %7702 = vmatmul.mubr.bf16.gmra.mrb[0].mxu0 %v6585
        %v7703 = vpop.f32.mrb[0].mxu0
        %v7704 = vadd.f32 %v7159, %v7703
        %v7705 = vpop.f32.mrb[0].mxu0
        %v7706 = vpop.f32.mrb[0].mxu0
        %v7707 = vadd.f32 %v7162, %v7706
        %v7708 = vpop.f32.mrb[0].mxu0
        %7709 = vmatprep.mubr.bf16.mxu0 0
        %7710 = vmatmul.mubr.bf16.gmra.mrb[0].mxu0 %v6588
        %v7711 = vpop.f32.mrb[0].mxu0
        %v7712 = vadd.f32 %v7167, %v7711
        %v7713 = vpop.f32.mrb[0].mxu0
        %v7714 = vpop.f32.mrb[0].mxu0
        %v7715 = vadd.f32 %v7170, %v7714
        %v7716 = vpop.f32.mrb[0].mxu0
        %7717 = vmatprep.mubr.bf16.mxu0 0
        %7718 = vmatmul.mubr.bf16.gmra.mrb[0].mxu0 %v6591
        %v7719 = vpop.f32.mrb[0].mxu0
        %v7720 = vadd.f32 %v7175, %v7719
        %v7721 = vpop.f32.mrb[0].mxu0
        %v7722 = vpop.f32.mrb[0].mxu0
        %v7723 = vadd.f32 %v7178, %v7722
        %v7724 = vpop.f32.mrb[0].mxu0
        %7725 = vmatprep.mubr.bf16.mxu0 0
        %7726 = vmatmul.mubr.bf16.gmra.mrb[0].mxu0 %v6594
        %v7727 = vpop.f32.mrb[0].mxu0
        %v7728 = vadd.f32 %v7183, %v7727
        %v7729 = vpop.f32.mrb[0].mxu0
        %v7730 = vpop.f32.mrb[0].mxu0
        %v7731 = vadd.f32 %v7186, %v7730
        %v7732 = vpop.f32.mrb[0].mxu0
        %7733 = vmatprep.mubr.bf16.mxu0 0
        %7734 = vmatmul.mubr.bf16.gmra.mrb[0].mxu0 %v6597
        %v7735 = vpop.f32.mrb[0].mxu0
        %v7736 = vadd.f32 %v7191, %v7735
        %v7737 = vpop.f32.mrb[0].mxu0
        %v7738 = vpop.f32.mrb[0].mxu0
        %v7739 = vadd.f32 %v7194, %v7738
        %v7740 = vpop.f32.mrb[0].mxu0
        %7741 = vmatprep.mubr.bf16.mxu0 0
        %7742 = vmatmul.mubr.bf16.gmra.mrb[0].mxu0 %v6600
        %v7743 = vpop.f32.mrb[0].mxu0
        %v7744 = vadd.f32 %v7199, %v7743
        %v7745 = vpop.f32.mrb[0].mxu0
        %v7746 = vpop.f32.mrb[0].mxu0
        %v7747 = vadd.f32 %v7202, %v7746
        %v7748 = vpop.f32.mrb[0].mxu0
        %7749 = vmatprep.mubr.bf16.mxu0 0
        %7750 = vmatmul.mubr.bf16.gmra.mrb[0].mxu0 %v6603
        %v7751 = vpop.f32.mrb[0].mxu0
        %v7752 = vadd.f32 %v7207, %v7751
        %v7753 = vpop.f32.mrb[0].mxu0
        %v7754 = vpop.f32.mrb[0].mxu0
        %v7755 = vadd.f32 %v7210, %v7754
        %v7756 = vpop.f32.mrb[0].mxu0
        %7757 = vmatprep.mubr.bf16.mxu0 0
        %7758 = vmatmul.mubr.bf16.gmra.mrb[0].mxu0 %v6606
        %v7759 = vpop.f32.mrb[0].mxu0
        %v7760 = vadd.f32 %v7215, %v7759
        %v7761 = vpop.f32.mrb[0].mxu0
        %v7762 = vpop.f32.mrb[0].mxu0
        %v7763 = vadd.f32 %v7218, %v7762
        %v7764 = vpop.f32.mrb[0].mxu0
        %7765 = vmatprep.mubr.bf16.mxu0 0
        %7766 = vmatmul.mubr.bf16.gmra.mrb[0].mxu0 %v6609
        %v7767 = vpop.f32.mrb[0].mxu0
        %v7768 = vadd.f32 %v7223, %v7767
        %v7769 = vpop.f32.mrb[0].mxu0
        %v7770 = vpop.f32.mrb[0].mxu0
        %v7771 = vadd.f32 %v7226, %v7770
        %v7772 = vpop.f32.mrb[0].mxu0
        %7773 = vmatprep.mubr.bf16.mxu0 0
        %7774 = vmatmul.mubr.bf16.gmra.mrb[0].mxu0 %v6612
        %v7775 = vpop.f32.mrb[0].mxu0
        %v7776 = vadd.f32 %v7231, %v7775
        %v7777 = vpop.f32.mrb[0].mxu0
        %v7778 = vpop.f32.mrb[0].mxu0
        %v7779 = vadd.f32 %v7234, %v7778
        %v7780 = vpop.f32.mrb[0].mxu0
        %7781 = vmatprep.mubr.bf16.mxu0 0
        %7782 = vmatmul.mubr.bf16.gmra.mrb[0].mxu0 %v6615
        %v7783 = vpop.f32.mrb[0].mxu0
        %v7784 = vadd.f32 %v7239, %v7783
        %v7785 = vpop.f32.mrb[0].mxu0
        %v7786 = vpop.f32.mrb[0].mxu0
        %v7787 = vadd.f32 %v7242, %v7786
        %v7788 = vpop.f32.mrb[0].mxu0
        %7789 = vmatprep.mubr.bf16.mxu0 0
        %7790 = vmatmul.mubr.bf16.gmra.mrb[0].mxu0 %v6618
        %v7791 = vpop.f32.mrb[0].mxu0
        %v7792 = vadd.f32 %v7247, %v7791
        %v7793 = vpop.f32.mrb[0].mxu0
        %v7794 = vpop.f32.mrb[0].mxu0
        %v7795 = vadd.f32 %v7250, %v7794
        %v7796 = vpop.f32.mrb[0].mxu0
        %7797 = vmatprep.mubr.bf16.mxu0 0
        %7798 = vmatmul.mubr.bf16.gmra.mrb[0].mxu0 %v6621
        %v7799 = vpop.f32.mrb[0].mxu0
        %v7800 = vadd.f32 %v7255, %v7799
        %v7801 = vpop.f32.mrb[0].mxu0
        %v7802 = vpop.f32.mrb[0].mxu0
        %v7803 = vadd.f32 %v7258, %v7802
        %v7804 = vpop.f32.mrb[0].mxu0
        %7805 = vmatprep.mubr.bf16.mxu0 0
        %7806 = vmatmul.mubr.bf16.gmra.mrb[0].mxu0 %v6624
        %v7807 = vpop.f32.mrb[0].mxu0
        %v7808 = vadd.f32 %v7263, %v7807
        %v7809 = vpop.f32.mrb[0].mxu0
        %v7810 = vpop.f32.mrb[0].mxu0
        %v7811 = vadd.f32 %v7266, %v7810
        %v7812 = vpop.f32.mrb[0].mxu0
        %7813 = vmatprep.mubr.bf16.mxu0 0
        %7814 = vmatmul.mubr.bf16.gmra.mrb[0].mxu0 %v6627
        %v7815 = vpop.f32.mrb[0].mxu0
        %v7816 = vadd.f32 %v7271, %v7815
        %v7817 = vpop.f32.mrb[0].mxu0
        %v7818 = vpop.f32.mrb[0].mxu0
        %v7819 = vadd.f32 %v7274, %v7818
        %v7820 = vpop.f32.mrb[0].mxu0
        %7821 = vmatprep.mubr.bf16.mxu0 0
        %7822 = vmatmul.mubr.bf16.gmra.mrb[0].mxu0 %v6630
        %v7823 = vpop.f32.mrb[0].mxu0
        %v7824 = vadd.f32 %v7279, %v7823
        %v7825 = vpop.f32.mrb[0].mxu0
        %v7826 = vpop.f32.mrb[0].mxu0
        %v7827 = vadd.f32 %v7282, %v7826
        %v7828 = vpop.f32.mrb[0].mxu0
        %7829 = vmatprep.mubr.bf16.mxu0 0
        %7830 = vmatmul.mubr.bf16.gmra.mrb[0].mxu0 %v6633
        %v7831 = vpop.f32.mrb[0].mxu0
        %v7832 = vadd.f32 %v7287, %v7831
        %v7833 = vpop.f32.mrb[0].mxu0
        %v7834 = vpop.f32.mrb[0].mxu0
        %v7835 = vadd.f32 %v7290, %v7834
        %v7836 = vpop.f32.mrb[0].mxu0
        %7837 = vmatprep.mubr.bf16.mxu0 0
        %7838 = vmatmul.mubr.bf16.gmra.mrb[0].mxu0 %v6636
        %v7839 = vpop.f32.mrb[0].mxu0
        %v7840 = vadd.f32 %v7295, %v7839
        %v7841 = vpop.f32.mrb[0].mxu0
        %v7842 = vpop.f32.mrb[0].mxu0
        %v7843 = vadd.f32 %v7298, %v7842
        %v7844 = vpop.f32.mrb[0].mxu0
        %7845 = vmatprep.mubr.bf16.mxu0 0
        %7846 = vmatmul.mubr.bf16.gmra.mrb[0].mxu0 %v6639
        %v7847 = vpop.f32.mrb[0].mxu0
        %v7848 = vadd.f32 %v7303, %v7847
        %v7849 = vpop.f32.mrb[0].mxu0
        %v7850 = vpop.f32.mrb[0].mxu0
        %v7851 = vadd.f32 %v7306, %v7850
        %v7852 = vpop.f32.mrb[0].mxu0
        %7853 = vmatprep.mubr.bf16.mxu0 0
        %7854 = vmatmul.mubr.bf16.gmra.mrb[0].mxu0 %v6642
        %v7855 = vpop.f32.mrb[0].mxu0
        %v7856 = vadd.f32 %v7311, %v7855
        %v7857 = vpop.f32.mrb[0].mxu0
        %v7858 = vpop.f32.mrb[0].mxu0
        %v7859 = vadd.f32 %v7314, %v7858
        %v7860 = vpop.f32.mrb[0].mxu0
        %7861 = vmatprep.mubr.bf16.mxu0 0
        %7862 = vmatmul.mubr.bf16.gmra.mrb[0].mxu0 %v6645
        %v7863 = vpop.f32.mrb[0].mxu0
        %v7864 = vadd.f32 %v7319, %v7863
        %v7865 = vpop.f32.mrb[0].mxu0
        %v7866 = vpop.f32.mrb[0].mxu0
        %v7867 = vadd.f32 %v7322, %v7866
        %v7868 = vpop.f32.mrb[0].mxu0
        %7869 = vmatprep.mubr.bf16.mxu0 0
        %7870 = vmatmul.mubr.bf16.gmra.mrb[0].mxu0 %v6648
        %v7871 = vpop.f32.mrb[0].mxu0
        %v7872 = vadd.f32 %v7327, %v7871
        %v7873 = vpop.f32.mrb[0].mxu0
        %v7874 = vpop.f32.mrb[0].mxu0
        %v7875 = vadd.f32 %v7330, %v7874
        %v7876 = vpop.f32.mrb[0].mxu0
        %7877 = vmatprep.mubr.bf16.mxu0 0
        %7878 = vmatmul.mubr.bf16.gmra.mrb[0].mxu0 %v6651
        %v7879 = vpop.f32.mrb[0].mxu0
        %v7880 = vadd.f32 %v7335, %v7879
        %v7881 = vpop.f32.mrb[0].mxu0
        %v7882 = vpop.f32.mrb[0].mxu0
        %v7883 = vadd.f32 %v7338, %v7882
        %v7884 = vpop.f32.mrb[0].mxu0
        %7885 = vmatprep.mubr.bf16.mxu0 0
        %7886 = vmatmul.mubr.bf16.gmra.mrb[0].mxu0 %v6654
        %v7887 = vpop.f32.mrb[0].mxu0
        %v7888 = vadd.f32 %v7343, %v7887
        %v7889 = vpop.f32.mrb[0].mxu0
        %v7890 = vpop.f32.mrb[0].mxu0
        %v7891 = vadd.f32 %v7346, %v7890
        %v7892 = vpop.f32.mrb[0].mxu0
        %7893 = vmatprep.mubr.bf16.mxu0 0
        %7894 = vmatmul.mubr.bf16.gmra.mrb[0].mxu0 %v6657
        %v7895 = vpop.f32.mrb[0].mxu0
        %v7896 = vadd.f32 %v7351, %v7895
        %v7897 = vpop.f32.mrb[0].mxu0
        %v7898 = vpop.f32.mrb[0].mxu0
        %v7899 = vadd.f32 %v7354, %v7898
        %v7900 = vpop.f32.mrb[0].mxu0
        %7901 = vmatprep.mubr.bf16.mxu0 0
        %7902 = vmatmul.mubr.bf16.gmra.mrb[0].mxu0 %v6660
        %v7903 = vpop.f32.mrb[0].mxu0
        %v7904 = vadd.f32 %v7359, %v7903
        %v7905 = vpop.f32.mrb[0].mxu0
        %v7906 = vpop.f32.mrb[0].mxu0
        %v7907 = vadd.f32 %v7362, %v7906
        %v7908 = vpop.f32.mrb[0].mxu0
        %7909 = vmatprep.mubr.bf16.mxu0 0
        %7910 = vmatmul.mubr.bf16.gmra.mrb[0].mxu0 %v6663
        %v7911 = vpop.f32.mrb[0].mxu0
        %v7912 = vadd.f32 %v7367, %v7911
        %v7913 = vpop.f32.mrb[0].mxu0
        %v7914 = vpop.f32.mrb[0].mxu0
        %v7915 = vadd.f32 %v7370, %v7914
        %v7916 = vpop.f32.mrb[0].mxu0
        %7917 = vmatprep.mubr.bf16.mxu0 0
        %7918 = vmatmul.mubr.bf16.gmra.mrb[0].mxu0 %v6666
        %v7919 = vpop.f32.mrb[0].mxu0
        %v7920 = vadd.f32 %v7375, %v7919
        %v7921 = vpop.f32.mrb[0].mxu0
        %v7922 = vpop.f32.mrb[0].mxu0
        %v7923 = vadd.f32 %v7378, %v7922
        %v7924 = vpop.f32.mrb[0].mxu0
        %7925 = vmatprep.mubr.bf16.mxu0 0
        %7926 = vmatmul.mubr.bf16.gmra.mrb[0].mxu0 %v6669
        %v7927 = vpop.f32.mrb[0].mxu0
        %v7928 = vadd.f32 %v7383, %v7927
        %v7929 = vpop.f32.mrb[0].mxu0
        %v7930 = vpop.f32.mrb[0].mxu0
        %v7931 = vadd.f32 %v7386, %v7930
        %v7932 = vpop.f32.mrb[0].mxu0
        %7933 = vmatprep.mubr.bf16.mxu0 0
        %7934 = vmatmul.mubr.bf16.gmra.mrb[0].mxu0 %v6672
        %v7935 = vpop.f32.mrb[0].mxu0
        %v7936 = vadd.f32 %v7391, %v7935
        %v7937 = vpop.f32.mrb[0].mxu0
        %v7938 = vpop.f32.mrb[0].mxu0
        %v7939 = vadd.f32 %v7394, %v7938
        %v7940 = vpop.f32.mrb[0].mxu0
        %7941 = vmatprep.mubr.bf16.mxu0 0
        %7942 = vmatmul.mubr.bf16.gmra.mrb[0].mxu0 %v6675
        %v7943 = vpop.f32.mrb[0].mxu0
        %v7944 = vadd.f32 %v7399, %v7943
        %v7945 = vpop.f32.mrb[0].mxu0
        %v7946 = vpop.f32.mrb[0].mxu0
        %v7947 = vadd.f32 %v7402, %v7946
        %v7948 = vpop.f32.mrb[0].mxu0
        %7949 = vmatprep.mubr.bf16.mxu0 0
        %7950 = vmatmul.mubr.bf16.gmra.mrb[0].mxu0 %v6678
        %v7951 = vpop.f32.mrb[0].mxu0
        %v7952 = vadd.f32 %v7407, %v7951
        %v7953 = vpop.f32.mrb[0].mxu0
        %v7954 = vpop.f32.mrb[0].mxu0
        %v7955 = vadd.f32 %v7410, %v7954
        %v7956 = vpop.f32.mrb[0].mxu0
        %7957 = vmatprep.mubr.bf16.mxu0 0
        %7958 = vmatmul.mubr.bf16.gmra.mrb[0].mxu0 %v6681
        %v7959 = vpop.f32.mrb[0].mxu0
        %v7960 = vadd.f32 %v7415, %v7959
        %v7961 = vpop.f32.mrb[0].mxu0
        %v7962 = vpop.f32.mrb[0].mxu0
        %v7963 = vadd.f32 %v7418, %v7962
        %v7964 = vpop.f32.mrb[0].mxu0
        %7965 = vmatprep.mubr.bf16.mxu0 0
        %7966 = vmatmul.mubr.bf16.gmra.mrb[0].mxu0 %v6684
        %v7967 = vpop.f32.mrb[0].mxu0
        %v7968 = vadd.f32 %v7423, %v7967
        %v7969 = vpop.f32.mrb[0].mxu0
        %v7970 = vpop.f32.mrb[0].mxu0
        %v7971 = vadd.f32 %v7426, %v7970
        %v7972 = vpop.f32.mrb[0].mxu0
        %7973 = vdwg.mxu0
        %v7974 = vmul.f32 %v7464, 0.5
        %v7975 = vmul.f32 %v7467, 0.5
        %v7976 = vmul.f32 %v7472, 0.5
        %v7977 = vmul.f32 %v7475, 0.5
        %v7978 = vmul.f32 %v7480, 0.5
        %v7979 = vmul.f32 %v7483, 0.5
        %v7980 = vmul.f32 %v7488, 0.5
        %v7981 = vmul.f32 %v7491, 0.5
        %v7982 = vmul.f32 %v7496, 0.5
        %v7983 = vmul.f32 %v7499, 0.5
        %v7984 = vmul.f32 %v7504, 0.5
        %v7985 = vmul.f32 %v7507, 0.5
        %v7986 = vmul.f32 %v7512, 0.5
        %v7987 = vmul.f32 %v7515, 0.5
        %v7988 = vmul.f32 %v7520, 0.5
        %v7989 = vmul.f32 %v7523, 0.5
        %v7990 = vmul.f32 %v7528, 0.5
        %v7991 = vmul.f32 %v7531, 0.5
        %v7992 = vmul.f32 %v7536, 0.5
        %v7993 = vmul.f32 %v7539, 0.5
        %v7994 = vmul.f32 %v7544, 0.5
        %v7995 = vmul.f32 %v7547, 0.5
        %v7996 = vmul.f32 %v7552, 0.5
        %v7997 = vmul.f32 %v7555, 0.5
        %v7998 = vmul.f32 %v7560, 0.5
        %v7999 = vmul.f32 %v7563, 0.5
        %v8000 = vmul.f32 %v7568, 0.5
        %v8001 = vmul.f32 %v7571, 0.5
        %v8002 = vmul.f32 %v7576, 0.5
        %v8003 = vmul.f32 %v7579, 0.5
        %v8004 = vmul.f32 %v7584, 0.5
        %v8005 = vmul.f32 %v7587, 0.5
        %v8006 = vmul.f32 %v7592, 0.5
        %v8007 = vmul.f32 %v7595, 0.5
        %v8008 = vmul.f32 %v7600, 0.5
        %v8009 = vmul.f32 %v7603, 0.5
        %v8010 = vmul.f32 %v7608, 0.5
        %v8011 = vmul.f32 %v7611, 0.5
        %v8012 = vmul.f32 %v7616, 0.5
        %v8013 = vmul.f32 %v7619, 0.5
        %v8014 = vmul.f32 %v7624, 0.5
        %v8015 = vmul.f32 %v7627, 0.5
        %v8016 = vmul.f32 %v7632, 0.5
        %v8017 = vmul.f32 %v7635, 0.5
        %v8018 = vmul.f32 %v7640, 0.5
        %v8019 = vmul.f32 %v7643, 0.5
        %v8020 = vmul.f32 %v7648, 0.5
        %v8021 = vmul.f32 %v7651, 0.5
        %v8022 = vmul.f32 %v7656, 0.5
        %v8023 = vmul.f32 %v7659, 0.5
        %v8024 = vmul.f32 %v7664, 0.5
        %v8025 = vmul.f32 %v7667, 0.5
        %v8026 = vmul.f32 %v7672, 0.5
        %v8027 = vmul.f32 %v7675, 0.5
        %v8028 = vmul.f32 %v7680, 0.5
        %v8029 = vmul.f32 %v7683, 0.5
        %v8030 = vmul.f32 %v7688, 0.5
        %v8031 = vmul.f32 %v7691, 0.5
        %v8032 = vmul.f32 %v7696, 0.5
        %v8033 = vmul.f32 %v7699, 0.5
        %v8034 = vmul.f32 %v7704, 0.5
        %v8035 = vmul.f32 %v7707, 0.5
        %v8036 = vmul.f32 %v7712, 0.5
        %v8037 = vmul.f32 %v7715, 0.5
        %v8038 = vmul.f32 %v7720, 0.5
        %v8039 = vmul.f32 %v7723, 0.5
        %v8040 = vmul.f32 %v7728, 0.5
        %v8041 = vmul.f32 %v7731, 0.5
        %v8042 = vmul.f32 %v7736, 0.5
        %v8043 = vmul.f32 %v7739, 0.5
        %v8044 = vmul.f32 %v7744, 0.5
        %v8045 = vmul.f32 %v7747, 0.5
        %v8046 = vmul.f32 %v7752, 0.5
        %v8047 = vmul.f32 %v7755, 0.5
        %v8048 = vmul.f32 %v7760, 0.5
        %v8049 = vmul.f32 %v7763, 0.5
        %v8050 = vmul.f32 %v7768, 0.5
        %v8051 = vmul.f32 %v7771, 0.5
        %v8052 = vmul.f32 %v7776, 0.5
        %v8053 = vmul.f32 %v7779, 0.5
        %v8054 = vmul.f32 %v7784, 0.5
        %v8055 = vmul.f32 %v7787, 0.5
        %v8056 = vmul.f32 %v7792, 0.5
        %v8057 = vmul.f32 %v7795, 0.5
        %v8058 = vmul.f32 %v7800, 0.5
        %v8059 = vmul.f32 %v7803, 0.5
        %v8060 = vmul.f32 %v7808, 0.5
        %v8061 = vmul.f32 %v7811, 0.5
        %v8062 = vmul.f32 %v7816, 0.5
        %v8063 = vmul.f32 %v7819, 0.5
        %v8064 = vmul.f32 %v7824, 0.5
        %v8065 = vmul.f32 %v7827, 0.5
        %v8066 = vmul.f32 %v7832, 0.5
        %v8067 = vmul.f32 %v7835, 0.5
        %v8068 = vmul.f32 %v7840, 0.5
        %v8069 = vmul.f32 %v7843, 0.5
        %v8070 = vmul.f32 %v7848, 0.5
        %v8071 = vmul.f32 %v7851, 0.5
        %v8072 = vmul.f32 %v7856, 0.5
        %v8073 = vmul.f32 %v7859, 0.5
        %v8074 = vmul.f32 %v7864, 0.5
        %v8075 = vmul.f32 %v7867, 0.5
        %v8076 = vmul.f32 %v7872, 0.5
        %v8077 = vmul.f32 %v7875, 0.5
        %v8078 = vmul.f32 %v7880, 0.5
        %v8079 = vmul.f32 %v7883, 0.5
        %v8080 = vmul.f32 %v7888, 0.5
        %v8081 = vmul.f32 %v7891, 0.5
        %v8082 = vmul.f32 %v7896, 0.5
        %v8083 = vmul.f32 %v7899, 0.5
        %v8084 = vmul.f32 %v7904, 0.5
        %v8085 = vmul.f32 %v7907, 0.5
        %v8086 = vmul.f32 %v7912, 0.5
        %v8087 = vmul.f32 %v7915, 0.5
        %v8088 = vmul.f32 %v7920, 0.5
        %v8089 = vmul.f32 %v7923, 0.5
        %v8090 = vmul.f32 %v7928, 0.5
        %v8091 = vmul.f32 %v7931, 0.5
        %v8092 = vmul.f32 %v7936, 0.5
        %v8093 = vmul.f32 %v7939, 0.5
        %v8094 = vmul.f32 %v7944, 0.5
        %v8095 = vmul.f32 %v7947, 0.5
        %v8096 = vmul.f32 %v7952, 0.5
        %v8097 = vmul.f32 %v7955, 0.5
        %v8098 = vmul.f32 %v7960, 0.5
        %v8099 = vmul.f32 %v7963, 0.5
        %v8100 = vmul.f32 %v7968, 0.5
        %v8101 = vmul.f32 %v7971, 0.5
        %v8102 = vtanh.pop %v7974
        %v8103 = vtanh.pop %v7975
        %v8104 = vtanh.pop %v7976
        %v8105 = vtanh.pop %v7977
        %v8106 = vtanh.pop %v7978
        %v8107 = vtanh.pop %v7979
        %v8108 = vtanh.pop %v7980
        %v8109 = vtanh.pop %v7981
        %v8110 = vtanh.pop %v7982
        %v8111 = vtanh.pop %v7983
        %v8112 = vtanh.pop %v7984
        %v8113 = vtanh.pop %v7985
        %v8114 = vtanh.pop %v7986
        %v8115 = vtanh.pop %v7987
        %v8116 = vtanh.pop %v7988
        %v8117 = vtanh.pop %v7989
        %v8118 = vtanh.pop %v7990
        %v8119 = vtanh.pop %v7991
        %v8120 = vtanh.pop %v7992
        %v8121 = vtanh.pop %v7993
        %v8122 = vtanh.pop %v7994
        %v8123 = vtanh.pop %v7995
        %v8124 = vtanh.pop %v7996
        %v8125 = vtanh.pop %v7997
        %v8126 = vtanh.pop %v7998
        %v8127 = vtanh.pop %v7999
        %v8128 = vtanh.pop %v8000
        %v8129 = vtanh.pop %v8001
        %v8130 = vtanh.pop %v8002
        %v8131 = vtanh.pop %v8003
        %v8132 = vtanh.pop %v8004
        %v8133 = vtanh.pop %v8005
        %v8134 = vtanh.pop %v8006
        %v8135 = vtanh.pop %v8007
        %v8136 = vtanh.pop %v8008
        %v8137 = vtanh.pop %v8009
        %v8138 = vtanh.pop %v8010
        %v8139 = vtanh.pop %v8011
        %v8140 = vtanh.pop %v8012
        %v8141 = vtanh.pop %v8013
        %v8142 = vtanh.pop %v8014
        %v8143 = vtanh.pop %v8015
        %v8144 = vtanh.pop %v8016
        %v8145 = vtanh.pop %v8017
        %v8146 = vtanh.pop %v8018
        %v8147 = vtanh.pop %v8019
        %v8148 = vtanh.pop %v8020
        %v8149 = vtanh.pop %v8021
        %v8150 = vtanh.pop %v8022
        %v8151 = vtanh.pop %v8023
        %v8152 = vtanh.pop %v8024
        %v8153 = vtanh.pop %v8025
        %v8154 = vtanh.pop %v8026
        %v8155 = vtanh.pop %v8027
        %v8156 = vtanh.pop %v8028
        %v8157 = vtanh.pop %v8029
        %v8158 = vtanh.pop %v8030
        %v8159 = vtanh.pop %v8031
        %v8160 = vtanh.pop %v8032
        %v8161 = vtanh.pop %v8033
        %v8162 = vtanh.pop %v8034
        %v8163 = vtanh.pop %v8035
        %v8164 = vtanh.pop %v8036
        %v8165 = vtanh.pop %v8037
        %v8166 = vtanh.pop %v8038
        %v8167 = vtanh.pop %v8039
        %v8168 = vtanh.pop %v8040
        %v8169 = vtanh.pop %v8041
        %v8170 = vtanh.pop %v8042
        %v8171 = vtanh.pop %v8043
        %v8172 = vtanh.pop %v8044
        %v8173 = vtanh.pop %v8045
        %v8174 = vtanh.pop %v8046
        %v8175 = vtanh.pop %v8047
        %v8176 = vtanh.pop %v8048
        %v8177 = vtanh.pop %v8049
        %v8178 = vtanh.pop %v8050
        %v8179 = vtanh.pop %v8051
        %v8180 = vtanh.pop %v8052
        %v8181 = vtanh.pop %v8053
        %v8182 = vtanh.pop %v8054
        %v8183 = vtanh.pop %v8055
        %v8184 = vtanh.pop %v8056
        %v8185 = vtanh.pop %v8057
        %v8186 = vtanh.pop %v8058
        %v8187 = vtanh.pop %v8059
        %v8188 = vtanh.pop %v8060
        %v8189 = vtanh.pop %v8061
        %v8190 = vtanh.pop %v8062
        %v8191 = vtanh.pop %v8063
        %v8192 = vtanh.pop %v8064
        %v8193 = vtanh.pop %v8065
        %v8194 = vtanh.pop %v8066
        %v8195 = vtanh.pop %v8067
        %v8196 = vtanh.pop %v8068
        %v8197 = vtanh.pop %v8069
        %v8198 = vtanh.pop %v8070
        %v8199 = vtanh.pop %v8071
        %v8200 = vtanh.pop %v8072
        %v8201 = vtanh.pop %v8073
        %v8202 = vtanh.pop %v8074
        %v8203 = vtanh.pop %v8075
        %v8204 = vtanh.pop %v8076
        %v8205 = vtanh.pop %v8077
        %v8206 = vtanh.pop %v8078
        %v8207 = vtanh.pop %v8079
        %v8208 = vtanh.pop %v8080
        %v8209 = vtanh.pop %v8081
        %v8210 = vtanh.pop %v8082
        %v8211 = vtanh.pop %v8083
        %v8212 = vtanh.pop %v8084
        %v8213 = vtanh.pop %v8085
        %v8214 = vtanh.pop %v8086
        %v8215 = vtanh.pop %v8087
        %v8216 = vtanh.pop %v8088
        %v8217 = vtanh.pop %v8089
        %v8218 = vtanh.pop %v8090
        %v8219 = vtanh.pop %v8091
        %v8220 = vtanh.pop %v8092
        %v8221 = vtanh.pop %v8093
        %v8222 = vtanh.pop %v8094
        %v8223 = vtanh.pop %v8095
        %v8224 = vtanh.pop %v8096
        %v8225 = vtanh.pop %v8097
        %v8226 = vtanh.pop %v8098
        %v8227 = vtanh.pop %v8099
        %v8228 = vtanh.pop %v8100
        %v8229 = vtanh.pop %v8101
        %v8230 = vadd.f32 %v8102, 1.0
        %v8231 = vadd.f32 %v8103, 1.0
        %v8232 = vadd.f32 %v8104, 1.0
        %v8233 = vadd.f32 %v8105, 1.0
        %v8234 = vadd.f32 %v8106, 1.0
        %v8235 = vadd.f32 %v8107, 1.0
        %v8236 = vadd.f32 %v8108, 1.0
        %v8237 = vadd.f32 %v8109, 1.0
        %v8238 = vadd.f32 %v8110, 1.0
        %v8239 = vadd.f32 %v8111, 1.0
        %v8240 = vadd.f32 %v8112, 1.0
        %v8241 = vadd.f32 %v8113, 1.0
        %v8242 = vadd.f32 %v8114, 1.0
        %v8243 = vadd.f32 %v8115, 1.0
        %v8244 = vadd.f32 %v8116, 1.0
        %v8245 = vadd.f32 %v8117, 1.0
        %v8246 = vadd.f32 %v8118, 1.0
        %v8247 = vadd.f32 %v8119, 1.0
        %v8248 = vadd.f32 %v8120, 1.0
        %v8249 = vadd.f32 %v8121, 1.0
        %v8250 = vadd.f32 %v8122, 1.0
        %v8251 = vadd.f32 %v8123, 1.0
        %v8252 = vadd.f32 %v8124, 1.0
        %v8253 = vadd.f32 %v8125, 1.0
        %v8254 = vadd.f32 %v8126, 1.0
        %v8255 = vadd.f32 %v8127, 1.0
        %v8256 = vadd.f32 %v8128, 1.0
        %v8257 = vadd.f32 %v8129, 1.0
        %v8258 = vadd.f32 %v8130, 1.0
        %v8259 = vadd.f32 %v8131, 1.0
        %v8260 = vadd.f32 %v8132, 1.0
        %v8261 = vadd.f32 %v8133, 1.0
        %v8262 = vadd.f32 %v8134, 1.0
        %v8263 = vadd.f32 %v8135, 1.0
        %v8264 = vadd.f32 %v8136, 1.0
        %v8265 = vadd.f32 %v8137, 1.0
        %v8266 = vadd.f32 %v8138, 1.0
        %v8267 = vadd.f32 %v8139, 1.0
        %v8268 = vadd.f32 %v8140, 1.0
        %v8269 = vadd.f32 %v8141, 1.0
        %v8270 = vadd.f32 %v8142, 1.0
        %v8271 = vadd.f32 %v8143, 1.0
        %v8272 = vadd.f32 %v8144, 1.0
        %v8273 = vadd.f32 %v8145, 1.0
        %v8274 = vadd.f32 %v8146, 1.0
        %v8275 = vadd.f32 %v8147, 1.0
        %v8276 = vadd.f32 %v8148, 1.0
        %v8277 = vadd.f32 %v8149, 1.0
        %v8278 = vadd.f32 %v8150, 1.0
        %v8279 = vadd.f32 %v8151, 1.0
        %v8280 = vadd.f32 %v8152, 1.0
        %v8281 = vadd.f32 %v8153, 1.0
        %v8282 = vadd.f32 %v8154, 1.0
        %v8283 = vadd.f32 %v8155, 1.0
        %v8284 = vadd.f32 %v8156, 1.0
        %v8285 = vadd.f32 %v8157, 1.0
        %v8286 = vadd.f32 %v8158, 1.0
        %v8287 = vadd.f32 %v8159, 1.0
        %v8288 = vadd.f32 %v8160, 1.0
        %v8289 = vadd.f32 %v8161, 1.0
        %v8290 = vadd.f32 %v8162, 1.0
        %v8291 = vadd.f32 %v8163, 1.0
        %v8292 = vadd.f32 %v8164, 1.0
        %v8293 = vadd.f32 %v8165, 1.0
        %v8294 = vadd.f32 %v8166, 1.0
        %v8295 = vadd.f32 %v8167, 1.0
        %v8296 = vadd.f32 %v8168, 1.0
        %v8297 = vadd.f32 %v8169, 1.0
        %v8298 = vadd.f32 %v8170, 1.0
        %v8299 = vadd.f32 %v8171, 1.0
        %v8300 = vadd.f32 %v8172, 1.0
        %v8301 = vadd.f32 %v8173, 1.0
        %v8302 = vadd.f32 %v8174, 1.0
        %v8303 = vadd.f32 %v8175, 1.0
        %v8304 = vadd.f32 %v8176, 1.0
        %v8305 = vadd.f32 %v8177, 1.0
        %v8306 = vadd.f32 %v8178, 1.0
        %v8307 = vadd.f32 %v8179, 1.0
        %v8308 = vadd.f32 %v8180, 1.0
        %v8309 = vadd.f32 %v8181, 1.0
        %v8310 = vadd.f32 %v8182, 1.0
        %v8311 = vadd.f32 %v8183, 1.0
        %v8312 = vadd.f32 %v8184, 1.0
        %v8313 = vadd.f32 %v8185, 1.0
        %v8314 = vadd.f32 %v8186, 1.0
        %v8315 = vadd.f32 %v8187, 1.0
        %v8316 = vadd.f32 %v8188, 1.0
        %v8317 = vadd.f32 %v8189, 1.0
        %v8318 = vadd.f32 %v8190, 1.0
        %v8319 = vadd.f32 %v8191, 1.0
        %v8320 = vadd.f32 %v8192, 1.0
        %v8321 = vadd.f32 %v8193, 1.0
        %v8322 = vadd.f32 %v8194, 1.0
        %v8323 = vadd.f32 %v8195, 1.0
        %v8324 = vadd.f32 %v8196, 1.0
        %v8325 = vadd.f32 %v8197, 1.0
        %v8326 = vadd.f32 %v8198, 1.0
        %v8327 = vadd.f32 %v8199, 1.0
        %v8328 = vadd.f32 %v8200, 1.0
        %v8329 = vadd.f32 %v8201, 1.0
        %v8330 = vadd.f32 %v8202, 1.0
        %v8331 = vadd.f32 %v8203, 1.0
        %v8332 = vadd.f32 %v8204, 1.0
        %v8333 = vadd.f32 %v8205, 1.0
        %v8334 = vadd.f32 %v8206, 1.0
        %v8335 = vadd.f32 %v8207, 1.0
        %v8336 = vadd.f32 %v8208, 1.0
        %v8337 = vadd.f32 %v8209, 1.0
        %v8338 = vadd.f32 %v8210, 1.0
        %v8339 = vadd.f32 %v8211, 1.0
        %v8340 = vadd.f32 %v8212, 1.0
        %v8341 = vadd.f32 %v8213, 1.0
        %v8342 = vadd.f32 %v8214, 1.0
        %v8343 = vadd.f32 %v8215, 1.0
        %v8344 = vadd.f32 %v8216, 1.0
        %v8345 = vadd.f32 %v8217, 1.0
        %v8346 = vadd.f32 %v8218, 1.0
        %v8347 = vadd.f32 %v8219, 1.0
        %v8348 = vadd.f32 %v8220, 1.0
        %v8349 = vadd.f32 %v8221, 1.0
        %v8350 = vadd.f32 %v8222, 1.0
        %v8351 = vadd.f32 %v8223, 1.0
        %v8352 = vadd.f32 %v8224, 1.0
        %v8353 = vadd.f32 %v8225, 1.0
        %v8354 = vadd.f32 %v8226, 1.0
        %v8355 = vadd.f32 %v8227, 1.0
        %v8356 = vadd.f32 %v8228, 1.0
        %v8357 = vadd.f32 %v8229, 1.0
        %v8358 = vmul.f32 %v8230, 0.5
        %v8359 = vmul.f32 %v8231, 0.5
        %v8360 = vmul.f32 %v8232, 0.5
        %v8361 = vmul.f32 %v8233, 0.5
        %v8362 = vmul.f32 %v8234, 0.5
        %v8363 = vmul.f32 %v8235, 0.5
        %v8364 = vmul.f32 %v8236, 0.5
        %v8365 = vmul.f32 %v8237, 0.5
        %v8366 = vmul.f32 %v8238, 0.5
        %v8367 = vmul.f32 %v8239, 0.5
        %v8368 = vmul.f32 %v8240, 0.5
        %v8369 = vmul.f32 %v8241, 0.5
        %v8370 = vmul.f32 %v8242, 0.5
        %v8371 = vmul.f32 %v8243, 0.5
        %v8372 = vmul.f32 %v8244, 0.5
        %v8373 = vmul.f32 %v8245, 0.5
        %v8374 = vmul.f32 %v8246, 0.5
        %v8375 = vmul.f32 %v8247, 0.5
        %v8376 = vmul.f32 %v8248, 0.5
        %v8377 = vmul.f32 %v8249, 0.5
        %v8378 = vmul.f32 %v8250, 0.5
        %v8379 = vmul.f32 %v8251, 0.5
        %v8380 = vmul.f32 %v8252, 0.5
        %v8381 = vmul.f32 %v8253, 0.5
        %v8382 = vmul.f32 %v8254, 0.5
        %v8383 = vmul.f32 %v8255, 0.5
        %v8384 = vmul.f32 %v8256, 0.5
        %v8385 = vmul.f32 %v8257, 0.5
        %v8386 = vmul.f32 %v8258, 0.5
        %v8387 = vmul.f32 %v8259, 0.5
        %v8388 = vmul.f32 %v8260, 0.5
        %v8389 = vmul.f32 %v8261, 0.5
        %v8390 = vmul.f32 %v8262, 0.5
        %v8391 = vmul.f32 %v8263, 0.5
        %v8392 = vmul.f32 %v8264, 0.5
        %v8393 = vmul.f32 %v8265, 0.5
        %v8394 = vmul.f32 %v8266, 0.5
        %v8395 = vmul.f32 %v8267, 0.5
        %v8396 = vmul.f32 %v8268, 0.5
        %v8397 = vmul.f32 %v8269, 0.5
        %v8398 = vmul.f32 %v8270, 0.5
        %v8399 = vmul.f32 %v8271, 0.5
        %v8400 = vmul.f32 %v8272, 0.5
        %v8401 = vmul.f32 %v8273, 0.5
        %v8402 = vmul.f32 %v8274, 0.5
        %v8403 = vmul.f32 %v8275, 0.5
        %v8404 = vmul.f32 %v8276, 0.5
        %v8405 = vmul.f32 %v8277, 0.5
        %v8406 = vmul.f32 %v8278, 0.5
        %v8407 = vmul.f32 %v8279, 0.5
        %v8408 = vmul.f32 %v8280, 0.5
        %v8409 = vmul.f32 %v8281, 0.5
        %v8410 = vmul.f32 %v8282, 0.5
        %v8411 = vmul.f32 %v8283, 0.5
        %v8412 = vmul.f32 %v8284, 0.5
        %v8413 = vmul.f32 %v8285, 0.5
        %v8414 = vmul.f32 %v8286, 0.5
        %v8415 = vmul.f32 %v8287, 0.5
        %v8416 = vmul.f32 %v8288, 0.5
        %v8417 = vmul.f32 %v8289, 0.5
        %v8418 = vmul.f32 %v8290, 0.5
        %v8419 = vmul.f32 %v8291, 0.5
        %v8420 = vmul.f32 %v8292, 0.5
        %v8421 = vmul.f32 %v8293, 0.5
        %v8422 = vmul.f32 %v8294, 0.5
        %v8423 = vmul.f32 %v8295, 0.5
        %v8424 = vmul.f32 %v8296, 0.5
        %v8425 = vmul.f32 %v8297, 0.5
        %v8426 = vmul.f32 %v8298, 0.5
        %v8427 = vmul.f32 %v8299, 0.5
        %v8428 = vmul.f32 %v8300, 0.5
        %v8429 = vmul.f32 %v8301, 0.5
        %v8430 = vmul.f32 %v8302, 0.5
        %v8431 = vmul.f32 %v8303, 0.5
        %v8432 = vmul.f32 %v8304, 0.5
        %v8433 = vmul.f32 %v8305, 0.5
        %v8434 = vmul.f32 %v8306, 0.5
        %v8435 = vmul.f32 %v8307, 0.5
        %v8436 = vmul.f32 %v8308, 0.5
        %v8437 = vmul.f32 %v8309, 0.5
        %v8438 = vmul.f32 %v8310, 0.5
        %v8439 = vmul.f32 %v8311, 0.5
        %v8440 = vmul.f32 %v8312, 0.5
        %v8441 = vmul.f32 %v8313, 0.5
        %v8442 = vmul.f32 %v8314, 0.5
        %v8443 = vmul.f32 %v8315, 0.5
        %v8444 = vmul.f32 %v8316, 0.5
        %v8445 = vmul.f32 %v8317, 0.5
        %v8446 = vmul.f32 %v8318, 0.5
        %v8447 = vmul.f32 %v8319, 0.5
        %v8448 = vmul.f32 %v8320, 0.5
        %v8449 = vmul.f32 %v8321, 0.5
        %v8450 = vmul.f32 %v8322, 0.5
        %v8451 = vmul.f32 %v8323, 0.5
        %v8452 = vmul.f32 %v8324, 0.5
        %v8453 = vmul.f32 %v8325, 0.5
        %v8454 = vmul.f32 %v8326, 0.5
        %v8455 = vmul.f32 %v8327, 0.5
        %v8456 = vmul.f32 %v8328, 0.5
        %v8457 = vmul.f32 %v8329, 0.5
        %v8458 = vmul.f32 %v8330, 0.5
        %v8459 = vmul.f32 %v8331, 0.5
        %v8460 = vmul.f32 %v8332, 0.5
        %v8461 = vmul.f32 %v8333, 0.5
        %v8462 = vmul.f32 %v8334, 0.5
        %v8463 = vmul.f32 %v8335, 0.5
        %v8464 = vmul.f32 %v8336, 0.5
        %v8465 = vmul.f32 %v8337, 0.5
        %v8466 = vmul.f32 %v8338, 0.5
        %v8467 = vmul.f32 %v8339, 0.5
        %v8468 = vmul.f32 %v8340, 0.5
        %v8469 = vmul.f32 %v8341, 0.5
        %v8470 = vmul.f32 %v8342, 0.5
        %v8471 = vmul.f32 %v8343, 0.5
        %v8472 = vmul.f32 %v8344, 0.5
        %v8473 = vmul.f32 %v8345, 0.5
        %v8474 = vmul.f32 %v8346, 0.5
        %v8475 = vmul.f32 %v8347, 0.5
        %v8476 = vmul.f32 %v8348, 0.5
        %v8477 = vmul.f32 %v8349, 0.5
        %v8478 = vmul.f32 %v8350, 0.5
        %v8479 = vmul.f32 %v8351, 0.5
        %v8480 = vmul.f32 %v8352, 0.5
        %v8481 = vmul.f32 %v8353, 0.5
        %v8482 = vmul.f32 %v8354, 0.5
        %v8483 = vmul.f32 %v8355, 0.5
        %v8484 = vmul.f32 %v8356, 0.5
        %v8485 = vmul.f32 %v8357, 0.5
        %v8486 = vmul.f32 %v7464, %v8358
        %v8487 = vmul.f32 %v7467, %v8359
        %v8488 = vmul.f32 %v7472, %v8360
        %v8489 = vmul.f32 %v7475, %v8361
        %v8490 = vmul.f32 %v7480, %v8362
        %v8491 = vmul.f32 %v7483, %v8363
        %v8492 = vmul.f32 %v7488, %v8364
        %v8493 = vmul.f32 %v7491, %v8365
        %v8494 = vmul.f32 %v7496, %v8366
        %v8495 = vmul.f32 %v7499, %v8367
        %v8496 = vmul.f32 %v7504, %v8368
        %v8497 = vmul.f32 %v7507, %v8369
        %v8498 = vmul.f32 %v7512, %v8370
        %v8499 = vmul.f32 %v7515, %v8371
        %v8500 = vmul.f32 %v7520, %v8372
        %v8501 = vmul.f32 %v7523, %v8373
        %v8502 = vmul.f32 %v7528, %v8374
        %v8503 = vmul.f32 %v7531, %v8375
        %v8504 = vmul.f32 %v7536, %v8376
        %v8505 = vmul.f32 %v7539, %v8377
        %v8506 = vmul.f32 %v7544, %v8378
        %v8507 = vmul.f32 %v7547, %v8379
        %v8508 = vmul.f32 %v7552, %v8380
        %v8509 = vmul.f32 %v7555, %v8381
        %v8510 = vmul.f32 %v7560, %v8382
        %v8511 = vmul.f32 %v7563, %v8383
        %v8512 = vmul.f32 %v7568, %v8384
        %v8513 = vmul.f32 %v7571, %v8385
        %v8514 = vmul.f32 %v7576, %v8386
        %v8515 = vmul.f32 %v7579, %v8387
        %v8516 = vmul.f32 %v7584, %v8388
        %v8517 = vmul.f32 %v7587, %v8389
        %v8518 = vmul.f32 %v7592, %v8390
        %v8519 = vmul.f32 %v7595, %v8391
        %v8520 = vmul.f32 %v7600, %v8392
        %v8521 = vmul.f32 %v7603, %v8393
        %v8522 = vmul.f32 %v7608, %v8394
        %v8523 = vmul.f32 %v7611, %v8395
        %v8524 = vmul.f32 %v7616, %v8396
        %v8525 = vmul.f32 %v7619, %v8397
        %v8526 = vmul.f32 %v7624, %v8398
        %v8527 = vmul.f32 %v7627, %v8399
        %v8528 = vmul.f32 %v7632, %v8400
        %v8529 = vmul.f32 %v7635, %v8401
        %v8530 = vmul.f32 %v7640, %v8402
        %v8531 = vmul.f32 %v7643, %v8403
        %v8532 = vmul.f32 %v7648, %v8404
        %v8533 = vmul.f32 %v7651, %v8405
        %v8534 = vmul.f32 %v7656, %v8406
        %v8535 = vmul.f32 %v7659, %v8407
        %v8536 = vmul.f32 %v7664, %v8408
        %v8537 = vmul.f32 %v7667, %v8409
        %v8538 = vmul.f32 %v7672, %v8410
        %v8539 = vmul.f32 %v7675, %v8411
        %v8540 = vmul.f32 %v7680, %v8412
        %v8541 = vmul.f32 %v7683, %v8413
        %v8542 = vmul.f32 %v7688, %v8414
        %v8543 = vmul.f32 %v7691, %v8415
        %v8544 = vmul.f32 %v7696, %v8416
        %v8545 = vmul.f32 %v7699, %v8417
        %v8546 = vmul.f32 %v7704, %v8418
        %v8547 = vmul.f32 %v7707, %v8419
        %v8548 = vmul.f32 %v7712, %v8420
        %v8549 = vmul.f32 %v7715, %v8421
        %v8550 = vmul.f32 %v7720, %v8422
        %v8551 = vmul.f32 %v7723, %v8423
        %v8552 = vmul.f32 %v7728, %v8424
        %v8553 = vmul.f32 %v7731, %v8425
        %v8554 = vmul.f32 %v7736, %v8426
        %v8555 = vmul.f32 %v7739, %v8427
        %v8556 = vmul.f32 %v7744, %v8428
        %v8557 = vmul.f32 %v7747, %v8429
        %v8558 = vmul.f32 %v7752, %v8430
        %v8559 = vmul.f32 %v7755, %v8431
        %v8560 = vmul.f32 %v7760, %v8432
        %v8561 = vmul.f32 %v7763, %v8433
        %v8562 = vmul.f32 %v7768, %v8434
        %v8563 = vmul.f32 %v7771, %v8435
        %v8564 = vmul.f32 %v7776, %v8436
        %v8565 = vmul.f32 %v7779, %v8437
        %v8566 = vmul.f32 %v7784, %v8438
        %v8567 = vmul.f32 %v7787, %v8439
        %v8568 = vmul.f32 %v7792, %v8440
        %v8569 = vmul.f32 %v7795, %v8441
        %v8570 = vmul.f32 %v7800, %v8442
        %v8571 = vmul.f32 %v7803, %v8443
        %v8572 = vmul.f32 %v7808, %v8444
        %v8573 = vmul.f32 %v7811, %v8445
        %v8574 = vmul.f32 %v7816, %v8446
        %v8575 = vmul.f32 %v7819, %v8447
        %v8576 = vmul.f32 %v7824, %v8448
        %v8577 = vmul.f32 %v7827, %v8449
        %v8578 = vmul.f32 %v7832, %v8450
        %v8579 = vmul.f32 %v7835, %v8451
        %v8580 = vmul.f32 %v7840, %v8452
        %v8581 = vmul.f32 %v7843, %v8453
        %v8582 = vmul.f32 %v7848, %v8454
        %v8583 = vmul.f32 %v7851, %v8455
        %v8584 = vmul.f32 %v7856, %v8456
        %v8585 = vmul.f32 %v7859, %v8457
        %v8586 = vmul.f32 %v7864, %v8458
        %v8587 = vmul.f32 %v7867, %v8459
        %v8588 = vmul.f32 %v7872, %v8460
        %v8589 = vmul.f32 %v7875, %v8461
        %v8590 = vmul.f32 %v7880, %v8462
        %v8591 = vmul.f32 %v7883, %v8463
        %v8592 = vmul.f32 %v7888, %v8464
        %v8593 = vmul.f32 %v7891, %v8465
        %v8594 = vmul.f32 %v7896, %v8466
        %v8595 = vmul.f32 %v7899, %v8467
        %v8596 = vmul.f32 %v7904, %v8468
        %v8597 = vmul.f32 %v7907, %v8469
        %v8598 = vmul.f32 %v7912, %v8470
        %v8599 = vmul.f32 %v7915, %v8471
        %v8600 = vmul.f32 %v7920, %v8472
        %v8601 = vmul.f32 %v7923, %v8473
        %v8602 = vmul.f32 %v7928, %v8474
        %v8603 = vmul.f32 %v7931, %v8475
        %v8604 = vmul.f32 %v7936, %v8476
        %v8605 = vmul.f32 %v7939, %v8477
        %v8606 = vmul.f32 %v7944, %v8478
        %v8607 = vmul.f32 %v7947, %v8479
        %v8608 = vmul.f32 %v7952, %v8480
        %v8609 = vmul.f32 %v7955, %v8481
        %v8610 = vmul.f32 %v7960, %v8482
        %v8611 = vmul.f32 %v7963, %v8483
        %v8612 = vmul.f32 %v7968, %v8484
        %v8613 = vmul.f32 %v7971, %v8485
        %v8614 = vld [vmem:[%s853] sm:$0xff]
        %v8615 = vld [vmem:[%s853 + $0x8] sm:$0xff]
        %v8616 = vld [vmem:[%s853 + $0x10] sm:$0xff]
        %v8617 = vld [vmem:[%s853 + $0x18] sm:$0xff]
        %v8618 = vld [vmem:[%s853 + $0x20] sm:$0xff]
        %v8619 = vld [vmem:[%s853 + $0x28] sm:$0xff]
        %v8620 = vld [vmem:[%s853 + $0x30] sm:$0xff]
        %v8621 = vld [vmem:[%s853 + $0x38] sm:$0xff]
        %v8622 = vld [vmem:[%s853 + $0x40] sm:$0xff]
        %v8623 = vld [vmem:[%s853 + $0x48] sm:$0xff]
        %v8624 = vld [vmem:[%s853 + $0x50] sm:$0xff]
        %v8625 = vld [vmem:[%s853 + $0x58] sm:$0xff]
        %v8626 = vld [vmem:[%s853 + $0x60] sm:$0xff]
        %v8627 = vld [vmem:[%s853 + $0x68] sm:$0xff]
        %v8628 = vld [vmem:[%s853 + $0x70] sm:$0xff]
        %v8629 = vld [vmem:[%s853 + $0x78] sm:$0xff]
        %v8630 = vld [vmem:[%s856] sm:$0x1]
        %v8632 = vlaneseq
        %v8633 = vshrl.u32 %v8632, 7
        %v8634 = vsub.s32 0, %v8633
        %v8635 = vrot.slane %v8630, %v8634
        %8637 = vmatprep.subr.mxu0 0.0
        %8638 = vmatpush1.msra.mxu0 %v8614
        %8639 = vmatprep.subr.mxu0 0.0
        %8640 = vmatpush1.msra.mxu0 %v8615
        %8641 = vmatprep.subr.mxu0 0.0
        %8642 = vmatpush1.msra.mxu0 %v8616
        %8643 = vmatprep.subr.mxu0 0.0
        %8644 = vmatpush1.msra.mxu0 %v8617
        %8645 = vmatprep.subr.mxu0 0.0
        %8646 = vmatpush1.msra.mxu0 %v8618
        %8647 = vmatprep.subr.mxu0 0.0
        %8648 = vmatpush1.msra.mxu0 %v8619
        %8649 = vmatprep.subr.mxu0 0.0
        %8650 = vmatpush1.msra.mxu0 %v8620
        %8651 = vmatprep.subr.mxu0 0.0
        %8652 = vmatpush1.msra.mxu0 %v8621
        %8653 = vmatprep.subr.mxu0 0.0
        %8654 = vmatpush1.msra.mxu0 %v8622
        %8655 = vmatprep.subr.mxu0 0.0
        %8656 = vmatpush1.msra.mxu0 %v8623
        %8657 = vmatprep.subr.mxu0 0.0
        %8658 = vmatpush1.msra.mxu0 %v8624
        %8659 = vmatprep.subr.mxu0 0.0
        %8660 = vmatpush1.msra.mxu0 %v8625
        %8661 = vmatprep.subr.mxu0 0.0
        %8662 = vmatpush1.msra.mxu0 %v8626
        %8663 = vmatprep.subr.mxu0 0.0
        %8664 = vmatpush1.msra.mxu0 %v8627
        %8665 = vmatprep.subr.mxu0 0.0
        %8666 = vmatpush1.msra.mxu0 %v8628
        %8667 = vmatprep.subr.mxu0 0.0
        %8668 = vmatpush1.msra.mxu0 %v8629
        %8669 = vmatprep.subr.mxu0 0.0
        %8670 = vmatpush1.msra.mxu0 0.0
        %8671 = vmatprep.subr.mxu0 0.0
        %8672 = vmatpush1.msra.mxu0 0.0
        %8673 = vmatprep.subr.mxu0 0.0
        %8674 = vmatpush1.msra.mxu0 0.0
        %8675 = vmatprep.subr.mxu0 0.0
        %8676 = vmatpush1.msra.mxu0 0.0
        %8677 = vmatprep.subr.mxu0 0.0
        %8678 = vmatpush1.msra.mxu0 0.0
        %8679 = vmatprep.subr.mxu0 0.0
        %8680 = vmatpush1.msra.mxu0 0.0
        %8681 = vmatprep.subr.mxu0 0.0
        %8682 = vmatpush1.msra.mxu0 0.0
        %8683 = vmatprep.subr.mxu0 0.0
        %8684 = vmatpush1.msra.mxu0 0.0
        %8685 = vmatprep.subr.mxu0 0.0
        %8686 = vmatpush1.msra.mxu0 0.0
        %8687 = vmatprep.subr.mxu0 0.0
        %8688 = vmatpush1.msra.mxu0 0.0
        %8689 = vmatprep.subr.mxu0 0.0
        %8690 = vmatpush1.msra.mxu0 0.0
        %8691 = vmatprep.subr.mxu0 0.0
        %8692 = vmatpush1.msra.mxu0 0.0
        %8693 = vmatprep.subr.mxu0 0.0
        %8694 = vmatpush1.msra.mxu0 0.0
        %8695 = vmatprep.subr.mxu0 0.0
        %8696 = vmatpush1.msra.mxu0 0.0
        %8697 = vmatprep.subr.mxu0 0.0
        %8698 = vmatpush1.msra.mxu0 0.0
        %8699 = vmatprep.subr.mxu0 0.0
        %8700 = vmatpush1.msra.mxu0 0.0
        %8701 = vmatprep.mubr.f32.mxu0 0.0
        %8702 = vmatmul.mubr.f32.gmra.mrb[0].mxu0 %v8486
        %v8703 = vpop.f32.mrb[0].mxu0
        %v8704 = vadd.f32 %v8635, %v8703
        %v8705 = vpop.f32.mrb[0].mxu0
        %8706 = vmatprep.mubr.f32.mxu0 0.0
        %8707 = vmatmul.mubr.f32.gmra.mrb[0].mxu0 %v8487
        %v8708 = vpop.f32.mrb[0].mxu0
        %v8709 = vadd.f32 %v8635, %v8708
        %v8710 = vpop.f32.mrb[0].mxu0
        %8711 = vmatprep.mubr.f32.mxu0 0.0
        %8712 = vmatmul.mubr.f32.gmra.mrb[0].mxu0 %v8488
        %v8713 = vpop.f32.mrb[0].mxu0
        %v8714 = vadd.f32 %v8635, %v8713
        %v8715 = vpop.f32.mrb[0].mxu0
        %8716 = vmatprep.mubr.f32.mxu0 0.0
        %8717 = vmatmul.mubr.f32.gmra.mrb[0].mxu0 %v8489
        %v8718 = vpop.f32.mrb[0].mxu0
        %v8719 = vadd.f32 %v8635, %v8718
        %v8720 = vpop.f32.mrb[0].mxu0
        %8721 = vmatprep.mubr.f32.mxu0 0.0
        %8722 = vmatmul.mubr.f32.gmra.mrb[0].mxu0 %v8490
        %v8723 = vpop.f32.mrb[0].mxu0
        %v8724 = vadd.f32 %v8635, %v8723
        %v8725 = vpop.f32.mrb[0].mxu0
        %8726 = vmatprep.mubr.f32.mxu0 0.0
        %8727 = vmatmul.mubr.f32.gmra.mrb[0].mxu0 %v8491
        %v8728 = vpop.f32.mrb[0].mxu0
        %v8729 = vadd.f32 %v8635, %v8728
        %v8730 = vpop.f32.mrb[0].mxu0
        %8731 = vmatprep.mubr.f32.mxu0 0.0
        %8732 = vmatmul.mubr.f32.gmra.mrb[0].mxu0 %v8492
        %v8733 = vpop.f32.mrb[0].mxu0
        %v8734 = vadd.f32 %v8635, %v8733
        %v8735 = vpop.f32.mrb[0].mxu0
        %8736 = vmatprep.mubr.f32.mxu0 0.0
        %8737 = vmatmul.mubr.f32.gmra.mrb[0].mxu0 %v8493
        %v8738 = vpop.f32.mrb[0].mxu0
        %v8739 = vadd.f32 %v8635, %v8738
        %v8740 = vpop.f32.mrb[0].mxu0
        %8741 = vmatprep.mubr.f32.mxu0 0.0
        %8742 = vmatmul.mubr.f32.gmra.mrb[0].mxu0 %v8494
        %v8743 = vpop.f32.mrb[0].mxu0
        %v8744 = vadd.f32 %v8635, %v8743
        %v8745 = vpop.f32.mrb[0].mxu0
        %8746 = vmatprep.mubr.f32.mxu0 0.0
        %8747 = vmatmul.mubr.f32.gmra.mrb[0].mxu0 %v8495
        %v8748 = vpop.f32.mrb[0].mxu0
        %v8749 = vadd.f32 %v8635, %v8748
        %v8750 = vpop.f32.mrb[0].mxu0
        %8751 = vmatprep.mubr.f32.mxu0 0.0
        %8752 = vmatmul.mubr.f32.gmra.mrb[0].mxu0 %v8496
        %v8753 = vpop.f32.mrb[0].mxu0
        %v8754 = vadd.f32 %v8635, %v8753
        %v8755 = vpop.f32.mrb[0].mxu0
        %8756 = vmatprep.mubr.f32.mxu0 0.0
        %8757 = vmatmul.mubr.f32.gmra.mrb[0].mxu0 %v8497
        %v8758 = vpop.f32.mrb[0].mxu0
        %v8759 = vadd.f32 %v8635, %v8758
        %v8760 = vpop.f32.mrb[0].mxu0
        %8761 = vmatprep.mubr.f32.mxu0 0.0
        %8762 = vmatmul.mubr.f32.gmra.mrb[0].mxu0 %v8498
        %v8763 = vpop.f32.mrb[0].mxu0
        %v8764 = vadd.f32 %v8635, %v8763
        %v8765 = vpop.f32.mrb[0].mxu0
        %8766 = vmatprep.mubr.f32.mxu0 0.0
        %8767 = vmatmul.mubr.f32.gmra.mrb[0].mxu0 %v8499
        %v8768 = vpop.f32.mrb[0].mxu0
        %v8769 = vadd.f32 %v8635, %v8768
        %v8770 = vpop.f32.mrb[0].mxu0
        %8771 = vmatprep.mubr.f32.mxu0 0.0
        %8772 = vmatmul.mubr.f32.gmra.mrb[0].mxu0 %v8500
        %v8773 = vpop.f32.mrb[0].mxu0
        %v8774 = vadd.f32 %v8635, %v8773
        %v8775 = vpop.f32.mrb[0].mxu0
        %8776 = vmatprep.mubr.f32.mxu0 0.0
        %8777 = vmatmul.mubr.f32.gmra.mrb[0].mxu0 %v8501
        %v8778 = vpop.f32.mrb[0].mxu0
        %v8779 = vadd.f32 %v8635, %v8778
        %v8780 = vpop.f32.mrb[0].mxu0
        %8781 = vmatprep.mubr.f32.mxu0 0.0
        %8782 = vmatmul.mubr.f32.gmra.mrb[0].mxu0 %v8502
        %v8783 = vpop.f32.mrb[0].mxu0
        %v8784 = vadd.f32 %v8635, %v8783
        %v8785 = vpop.f32.mrb[0].mxu0
        %8786 = vmatprep.mubr.f32.mxu0 0.0
        %8787 = vmatmul.mubr.f32.gmra.mrb[0].mxu0 %v8503
        %v8788 = vpop.f32.mrb[0].mxu0
        %v8789 = vadd.f32 %v8635, %v8788
        %v8790 = vpop.f32.mrb[0].mxu0
        %8791 = vmatprep.mubr.f32.mxu0 0.0
        %8792 = vmatmul.mubr.f32.gmra.mrb[0].mxu0 %v8504
        %v8793 = vpop.f32.mrb[0].mxu0
        %v8794 = vadd.f32 %v8635, %v8793
        %v8795 = vpop.f32.mrb[0].mxu0
        %8796 = vmatprep.mubr.f32.mxu0 0.0
        %8797 = vmatmul.mubr.f32.gmra.mrb[0].mxu0 %v8505
        %v8798 = vpop.f32.mrb[0].mxu0
        %v8799 = vadd.f32 %v8635, %v8798
        %v8800 = vpop.f32.mrb[0].mxu0
        %8801 = vmatprep.mubr.f32.mxu0 0.0
        %8802 = vmatmul.mubr.f32.gmra.mrb[0].mxu0 %v8506
        %v8803 = vpop.f32.mrb[0].mxu0
        %v8804 = vadd.f32 %v8635, %v8803
        %v8805 = vpop.f32.mrb[0].mxu0
        %8806 = vmatprep.mubr.f32.mxu0 0.0
        %8807 = vmatmul.mubr.f32.gmra.mrb[0].mxu0 %v8507
        %v8808 = vpop.f32.mrb[0].mxu0
        %v8809 = vadd.f32 %v8635, %v8808
        %v8810 = vpop.f32.mrb[0].mxu0
        %8811 = vmatprep.mubr.f32.mxu0 0.0
        %8812 = vmatmul.mubr.f32.gmra.mrb[0].mxu0 %v8508
        %v8813 = vpop.f32.mrb[0].mxu0
        %v8814 = vadd.f32 %v8635, %v8813
        %v8815 = vpop.f32.mrb[0].mxu0
        %8816 = vmatprep.mubr.f32.mxu0 0.0
        %8817 = vmatmul.mubr.f32.gmra.mrb[0].mxu0 %v8509
        %v8818 = vpop.f32.mrb[0].mxu0
        %v8819 = vadd.f32 %v8635, %v8818
        %v8820 = vpop.f32.mrb[0].mxu0
        %8821 = vmatprep.mubr.f32.mxu0 0.0
        %8822 = vmatmul.mubr.f32.gmra.mrb[0].mxu0 %v8510
        %v8823 = vpop.f32.mrb[0].mxu0
        %v8824 = vadd.f32 %v8635, %v8823
        %v8825 = vpop.f32.mrb[0].mxu0
        %8826 = vmatprep.mubr.f32.mxu0 0.0
        %8827 = vmatmul.mubr.f32.gmra.mrb[0].mxu0 %v8511
        %v8828 = vpop.f32.mrb[0].mxu0
        %v8829 = vadd.f32 %v8635, %v8828
        %v8830 = vpop.f32.mrb[0].mxu0
        %8831 = vmatprep.mubr.f32.mxu0 0.0
        %8832 = vmatmul.mubr.f32.gmra.mrb[0].mxu0 %v8512
        %v8833 = vpop.f32.mrb[0].mxu0
        %v8834 = vadd.f32 %v8635, %v8833
        %v8835 = vpop.f32.mrb[0].mxu0
        %8836 = vmatprep.mubr.f32.mxu0 0.0
        %8837 = vmatmul.mubr.f32.gmra.mrb[0].mxu0 %v8513
        %v8838 = vpop.f32.mrb[0].mxu0
        %v8839 = vadd.f32 %v8635, %v8838
        %v8840 = vpop.f32.mrb[0].mxu0
        %8841 = vmatprep.mubr.f32.mxu0 0.0
        %8842 = vmatmul.mubr.f32.gmra.mrb[0].mxu0 %v8514
        %v8843 = vpop.f32.mrb[0].mxu0
        %v8844 = vadd.f32 %v8635, %v8843
        %v8845 = vpop.f32.mrb[0].mxu0
        %8846 = vmatprep.mubr.f32.mxu0 0.0
        %8847 = vmatmul.mubr.f32.gmra.mrb[0].mxu0 %v8515
        %v8848 = vpop.f32.mrb[0].mxu0
        %v8849 = vadd.f32 %v8635, %v8848
        %v8850 = vpop.f32.mrb[0].mxu0
        %8851 = vmatprep.mubr.f32.mxu0 0.0
        %8852 = vmatmul.mubr.f32.gmra.mrb[0].mxu0 %v8516
        %v8853 = vpop.f32.mrb[0].mxu0
        %v8854 = vadd.f32 %v8635, %v8853
        %v8855 = vpop.f32.mrb[0].mxu0
        %8856 = vmatprep.mubr.f32.mxu0 0.0
        %8857 = vmatmul.mubr.f32.gmra.mrb[0].mxu0 %v8517
        %v8858 = vpop.f32.mrb[0].mxu0
        %v8859 = vadd.f32 %v8635, %v8858
        %v8860 = vpop.f32.mrb[0].mxu0
        %8861 = vmatprep.mubr.f32.mxu0 0.0
        %8862 = vmatmul.mubr.f32.gmra.mrb[0].mxu0 %v8518
        %v8863 = vpop.f32.mrb[0].mxu0
        %v8864 = vadd.f32 %v8635, %v8863
        %v8865 = vpop.f32.mrb[0].mxu0
        %8866 = vmatprep.mubr.f32.mxu0 0.0
        %8867 = vmatmul.mubr.f32.gmra.mrb[0].mxu0 %v8519
        %v8868 = vpop.f32.mrb[0].mxu0
        %v8869 = vadd.f32 %v8635, %v8868
        %v8870 = vpop.f32.mrb[0].mxu0
        %8871 = vmatprep.mubr.f32.mxu0 0.0
        %8872 = vmatmul.mubr.f32.gmra.mrb[0].mxu0 %v8520
        %v8873 = vpop.f32.mrb[0].mxu0
        %v8874 = vadd.f32 %v8635, %v8873
        %v8875 = vpop.f32.mrb[0].mxu0
        %8876 = vmatprep.mubr.f32.mxu0 0.0
        %8877 = vmatmul.mubr.f32.gmra.mrb[0].mxu0 %v8521
        %v8878 = vpop.f32.mrb[0].mxu0
        %v8879 = vadd.f32 %v8635, %v8878
        %v8880 = vpop.f32.mrb[0].mxu0
        %8881 = vmatprep.mubr.f32.mxu0 0.0
        %8882 = vmatmul.mubr.f32.gmra.mrb[0].mxu0 %v8522
        %v8883 = vpop.f32.mrb[0].mxu0
        %v8884 = vadd.f32 %v8635, %v8883
        %v8885 = vpop.f32.mrb[0].mxu0
        %8886 = vmatprep.mubr.f32.mxu0 0.0
        %8887 = vmatmul.mubr.f32.gmra.mrb[0].mxu0 %v8523
        %v8888 = vpop.f32.mrb[0].mxu0
        %v8889 = vadd.f32 %v8635, %v8888
        %v8890 = vpop.f32.mrb[0].mxu0
        %8891 = vmatprep.mubr.f32.mxu0 0.0
        %8892 = vmatmul.mubr.f32.gmra.mrb[0].mxu0 %v8524
        %v8893 = vpop.f32.mrb[0].mxu0
        %v8894 = vadd.f32 %v8635, %v8893
        %v8895 = vpop.f32.mrb[0].mxu0
        %8896 = vmatprep.mubr.f32.mxu0 0.0
        %8897 = vmatmul.mubr.f32.gmra.mrb[0].mxu0 %v8525
        %v8898 = vpop.f32.mrb[0].mxu0
        %v8899 = vadd.f32 %v8635, %v8898
        %v8900 = vpop.f32.mrb[0].mxu0
        %8901 = vmatprep.mubr.f32.mxu0 0.0
        %8902 = vmatmul.mubr.f32.gmra.mrb[0].mxu0 %v8526
        %v8903 = vpop.f32.mrb[0].mxu0
        %v8904 = vadd.f32 %v8635, %v8903
        %v8905 = vpop.f32.mrb[0].mxu0
        %8906 = vmatprep.mubr.f32.mxu0 0.0
        %8907 = vmatmul.mubr.f32.gmra.mrb[0].mxu0 %v8527
        %v8908 = vpop.f32.mrb[0].mxu0
        %v8909 = vadd.f32 %v8635, %v8908
        %v8910 = vpop.f32.mrb[0].mxu0
        %8911 = vmatprep.mubr.f32.mxu0 0.0
        %8912 = vmatmul.mubr.f32.gmra.mrb[0].mxu0 %v8528
        %v8913 = vpop.f32.mrb[0].mxu0
        %v8914 = vadd.f32 %v8635, %v8913
        %v8915 = vpop.f32.mrb[0].mxu0
        %8916 = vmatprep.mubr.f32.mxu0 0.0
        %8917 = vmatmul.mubr.f32.gmra.mrb[0].mxu0 %v8529
        %v8918 = vpop.f32.mrb[0].mxu0
        %v8919 = vadd.f32 %v8635, %v8918
        %v8920 = vpop.f32.mrb[0].mxu0
        %8921 = vmatprep.mubr.f32.mxu0 0.0
        %8922 = vmatmul.mubr.f32.gmra.mrb[0].mxu0 %v8530
        %v8923 = vpop.f32.mrb[0].mxu0
        %v8924 = vadd.f32 %v8635, %v8923
        %v8925 = vpop.f32.mrb[0].mxu0
        %8926 = vmatprep.mubr.f32.mxu0 0.0
        %8927 = vmatmul.mubr.f32.gmra.mrb[0].mxu0 %v8531
        %v8928 = vpop.f32.mrb[0].mxu0
        %v8929 = vadd.f32 %v8635, %v8928
        %v8930 = vpop.f32.mrb[0].mxu0
        %8931 = vmatprep.mubr.f32.mxu0 0.0
        %8932 = vmatmul.mubr.f32.gmra.mrb[0].mxu0 %v8532
        %v8933 = vpop.f32.mrb[0].mxu0
        %v8934 = vadd.f32 %v8635, %v8933
        %v8935 = vpop.f32.mrb[0].mxu0
        %8936 = vmatprep.mubr.f32.mxu0 0.0
        %8937 = vmatmul.mubr.f32.gmra.mrb[0].mxu0 %v8533
        %v8938 = vpop.f32.mrb[0].mxu0
        %v8939 = vadd.f32 %v8635, %v8938
        %v8940 = vpop.f32.mrb[0].mxu0
        %8941 = vmatprep.mubr.f32.mxu0 0.0
        %8942 = vmatmul.mubr.f32.gmra.mrb[0].mxu0 %v8534
        %v8943 = vpop.f32.mrb[0].mxu0
        %v8944 = vadd.f32 %v8635, %v8943
        %v8945 = vpop.f32.mrb[0].mxu0
        %8946 = vmatprep.mubr.f32.mxu0 0.0
        %8947 = vmatmul.mubr.f32.gmra.mrb[0].mxu0 %v8535
        %v8948 = vpop.f32.mrb[0].mxu0
        %v8949 = vadd.f32 %v8635, %v8948
        %v8950 = vpop.f32.mrb[0].mxu0
        %8951 = vmatprep.mubr.f32.mxu0 0.0
        %8952 = vmatmul.mubr.f32.gmra.mrb[0].mxu0 %v8536
        %v8953 = vpop.f32.mrb[0].mxu0
        %v8954 = vadd.f32 %v8635, %v8953
        %v8955 = vpop.f32.mrb[0].mxu0
        %8956 = vmatprep.mubr.f32.mxu0 0.0
        %8957 = vmatmul.mubr.f32.gmra.mrb[0].mxu0 %v8537
        %v8958 = vpop.f32.mrb[0].mxu0
        %v8959 = vadd.f32 %v8635, %v8958
        %v8960 = vpop.f32.mrb[0].mxu0
        %8961 = vmatprep.mubr.f32.mxu0 0.0
        %8962 = vmatmul.mubr.f32.gmra.mrb[0].mxu0 %v8538
        %v8963 = vpop.f32.mrb[0].mxu0
        %v8964 = vadd.f32 %v8635, %v8963
        %v8965 = vpop.f32.mrb[0].mxu0
        %8966 = vmatprep.mubr.f32.mxu0 0.0
        %8967 = vmatmul.mubr.f32.gmra.mrb[0].mxu0 %v8539
        %v8968 = vpop.f32.mrb[0].mxu0
        %v8969 = vadd.f32 %v8635, %v8968
        %v8970 = vpop.f32.mrb[0].mxu0
        %8971 = vmatprep.mubr.f32.mxu0 0.0
        %8972 = vmatmul.mubr.f32.gmra.mrb[0].mxu0 %v8540
        %v8973 = vpop.f32.mrb[0].mxu0
        %v8974 = vadd.f32 %v8635, %v8973
        %v8975 = vpop.f32.mrb[0].mxu0
        %8976 = vmatprep.mubr.f32.mxu0 0.0
        %8977 = vmatmul.mubr.f32.gmra.mrb[0].mxu0 %v8541
        %v8978 = vpop.f32.mrb[0].mxu0
        %v8979 = vadd.f32 %v8635, %v8978
        %v8980 = vpop.f32.mrb[0].mxu0
        %8981 = vmatprep.mubr.f32.mxu0 0.0
        %8982 = vmatmul.mubr.f32.gmra.mrb[0].mxu0 %v8542
        %v8983 = vpop.f32.mrb[0].mxu0
        %v8984 = vadd.f32 %v8635, %v8983
        %v8985 = vpop.f32.mrb[0].mxu0
        %8986 = vmatprep.mubr.f32.mxu0 0.0
        %8987 = vmatmul.mubr.f32.gmra.mrb[0].mxu0 %v8543
        %v8988 = vpop.f32.mrb[0].mxu0
        %v8989 = vadd.f32 %v8635, %v8988
        %v8990 = vpop.f32.mrb[0].mxu0
        %8991 = vmatprep.mubr.f32.mxu0 0.0
        %8992 = vmatmul.mubr.f32.gmra.mrb[0].mxu0 %v8544
        %v8993 = vpop.f32.mrb[0].mxu0
        %v8994 = vadd.f32 %v8635, %v8993
        %v8995 = vpop.f32.mrb[0].mxu0
        %8996 = vmatprep.mubr.f32.mxu0 0.0
        %8997 = vmatmul.mubr.f32.gmra.mrb[0].mxu0 %v8545
        %v8998 = vpop.f32.mrb[0].mxu0
        %v8999 = vadd.f32 %v8635, %v8998
        %v9000 = vpop.f32.mrb[0].mxu0
        %9001 = vmatprep.mubr.f32.mxu0 0.0
        %9002 = vmatmul.mubr.f32.gmra.mrb[0].mxu0 %v8546
        %v9003 = vpop.f32.mrb[0].mxu0
        %v9004 = vadd.f32 %v8635, %v9003
        %v9005 = vpop.f32.mrb[0].mxu0
        %9006 = vmatprep.mubr.f32.mxu0 0.0
        %9007 = vmatmul.mubr.f32.gmra.mrb[0].mxu0 %v8547
        %v9008 = vpop.f32.mrb[0].mxu0
        %v9009 = vadd.f32 %v8635, %v9008
        %v9010 = vpop.f32.mrb[0].mxu0
        %9011 = vmatprep.mubr.f32.mxu0 0.0
        %9012 = vmatmul.mubr.f32.gmra.mrb[0].mxu0 %v8548
        %v9013 = vpop.f32.mrb[0].mxu0
        %v9014 = vadd.f32 %v8635, %v9013
        %v9015 = vpop.f32.mrb[0].mxu0
        %9016 = vmatprep.mubr.f32.mxu0 0.0
        %9017 = vmatmul.mubr.f32.gmra.mrb[0].mxu0 %v8549
        %v9018 = vpop.f32.mrb[0].mxu0
        %v9019 = vadd.f32 %v8635, %v9018
        %v9020 = vpop.f32.mrb[0].mxu0
        %9021 = vmatprep.mubr.f32.mxu0 0.0
        %9022 = vmatmul.mubr.f32.gmra.mrb[0].mxu0 %v8550
        %v9023 = vpop.f32.mrb[0].mxu0
        %v9024 = vadd.f32 %v8635, %v9023
        %v9025 = vpop.f32.mrb[0].mxu0
        %9026 = vmatprep.mubr.f32.mxu0 0.0
        %9027 = vmatmul.mubr.f32.gmra.mrb[0].mxu0 %v8551
        %v9028 = vpop.f32.mrb[0].mxu0
        %v9029 = vadd.f32 %v8635, %v9028
        %v9030 = vpop.f32.mrb[0].mxu0
        %9031 = vmatprep.mubr.f32.mxu0 0.0
        %9032 = vmatmul.mubr.f32.gmra.mrb[0].mxu0 %v8552
        %v9033 = vpop.f32.mrb[0].mxu0
        %v9034 = vadd.f32 %v8635, %v9033
        %v9035 = vpop.f32.mrb[0].mxu0
        %9036 = vmatprep.mubr.f32.mxu0 0.0
        %9037 = vmatmul.mubr.f32.gmra.mrb[0].mxu0 %v8553
        %v9038 = vpop.f32.mrb[0].mxu0
        %v9039 = vadd.f32 %v8635, %v9038
        %v9040 = vpop.f32.mrb[0].mxu0
        %9041 = vmatprep.mubr.f32.mxu0 0.0
        %9042 = vmatmul.mubr.f32.gmra.mrb[0].mxu0 %v8554
        %v9043 = vpop.f32.mrb[0].mxu0
        %v9044 = vadd.f32 %v8635, %v9043
        %v9045 = vpop.f32.mrb[0].mxu0
        %9046 = vmatprep.mubr.f32.mxu0 0.0
        %9047 = vmatmul.mubr.f32.gmra.mrb[0].mxu0 %v8555
        %v9048 = vpop.f32.mrb[0].mxu0
        %v9049 = vadd.f32 %v8635, %v9048
        %v9050 = vpop.f32.mrb[0].mxu0
        %9051 = vmatprep.mubr.f32.mxu0 0.0
        %9052 = vmatmul.mubr.f32.gmra.mrb[0].mxu0 %v8556
        %v9053 = vpop.f32.mrb[0].mxu0
        %v9054 = vadd.f32 %v8635, %v9053
        %v9055 = vpop.f32.mrb[0].mxu0
        %9056 = vmatprep.mubr.f32.mxu0 0.0
        %9057 = vmatmul.mubr.f32.gmra.mrb[0].mxu0 %v8557
        %v9058 = vpop.f32.mrb[0].mxu0
        %v9059 = vadd.f32 %v8635, %v9058
        %v9060 = vpop.f32.mrb[0].mxu0
        %9061 = vmatprep.mubr.f32.mxu0 0.0
        %9062 = vmatmul.mubr.f32.gmra.mrb[0].mxu0 %v8558
        %v9063 = vpop.f32.mrb[0].mxu0
        %v9064 = vadd.f32 %v8635, %v9063
        %v9065 = vpop.f32.mrb[0].mxu0
        %9066 = vmatprep.mubr.f32.mxu0 0.0
        %9067 = vmatmul.mubr.f32.gmra.mrb[0].mxu0 %v8559
        %v9068 = vpop.f32.mrb[0].mxu0
        %v9069 = vadd.f32 %v8635, %v9068
        %v9070 = vpop.f32.mrb[0].mxu0
        %9071 = vmatprep.mubr.f32.mxu0 0.0
        %9072 = vmatmul.mubr.f32.gmra.mrb[0].mxu0 %v8560
        %v9073 = vpop.f32.mrb[0].mxu0
        %v9074 = vadd.f32 %v8635, %v9073
        %v9075 = vpop.f32.mrb[0].mxu0
        %9076 = vmatprep.mubr.f32.mxu0 0.0
        %9077 = vmatmul.mubr.f32.gmra.mrb[0].mxu0 %v8561
        %v9078 = vpop.f32.mrb[0].mxu0
        %v9079 = vadd.f32 %v8635, %v9078
        %v9080 = vpop.f32.mrb[0].mxu0
        %9081 = vmatprep.mubr.f32.mxu0 0.0
        %9082 = vmatmul.mubr.f32.gmra.mrb[0].mxu0 %v8562
        %v9083 = vpop.f32.mrb[0].mxu0
        %v9084 = vadd.f32 %v8635, %v9083
        %v9085 = vpop.f32.mrb[0].mxu0
        %9086 = vmatprep.mubr.f32.mxu0 0.0
        %9087 = vmatmul.mubr.f32.gmra.mrb[0].mxu0 %v8563
        %v9088 = vpop.f32.mrb[0].mxu0
        %v9089 = vadd.f32 %v8635, %v9088
        %v9090 = vpop.f32.mrb[0].mxu0
        %9091 = vmatprep.mubr.f32.mxu0 0.0
        %9092 = vmatmul.mubr.f32.gmra.mrb[0].mxu0 %v8564
        %v9093 = vpop.f32.mrb[0].mxu0
        %v9094 = vadd.f32 %v8635, %v9093
        %v9095 = vpop.f32.mrb[0].mxu0
        %9096 = vmatprep.mubr.f32.mxu0 0.0
        %9097 = vmatmul.mubr.f32.gmra.mrb[0].mxu0 %v8565
        %v9098 = vpop.f32.mrb[0].mxu0
        %v9099 = vadd.f32 %v8635, %v9098
        %v9100 = vpop.f32.mrb[0].mxu0
        %9101 = vmatprep.mubr.f32.mxu0 0.0
        %9102 = vmatmul.mubr.f32.gmra.mrb[0].mxu0 %v8566
        %v9103 = vpop.f32.mrb[0].mxu0
        %v9104 = vadd.f32 %v8635, %v9103
        %v9105 = vpop.f32.mrb[0].mxu0
        %9106 = vmatprep.mubr.f32.mxu0 0.0
        %9107 = vmatmul.mubr.f32.gmra.mrb[0].mxu0 %v8567
        %v9108 = vpop.f32.mrb[0].mxu0
        %v9109 = vadd.f32 %v8635, %v9108
        %v9110 = vpop.f32.mrb[0].mxu0
        %9111 = vmatprep.mubr.f32.mxu0 0.0
        %9112 = vmatmul.mubr.f32.gmra.mrb[0].mxu0 %v8568
        %v9113 = vpop.f32.mrb[0].mxu0
        %v9114 = vadd.f32 %v8635, %v9113
        %v9115 = vpop.f32.mrb[0].mxu0
        %9116 = vmatprep.mubr.f32.mxu0 0.0
        %9117 = vmatmul.mubr.f32.gmra.mrb[0].mxu0 %v8569
        %v9118 = vpop.f32.mrb[0].mxu0
        %v9119 = vadd.f32 %v8635, %v9118
        %v9120 = vpop.f32.mrb[0].mxu0
        %9121 = vmatprep.mubr.f32.mxu0 0.0
        %9122 = vmatmul.mubr.f32.gmra.mrb[0].mxu0 %v8570
        %v9123 = vpop.f32.mrb[0].mxu0
        %v9124 = vadd.f32 %v8635, %v9123
        %v9125 = vpop.f32.mrb[0].mxu0
        %9126 = vmatprep.mubr.f32.mxu0 0.0
        %9127 = vmatmul.mubr.f32.gmra.mrb[0].mxu0 %v8571
        %v9128 = vpop.f32.mrb[0].mxu0
        %v9129 = vadd.f32 %v8635, %v9128
        %v9130 = vpop.f32.mrb[0].mxu0
        %9131 = vmatprep.mubr.f32.mxu0 0.0
        %9132 = vmatmul.mubr.f32.gmra.mrb[0].mxu0 %v8572
        %v9133 = vpop.f32.mrb[0].mxu0
        %v9134 = vadd.f32 %v8635, %v9133
        %v9135 = vpop.f32.mrb[0].mxu0
        %9136 = vmatprep.mubr.f32.mxu0 0.0
        %9137 = vmatmul.mubr.f32.gmra.mrb[0].mxu0 %v8573
        %v9138 = vpop.f32.mrb[0].mxu0
        %v9139 = vadd.f32 %v8635, %v9138
        %v9140 = vpop.f32.mrb[0].mxu0
        %9141 = vmatprep.mubr.f32.mxu0 0.0
        %9142 = vmatmul.mubr.f32.gmra.mrb[0].mxu0 %v8574
        %v9143 = vpop.f32.mrb[0].mxu0
        %v9144 = vadd.f32 %v8635, %v9143
        %v9145 = vpop.f32.mrb[0].mxu0
        %9146 = vmatprep.mubr.f32.mxu0 0.0
        %9147 = vmatmul.mubr.f32.gmra.mrb[0].mxu0 %v8575
        %v9148 = vpop.f32.mrb[0].mxu0
        %v9149 = vadd.f32 %v8635, %v9148
        %v9150 = vpop.f32.mrb[0].mxu0
        %9151 = vmatprep.mubr.f32.mxu0 0.0
        %9152 = vmatmul.mubr.f32.gmra.mrb[0].mxu0 %v8576
        %v9153 = vpop.f32.mrb[0].mxu0
        %v9154 = vadd.f32 %v8635, %v9153
        %v9155 = vpop.f32.mrb[0].mxu0
        %9156 = vmatprep.mubr.f32.mxu0 0.0
        %9157 = vmatmul.mubr.f32.gmra.mrb[0].mxu0 %v8577
        %v9158 = vpop.f32.mrb[0].mxu0
        %v9159 = vadd.f32 %v8635, %v9158
        %v9160 = vpop.f32.mrb[0].mxu0
        %9161 = vmatprep.mubr.f32.mxu0 0.0
        %9162 = vmatmul.mubr.f32.gmra.mrb[0].mxu0 %v8578
        %v9163 = vpop.f32.mrb[0].mxu0
        %v9164 = vadd.f32 %v8635, %v9163
        %v9165 = vpop.f32.mrb[0].mxu0
        %9166 = vmatprep.mubr.f32.mxu0 0.0
        %9167 = vmatmul.mubr.f32.gmra.mrb[0].mxu0 %v8579
        %v9168 = vpop.f32.mrb[0].mxu0
        %v9169 = vadd.f32 %v8635, %v9168
        %v9170 = vpop.f32.mrb[0].mxu0
        %9171 = vmatprep.mubr.f32.mxu0 0.0
        %9172 = vmatmul.mubr.f32.gmra.mrb[0].mxu0 %v8580
        %v9173 = vpop.f32.mrb[0].mxu0
        %v9174 = vadd.f32 %v8635, %v9173
        %v9175 = vpop.f32.mrb[0].mxu0
        %9176 = vmatprep.mubr.f32.mxu0 0.0
        %9177 = vmatmul.mubr.f32.gmra.mrb[0].mxu0 %v8581
        %v9178 = vpop.f32.mrb[0].mxu0
        %v9179 = vadd.f32 %v8635, %v9178
        %v9180 = vpop.f32.mrb[0].mxu0
        %9181 = vmatprep.mubr.f32.mxu0 0.0
        %9182 = vmatmul.mubr.f32.gmra.mrb[0].mxu0 %v8582
        %v9183 = vpop.f32.mrb[0].mxu0
        %v9184 = vadd.f32 %v8635, %v9183
        %v9185 = vpop.f32.mrb[0].mxu0
        %9186 = vmatprep.mubr.f32.mxu0 0.0
        %9187 = vmatmul.mubr.f32.gmra.mrb[0].mxu0 %v8583
        %v9188 = vpop.f32.mrb[0].mxu0
        %v9189 = vadd.f32 %v8635, %v9188
        %v9190 = vpop.f32.mrb[0].mxu0
        %9191 = vmatprep.mubr.f32.mxu0 0.0
        %9192 = vmatmul.mubr.f32.gmra.mrb[0].mxu0 %v8584
        %v9193 = vpop.f32.mrb[0].mxu0
        %v9194 = vadd.f32 %v8635, %v9193
        %v9195 = vpop.f32.mrb[0].mxu0
        %9196 = vmatprep.mubr.f32.mxu0 0.0
        %9197 = vmatmul.mubr.f32.gmra.mrb[0].mxu0 %v8585
        %v9198 = vpop.f32.mrb[0].mxu0
        %v9199 = vadd.f32 %v8635, %v9198
        %v9200 = vpop.f32.mrb[0].mxu0
        %9201 = vmatprep.mubr.f32.mxu0 0.0
        %9202 = vmatmul.mubr.f32.gmra.mrb[0].mxu0 %v8586
        %v9203 = vpop.f32.mrb[0].mxu0
        %v9204 = vadd.f32 %v8635, %v9203
        %v9205 = vpop.f32.mrb[0].mxu0
        %9206 = vmatprep.mubr.f32.mxu0 0.0
        %9207 = vmatmul.mubr.f32.gmra.mrb[0].mxu0 %v8587
        %v9208 = vpop.f32.mrb[0].mxu0
        %v9209 = vadd.f32 %v8635, %v9208
        %v9210 = vpop.f32.mrb[0].mxu0
        %9211 = vmatprep.mubr.f32.mxu0 0.0
        %9212 = vmatmul.mubr.f32.gmra.mrb[0].mxu0 %v8588
        %v9213 = vpop.f32.mrb[0].mxu0
        %v9214 = vadd.f32 %v8635, %v9213
        %v9215 = vpop.f32.mrb[0].mxu0
        %9216 = vmatprep.mubr.f32.mxu0 0.0
        %9217 = vmatmul.mubr.f32.gmra.mrb[0].mxu0 %v8589
        %v9218 = vpop.f32.mrb[0].mxu0
        %v9219 = vadd.f32 %v8635, %v9218
        %v9220 = vpop.f32.mrb[0].mxu0
        %9221 = vmatprep.mubr.f32.mxu0 0.0
        %9222 = vmatmul.mubr.f32.gmra.mrb[0].mxu0 %v8590
        %v9223 = vpop.f32.mrb[0].mxu0
        %v9224 = vadd.f32 %v8635, %v9223
        %v9225 = vpop.f32.mrb[0].mxu0
        %9226 = vmatprep.mubr.f32.mxu0 0.0
        %9227 = vmatmul.mubr.f32.gmra.mrb[0].mxu0 %v8591
        %v9228 = vpop.f32.mrb[0].mxu0
        %v9229 = vadd.f32 %v8635, %v9228
        %v9230 = vpop.f32.mrb[0].mxu0
        %9231 = vmatprep.mubr.f32.mxu0 0.0
        %9232 = vmatmul.mubr.f32.gmra.mrb[0].mxu0 %v8592
        %v9233 = vpop.f32.mrb[0].mxu0
        %v9234 = vadd.f32 %v8635, %v9233
        %v9235 = vpop.f32.mrb[0].mxu0
        %9236 = vmatprep.mubr.f32.mxu0 0.0
        %9237 = vmatmul.mubr.f32.gmra.mrb[0].mxu0 %v8593
        %v9238 = vpop.f32.mrb[0].mxu0
        %v9239 = vadd.f32 %v8635, %v9238
        %v9240 = vpop.f32.mrb[0].mxu0
        %9241 = vmatprep.mubr.f32.mxu0 0.0
        %9242 = vmatmul.mubr.f32.gmra.mrb[0].mxu0 %v8594
        %v9243 = vpop.f32.mrb[0].mxu0
        %v9244 = vadd.f32 %v8635, %v9243
        %v9245 = vpop.f32.mrb[0].mxu0
        %9246 = vmatprep.mubr.f32.mxu0 0.0
        %9247 = vmatmul.mubr.f32.gmra.mrb[0].mxu0 %v8595
        %v9248 = vpop.f32.mrb[0].mxu0
        %v9249 = vadd.f32 %v8635, %v9248
        %v9250 = vpop.f32.mrb[0].mxu0
        %9251 = vmatprep.mubr.f32.mxu0 0.0
        %9252 = vmatmul.mubr.f32.gmra.mrb[0].mxu0 %v8596
        %v9253 = vpop.f32.mrb[0].mxu0
        %v9254 = vadd.f32 %v8635, %v9253
        %v9255 = vpop.f32.mrb[0].mxu0
        %9256 = vmatprep.mubr.f32.mxu0 0.0
        %9257 = vmatmul.mubr.f32.gmra.mrb[0].mxu0 %v8597
        %v9258 = vpop.f32.mrb[0].mxu0
        %v9259 = vadd.f32 %v8635, %v9258
        %v9260 = vpop.f32.mrb[0].mxu0
        %9261 = vmatprep.mubr.f32.mxu0 0.0
        %9262 = vmatmul.mubr.f32.gmra.mrb[0].mxu0 %v8598
        %v9263 = vpop.f32.mrb[0].mxu0
        %v9264 = vadd.f32 %v8635, %v9263
        %v9265 = vpop.f32.mrb[0].mxu0
        %9266 = vmatprep.mubr.f32.mxu0 0.0
        %9267 = vmatmul.mubr.f32.gmra.mrb[0].mxu0 %v8599
        %v9268 = vpop.f32.mrb[0].mxu0
        %v9269 = vadd.f32 %v8635, %v9268
        %v9270 = vpop.f32.mrb[0].mxu0
        %9271 = vmatprep.mubr.f32.mxu0 0.0
        %9272 = vmatmul.mubr.f32.gmra.mrb[0].mxu0 %v8600
        %v9273 = vpop.f32.mrb[0].mxu0
        %v9274 = vadd.f32 %v8635, %v9273
        %v9275 = vpop.f32.mrb[0].mxu0
        %9276 = vmatprep.mubr.f32.mxu0 0.0
        %9277 = vmatmul.mubr.f32.gmra.mrb[0].mxu0 %v8601
        %v9278 = vpop.f32.mrb[0].mxu0
        %v9279 = vadd.f32 %v8635, %v9278
        %v9280 = vpop.f32.mrb[0].mxu0
        %9281 = vmatprep.mubr.f32.mxu0 0.0
        %9282 = vmatmul.mubr.f32.gmra.mrb[0].mxu0 %v8602
        %v9283 = vpop.f32.mrb[0].mxu0
        %v9284 = vadd.f32 %v8635, %v9283
        %v9285 = vpop.f32.mrb[0].mxu0
        %9286 = vmatprep.mubr.f32.mxu0 0.0
        %9287 = vmatmul.mubr.f32.gmra.mrb[0].mxu0 %v8603
        %v9288 = vpop.f32.mrb[0].mxu0
        %v9289 = vadd.f32 %v8635, %v9288
        %v9290 = vpop.f32.mrb[0].mxu0
        %9291 = vmatprep.mubr.f32.mxu0 0.0
        %9292 = vmatmul.mubr.f32.gmra.mrb[0].mxu0 %v8604
        %v9293 = vpop.f32.mrb[0].mxu0
        %v9294 = vadd.f32 %v8635, %v9293
        %v9295 = vpop.f32.mrb[0].mxu0
        %9296 = vmatprep.mubr.f32.mxu0 0.0
        %9297 = vmatmul.mubr.f32.gmra.mrb[0].mxu0 %v8605
        %v9298 = vpop.f32.mrb[0].mxu0
        %v9299 = vadd.f32 %v8635, %v9298
        %v9300 = vpop.f32.mrb[0].mxu0
        %9301 = vmatprep.mubr.f32.mxu0 0.0
        %9302 = vmatmul.mubr.f32.gmra.mrb[0].mxu0 %v8606
        %v9303 = vpop.f32.mrb[0].mxu0
        %v9304 = vadd.f32 %v8635, %v9303
        %v9305 = vpop.f32.mrb[0].mxu0
        %9306 = vmatprep.mubr.f32.mxu0 0.0
        %9307 = vmatmul.mubr.f32.gmra.mrb[0].mxu0 %v8607
        %v9308 = vpop.f32.mrb[0].mxu0
        %v9309 = vadd.f32 %v8635, %v9308
        %v9310 = vpop.f32.mrb[0].mxu0
        %9311 = vmatprep.mubr.f32.mxu0 0.0
        %9312 = vmatmul.mubr.f32.gmra.mrb[0].mxu0 %v8608
        %v9313 = vpop.f32.mrb[0].mxu0
        %v9314 = vadd.f32 %v8635, %v9313
        %v9315 = vpop.f32.mrb[0].mxu0
        %9316 = vmatprep.mubr.f32.mxu0 0.0
        %9317 = vmatmul.mubr.f32.gmra.mrb[0].mxu0 %v8609
        %v9318 = vpop.f32.mrb[0].mxu0
        %v9319 = vadd.f32 %v8635, %v9318
        %v9320 = vpop.f32.mrb[0].mxu0
        %9321 = vmatprep.mubr.f32.mxu0 0.0
        %9322 = vmatmul.mubr.f32.gmra.mrb[0].mxu0 %v8610
        %v9323 = vpop.f32.mrb[0].mxu0
        %v9324 = vadd.f32 %v8635, %v9323
        %v9325 = vpop.f32.mrb[0].mxu0
        %9326 = vmatprep.mubr.f32.mxu0 0.0
        %9327 = vmatmul.mubr.f32.gmra.mrb[0].mxu0 %v8611
        %v9328 = vpop.f32.mrb[0].mxu0
        %v9329 = vadd.f32 %v8635, %v9328
        %v9330 = vpop.f32.mrb[0].mxu0
        %9331 = vmatprep.mubr.f32.mxu0 0.0
        %9332 = vmatmul.mubr.f32.gmra.mrb[0].mxu0 %v8612
        %v9333 = vpop.f32.mrb[0].mxu0
        %v9334 = vadd.f32 %v8635, %v9333
        %v9335 = vpop.f32.mrb[0].mxu0
        %9336 = vmatprep.mubr.f32.mxu0 0.0
        %9337 = vmatmul.mubr.f32.gmra.mrb[0].mxu0 %v8613
        %v9338 = vpop.f32.mrb[0].mxu0
        %v9339 = vadd.f32 %v8635, %v9338
        %v9340 = vpop.f32.mrb[0].mxu0
        %9341 = vdwg.mxu0
        %v9342 = vmul.f32 %v8704, 0.5
        %v9343 = vmul.f32 %v8709, 0.5
        %v9344 = vmul.f32 %v8714, 0.5
        %v9345 = vmul.f32 %v8719, 0.5
        %v9346 = vmul.f32 %v8724, 0.5
        %v9347 = vmul.f32 %v8729, 0.5
        %v9348 = vmul.f32 %v8734, 0.5
        %v9349 = vmul.f32 %v8739, 0.5
        %v9350 = vmul.f32 %v8744, 0.5
        %v9351 = vmul.f32 %v8749, 0.5
        %v9352 = vmul.f32 %v8754, 0.5
        %v9353 = vmul.f32 %v8759, 0.5
        %v9354 = vmul.f32 %v8764, 0.5
        %v9355 = vmul.f32 %v8769, 0.5
        %v9356 = vmul.f32 %v8774, 0.5
        %v9357 = vmul.f32 %v8779, 0.5
        %v9358 = vmul.f32 %v8784, 0.5
        %v9359 = vmul.f32 %v8789, 0.5
        %v9360 = vmul.f32 %v8794, 0.5
        %v9361 = vmul.f32 %v8799, 0.5
        %v9362 = vmul.f32 %v8804, 0.5
        %v9363 = vmul.f32 %v8809, 0.5
        %v9364 = vmul.f32 %v8814, 0.5
        %v9365 = vmul.f32 %v8819, 0.5
        %v9366 = vmul.f32 %v8824, 0.5
        %v9367 = vmul.f32 %v8829, 0.5
        %v9368 = vmul.f32 %v8834, 0.5
        %v9369 = vmul.f32 %v8839, 0.5
        %v9370 = vmul.f32 %v8844, 0.5
        %v9371 = vmul.f32 %v8849, 0.5
        %v9372 = vmul.f32 %v8854, 0.5
        %v9373 = vmul.f32 %v8859, 0.5
        %v9374 = vmul.f32 %v8864, 0.5
        %v9375 = vmul.f32 %v8869, 0.5
        %v9376 = vmul.f32 %v8874, 0.5
        %v9377 = vmul.f32 %v8879, 0.5
        %v9378 = vmul.f32 %v8884, 0.5
        %v9379 = vmul.f32 %v8889, 0.5
        %v9380 = vmul.f32 %v8894, 0.5
        %v9381 = vmul.f32 %v8899, 0.5
        %v9382 = vmul.f32 %v8904, 0.5
        %v9383 = vmul.f32 %v8909, 0.5
        %v9384 = vmul.f32 %v8914, 0.5
        %v9385 = vmul.f32 %v8919, 0.5
        %v9386 = vmul.f32 %v8924, 0.5
        %v9387 = vmul.f32 %v8929, 0.5
        %v9388 = vmul.f32 %v8934, 0.5
        %v9389 = vmul.f32 %v8939, 0.5
        %v9390 = vmul.f32 %v8944, 0.5
        %v9391 = vmul.f32 %v8949, 0.5
        %v9392 = vmul.f32 %v8954, 0.5
        %v9393 = vmul.f32 %v8959, 0.5
        %v9394 = vmul.f32 %v8964, 0.5
        %v9395 = vmul.f32 %v8969, 0.5
        %v9396 = vmul.f32 %v8974, 0.5
        %v9397 = vmul.f32 %v8979, 0.5
        %v9398 = vmul.f32 %v8984, 0.5
        %v9399 = vmul.f32 %v8989, 0.5
        %v9400 = vmul.f32 %v8994, 0.5
        %v9401 = vmul.f32 %v8999, 0.5
        %v9402 = vmul.f32 %v9004, 0.5
        %v9403 = vmul.f32 %v9009, 0.5
        %v9404 = vmul.f32 %v9014, 0.5
        %v9405 = vmul.f32 %v9019, 0.5
        %v9406 = vmul.f32 %v9024, 0.5
        %v9407 = vmul.f32 %v9029, 0.5
        %v9408 = vmul.f32 %v9034, 0.5
        %v9409 = vmul.f32 %v9039, 0.5
        %v9410 = vmul.f32 %v9044, 0.5
        %v9411 = vmul.f32 %v9049, 0.5
        %v9412 = vmul.f32 %v9054, 0.5
        %v9413 = vmul.f32 %v9059, 0.5
        %v9414 = vmul.f32 %v9064, 0.5
        %v9415 = vmul.f32 %v9069, 0.5
        %v9416 = vmul.f32 %v9074, 0.5
        %v9417 = vmul.f32 %v9079, 0.5
        %v9418 = vmul.f32 %v9084, 0.5
        %v9419 = vmul.f32 %v9089, 0.5
        %v9420 = vmul.f32 %v9094, 0.5
        %v9421 = vmul.f32 %v9099, 0.5
        %v9422 = vmul.f32 %v9104, 0.5
        %v9423 = vmul.f32 %v9109, 0.5
        %v9424 = vmul.f32 %v9114, 0.5
        %v9425 = vmul.f32 %v9119, 0.5
        %v9426 = vmul.f32 %v9124, 0.5
        %v9427 = vmul.f32 %v9129, 0.5
        %v9428 = vmul.f32 %v9134, 0.5
        %v9429 = vmul.f32 %v9139, 0.5
        %v9430 = vmul.f32 %v9144, 0.5
        %v9431 = vmul.f32 %v9149, 0.5
        %v9432 = vmul.f32 %v9154, 0.5
        %v9433 = vmul.f32 %v9159, 0.5
        %v9434 = vmul.f32 %v9164, 0.5
        %v9435 = vmul.f32 %v9169, 0.5
        %v9436 = vmul.f32 %v9174, 0.5
        %v9437 = vmul.f32 %v9179, 0.5
        %v9438 = vmul.f32 %v9184, 0.5
        %v9439 = vmul.f32 %v9189, 0.5
        %v9440 = vmul.f32 %v9194, 0.5
        %v9441 = vmul.f32 %v9199, 0.5
        %v9442 = vmul.f32 %v9204, 0.5
        %v9443 = vmul.f32 %v9209, 0.5
        %v9444 = vmul.f32 %v9214, 0.5
        %v9445 = vmul.f32 %v9219, 0.5
        %v9446 = vmul.f32 %v9224, 0.5
        %v9447 = vmul.f32 %v9229, 0.5
        %v9448 = vmul.f32 %v9234, 0.5
        %v9449 = vmul.f32 %v9239, 0.5
        %v9450 = vmul.f32 %v9244, 0.5
        %v9451 = vmul.f32 %v9249, 0.5
        %v9452 = vmul.f32 %v9254, 0.5
        %v9453 = vmul.f32 %v9259, 0.5
        %v9454 = vmul.f32 %v9264, 0.5
        %v9455 = vmul.f32 %v9269, 0.5
        %v9456 = vmul.f32 %v9274, 0.5
        %v9457 = vmul.f32 %v9279, 0.5
        %v9458 = vmul.f32 %v9284, 0.5
        %v9459 = vmul.f32 %v9289, 0.5
        %v9460 = vmul.f32 %v9294, 0.5
        %v9461 = vmul.f32 %v9299, 0.5
        %v9462 = vmul.f32 %v9304, 0.5
        %v9463 = vmul.f32 %v9309, 0.5
        %v9464 = vmul.f32 %v9314, 0.5
        %v9465 = vmul.f32 %v9319, 0.5
        %v9466 = vmul.f32 %v9324, 0.5
        %v9467 = vmul.f32 %v9329, 0.5
        %v9468 = vmul.f32 %v9334, 0.5
        %v9469 = vmul.f32 %v9339, 0.5
        %v9470 = vtanh.pop %v9342
        %v9471 = vtanh.pop %v9343
        %v9472 = vtanh.pop %v9344
        %v9473 = vtanh.pop %v9345
        %v9474 = vtanh.pop %v9346
        %v9475 = vtanh.pop %v9347
        %v9476 = vtanh.pop %v9348
        %v9477 = vtanh.pop %v9349
        %v9478 = vtanh.pop %v9350
        %v9479 = vtanh.pop %v9351
        %v9480 = vtanh.pop %v9352
        %v9481 = vtanh.pop %v9353
        %v9482 = vtanh.pop %v9354
        %v9483 = vtanh.pop %v9355
        %v9484 = vtanh.pop %v9356
        %v9485 = vtanh.pop %v9357
        %v9486 = vtanh.pop %v9358
        %v9487 = vtanh.pop %v9359
        %v9488 = vtanh.pop %v9360
        %v9489 = vtanh.pop %v9361
        %v9490 = vtanh.pop %v9362
        %v9491 = vtanh.pop %v9363
        %v9492 = vtanh.pop %v9364
        %v9493 = vtanh.pop %v9365
        %v9494 = vtanh.pop %v9366
        %v9495 = vtanh.pop %v9367
        %v9496 = vtanh.pop %v9368
        %v9497 = vtanh.pop %v9369
        %v9498 = vtanh.pop %v9370
        %v9499 = vtanh.pop %v9371
        %v9500 = vtanh.pop %v9372
        %v9501 = vtanh.pop %v9373
        %v9502 = vtanh.pop %v9374
        %v9503 = vtanh.pop %v9375
        %v9504 = vtanh.pop %v9376
        %v9505 = vtanh.pop %v9377
        %v9506 = vtanh.pop %v9378
        %v9507 = vtanh.pop %v9379
        %v9508 = vtanh.pop %v9380
        %v9509 = vtanh.pop %v9381
        %v9510 = vtanh.pop %v9382
        %v9511 = vtanh.pop %v9383
        %v9512 = vtanh.pop %v9384
        %v9513 = vtanh.pop %v9385
        %v9514 = vtanh.pop %v9386
        %v9515 = vtanh.pop %v9387
        %v9516 = vtanh.pop %v9388
        %v9517 = vtanh.pop %v9389
        %v9518 = vtanh.pop %v9390
        %v9519 = vtanh.pop %v9391
        %v9520 = vtanh.pop %v9392
        %v9521 = vtanh.pop %v9393
        %v9522 = vtanh.pop %v9394
        %v9523 = vtanh.pop %v9395
        %v9524 = vtanh.pop %v9396
        %v9525 = vtanh.pop %v9397
        %v9526 = vtanh.pop %v9398
        %v9527 = vtanh.pop %v9399
        %v9528 = vtanh.pop %v9400
        %v9529 = vtanh.pop %v9401
        %v9530 = vtanh.pop %v9402
        %v9531 = vtanh.pop %v9403
        %v9532 = vtanh.pop %v9404
        %v9533 = vtanh.pop %v9405
        %v9534 = vtanh.pop %v9406
        %v9535 = vtanh.pop %v9407
        %v9536 = vtanh.pop %v9408
        %v9537 = vtanh.pop %v9409
        %v9538 = vtanh.pop %v9410
        %v9539 = vtanh.pop %v9411
        %v9540 = vtanh.pop %v9412
        %v9541 = vtanh.pop %v9413
        %v9542 = vtanh.pop %v9414
        %v9543 = vtanh.pop %v9415
        %v9544 = vtanh.pop %v9416
        %v9545 = vtanh.pop %v9417
        %v9546 = vtanh.pop %v9418
        %v9547 = vtanh.pop %v9419
        %v9548 = vtanh.pop %v9420
        %v9549 = vtanh.pop %v9421
        %v9550 = vtanh.pop %v9422
        %v9551 = vtanh.pop %v9423
        %v9552 = vtanh.pop %v9424
        %v9553 = vtanh.pop %v9425
        %v9554 = vtanh.pop %v9426
        %v9555 = vtanh.pop %v9427
        %v9556 = vtanh.pop %v9428
        %v9557 = vtanh.pop %v9429
        %v9558 = vtanh.pop %v9430
        %v9559 = vtanh.pop %v9431
        %v9560 = vtanh.pop %v9432
        %v9561 = vtanh.pop %v9433
        %v9562 = vtanh.pop %v9434
        %v9563 = vtanh.pop %v9435
        %v9564 = vtanh.pop %v9436
        %v9565 = vtanh.pop %v9437
        %v9566 = vtanh.pop %v9438
        %v9567 = vtanh.pop %v9439
        %v9568 = vtanh.pop %v9440
        %v9569 = vtanh.pop %v9441
        %v9570 = vtanh.pop %v9442
        %v9571 = vtanh.pop %v9443
        %v9572 = vtanh.pop %v9444
        %v9573 = vtanh.pop %v9445
        %v9574 = vtanh.pop %v9446
        %v9575 = vtanh.pop %v9447
        %v9576 = vtanh.pop %v9448
        %v9577 = vtanh.pop %v9449
        %v9578 = vtanh.pop %v9450
        %v9579 = vtanh.pop %v9451
        %v9580 = vtanh.pop %v9452
        %v9581 = vtanh.pop %v9453
        %v9582 = vtanh.pop %v9454
        %v9583 = vtanh.pop %v9455
        %v9584 = vtanh.pop %v9456
        %v9585 = vtanh.pop %v9457
        %v9586 = vtanh.pop %v9458
        %v9587 = vtanh.pop %v9459
        %v9588 = vtanh.pop %v9460
        %v9589 = vtanh.pop %v9461
        %v9590 = vtanh.pop %v9462
        %v9591 = vtanh.pop %v9463
        %v9592 = vtanh.pop %v9464
        %v9593 = vtanh.pop %v9465
        %v9594 = vtanh.pop %v9466
        %v9595 = vtanh.pop %v9467
        %v9596 = vtanh.pop %v9468
        %v9597 = vtanh.pop %v9469
        %v9598 = vadd.f32 %v9470, 1.0
        %v9599 = vadd.f32 %v9471, 1.0
        %v9600 = vadd.f32 %v9472, 1.0
        %v9601 = vadd.f32 %v9473, 1.0
        %v9602 = vadd.f32 %v9474, 1.0
        %v9603 = vadd.f32 %v9475, 1.0
        %v9604 = vadd.f32 %v9476, 1.0
        %v9605 = vadd.f32 %v9477, 1.0
        %v9606 = vadd.f32 %v9478, 1.0
        %v9607 = vadd.f32 %v9479, 1.0
        %v9608 = vadd.f32 %v9480, 1.0
        %v9609 = vadd.f32 %v9481, 1.0
        %v9610 = vadd.f32 %v9482, 1.0
        %v9611 = vadd.f32 %v9483, 1.0
        %v9612 = vadd.f32 %v9484, 1.0
        %v9613 = vadd.f32 %v9485, 1.0
        %v9614 = vadd.f32 %v9486, 1.0
        %v9615 = vadd.f32 %v9487, 1.0
        %v9616 = vadd.f32 %v9488, 1.0
        %v9617 = vadd.f32 %v9489, 1.0
        %v9618 = vadd.f32 %v9490, 1.0
        %v9619 = vadd.f32 %v9491, 1.0
        %v9620 = vadd.f32 %v9492, 1.0
        %v9621 = vadd.f32 %v9493, 1.0
        %v9622 = vadd.f32 %v9494, 1.0
        %v9623 = vadd.f32 %v9495, 1.0
        %v9624 = vadd.f32 %v9496, 1.0
        %v9625 = vadd.f32 %v9497, 1.0
        %v9626 = vadd.f32 %v9498, 1.0
        %v9627 = vadd.f32 %v9499, 1.0
        %v9628 = vadd.f32 %v9500, 1.0
        %v9629 = vadd.f32 %v9501, 1.0
        %v9630 = vadd.f32 %v9502, 1.0
        %v9631 = vadd.f32 %v9503, 1.0
        %v9632 = vadd.f32 %v9504, 1.0
        %v9633 = vadd.f32 %v9505, 1.0
        %v9634 = vadd.f32 %v9506, 1.0
        %v9635 = vadd.f32 %v9507, 1.0
        %v9636 = vadd.f32 %v9508, 1.0
        %v9637 = vadd.f32 %v9509, 1.0
        %v9638 = vadd.f32 %v9510, 1.0
        %v9639 = vadd.f32 %v9511, 1.0
        %v9640 = vadd.f32 %v9512, 1.0
        %v9641 = vadd.f32 %v9513, 1.0
        %v9642 = vadd.f32 %v9514, 1.0
        %v9643 = vadd.f32 %v9515, 1.0
        %v9644 = vadd.f32 %v9516, 1.0
        %v9645 = vadd.f32 %v9517, 1.0
        %v9646 = vadd.f32 %v9518, 1.0
        %v9647 = vadd.f32 %v9519, 1.0
        %v9648 = vadd.f32 %v9520, 1.0
        %v9649 = vadd.f32 %v9521, 1.0
        %v9650 = vadd.f32 %v9522, 1.0
        %v9651 = vadd.f32 %v9523, 1.0
        %v9652 = vadd.f32 %v9524, 1.0
        %v9653 = vadd.f32 %v9525, 1.0
        %v9654 = vadd.f32 %v9526, 1.0
        %v9655 = vadd.f32 %v9527, 1.0
        %v9656 = vadd.f32 %v9528, 1.0
        %v9657 = vadd.f32 %v9529, 1.0
        %v9658 = vadd.f32 %v9530, 1.0
        %v9659 = vadd.f32 %v9531, 1.0
        %v9660 = vadd.f32 %v9532, 1.0
        %v9661 = vadd.f32 %v9533, 1.0
        %v9662 = vadd.f32 %v9534, 1.0
        %v9663 = vadd.f32 %v9535, 1.0
        %v9664 = vadd.f32 %v9536, 1.0
        %v9665 = vadd.f32 %v9537, 1.0
        %v9666 = vadd.f32 %v9538, 1.0
        %v9667 = vadd.f32 %v9539, 1.0
        %v9668 = vadd.f32 %v9540, 1.0
        %v9669 = vadd.f32 %v9541, 1.0
        %v9670 = vadd.f32 %v9542, 1.0
        %v9671 = vadd.f32 %v9543, 1.0
        %v9672 = vadd.f32 %v9544, 1.0
        %v9673 = vadd.f32 %v9545, 1.0
        %v9674 = vadd.f32 %v9546, 1.0
        %v9675 = vadd.f32 %v9547, 1.0
        %v9676 = vadd.f32 %v9548, 1.0
        %v9677 = vadd.f32 %v9549, 1.0
        %v9678 = vadd.f32 %v9550, 1.0
        %v9679 = vadd.f32 %v9551, 1.0
        %v9680 = vadd.f32 %v9552, 1.0
        %v9681 = vadd.f32 %v9553, 1.0
        %v9682 = vadd.f32 %v9554, 1.0
        %v9683 = vadd.f32 %v9555, 1.0
        %v9684 = vadd.f32 %v9556, 1.0
        %v9685 = vadd.f32 %v9557, 1.0
        %v9686 = vadd.f32 %v9558, 1.0
        %v9687 = vadd.f32 %v9559, 1.0
        %v9688 = vadd.f32 %v9560, 1.0
        %v9689 = vadd.f32 %v9561, 1.0
        %v9690 = vadd.f32 %v9562, 1.0
        %v9691 = vadd.f32 %v9563, 1.0
        %v9692 = vadd.f32 %v9564, 1.0
        %v9693 = vadd.f32 %v9565, 1.0
        %v9694 = vadd.f32 %v9566, 1.0
        %v9695 = vadd.f32 %v9567, 1.0
        %v9696 = vadd.f32 %v9568, 1.0
        %v9697 = vadd.f32 %v9569, 1.0
        %v9698 = vadd.f32 %v9570, 1.0
        %v9699 = vadd.f32 %v9571, 1.0
        %v9700 = vadd.f32 %v9572, 1.0
        %v9701 = vadd.f32 %v9573, 1.0
        %v9702 = vadd.f32 %v9574, 1.0
        %v9703 = vadd.f32 %v9575, 1.0
        %v9704 = vadd.f32 %v9576, 1.0
        %v9705 = vadd.f32 %v9577, 1.0
        %v9706 = vadd.f32 %v9578, 1.0
        %v9707 = vadd.f32 %v9579, 1.0
        %v9708 = vadd.f32 %v9580, 1.0
        %v9709 = vadd.f32 %v9581, 1.0
        %v9710 = vadd.f32 %v9582, 1.0
        %v9711 = vadd.f32 %v9583, 1.0
        %v9712 = vadd.f32 %v9584, 1.0
        %v9713 = vadd.f32 %v9585, 1.0
        %v9714 = vadd.f32 %v9586, 1.0
        %v9715 = vadd.f32 %v9587, 1.0
        %v9716 = vadd.f32 %v9588, 1.0
        %v9717 = vadd.f32 %v9589, 1.0
        %v9718 = vadd.f32 %v9590, 1.0
        %v9719 = vadd.f32 %v9591, 1.0
        %v9720 = vadd.f32 %v9592, 1.0
        %v9721 = vadd.f32 %v9593, 1.0
        %v9722 = vadd.f32 %v9594, 1.0
        %v9723 = vadd.f32 %v9595, 1.0
        %v9724 = vadd.f32 %v9596, 1.0
        %v9725 = vadd.f32 %v9597, 1.0
        %v9726 = vmul.f32 %v9598, 0.5
        %v9727 = vmul.f32 %v9599, 0.5
        %v9728 = vmul.f32 %v9600, 0.5
        %v9729 = vmul.f32 %v9601, 0.5
        %v9730 = vmul.f32 %v9602, 0.5
        %v9731 = vmul.f32 %v9603, 0.5
        %v9732 = vmul.f32 %v9604, 0.5
        %v9733 = vmul.f32 %v9605, 0.5
        %v9734 = vmul.f32 %v9606, 0.5
        %v9735 = vmul.f32 %v9607, 0.5
        %v9736 = vmul.f32 %v9608, 0.5
        %v9737 = vmul.f32 %v9609, 0.5
        %v9738 = vmul.f32 %v9610, 0.5
        %v9739 = vmul.f32 %v9611, 0.5
        %v9740 = vmul.f32 %v9612, 0.5
        %v9741 = vmul.f32 %v9613, 0.5
        %v9742 = vmul.f32 %v9614, 0.5
        %v9743 = vmul.f32 %v9615, 0.5
        %v9744 = vmul.f32 %v9616, 0.5
        %v9745 = vmul.f32 %v9617, 0.5
        %v9746 = vmul.f32 %v9618, 0.5
        %v9747 = vmul.f32 %v9619, 0.5
        %v9748 = vmul.f32 %v9620, 0.5
        %v9749 = vmul.f32 %v9621, 0.5
        %v9750 = vmul.f32 %v9622, 0.5
        %v9751 = vmul.f32 %v9623, 0.5
        %v9752 = vmul.f32 %v9624, 0.5
        %v9753 = vmul.f32 %v9625, 0.5
        %v9754 = vmul.f32 %v9626, 0.5
        %v9755 = vmul.f32 %v9627, 0.5
        %v9756 = vmul.f32 %v9628, 0.5
        %v9757 = vmul.f32 %v9629, 0.5
        %v9758 = vmul.f32 %v9630, 0.5
        %v9759 = vmul.f32 %v9631, 0.5
        %v9760 = vmul.f32 %v9632, 0.5
        %v9761 = vmul.f32 %v9633, 0.5
        %v9762 = vmul.f32 %v9634, 0.5
        %v9763 = vmul.f32 %v9635, 0.5
        %v9764 = vmul.f32 %v9636, 0.5
        %v9765 = vmul.f32 %v9637, 0.5
        %v9766 = vmul.f32 %v9638, 0.5
        %v9767 = vmul.f32 %v9639, 0.5
        %v9768 = vmul.f32 %v9640, 0.5
        %v9769 = vmul.f32 %v9641, 0.5
        %v9770 = vmul.f32 %v9642, 0.5
        %v9771 = vmul.f32 %v9643, 0.5
        %v9772 = vmul.f32 %v9644, 0.5
        %v9773 = vmul.f32 %v9645, 0.5
        %v9774 = vmul.f32 %v9646, 0.5
        %v9775 = vmul.f32 %v9647, 0.5
        %v9776 = vmul.f32 %v9648, 0.5
        %v9777 = vmul.f32 %v9649, 0.5
        %v9778 = vmul.f32 %v9650, 0.5
        %v9779 = vmul.f32 %v9651, 0.5
        %v9780 = vmul.f32 %v9652, 0.5
        %v9781 = vmul.f32 %v9653, 0.5
        %v9782 = vmul.f32 %v9654, 0.5
        %v9783 = vmul.f32 %v9655, 0.5
        %v9784 = vmul.f32 %v9656, 0.5
        %v9785 = vmul.f32 %v9657, 0.5
        %v9786 = vmul.f32 %v9658, 0.5
        %v9787 = vmul.f32 %v9659, 0.5
        %v9788 = vmul.f32 %v9660, 0.5
        %v9789 = vmul.f32 %v9661, 0.5
        %v9790 = vmul.f32 %v9662, 0.5
        %v9791 = vmul.f32 %v9663, 0.5
        %v9792 = vmul.f32 %v9664, 0.5
        %v9793 = vmul.f32 %v9665, 0.5
        %v9794 = vmul.f32 %v9666, 0.5
        %v9795 = vmul.f32 %v9667, 0.5
        %v9796 = vmul.f32 %v9668, 0.5
        %v9797 = vmul.f32 %v9669, 0.5
        %v9798 = vmul.f32 %v9670, 0.5
        %v9799 = vmul.f32 %v9671, 0.5
        %v9800 = vmul.f32 %v9672, 0.5
        %v9801 = vmul.f32 %v9673, 0.5
        %v9802 = vmul.f32 %v9674, 0.5
        %v9803 = vmul.f32 %v9675, 0.5
        %v9804 = vmul.f32 %v9676, 0.5
        %v9805 = vmul.f32 %v9677, 0.5
        %v9806 = vmul.f32 %v9678, 0.5
        %v9807 = vmul.f32 %v9679, 0.5
        %v9808 = vmul.f32 %v9680, 0.5
        %v9809 = vmul.f32 %v9681, 0.5
        %v9810 = vmul.f32 %v9682, 0.5
        %v9811 = vmul.f32 %v9683, 0.5
        %v9812 = vmul.f32 %v9684, 0.5
        %v9813 = vmul.f32 %v9685, 0.5
        %v9814 = vmul.f32 %v9686, 0.5
        %v9815 = vmul.f32 %v9687, 0.5
        %v9816 = vmul.f32 %v9688, 0.5
        %v9817 = vmul.f32 %v9689, 0.5
        %v9818 = vmul.f32 %v9690, 0.5
        %v9819 = vmul.f32 %v9691, 0.5
        %v9820 = vmul.f32 %v9692, 0.5
        %v9821 = vmul.f32 %v9693, 0.5
        %v9822 = vmul.f32 %v9694, 0.5
        %v9823 = vmul.f32 %v9695, 0.5
        %v9824 = vmul.f32 %v9696, 0.5
        %v9825 = vmul.f32 %v9697, 0.5
        %v9826 = vmul.f32 %v9698, 0.5
        %v9827 = vmul.f32 %v9699, 0.5
        %v9828 = vmul.f32 %v9700, 0.5
        %v9829 = vmul.f32 %v9701, 0.5
        %v9830 = vmul.f32 %v9702, 0.5
        %v9831 = vmul.f32 %v9703, 0.5
        %v9832 = vmul.f32 %v9704, 0.5
        %v9833 = vmul.f32 %v9705, 0.5
        %v9834 = vmul.f32 %v9706, 0.5
        %v9835 = vmul.f32 %v9707, 0.5
        %v9836 = vmul.f32 %v9708, 0.5
        %v9837 = vmul.f32 %v9709, 0.5
        %v9838 = vmul.f32 %v9710, 0.5
        %v9839 = vmul.f32 %v9711, 0.5
        %v9840 = vmul.f32 %v9712, 0.5
        %v9841 = vmul.f32 %v9713, 0.5
        %v9842 = vmul.f32 %v9714, 0.5
        %v9843 = vmul.f32 %v9715, 0.5
        %v9844 = vmul.f32 %v9716, 0.5
        %v9845 = vmul.f32 %v9717, 0.5
        %v9846 = vmul.f32 %v9718, 0.5
        %v9847 = vmul.f32 %v9719, 0.5
        %v9848 = vmul.f32 %v9720, 0.5
        %v9849 = vmul.f32 %v9721, 0.5
        %v9850 = vmul.f32 %v9722, 0.5
        %v9851 = vmul.f32 %v9723, 0.5
        %v9852 = vmul.f32 %v9724, 0.5
        %v9853 = vmul.f32 %v9725, 0.5
        %9855 = vset.pattern.permute.xlu0 0
        %9856 = vperm.xlu0 %9855, %v9726
        %v9857 = vpop.permute.xlu0 %9856
        %9860 = vset.pattern.permute.xlu0 0
        %9861 = vperm.xlu0 %9860, %v9727
        %v9862 = vpop.permute.xlu0 %9861
        %9865 = vset.pattern.permute.xlu0 0
        %9866 = vperm.xlu0 %9865, %v9728
        %v9867 = vpop.permute.xlu0 %9866
        %9870 = vset.pattern.permute.xlu0 0
        %9871 = vperm.xlu0 %9870, %v9729
        %v9872 = vpop.permute.xlu0 %9871
        %9875 = vset.pattern.permute.xlu0 0
        %9876 = vperm.xlu0 %9875, %v9730
        %v9877 = vpop.permute.xlu0 %9876
        %9880 = vset.pattern.permute.xlu0 0
        %9881 = vperm.xlu0 %9880, %v9731
        %v9882 = vpop.permute.xlu0 %9881
        %9885 = vset.pattern.permute.xlu0 0
        %9886 = vperm.xlu0 %9885, %v9732
        %v9887 = vpop.permute.xlu0 %9886
        %9890 = vset.pattern.permute.xlu0 0
        %9891 = vperm.xlu0 %9890, %v9733
        %v9892 = vpop.permute.xlu0 %9891
        %9895 = vset.pattern.permute.xlu0 0
        %9896 = vperm.xlu0 %9895, %v9734
        %v9897 = vpop.permute.xlu0 %9896
        %9900 = vset.pattern.permute.xlu0 0
        %9901 = vperm.xlu0 %9900, %v9735
        %v9902 = vpop.permute.xlu0 %9901
        %9905 = vset.pattern.permute.xlu0 0
        %9906 = vperm.xlu0 %9905, %v9736
        %v9907 = vpop.permute.xlu0 %9906
        %9910 = vset.pattern.permute.xlu0 0
        %9911 = vperm.xlu0 %9910, %v9737
        %v9912 = vpop.permute.xlu0 %9911
        %9915 = vset.pattern.permute.xlu0 0
        %9916 = vperm.xlu0 %9915, %v9738
        %v9917 = vpop.permute.xlu0 %9916
        %9920 = vset.pattern.permute.xlu0 0
        %9921 = vperm.xlu0 %9920, %v9739
        %v9922 = vpop.permute.xlu0 %9921
        %9925 = vset.pattern.permute.xlu0 0
        %9926 = vperm.xlu0 %9925, %v9740
        %v9927 = vpop.permute.xlu0 %9926
        %9930 = vset.pattern.permute.xlu0 0
        %9931 = vperm.xlu0 %9930, %v9741
        %v9932 = vpop.permute.xlu0 %9931
        %9935 = vset.pattern.permute.xlu0 0
        %9936 = vperm.xlu0 %9935, %v9742
        %v9937 = vpop.permute.xlu0 %9936
        %9940 = vset.pattern.permute.xlu0 0
        %9941 = vperm.xlu0 %9940, %v9743
        %v9942 = vpop.permute.xlu0 %9941
        %9945 = vset.pattern.permute.xlu0 0
        %9946 = vperm.xlu0 %9945, %v9744
        %v9947 = vpop.permute.xlu0 %9946
        %9950 = vset.pattern.permute.xlu0 0
        %9951 = vperm.xlu0 %9950, %v9745
        %v9952 = vpop.permute.xlu0 %9951
        %9955 = vset.pattern.permute.xlu0 0
        %9956 = vperm.xlu0 %9955, %v9746
        %v9957 = vpop.permute.xlu0 %9956
        %9960 = vset.pattern.permute.xlu0 0
        %9961 = vperm.xlu0 %9960, %v9747
        %v9962 = vpop.permute.xlu0 %9961
        %9965 = vset.pattern.permute.xlu0 0
        %9966 = vperm.xlu0 %9965, %v9748
        %v9967 = vpop.permute.xlu0 %9966
        %9970 = vset.pattern.permute.xlu0 0
        %9971 = vperm.xlu0 %9970, %v9749
        %v9972 = vpop.permute.xlu0 %9971
        %9975 = vset.pattern.permute.xlu0 0
        %9976 = vperm.xlu0 %9975, %v9750
        %v9977 = vpop.permute.xlu0 %9976
        %9980 = vset.pattern.permute.xlu0 0
        %9981 = vperm.xlu0 %9980, %v9751
        %v9982 = vpop.permute.xlu0 %9981
        %9985 = vset.pattern.permute.xlu0 0
        %9986 = vperm.xlu0 %9985, %v9752
        %v9987 = vpop.permute.xlu0 %9986
        %9990 = vset.pattern.permute.xlu0 0
        %9991 = vperm.xlu0 %9990, %v9753
        %v9992 = vpop.permute.xlu0 %9991
        %9995 = vset.pattern.permute.xlu0 0
        %9996 = vperm.xlu0 %9995, %v9754
        %v9997 = vpop.permute.xlu0 %9996
        %10000 = vset.pattern.permute.xlu0 0
        %10001 = vperm.xlu0 %10000, %v9755
        %v10002 = vpop.permute.xlu0 %10001
        %10005 = vset.pattern.permute.xlu0 0
        %10006 = vperm.xlu0 %10005, %v9756
        %v10007 = vpop.permute.xlu0 %10006
        %10010 = vset.pattern.permute.xlu0 0
        %10011 = vperm.xlu0 %10010, %v9757
        %v10012 = vpop.permute.xlu0 %10011
        %10015 = vset.pattern.permute.xlu0 0
        %10016 = vperm.xlu0 %10015, %v9758
        %v10017 = vpop.permute.xlu0 %10016
        %10020 = vset.pattern.permute.xlu0 0
        %10021 = vperm.xlu0 %10020, %v9759
        %v10022 = vpop.permute.xlu0 %10021
        %10025 = vset.pattern.permute.xlu0 0
        %10026 = vperm.xlu0 %10025, %v9760
        %v10027 = vpop.permute.xlu0 %10026
        %10030 = vset.pattern.permute.xlu0 0
        %10031 = vperm.xlu0 %10030, %v9761
        %v10032 = vpop.permute.xlu0 %10031
        %10035 = vset.pattern.permute.xlu0 0
        %10036 = vperm.xlu0 %10035, %v9762
        %v10037 = vpop.permute.xlu0 %10036
        %10040 = vset.pattern.permute.xlu0 0
        %10041 = vperm.xlu0 %10040, %v9763
        %v10042 = vpop.permute.xlu0 %10041
        %10045 = vset.pattern.permute.xlu0 0
        %10046 = vperm.xlu0 %10045, %v9764
        %v10047 = vpop.permute.xlu0 %10046
        %10050 = vset.pattern.permute.xlu0 0
        %10051 = vperm.xlu0 %10050, %v9765
        %v10052 = vpop.permute.xlu0 %10051
        %10055 = vset.pattern.permute.xlu0 0
        %10056 = vperm.xlu0 %10055, %v9766
        %v10057 = vpop.permute.xlu0 %10056
        %10060 = vset.pattern.permute.xlu0 0
        %10061 = vperm.xlu0 %10060, %v9767
        %v10062 = vpop.permute.xlu0 %10061
        %10065 = vset.pattern.permute.xlu0 0
        %10066 = vperm.xlu0 %10065, %v9768
        %v10067 = vpop.permute.xlu0 %10066
        %10070 = vset.pattern.permute.xlu0 0
        %10071 = vperm.xlu0 %10070, %v9769
        %v10072 = vpop.permute.xlu0 %10071
        %10075 = vset.pattern.permute.xlu0 0
        %10076 = vperm.xlu0 %10075, %v9770
        %v10077 = vpop.permute.xlu0 %10076
        %10080 = vset.pattern.permute.xlu0 0
        %10081 = vperm.xlu0 %10080, %v9771
        %v10082 = vpop.permute.xlu0 %10081
        %10085 = vset.pattern.permute.xlu0 0
        %10086 = vperm.xlu0 %10085, %v9772
        %v10087 = vpop.permute.xlu0 %10086
        %10090 = vset.pattern.permute.xlu0 0
        %10091 = vperm.xlu0 %10090, %v9773
        %v10092 = vpop.permute.xlu0 %10091
        %10095 = vset.pattern.permute.xlu0 0
        %10096 = vperm.xlu0 %10095, %v9774
        %v10097 = vpop.permute.xlu0 %10096
        %10100 = vset.pattern.permute.xlu0 0
        %10101 = vperm.xlu0 %10100, %v9775
        %v10102 = vpop.permute.xlu0 %10101
        %10105 = vset.pattern.permute.xlu0 0
        %10106 = vperm.xlu0 %10105, %v9776
        %v10107 = vpop.permute.xlu0 %10106
        %10110 = vset.pattern.permute.xlu0 0
        %10111 = vperm.xlu0 %10110, %v9777
        %v10112 = vpop.permute.xlu0 %10111
        %10115 = vset.pattern.permute.xlu0 0
        %10116 = vperm.xlu0 %10115, %v9778
        %v10117 = vpop.permute.xlu0 %10116
        %10120 = vset.pattern.permute.xlu0 0
        %10121 = vperm.xlu0 %10120, %v9779
        %v10122 = vpop.permute.xlu0 %10121
        %10125 = vset.pattern.permute.xlu0 0
        %10126 = vperm.xlu0 %10125, %v9780
        %v10127 = vpop.permute.xlu0 %10126
        %10130 = vset.pattern.permute.xlu0 0
        %10131 = vperm.xlu0 %10130, %v9781
        %v10132 = vpop.permute.xlu0 %10131
        %10135 = vset.pattern.permute.xlu0 0
        %10136 = vperm.xlu0 %10135, %v9782
        %v10137 = vpop.permute.xlu0 %10136
        %10140 = vset.pattern.permute.xlu0 0
        %10141 = vperm.xlu0 %10140, %v9783
        %v10142 = vpop.permute.xlu0 %10141
        %10145 = vset.pattern.permute.xlu0 0
        %10146 = vperm.xlu0 %10145, %v9784
        %v10147 = vpop.permute.xlu0 %10146
        %10150 = vset.pattern.permute.xlu0 0
        %10151 = vperm.xlu0 %10150, %v9785
        %v10152 = vpop.permute.xlu0 %10151
        %10155 = vset.pattern.permute.xlu0 0
        %10156 = vperm.xlu0 %10155, %v9786
        %v10157 = vpop.permute.xlu0 %10156
        %10160 = vset.pattern.permute.xlu0 0
        %10161 = vperm.xlu0 %10160, %v9787
        %v10162 = vpop.permute.xlu0 %10161
        %10165 = vset.pattern.permute.xlu0 0
        %10166 = vperm.xlu0 %10165, %v9788
        %v10167 = vpop.permute.xlu0 %10166
        %10170 = vset.pattern.permute.xlu0 0
        %10171 = vperm.xlu0 %10170, %v9789
        %v10172 = vpop.permute.xlu0 %10171
        %10175 = vset.pattern.permute.xlu0 0
        %10176 = vperm.xlu0 %10175, %v9790
        %v10177 = vpop.permute.xlu0 %10176
        %10180 = vset.pattern.permute.xlu0 0
        %10181 = vperm.xlu0 %10180, %v9791
        %v10182 = vpop.permute.xlu0 %10181
        %10185 = vset.pattern.permute.xlu0 0
        %10186 = vperm.xlu0 %10185, %v9792
        %v10187 = vpop.permute.xlu0 %10186
        %10190 = vset.pattern.permute.xlu0 0
        %10191 = vperm.xlu0 %10190, %v9793
        %v10192 = vpop.permute.xlu0 %10191
        %10195 = vset.pattern.permute.xlu0 0
        %10196 = vperm.xlu0 %10195, %v9794
        %v10197 = vpop.permute.xlu0 %10196
        %10200 = vset.pattern.permute.xlu0 0
        %10201 = vperm.xlu0 %10200, %v9795
        %v10202 = vpop.permute.xlu0 %10201
        %10205 = vset.pattern.permute.xlu0 0
        %10206 = vperm.xlu0 %10205, %v9796
        %v10207 = vpop.permute.xlu0 %10206
        %10210 = vset.pattern.permute.xlu0 0
        %10211 = vperm.xlu0 %10210, %v9797
        %v10212 = vpop.permute.xlu0 %10211
        %10215 = vset.pattern.permute.xlu0 0
        %10216 = vperm.xlu0 %10215, %v9798
        %v10217 = vpop.permute.xlu0 %10216
        %10220 = vset.pattern.permute.xlu0 0
        %10221 = vperm.xlu0 %10220, %v9799
        %v10222 = vpop.permute.xlu0 %10221
        %10225 = vset.pattern.permute.xlu0 0
        %10226 = vperm.xlu0 %10225, %v9800
        %v10227 = vpop.permute.xlu0 %10226
        %10230 = vset.pattern.permute.xlu0 0
        %10231 = vperm.xlu0 %10230, %v9801
        %v10232 = vpop.permute.xlu0 %10231
        %10235 = vset.pattern.permute.xlu0 0
        %10236 = vperm.xlu0 %10235, %v9802
        %v10237 = vpop.permute.xlu0 %10236
        %10240 = vset.pattern.permute.xlu0 0
        %10241 = vperm.xlu0 %10240, %v9803
        %v10242 = vpop.permute.xlu0 %10241
        %10245 = vset.pattern.permute.xlu0 0
        %10246 = vperm.xlu0 %10245, %v9804
        %v10247 = vpop.permute.xlu0 %10246
        %10250 = vset.pattern.permute.xlu0 0
        %10251 = vperm.xlu0 %10250, %v9805
        %v10252 = vpop.permute.xlu0 %10251
        %10255 = vset.pattern.permute.xlu0 0
        %10256 = vperm.xlu0 %10255, %v9806
        %v10257 = vpop.permute.xlu0 %10256
        %10260 = vset.pattern.permute.xlu0 0
        %10261 = vperm.xlu0 %10260, %v9807
        %v10262 = vpop.permute.xlu0 %10261
        %10265 = vset.pattern.permute.xlu0 0
        %10266 = vperm.xlu0 %10265, %v9808
        %v10267 = vpop.permute.xlu0 %10266
        %10270 = vset.pattern.permute.xlu0 0
        %10271 = vperm.xlu0 %10270, %v9809
        %v10272 = vpop.permute.xlu0 %10271
        %10275 = vset.pattern.permute.xlu0 0
        %10276 = vperm.xlu0 %10275, %v9810
        %v10277 = vpop.permute.xlu0 %10276
        %10280 = vset.pattern.permute.xlu0 0
        %10281 = vperm.xlu0 %10280, %v9811
        %v10282 = vpop.permute.xlu0 %10281
        %10285 = vset.pattern.permute.xlu0 0
        %10286 = vperm.xlu0 %10285, %v9812
        %v10287 = vpop.permute.xlu0 %10286
        %10290 = vset.pattern.permute.xlu0 0
        %10291 = vperm.xlu0 %10290, %v9813
        %v10292 = vpop.permute.xlu0 %10291
        %10295 = vset.pattern.permute.xlu0 0
        %10296 = vperm.xlu0 %10295, %v9814
        %v10297 = vpop.permute.xlu0 %10296
        %10300 = vset.pattern.permute.xlu0 0
        %10301 = vperm.xlu0 %10300, %v9815
        %v10302 = vpop.permute.xlu0 %10301
        %10305 = vset.pattern.permute.xlu0 0
        %10306 = vperm.xlu0 %10305, %v9816
        %v10307 = vpop.permute.xlu0 %10306
        %10310 = vset.pattern.permute.xlu0 0
        %10311 = vperm.xlu0 %10310, %v9817
        %v10312 = vpop.permute.xlu0 %10311
        %10315 = vset.pattern.permute.xlu0 0
        %10316 = vperm.xlu0 %10315, %v9818
        %v10317 = vpop.permute.xlu0 %10316
        %10320 = vset.pattern.permute.xlu0 0
        %10321 = vperm.xlu0 %10320, %v9819
        %v10322 = vpop.permute.xlu0 %10321
        %10325 = vset.pattern.permute.xlu0 0
        %10326 = vperm.xlu0 %10325, %v9820
        %v10327 = vpop.permute.xlu0 %10326
        %10330 = vset.pattern.permute.xlu0 0
        %10331 = vperm.xlu0 %10330, %v9821
        %v10332 = vpop.permute.xlu0 %10331
        %10335 = vset.pattern.permute.xlu0 0
        %10336 = vperm.xlu0 %10335, %v9822
        %v10337 = vpop.permute.xlu0 %10336
        %10340 = vset.pattern.permute.xlu0 0
        %10341 = vperm.xlu0 %10340, %v9823
        %v10342 = vpop.permute.xlu0 %10341
        %10345 = vset.pattern.permute.xlu0 0
        %10346 = vperm.xlu0 %10345, %v9824
        %v10347 = vpop.permute.xlu0 %10346
        %10350 = vset.pattern.permute.xlu0 0
        %10351 = vperm.xlu0 %10350, %v9825
        %v10352 = vpop.permute.xlu0 %10351
        %10355 = vset.pattern.permute.xlu0 0
        %10356 = vperm.xlu0 %10355, %v9826
        %v10357 = vpop.permute.xlu0 %10356
        %10360 = vset.pattern.permute.xlu0 0
        %10361 = vperm.xlu0 %10360, %v9827
        %v10362 = vpop.permute.xlu0 %10361
        %10365 = vset.pattern.permute.xlu0 0
        %10366 = vperm.xlu0 %10365, %v9828
        %v10367 = vpop.permute.xlu0 %10366
        %10370 = vset.pattern.permute.xlu0 0
        %10371 = vperm.xlu0 %10370, %v9829
        %v10372 = vpop.permute.xlu0 %10371
        %10375 = vset.pattern.permute.xlu0 0
        %10376 = vperm.xlu0 %10375, %v9830
        %v10377 = vpop.permute.xlu0 %10376
        %10380 = vset.pattern.permute.xlu0 0
        %10381 = vperm.xlu0 %10380, %v9831
        %v10382 = vpop.permute.xlu0 %10381
        %10385 = vset.pattern.permute.xlu0 0
        %10386 = vperm.xlu0 %10385, %v9832
        %v10387 = vpop.permute.xlu0 %10386
        %10390 = vset.pattern.permute.xlu0 0
        %10391 = vperm.xlu0 %10390, %v9833
        %v10392 = vpop.permute.xlu0 %10391
        %10395 = vset.pattern.permute.xlu0 0
        %10396 = vperm.xlu0 %10395, %v9834
        %v10397 = vpop.permute.xlu0 %10396
        %10400 = vset.pattern.permute.xlu0 0
        %10401 = vperm.xlu0 %10400, %v9835
        %v10402 = vpop.permute.xlu0 %10401
        %10405 = vset.pattern.permute.xlu0 0
        %10406 = vperm.xlu0 %10405, %v9836
        %v10407 = vpop.permute.xlu0 %10406
        %10410 = vset.pattern.permute.xlu0 0
        %10411 = vperm.xlu0 %10410, %v9837
        %v10412 = vpop.permute.xlu0 %10411
        %10415 = vset.pattern.permute.xlu0 0
        %10416 = vperm.xlu0 %10415, %v9838
        %v10417 = vpop.permute.xlu0 %10416
        %10420 = vset.pattern.permute.xlu0 0
        %10421 = vperm.xlu0 %10420, %v9839
        %v10422 = vpop.permute.xlu0 %10421
        %10425 = vset.pattern.permute.xlu0 0
        %10426 = vperm.xlu0 %10425, %v9840
        %v10427 = vpop.permute.xlu0 %10426
        %10430 = vset.pattern.permute.xlu0 0
        %10431 = vperm.xlu0 %10430, %v9841
        %v10432 = vpop.permute.xlu0 %10431
        %10435 = vset.pattern.permute.xlu0 0
        %10436 = vperm.xlu0 %10435, %v9842
        %v10437 = vpop.permute.xlu0 %10436
        %10440 = vset.pattern.permute.xlu0 0
        %10441 = vperm.xlu0 %10440, %v9843
        %v10442 = vpop.permute.xlu0 %10441
        %10445 = vset.pattern.permute.xlu0 0
        %10446 = vperm.xlu0 %10445, %v9844
        %v10447 = vpop.permute.xlu0 %10446
        %10450 = vset.pattern.permute.xlu0 0
        %10451 = vperm.xlu0 %10450, %v9845
        %v10452 = vpop.permute.xlu0 %10451
        %10455 = vset.pattern.permute.xlu0 0
        %10456 = vperm.xlu0 %10455, %v9846
        %v10457 = vpop.permute.xlu0 %10456
        %10460 = vset.pattern.permute.xlu0 0
        %10461 = vperm.xlu0 %10460, %v9847
        %v10462 = vpop.permute.xlu0 %10461
        %10465 = vset.pattern.permute.xlu0 0
        %10466 = vperm.xlu0 %10465, %v9848
        %v10467 = vpop.permute.xlu0 %10466
        %10470 = vset.pattern.permute.xlu0 0
        %10471 = vperm.xlu0 %10470, %v9849
        %v10472 = vpop.permute.xlu0 %10471
        %10475 = vset.pattern.permute.xlu0 0
        %10476 = vperm.xlu0 %10475, %v9850
        %v10477 = vpop.permute.xlu0 %10476
        %10480 = vset.pattern.permute.xlu0 0
        %10481 = vperm.xlu0 %10480, %v9851
        %v10482 = vpop.permute.xlu0 %10481
        %10485 = vset.pattern.permute.xlu0 0
        %10486 = vperm.xlu0 %10485, %v9852
        %v10487 = vpop.permute.xlu0 %10486
        %10490 = vset.pattern.permute.xlu0 0
        %10491 = vperm.xlu0 %10490, %v9853
        %v10492 = vpop.permute.xlu0 %10491
        %v10494 = vmul.f32 %v8486, %v9857
        %v10495 = vmul.f32 %v8487, %v9862
        %v10496 = vmul.f32 %v8488, %v9867
        %v10497 = vmul.f32 %v8489, %v9872
        %v10498 = vmul.f32 %v8490, %v9877
        %v10499 = vmul.f32 %v8491, %v9882
        %v10500 = vmul.f32 %v8492, %v9887
        %v10501 = vmul.f32 %v8493, %v9892
        %v10502 = vmul.f32 %v8494, %v9897
        %v10503 = vmul.f32 %v8495, %v9902
        %v10504 = vmul.f32 %v8496, %v9907
        %v10505 = vmul.f32 %v8497, %v9912
        %v10506 = vmul.f32 %v8498, %v9917
        %v10507 = vmul.f32 %v8499, %v9922
        %v10508 = vmul.f32 %v8500, %v9927
        %v10509 = vmul.f32 %v8501, %v9932
        %v10510 = vmul.f32 %v8502, %v9937
        %v10511 = vmul.f32 %v8503, %v9942
        %v10512 = vmul.f32 %v8504, %v9947
        %v10513 = vmul.f32 %v8505, %v9952
        %v10514 = vmul.f32 %v8506, %v9957
        %v10515 = vmul.f32 %v8507, %v9962
        %v10516 = vmul.f32 %v8508, %v9967
        %v10517 = vmul.f32 %v8509, %v9972
        %v10518 = vmul.f32 %v8510, %v9977
        %v10519 = vmul.f32 %v8511, %v9982
        %v10520 = vmul.f32 %v8512, %v9987
        %v10521 = vmul.f32 %v8513, %v9992
        %v10522 = vmul.f32 %v8514, %v9997
        %v10523 = vmul.f32 %v8515, %v10002
        %v10524 = vmul.f32 %v8516, %v10007
        %v10525 = vmul.f32 %v8517, %v10012
        %v10526 = vmul.f32 %v8518, %v10017
        %v10527 = vmul.f32 %v8519, %v10022
        %v10528 = vmul.f32 %v8520, %v10027
        %v10529 = vmul.f32 %v8521, %v10032
        %v10530 = vmul.f32 %v8522, %v10037
        %v10531 = vmul.f32 %v8523, %v10042
        %v10532 = vmul.f32 %v8524, %v10047
        %v10533 = vmul.f32 %v8525, %v10052
        %v10534 = vmul.f32 %v8526, %v10057
        %v10535 = vmul.f32 %v8527, %v10062
        %v10536 = vmul.f32 %v8528, %v10067
        %v10537 = vmul.f32 %v8529, %v10072
        %v10538 = vmul.f32 %v8530, %v10077
        %v10539 = vmul.f32 %v8531, %v10082
        %v10540 = vmul.f32 %v8532, %v10087
        %v10541 = vmul.f32 %v8533, %v10092
        %v10542 = vmul.f32 %v8534, %v10097
        %v10543 = vmul.f32 %v8535, %v10102
        %v10544 = vmul.f32 %v8536, %v10107
        %v10545 = vmul.f32 %v8537, %v10112
        %v10546 = vmul.f32 %v8538, %v10117
        %v10547 = vmul.f32 %v8539, %v10122
        %v10548 = vmul.f32 %v8540, %v10127
        %v10549 = vmul.f32 %v8541, %v10132
        %v10550 = vmul.f32 %v8542, %v10137
        %v10551 = vmul.f32 %v8543, %v10142
        %v10552 = vmul.f32 %v8544, %v10147
        %v10553 = vmul.f32 %v8545, %v10152
        %v10554 = vmul.f32 %v8546, %v10157
        %v10555 = vmul.f32 %v8547, %v10162
        %v10556 = vmul.f32 %v8548, %v10167
        %v10557 = vmul.f32 %v8549, %v10172
        %v10558 = vmul.f32 %v8550, %v10177
        %v10559 = vmul.f32 %v8551, %v10182
        %v10560 = vmul.f32 %v8552, %v10187
        %v10561 = vmul.f32 %v8553, %v10192
        %v10562 = vmul.f32 %v8554, %v10197
        %v10563 = vmul.f32 %v8555, %v10202
        %v10564 = vmul.f32 %v8556, %v10207
        %v10565 = vmul.f32 %v8557, %v10212
        %v10566 = vmul.f32 %v8558, %v10217
        %v10567 = vmul.f32 %v8559, %v10222
        %v10568 = vmul.f32 %v8560, %v10227
        %v10569 = vmul.f32 %v8561, %v10232
        %v10570 = vmul.f32 %v8562, %v10237
        %v10571 = vmul.f32 %v8563, %v10242
        %v10572 = vmul.f32 %v8564, %v10247
        %v10573 = vmul.f32 %v8565, %v10252
        %v10574 = vmul.f32 %v8566, %v10257
        %v10575 = vmul.f32 %v8567, %v10262
        %v10576 = vmul.f32 %v8568, %v10267
        %v10577 = vmul.f32 %v8569, %v10272
        %v10578 = vmul.f32 %v8570, %v10277
        %v10579 = vmul.f32 %v8571, %v10282
        %v10580 = vmul.f32 %v8572, %v10287
        %v10581 = vmul.f32 %v8573, %v10292
        %v10582 = vmul.f32 %v8574, %v10297
        %v10583 = vmul.f32 %v8575, %v10302
        %v10584 = vmul.f32 %v8576, %v10307
        %v10585 = vmul.f32 %v8577, %v10312
        %v10586 = vmul.f32 %v8578, %v10317
        %v10587 = vmul.f32 %v8579, %v10322
        %v10588 = vmul.f32 %v8580, %v10327
        %v10589 = vmul.f32 %v8581, %v10332
        %v10590 = vmul.f32 %v8582, %v10337
        %v10591 = vmul.f32 %v8583, %v10342
        %v10592 = vmul.f32 %v8584, %v10347
        %v10593 = vmul.f32 %v8585, %v10352
        %v10594 = vmul.f32 %v8586, %v10357
        %v10595 = vmul.f32 %v8587, %v10362
        %v10596 = vmul.f32 %v8588, %v10367
        %v10597 = vmul.f32 %v8589, %v10372
        %v10598 = vmul.f32 %v8590, %v10377
        %v10599 = vmul.f32 %v8591, %v10382
        %v10600 = vmul.f32 %v8592, %v10387
        %v10601 = vmul.f32 %v8593, %v10392
        %v10602 = vmul.f32 %v8594, %v10397
        %v10603 = vmul.f32 %v8595, %v10402
        %v10604 = vmul.f32 %v8596, %v10407
        %v10605 = vmul.f32 %v8597, %v10412
        %v10606 = vmul.f32 %v8598, %v10417
        %v10607 = vmul.f32 %v8599, %v10422
        %v10608 = vmul.f32 %v8600, %v10427
        %v10609 = vmul.f32 %v8601, %v10432
        %v10610 = vmul.f32 %v8602, %v10437
        %v10611 = vmul.f32 %v8603, %v10442
        %v10612 = vmul.f32 %v8604, %v10447
        %v10613 = vmul.f32 %v8605, %v10452
        %v10614 = vmul.f32 %v8606, %v10457
        %v10615 = vmul.f32 %v8607, %v10462
        %v10616 = vmul.f32 %v8608, %v10467
        %v10617 = vmul.f32 %v8609, %v10472
        %v10618 = vmul.f32 %v8610, %v10477
        %v10619 = vmul.f32 %v8611, %v10482
        %v10620 = vmul.f32 %v8612, %v10487
        %v10621 = vmul.f32 %v8613, %v10492
        %v10622 = vpack.c.bf16 %v10495, %v10494
        %v10623 = vpack.c.bf16 %v10497, %v10496
        %v10624 = vpack.c.bf16 %v10499, %v10498
        %v10625 = vpack.c.bf16 %v10501, %v10500
        %v10626 = vpack.c.bf16 %v10503, %v10502
        %v10627 = vpack.c.bf16 %v10505, %v10504
        %v10628 = vpack.c.bf16 %v10507, %v10506
        %v10629 = vpack.c.bf16 %v10509, %v10508
        %v10630 = vpack.c.bf16 %v10511, %v10510
        %v10631 = vpack.c.bf16 %v10513, %v10512
        %v10632 = vpack.c.bf16 %v10515, %v10514
        %v10633 = vpack.c.bf16 %v10517, %v10516
        %v10634 = vpack.c.bf16 %v10519, %v10518
        %v10635 = vpack.c.bf16 %v10521, %v10520
        %v10636 = vpack.c.bf16 %v10523, %v10522
        %v10637 = vpack.c.bf16 %v10525, %v10524
        %v10638 = vpack.c.bf16 %v10527, %v10526
        %v10639 = vpack.c.bf16 %v10529, %v10528
        %v10640 = vpack.c.bf16 %v10531, %v10530
        %v10641 = vpack.c.bf16 %v10533, %v10532
        %v10642 = vpack.c.bf16 %v10535, %v10534
        %v10643 = vpack.c.bf16 %v10537, %v10536
        %v10644 = vpack.c.bf16 %v10539, %v10538
        %v10645 = vpack.c.bf16 %v10541, %v10540
        %v10646 = vpack.c.bf16 %v10543, %v10542
        %v10647 = vpack.c.bf16 %v10545, %v10544
        %v10648 = vpack.c.bf16 %v10547, %v10546
        %v10649 = vpack.c.bf16 %v10549, %v10548
        %v10650 = vpack.c.bf16 %v10551, %v10550
        %v10651 = vpack.c.bf16 %v10553, %v10552
        %v10652 = vpack.c.bf16 %v10555, %v10554
        %v10653 = vpack.c.bf16 %v10557, %v10556
        %v10654 = vpack.c.bf16 %v10559, %v10558
        %v10655 = vpack.c.bf16 %v10561, %v10560
        %v10656 = vpack.c.bf16 %v10563, %v10562
        %v10657 = vpack.c.bf16 %v10565, %v10564
        %v10658 = vpack.c.bf16 %v10567, %v10566
        %v10659 = vpack.c.bf16 %v10569, %v10568
        %v10660 = vpack.c.bf16 %v10571, %v10570
        %v10661 = vpack.c.bf16 %v10573, %v10572
        %v10662 = vpack.c.bf16 %v10575, %v10574
        %v10663 = vpack.c.bf16 %v10577, %v10576
        %v10664 = vpack.c.bf16 %v10579, %v10578
        %v10665 = vpack.c.bf16 %v10581, %v10580
        %v10666 = vpack.c.bf16 %v10583, %v10582
        %v10667 = vpack.c.bf16 %v10585, %v10584
        %v10668 = vpack.c.bf16 %v10587, %v10586
        %v10669 = vpack.c.bf16 %v10589, %v10588
        %v10670 = vpack.c.bf16 %v10591, %v10590
        %v10671 = vpack.c.bf16 %v10593, %v10592
        %v10672 = vpack.c.bf16 %v10595, %v10594
        %v10673 = vpack.c.bf16 %v10597, %v10596
        %v10674 = vpack.c.bf16 %v10599, %v10598
        %v10675 = vpack.c.bf16 %v10601, %v10600
        %v10676 = vpack.c.bf16 %v10603, %v10602
        %v10677 = vpack.c.bf16 %v10605, %v10604
        %v10678 = vpack.c.bf16 %v10607, %v10606
        %v10679 = vpack.c.bf16 %v10609, %v10608
        %v10680 = vpack.c.bf16 %v10611, %v10610
        %v10681 = vpack.c.bf16 %v10613, %v10612
        %v10682 = vpack.c.bf16 %v10615, %v10614
        %v10683 = vpack.c.bf16 %v10617, %v10616
        %v10684 = vpack.c.bf16 %v10619, %v10618
        %v10685 = vpack.c.bf16 %v10621, %v10620
        %v10686 = vld [vmem:[%s822] sm:$0xff]
        %v10687 = vld [vmem:[%s822 + $0x8] sm:$0xff]
        %v10688 = vld [vmem:[%s822 + $0x10] sm:$0xff]
        %v10689 = vld [vmem:[%s822 + $0x18] sm:$0xff]
        %v10690 = vld [vmem:[%s822 + $0x20] sm:$0xff]
        %v10691 = vld [vmem:[%s822 + $0x28] sm:$0xff]
        %v10692 = vld [vmem:[%s822 + $0x30] sm:$0xff]
        %v10693 = vld [vmem:[%s822 + $0x38] sm:$0xff]
        %v10694 = vld [vmem:[%s822 + $0x40] sm:$0xff]
        %v10695 = vld [vmem:[%s822 + $0x48] sm:$0xff]
        %v10696 = vld [vmem:[%s822 + $0x50] sm:$0xff]
        %v10697 = vld [vmem:[%s822 + $0x58] sm:$0xff]
        %v10698 = vld [vmem:[%s822 + $0x60] sm:$0xff]
        %v10699 = vld [vmem:[%s822 + $0x68] sm:$0xff]
        %v10700 = vld [vmem:[%s822 + $0x70] sm:$0xff]
        %v10701 = vld [vmem:[%s822 + $0x78] sm:$0xff]
        %v10718 = vunpack.c.l.b16 %v10686
        %v10719 = vunpack.c.h.b16 %v10686
        %v10720 = vunpack.c.l.b16 %v10687
        %v10721 = vunpack.c.h.b16 %v10687
        %v10722 = vunpack.c.l.b16 %v10688
        %v10723 = vunpack.c.h.b16 %v10688
        %v10724 = vunpack.c.l.b16 %v10689
        %v10725 = vunpack.c.h.b16 %v10689
        %v10726 = vunpack.c.l.b16 %v10690
        %v10727 = vunpack.c.h.b16 %v10690
        %v10728 = vunpack.c.l.b16 %v10691
        %v10729 = vunpack.c.h.b16 %v10691
        %v10730 = vunpack.c.l.b16 %v10692
        %v10731 = vunpack.c.h.b16 %v10692
        %v10732 = vunpack.c.l.b16 %v10693
        %v10733 = vunpack.c.h.b16 %v10693
        %v10734 = vunpack.c.l.b16 %v10694
        %v10735 = vunpack.c.h.b16 %v10694
        %v10736 = vunpack.c.l.b16 %v10695
        %v10737 = vunpack.c.h.b16 %v10695
        %v10738 = vunpack.c.l.b16 %v10696
        %v10739 = vunpack.c.h.b16 %v10696
        %v10740 = vunpack.c.l.b16 %v10697
        %v10741 = vunpack.c.h.b16 %v10697
        %v10742 = vunpack.c.l.b16 %v10698
        %v10743 = vunpack.c.h.b16 %v10698
        %v10744 = vunpack.c.l.b16 %v10699
        %v10745 = vunpack.c.h.b16 %v10699
        %v10746 = vunpack.c.l.b16 %v10700
        %v10747 = vunpack.c.h.b16 %v10700
        %v10748 = vunpack.c.l.b16 %v10701
        %v10749 = vunpack.c.h.b16 %v10701
        %v10750 = vpack.c.b16 %v10726, %v10718
        %v10751 = vpack.c.b16 %v10727, %v10719
        %v10752 = vpack.c.b16 %v10728, %v10720
        %v10753 = vpack.c.b16 %v10729, %v10721
        %v10754 = vpack.c.b16 %v10730, %v10722
        %v10755 = vpack.c.b16 %v10731, %v10723
        %v10756 = vpack.c.b16 %v10732, %v10724
        %v10757 = vpack.c.b16 %v10733, %v10725
        %v10758 = vpack.c.b16 %v10742, %v10734
        %v10759 = vpack.c.b16 %v10743, %v10735
        %v10760 = vpack.c.b16 %v10744, %v10736
        %v10761 = vpack.c.b16 %v10745, %v10737
        %v10762 = vpack.c.b16 %v10746, %v10738
        %v10763 = vpack.c.b16 %v10747, %v10739
        %v10764 = vpack.c.b16 %v10748, %v10740
        %v10765 = vpack.c.b16 %v10749, %v10741
        %10782 = vmatprep.subr.bf16.mxu0 0
        %10783 = vmatpush1.bf16.msra.mxu0 %v10622
        %10784 = vmatprep.subr.bf16.mxu0 0
        %10785 = vmatpush1.bf16.msra.mxu0 %v10623
        %10786 = vmatprep.subr.bf16.mxu0 0
        %10787 = vmatpush1.bf16.msra.mxu0 %v10624
        %10788 = vmatprep.subr.bf16.mxu0 0
        %10789 = vmatpush1.bf16.msra.mxu0 %v10625
        %10790 = vmatprep.subr.bf16.mxu0 0
        %10791 = vmatpush1.bf16.msra.mxu0 %v10626
        %10792 = vmatprep.subr.bf16.mxu0 0
        %10793 = vmatpush1.bf16.msra.mxu0 %v10627
        %10794 = vmatprep.subr.bf16.mxu0 0
        %10795 = vmatpush1.bf16.msra.mxu0 %v10628
        %10796 = vmatprep.subr.bf16.mxu0 0
        %10797 = vmatpush1.bf16.msra.mxu0 %v10629
        %10798 = vmatprep.subr.bf16.mxu0 0
        %10799 = vmatpush1.bf16.msra.mxu0 %v10630
        %10800 = vmatprep.subr.bf16.mxu0 0
        %10801 = vmatpush1.bf16.msra.mxu0 %v10631
        %10802 = vmatprep.subr.bf16.mxu0 0
        %10803 = vmatpush1.bf16.msra.mxu0 %v10632
        %10804 = vmatprep.subr.bf16.mxu0 0
        %10805 = vmatpush1.bf16.msra.mxu0 %v10633
        %10806 = vmatprep.subr.bf16.mxu0 0
        %10807 = vmatpush1.bf16.msra.mxu0 %v10634
        %10808 = vmatprep.subr.bf16.mxu0 0
        %10809 = vmatpush1.bf16.msra.mxu0 %v10635
        %10810 = vmatprep.subr.bf16.mxu0 0
        %10811 = vmatpush1.bf16.msra.mxu0 %v10636
        %10812 = vmatprep.subr.bf16.mxu0 0
        %10813 = vmatpush1.bf16.msra.mxu0 %v10637
        %10814 = vmatprep.mubr.bf16.mxu0 %v10751
        %10815 = vmatmul.mubr.bf16.gmra.mrb[0].mxu0 %v10750
        %v10816 = vpop.f32.mrb[0].mxu0
        %v10817 = vadd.f32 0.0, %v10816
        %v10818 = vpop.f32.mrb[0].mxu0
        %v10819 = vpop.f32.mrb[0].mxu0
        %v10820 = vadd.f32 0.0, %v10819
        %v10821 = vpop.f32.mrb[0].mxu0
        %10822 = vmatprep.mubr.bf16.mxu0 %v10759
        %10823 = vmatmul.mubr.bf16.gmra.mrb[0].mxu0 %v10758
        %v10824 = vpop.f32.mrb[0].mxu0
        %v10825 = vadd.f32 0.0, %v10824
        %v10826 = vpop.f32.mrb[0].mxu0
        %v10827 = vpop.f32.mrb[0].mxu0
        %v10828 = vadd.f32 0.0, %v10827
        %v10829 = vpop.f32.mrb[0].mxu0
        %10830 = vdwg.mxu0
        %10831 = vmatprep.subr.bf16.mxu0 0
        %10832 = vmatpush1.bf16.msra.mxu0 %v10638
        %10833 = vmatprep.subr.bf16.mxu0 0
        %10834 = vmatpush1.bf16.msra.mxu0 %v10639
        %10835 = vmatprep.subr.bf16.mxu0 0
        %10836 = vmatpush1.bf16.msra.mxu0 %v10640
        %10837 = vmatprep.subr.bf16.mxu0 0
        %10838 = vmatpush1.bf16.msra.mxu0 %v10641
        %10839 = vmatprep.subr.bf16.mxu0 0
        %10840 = vmatpush1.bf16.msra.mxu0 %v10642
        %10841 = vmatprep.subr.bf16.mxu0 0
        %10842 = vmatpush1.bf16.msra.mxu0 %v10643
        %10843 = vmatprep.subr.bf16.mxu0 0
        %10844 = vmatpush1.bf16.msra.mxu0 %v10644
        %10845 = vmatprep.subr.bf16.mxu0 0
        %10846 = vmatpush1.bf16.msra.mxu0 %v10645
        %10847 = vmatprep.subr.bf16.mxu0 0
        %10848 = vmatpush1.bf16.msra.mxu0 %v10646
        %10849 = vmatprep.subr.bf16.mxu0 0
        %10850 = vmatpush1.bf16.msra.mxu0 %v10647
        %10851 = vmatprep.subr.bf16.mxu0 0
        %10852 = vmatpush1.bf16.msra.mxu0 %v10648
        %10853 = vmatprep.subr.bf16.mxu0 0
        %10854 = vmatpush1.bf16.msra.mxu0 %v10649
        %10855 = vmatprep.subr.bf16.mxu0 0
        %10856 = vmatpush1.bf16.msra.mxu0 %v10650
        %10857 = vmatprep.subr.bf16.mxu0 0
        %10858 = vmatpush1.bf16.msra.mxu0 %v10651
        %10859 = vmatprep.subr.bf16.mxu0 0
        %10860 = vmatpush1.bf16.msra.mxu0 %v10652
        %10861 = vmatprep.subr.bf16.mxu0 0
        %10862 = vmatpush1.bf16.msra.mxu0 %v10653
        %10863 = vmatprep.mubr.bf16.mxu0 %v10753
        %10864 = vmatmul.mubr.bf16.gmra.mrb[0].mxu0 %v10752
        %v10865 = vpop.f32.mrb[0].mxu0
        %v10866 = vadd.f32 %v10817, %v10865
        %v10867 = vpop.f32.mrb[0].mxu0
        %v10868 = vpop.f32.mrb[0].mxu0
        %v10869 = vadd.f32 %v10820, %v10868
        %v10870 = vpop.f32.mrb[0].mxu0
        %10871 = vmatprep.mubr.bf16.mxu0 %v10761
        %10872 = vmatmul.mubr.bf16.gmra.mrb[0].mxu0 %v10760
        %v10873 = vpop.f32.mrb[0].mxu0
        %v10874 = vadd.f32 %v10825, %v10873
        %v10875 = vpop.f32.mrb[0].mxu0
        %v10876 = vpop.f32.mrb[0].mxu0
        %v10877 = vadd.f32 %v10828, %v10876
        %v10878 = vpop.f32.mrb[0].mxu0
        %10879 = vdwg.mxu0
        %10880 = vmatprep.subr.bf16.mxu0 0
        %10881 = vmatpush1.bf16.msra.mxu0 %v10654
        %10882 = vmatprep.subr.bf16.mxu0 0
        %10883 = vmatpush1.bf16.msra.mxu0 %v10655
        %10884 = vmatprep.subr.bf16.mxu0 0
        %10885 = vmatpush1.bf16.msra.mxu0 %v10656
        %10886 = vmatprep.subr.bf16.mxu0 0
        %10887 = vmatpush1.bf16.msra.mxu0 %v10657
        %10888 = vmatprep.subr.bf16.mxu0 0
        %10889 = vmatpush1.bf16.msra.mxu0 %v10658
        %10890 = vmatprep.subr.bf16.mxu0 0
        %10891 = vmatpush1.bf16.msra.mxu0 %v10659
        %10892 = vmatprep.subr.bf16.mxu0 0
        %10893 = vmatpush1.bf16.msra.mxu0 %v10660
        %10894 = vmatprep.subr.bf16.mxu0 0
        %10895 = vmatpush1.bf16.msra.mxu0 %v10661
        %10896 = vmatprep.subr.bf16.mxu0 0
        %10897 = vmatpush1.bf16.msra.mxu0 %v10662
        %10898 = vmatprep.subr.bf16.mxu0 0
        %10899 = vmatpush1.bf16.msra.mxu0 %v10663
        %10900 = vmatprep.subr.bf16.mxu0 0
        %10901 = vmatpush1.bf16.msra.mxu0 %v10664
        %10902 = vmatprep.subr.bf16.mxu0 0
        %10903 = vmatpush1.bf16.msra.mxu0 %v10665
        %10904 = vmatprep.subr.bf16.mxu0 0
        %10905 = vmatpush1.bf16.msra.mxu0 %v10666
        %10906 = vmatprep.subr.bf16.mxu0 0
        %10907 = vmatpush1.bf16.msra.mxu0 %v10667
        %10908 = vmatprep.subr.bf16.mxu0 0
        %10909 = vmatpush1.bf16.msra.mxu0 %v10668
        %10910 = vmatprep.subr.bf16.mxu0 0
        %10911 = vmatpush1.bf16.msra.mxu0 %v10669
        %10912 = vmatprep.mubr.bf16.mxu0 %v10755
        %10913 = vmatmul.mubr.bf16.gmra.mrb[0].mxu0 %v10754
        %v10914 = vpop.f32.mrb[0].mxu0
        %v10915 = vadd.f32 %v10866, %v10914
        %v10916 = vpop.f32.mrb[0].mxu0
        %v10917 = vpop.f32.mrb[0].mxu0
        %v10918 = vadd.f32 %v10869, %v10917
        %v10919 = vpop.f32.mrb[0].mxu0
        %10920 = vmatprep.mubr.bf16.mxu0 %v10763
        %10921 = vmatmul.mubr.bf16.gmra.mrb[0].mxu0 %v10762
        %v10922 = vpop.f32.mrb[0].mxu0
        %v10923 = vadd.f32 %v10874, %v10922
        %v10924 = vpop.f32.mrb[0].mxu0
        %v10925 = vpop.f32.mrb[0].mxu0
        %v10926 = vadd.f32 %v10877, %v10925
        %v10927 = vpop.f32.mrb[0].mxu0
        %10928 = vdwg.mxu0
        %10929 = vmatprep.subr.bf16.mxu0 0
        %10930 = vmatpush1.bf16.msra.mxu0 %v10670
        %10931 = vmatprep.subr.bf16.mxu0 0
        %10932 = vmatpush1.bf16.msra.mxu0 %v10671
        %10933 = vmatprep.subr.bf16.mxu0 0
        %10934 = vmatpush1.bf16.msra.mxu0 %v10672
        %10935 = vmatprep.subr.bf16.mxu0 0
        %10936 = vmatpush1.bf16.msra.mxu0 %v10673
        %10937 = vmatprep.subr.bf16.mxu0 0
        %10938 = vmatpush1.bf16.msra.mxu0 %v10674
        %10939 = vmatprep.subr.bf16.mxu0 0
        %10940 = vmatpush1.bf16.msra.mxu0 %v10675
        %10941 = vmatprep.subr.bf16.mxu0 0
        %10942 = vmatpush1.bf16.msra.mxu0 %v10676
        %10943 = vmatprep.subr.bf16.mxu0 0
        %10944 = vmatpush1.bf16.msra.mxu0 %v10677
        %10945 = vmatprep.subr.bf16.mxu0 0
        %10946 = vmatpush1.bf16.msra.mxu0 %v10678
        %10947 = vmatprep.subr.bf16.mxu0 0
        %10948 = vmatpush1.bf16.msra.mxu0 %v10679
        %10949 = vmatprep.subr.bf16.mxu0 0
        %10950 = vmatpush1.bf16.msra.mxu0 %v10680
        %10951 = vmatprep.subr.bf16.mxu0 0
        %10952 = vmatpush1.bf16.msra.mxu0 %v10681
        %10953 = vmatprep.subr.bf16.mxu0 0
        %10954 = vmatpush1.bf16.msra.mxu0 %v10682
        %10955 = vmatprep.subr.bf16.mxu0 0
        %10956 = vmatpush1.bf16.msra.mxu0 %v10683
        %10957 = vmatprep.subr.bf16.mxu0 0
        %10958 = vmatpush1.bf16.msra.mxu0 %v10684
        %10959 = vmatprep.subr.bf16.mxu0 0
        %10960 = vmatpush1.bf16.msra.mxu0 %v10685
        %10961 = vmatprep.mubr.bf16.mxu0 %v10757
        %10962 = vmatmul.mubr.bf16.gmra.mrb[0].mxu0 %v10756
        %v10963 = vpop.f32.mrb[0].mxu0
        %v10964 = vadd.f32 %v10915, %v10963
        %v10965 = vpop.f32.mrb[0].mxu0
        %v10966 = vpop.f32.mrb[0].mxu0
        %v10967 = vadd.f32 %v10918, %v10966
        %v10968 = vpop.f32.mrb[0].mxu0
        %10969 = vmatprep.mubr.bf16.mxu0 %v10765
        %10970 = vmatmul.mubr.bf16.gmra.mrb[0].mxu0 %v10764
        %v10971 = vpop.f32.mrb[0].mxu0
        %v10972 = vadd.f32 %v10923, %v10971
        %v10973 = vpop.f32.mrb[0].mxu0
        %v10974 = vpop.f32.mrb[0].mxu0
        %v10975 = vadd.f32 %v10926, %v10974
        %v10976 = vpop.f32.mrb[0].mxu0
        %10977 = vdwg.mxu0
        %v10978 = vsel %vm943, %v898, 0.0
        %10979 = vadd.xlane.f32.xlu0 %v10978
        %v10980 = vpop.xlane.xlu0 %10979
        %v10981 = vsel %vm943, %v899, 0.0
        %10982 = vadd.xlane.f32.xlu0 %v10981
        %v10983 = vpop.xlane.xlu0 %10982
        %v10984 = vsel %vm943, %v900, 0.0
        %10985 = vadd.xlane.f32.xlu0 %v10984
        %v10986 = vpop.xlane.xlu0 %10985
        %v10987 = vsel %vm943, %v901, 0.0
        %10988 = vadd.xlane.f32.xlu0 %v10987
        %v10989 = vpop.xlane.xlu0 %10988
        %v10990 = vrcp.pop 64.0
        %v10991 = vmul.f32 %v10980, %v10990
        %v10992 = vmul.f32 %v10983, %v10990
        %v10993 = vmul.f32 %v10986, %v10990
        %v10994 = vmul.f32 %v10989, %v10990
        %v10995 = vsub.f32 %v898, %v10991
        %v10996 = vsub.f32 %v899, %v10992
        %v10997 = vsub.f32 %v900, %v10993
        %v10998 = vsub.f32 %v901, %v10994
        %v10999 = vmul.f32 %v10995, %v10995
        %v11000 = vmul.f32 %v10996, %v10996
        %v11001 = vmul.f32 %v10997, %v10997
        %v11002 = vmul.f32 %v10998, %v10998
        %v11003 = vsel %vm943, %v10999, 0.0
        %11004 = vadd.xlane.f32.xlu0 %v11003
        %v11005 = vpop.xlane.xlu0 %11004
        %v11006 = vsel %vm943, %v11000, 0.0
        %11007 = vadd.xlane.f32.xlu0 %v11006
        %v11008 = vpop.xlane.xlu0 %11007
        %v11009 = vsel %vm943, %v11001, 0.0
        %11010 = vadd.xlane.f32.xlu0 %v11009
        %v11011 = vpop.xlane.xlu0 %11010
        %v11012 = vsel %vm943, %v11002, 0.0
        %11013 = vadd.xlane.f32.xlu0 %v11012
        %v11014 = vpop.xlane.xlu0 %11013
        %v11015 = vmul.f32 %v11005, %v10990
        %v11016 = vmul.f32 %v11008, %v10990
        %v11017 = vmul.f32 %v11011, %v10990
        %v11018 = vmul.f32 %v11014, %v10990
        %v11019 = vadd.f32 %v11015, 1e-05
        %v11020 = vadd.f32 %v11016, 1e-05
        %v11021 = vadd.f32 %v11017, 1e-05
        %v11022 = vadd.f32 %v11018, 1e-05
        %v11023 = vrsqrt.pop %v11019
        %v11024 = vrsqrt.pop %v11020
        %v11025 = vrsqrt.pop %v11021
        %v11026 = vrsqrt.pop %v11022
        %v11027 = vmul.f32 %v10995, %v11023
        %v11028 = vmul.f32 %v10996, %v11024
        %v11029 = vmul.f32 %v10997, %v11025
        %v11030 = vmul.f32 %v10998, %v11026
        %v11031 = vld [vmem:[%s859] sm:$0x1]
        %v11033 = vlaneseq
        %v11034 = vshrl.u32 %v11033, 7
        %v11035 = vsub.s32 0, %v11034
        %v11036 = vrot.slane %v11031, %v11035
        %v11038 = vmul.f32 %v11027, %v11036
        %v11039 = vmul.f32 %v11028, %v11036
        %v11040 = vmul.f32 %v11029, %v11036
        %v11041 = vmul.f32 %v11030, %v11036
        %v11042 = vld [vmem:[%s862] sm:$0x1]
        %v11044 = vlaneseq
        %v11045 = vshrl.u32 %v11044, 7
        %v11046 = vsub.s32 0, %v11045
        %v11047 = vrot.slane %v11042, %v11046
        %v11049 = vadd.f32 %v11038, %v11047
        %v11050 = vadd.f32 %v11039, %v11047
        %v11051 = vadd.f32 %v11040, %v11047
        %v11052 = vadd.f32 %v11041, %v11047
        %v11053 = vld [vmem:[%s867] sm:$0xff]
        %v11054 = vld [vmem:[%s867 + $0x8] sm:$0xff]
        %v11055 = vld [vmem:[%s867 + $0x10] sm:$0xff]
        %v11056 = vld [vmem:[%s867 + $0x18] sm:$0xff]
        %v11057 = vld [vmem:[%s867 + $0x20] sm:$0xff]
        %v11058 = vld [vmem:[%s867 + $0x28] sm:$0xff]
        %v11059 = vld [vmem:[%s867 + $0x30] sm:$0xff]
        %v11060 = vld [vmem:[%s867 + $0x38] sm:$0xff]
        %v11061 = vld [vmem:[%s872] sm:$0xff]
        %v11062 = vld [vmem:[%s872 + $0x8] sm:$0xff]
        %v11063 = vld [vmem:[%s872 + $0x10] sm:$0xff]
        %v11064 = vld [vmem:[%s872 + $0x18] sm:$0xff]
        %v11065 = vld [vmem:[%s872 + $0x20] sm:$0xff]
        %v11066 = vld [vmem:[%s872 + $0x28] sm:$0xff]
        %v11067 = vld [vmem:[%s872 + $0x30] sm:$0xff]
        %v11068 = vld [vmem:[%s872 + $0x38] sm:$0xff]
        %v11069 = vld [vmem:[%s872 + $0x40] sm:$0xff]
        %v11070 = vld [vmem:[%s872 + $0x48] sm:$0xff]
        %v11071 = vld [vmem:[%s872 + $0x50] sm:$0xff]
        %v11072 = vld [vmem:[%s872 + $0x58] sm:$0xff]
        %v11073 = vld [vmem:[%s872 + $0x60] sm:$0xff]
        %v11074 = vld [vmem:[%s872 + $0x68] sm:$0xff]
        %v11075 = vld [vmem:[%s872 + $0x70] sm:$0xff]
        %v11076 = vld [vmem:[%s872 + $0x78] sm:$0xff]
        %11077 = vmatprep.subr.mxu0 0.0
        %11078 = vmatpush1.msra.mxu0 %v11061
        %11079 = vmatprep.subr.mxu0 0.0
        %11080 = vmatpush1.msra.mxu0 %v11062
        %11081 = vmatprep.subr.mxu0 0.0
        %11082 = vmatpush1.msra.mxu0 %v11063
        %11083 = vmatprep.subr.mxu0 0.0
        %11084 = vmatpush1.msra.mxu0 %v11064
        %11085 = vmatprep.subr.mxu0 0.0
        %11086 = vmatpush1.msra.mxu0 %v11065
        %11087 = vmatprep.subr.mxu0 0.0
        %11088 = vmatpush1.msra.mxu0 %v11066
        %11089 = vmatprep.subr.mxu0 0.0
        %11090 = vmatpush1.msra.mxu0 %v11067
        %11091 = vmatprep.subr.mxu0 0.0
        %11092 = vmatpush1.msra.mxu0 %v11068
        %11093 = vmatprep.subr.mxu0 0.0
        %11094 = vmatpush1.msra.mxu0 %v11069
        %11095 = vmatprep.subr.mxu0 0.0
        %11096 = vmatpush1.msra.mxu0 %v11070
        %11097 = vmatprep.subr.mxu0 0.0
        %11098 = vmatpush1.msra.mxu0 %v11071
        %11099 = vmatprep.subr.mxu0 0.0
        %11100 = vmatpush1.msra.mxu0 %v11072
        %11101 = vmatprep.subr.mxu0 0.0
        %11102 = vmatpush1.msra.mxu0 %v11073
        %11103 = vmatprep.subr.mxu0 0.0
        %11104 = vmatpush1.msra.mxu0 %v11074
        %11105 = vmatprep.subr.mxu0 0.0
        %11106 = vmatpush1.msra.mxu0 %v11075
        %11107 = vmatprep.subr.mxu0 0.0
        %11108 = vmatpush1.msra.mxu0 %v11076
        %11109 = vmatprep.subr.mxu0 0.0
        %11110 = vmatpush1.msra.mxu0 0.0
        %11111 = vmatprep.subr.mxu0 0.0
        %11112 = vmatpush1.msra.mxu0 0.0
        %11113 = vmatprep.subr.mxu0 0.0
        %11114 = vmatpush1.msra.mxu0 0.0
        %11115 = vmatprep.subr.mxu0 0.0
        %11116 = vmatpush1.msra.mxu0 0.0
        %11117 = vmatprep.subr.mxu0 0.0
        %11118 = vmatpush1.msra.mxu0 0.0
        %11119 = vmatprep.subr.mxu0 0.0
        %11120 = vmatpush1.msra.mxu0 0.0
        %11121 = vmatprep.subr.mxu0 0.0
        %11122 = vmatpush1.msra.mxu0 0.0
        %11123 = vmatprep.subr.mxu0 0.0
        %11124 = vmatpush1.msra.mxu0 0.0
        %11125 = vmatprep.subr.mxu0 0.0
        %11126 = vmatpush1.msra.mxu0 0.0
        %11127 = vmatprep.subr.mxu0 0.0
        %11128 = vmatpush1.msra.mxu0 0.0
        %11129 = vmatprep.subr.mxu0 0.0
        %11130 = vmatpush1.msra.mxu0 0.0
        %11131 = vmatprep.subr.mxu0 0.0
        %11132 = vmatpush1.msra.mxu0 0.0
        %11133 = vmatprep.subr.mxu0 0.0
        %11134 = vmatpush1.msra.mxu0 0.0
        %11135 = vmatprep.subr.mxu0 0.0
        %11136 = vmatpush1.msra.mxu0 0.0
        %11137 = vmatprep.subr.mxu0 0.0
        %11138 = vmatpush1.msra.mxu0 0.0
        %11139 = vmatprep.subr.mxu0 0.0
        %11140 = vmatpush1.msra.mxu0 0.0
        %11141 = vmatprep.mubr.f32.mxu0 0.0
        %11142 = vmatmul.mubr.f32.gmra.mrb[0].mxu0 %v10964
        %v11143 = vpop.f32.mrb[0].mxu0
        %v11144 = vadd.f32 0.0, %v11143
        %v11145 = vpop.f32.mrb[0].mxu0
        %11146 = vmatprep.mubr.f32.mxu0 0.0
        %11147 = vmatmul.mubr.f32.gmra.mrb[0].mxu0 %v10967
        %v11148 = vpop.f32.mrb[0].mxu0
        %v11149 = vadd.f32 0.0, %v11148
        %v11150 = vpop.f32.mrb[0].mxu0
        %11151 = vmatprep.mubr.f32.mxu0 0.0
        %11152 = vmatmul.mubr.f32.gmra.mrb[0].mxu0 %v10972
        %v11153 = vpop.f32.mrb[0].mxu0
        %v11154 = vadd.f32 0.0, %v11153
        %v11155 = vpop.f32.mrb[0].mxu0
        %11156 = vmatprep.mubr.f32.mxu0 0.0
        %11157 = vmatmul.mubr.f32.gmra.mrb[0].mxu0 %v10975
        %v11158 = vpop.f32.mrb[0].mxu0
        %v11159 = vadd.f32 0.0, %v11158
        %v11160 = vpop.f32.mrb[0].mxu0
        %11161 = vdwg.mxu0
        %v11163 = vsel %vm943, %v11049, 0
        %v11166 = vsel %vm943, %v11050, 0
        %v11169 = vsel %vm943, %v11051, 0
        %v11172 = vsel %vm943, %v11052, 0
        %11174 = vmatprep.subr.mxu0 0.0
        %11175 = vmatpush1.msra.mxu0 %v11053
        %11176 = vmatprep.subr.mxu0 0.0
        %11177 = vmatpush1.msra.mxu0 %v11054
        %11178 = vmatprep.subr.mxu0 0.0
        %11179 = vmatpush1.msra.mxu0 %v11055
        %11180 = vmatprep.subr.mxu0 0.0
        %11181 = vmatpush1.msra.mxu0 %v11056
        %11182 = vmatprep.subr.mxu0 0.0
        %11183 = vmatpush1.msra.mxu0 %v11057
        %11184 = vmatprep.subr.mxu0 0.0
        %11185 = vmatpush1.msra.mxu0 %v11058
        %11186 = vmatprep.subr.mxu0 0.0
        %11187 = vmatpush1.msra.mxu0 %v11059
        %11188 = vmatprep.subr.mxu0 0.0
        %11189 = vmatpush1.msra.mxu0 %v11060
        %11190 = vmatprep.subr.mxu0 0.0
        %11191 = vmatpush1.msra.mxu0 0.0
        %11192 = vmatprep.subr.mxu0 0.0
        %11193 = vmatpush1.msra.mxu0 0.0
        %11194 = vmatprep.subr.mxu0 0.0
        %11195 = vmatpush1.msra.mxu0 0.0
        %11196 = vmatprep.subr.mxu0 0.0
        %11197 = vmatpush1.msra.mxu0 0.0
        %11198 = vmatprep.subr.mxu0 0.0
        %11199 = vmatpush1.msra.mxu0 0.0
        %11200 = vmatprep.subr.mxu0 0.0
        %11201 = vmatpush1.msra.mxu0 0.0
        %11202 = vmatprep.subr.mxu0 0.0
        %11203 = vmatpush1.msra.mxu0 0.0
        %11204 = vmatprep.subr.mxu0 0.0
        %11205 = vmatpush1.msra.mxu0 0.0
        %11206 = vmatprep.subr.mxu0 0.0
        %11207 = vmatpush1.msra.mxu0 0.0
        %11208 = vmatprep.subr.mxu0 0.0
        %11209 = vmatpush1.msra.mxu0 0.0
        %11210 = vmatprep.subr.mxu0 0.0
        %11211 = vmatpush1.msra.mxu0 0.0
        %11212 = vmatprep.subr.mxu0 0.0
        %11213 = vmatpush1.msra.mxu0 0.0
        %11214 = vmatprep.subr.mxu0 0.0
        %11215 = vmatpush1.msra.mxu0 0.0
        %11216 = vmatprep.subr.mxu0 0.0
        %11217 = vmatpush1.msra.mxu0 0.0
        %11218 = vmatprep.subr.mxu0 0.0
        %11219 = vmatpush1.msra.mxu0 0.0
        %11220 = vmatprep.subr.mxu0 0.0
        %11221 = vmatpush1.msra.mxu0 0.0
        %11222 = vmatprep.subr.mxu0 0.0
        %11223 = vmatpush1.msra.mxu0 0.0
        %11224 = vmatprep.subr.mxu0 0.0
        %11225 = vmatpush1.msra.mxu0 0.0
        %11226 = vmatprep.subr.mxu0 0.0
        %11227 = vmatpush1.msra.mxu0 0.0
        %11228 = vmatprep.subr.mxu0 0.0
        %11229 = vmatpush1.msra.mxu0 0.0
        %11230 = vmatprep.subr.mxu0 0.0
        %11231 = vmatpush1.msra.mxu0 0.0
        %11232 = vmatprep.subr.mxu0 0.0
        %11233 = vmatpush1.msra.mxu0 0.0
        %11234 = vmatprep.subr.mxu0 0.0
        %11235 = vmatpush1.msra.mxu0 0.0
        %11236 = vmatprep.subr.mxu0 0.0
        %11237 = vmatpush1.msra.mxu0 0.0
        %11238 = vmatprep.mubr.f32.mxu0 0.0
        %11239 = vmatmul.mubr.f32.gmra.mrb[0].mxu0 %v11163
        %v11240 = vpop.f32.mrb[0].mxu0
        %v11241 = vadd.f32 %v11144, %v11240
        %v11242 = vpop.f32.mrb[0].mxu0
        %11243 = vmatprep.mubr.f32.mxu0 0.0
        %11244 = vmatmul.mubr.f32.gmra.mrb[0].mxu0 %v11166
        %v11245 = vpop.f32.mrb[0].mxu0
        %v11246 = vadd.f32 %v11149, %v11245
        %v11247 = vpop.f32.mrb[0].mxu0
        %11248 = vmatprep.mubr.f32.mxu0 0.0
        %11249 = vmatmul.mubr.f32.gmra.mrb[0].mxu0 %v11169
        %v11250 = vpop.f32.mrb[0].mxu0
        %v11251 = vadd.f32 %v11154, %v11250
        %v11252 = vpop.f32.mrb[0].mxu0
        %11253 = vmatprep.mubr.f32.mxu0 0.0
        %11254 = vmatmul.mubr.f32.gmra.mrb[0].mxu0 %v11172
        %v11255 = vpop.f32.mrb[0].mxu0
        %v11256 = vadd.f32 %v11159, %v11255
        %v11257 = vpop.f32.mrb[0].mxu0
        %11258 = vdwg.mxu0
        %v11259 = vld [vmem:[%s875] sm:$0x1]
        %v11261 = vlaneseq
        %v11262 = vshrl.u32 %v11261, 7
        %v11263 = vsub.s32 0, %v11262
        %v11264 = vrot.slane %v11259, %v11263
        %v11266 = vadd.f32 %v11241, %v11264
        %v11267 = vadd.f32 %v11246, %v11264
        %v11268 = vadd.f32 %v11251, %v11264
        %v11269 = vadd.f32 %v11256, %v11264
        %v11270 = vmul.f32 %v11266, 0.5
        %v11271 = vmul.f32 %v11267, 0.5
        %v11272 = vmul.f32 %v11268, 0.5
        %v11273 = vmul.f32 %v11269, 0.5
        %v11274 = vtanh.pop %v11270
        %v11275 = vtanh.pop %v11271
        %v11276 = vtanh.pop %v11272
        %v11277 = vtanh.pop %v11273
        %v11278 = vadd.f32 %v11274, 1.0
        %v11279 = vadd.f32 %v11275, 1.0
        %v11280 = vadd.f32 %v11276, 1.0
        %v11281 = vadd.f32 %v11277, 1.0
        %v11282 = vmul.f32 %v11278, 0.5
        %v11283 = vmul.f32 %v11279, 0.5
        %v11284 = vmul.f32 %v11280, 0.5
        %v11285 = vmul.f32 %v11281, 0.5
        %v11286 = vmul.f32 %v11266, %v11282
        %v11287 = vmul.f32 %v11267, %v11283
        %v11288 = vmul.f32 %v11268, %v11284
        %v11289 = vmul.f32 %v11269, %v11285
        %v11290 = vld [vmem:[%s880] sm:$0xff]
        %v11291 = vld [vmem:[%s880 + $0x8] sm:$0xff]
        %v11292 = vld [vmem:[%s880 + $0x10] sm:$0xff]
        %v11293 = vld [vmem:[%s880 + $0x18] sm:$0xff]
        %v11294 = vld [vmem:[%s880 + $0x20] sm:$0xff]
        %v11295 = vld [vmem:[%s880 + $0x28] sm:$0xff]
        %v11296 = vld [vmem:[%s880 + $0x30] sm:$0xff]
        %v11297 = vld [vmem:[%s880 + $0x38] sm:$0xff]
        %v11298 = vld [vmem:[%s880 + $0x40] sm:$0xff]
        %v11299 = vld [vmem:[%s880 + $0x48] sm:$0xff]
        %v11300 = vld [vmem:[%s880 + $0x50] sm:$0xff]
        %v11301 = vld [vmem:[%s880 + $0x58] sm:$0xff]
        %v11302 = vld [vmem:[%s880 + $0x60] sm:$0xff]
        %v11303 = vld [vmem:[%s880 + $0x68] sm:$0xff]
        %v11304 = vld [vmem:[%s880 + $0x70] sm:$0xff]
        %v11305 = vld [vmem:[%s880 + $0x78] sm:$0xff]
        %v11306 = vld [vmem:[%s883] sm:$0x1]
        %v11308 = vlaneseq
        %v11309 = vshrl.u32 %v11308, 7
        %v11310 = vsub.s32 0, %v11309
        %v11311 = vrot.slane %v11306, %v11310
        %11313 = vmatprep.subr.mxu0 0.0
        %11314 = vmatpush1.msra.mxu0 %v11290
        %11315 = vmatprep.subr.mxu0 0.0
        %11316 = vmatpush1.msra.mxu0 %v11291
        %11317 = vmatprep.subr.mxu0 0.0
        %11318 = vmatpush1.msra.mxu0 %v11292
        %11319 = vmatprep.subr.mxu0 0.0
        %11320 = vmatpush1.msra.mxu0 %v11293
        %11321 = vmatprep.subr.mxu0 0.0
        %11322 = vmatpush1.msra.mxu0 %v11294
        %11323 = vmatprep.subr.mxu0 0.0
        %11324 = vmatpush1.msra.mxu0 %v11295
        %11325 = vmatprep.subr.mxu0 0.0
        %11326 = vmatpush1.msra.mxu0 %v11296
        %11327 = vmatprep.subr.mxu0 0.0
        %11328 = vmatpush1.msra.mxu0 %v11297
        %11329 = vmatprep.subr.mxu0 0.0
        %11330 = vmatpush1.msra.mxu0 %v11298
        %11331 = vmatprep.subr.mxu0 0.0
        %11332 = vmatpush1.msra.mxu0 %v11299
        %11333 = vmatprep.subr.mxu0 0.0
        %11334 = vmatpush1.msra.mxu0 %v11300
        %11335 = vmatprep.subr.mxu0 0.0
        %11336 = vmatpush1.msra.mxu0 %v11301
        %11337 = vmatprep.subr.mxu0 0.0
        %11338 = vmatpush1.msra.mxu0 %v11302
        %11339 = vmatprep.subr.mxu0 0.0
        %11340 = vmatpush1.msra.mxu0 %v11303
        %11341 = vmatprep.subr.mxu0 0.0
        %11342 = vmatpush1.msra.mxu0 %v11304
        %11343 = vmatprep.subr.mxu0 0.0
        %11344 = vmatpush1.msra.mxu0 %v11305
        %11345 = vmatprep.subr.mxu0 0.0
        %11346 = vmatpush1.msra.mxu0 0.0
        %11347 = vmatprep.subr.mxu0 0.0
        %11348 = vmatpush1.msra.mxu0 0.0
        %11349 = vmatprep.subr.mxu0 0.0
        %11350 = vmatpush1.msra.mxu0 0.0
        %11351 = vmatprep.subr.mxu0 0.0
        %11352 = vmatpush1.msra.mxu0 0.0
        %11353 = vmatprep.subr.mxu0 0.0
        %11354 = vmatpush1.msra.mxu0 0.0
        %11355 = vmatprep.subr.mxu0 0.0
        %11356 = vmatpush1.msra.mxu0 0.0
        %11357 = vmatprep.subr.mxu0 0.0
        %11358 = vmatpush1.msra.mxu0 0.0
        %11359 = vmatprep.subr.mxu0 0.0
        %11360 = vmatpush1.msra.mxu0 0.0
        %11361 = vmatprep.subr.mxu0 0.0
        %11362 = vmatpush1.msra.mxu0 0.0
        %11363 = vmatprep.subr.mxu0 0.0
        %11364 = vmatpush1.msra.mxu0 0.0
        %11365 = vmatprep.subr.mxu0 0.0
        %11366 = vmatpush1.msra.mxu0 0.0
        %11367 = vmatprep.subr.mxu0 0.0
        %11368 = vmatpush1.msra.mxu0 0.0
        %11369 = vmatprep.subr.mxu0 0.0
        %11370 = vmatpush1.msra.mxu0 0.0
        %11371 = vmatprep.subr.mxu0 0.0
        %11372 = vmatpush1.msra.mxu0 0.0
        %11373 = vmatprep.subr.mxu0 0.0
        %11374 = vmatpush1.msra.mxu0 0.0
        %11375 = vmatprep.subr.mxu0 0.0
        %11376 = vmatpush1.msra.mxu0 0.0
        %11377 = vmatprep.mubr.f32.mxu0 0.0
        %11378 = vmatmul.mubr.f32.gmra.mrb[0].mxu0 %v11286
        %v11379 = vpop.f32.mrb[0].mxu0
        %v11380 = vadd.f32 %v11311, %v11379
        %v11381 = vpop.f32.mrb[0].mxu0
        %11382 = vmatprep.mubr.f32.mxu0 0.0
        %11383 = vmatmul.mubr.f32.gmra.mrb[0].mxu0 %v11287
        %v11384 = vpop.f32.mrb[0].mxu0
        %v11385 = vadd.f32 %v11311, %v11384
        %v11386 = vpop.f32.mrb[0].mxu0
        %11387 = vmatprep.mubr.f32.mxu0 0.0
        %11388 = vmatmul.mubr.f32.gmra.mrb[0].mxu0 %v11288
        %v11389 = vpop.f32.mrb[0].mxu0
        %v11390 = vadd.f32 %v11311, %v11389
        %v11391 = vpop.f32.mrb[0].mxu0
        %11392 = vmatprep.mubr.f32.mxu0 0.0
        %11393 = vmatmul.mubr.f32.gmra.mrb[0].mxu0 %v11289
        %v11394 = vpop.f32.mrb[0].mxu0
        %v11395 = vadd.f32 %v11311, %v11394
        %v11396 = vpop.f32.mrb[0].mxu0
        %11397 = vdwg.mxu0
        %v11398 = vadd.f32 %v11380, %v898
        %v11399 = vadd.f32 %v11385, %v899
        %v11400 = vadd.f32 %v11390, %v900
        %v11401 = vadd.f32 %v11395, %v901
        %11402 = vst.msk [vmem:[%s807] sm:$0xff] %vm943, %v11398
        %11403 = vst.msk [vmem:[%s807 + $0x8] sm:$0xff] %vm943, %v11399
        %11404 = vst.msk [vmem:[%s807 + $0x10] sm:$0xff] %vm943, %v11400
        %11405 = vst.msk [vmem:[%s807 + $0x18] sm:$0xff] %vm943, %v11401
        %s11406 = sand.u32 %s520, 1
        %s11407 = scalar_lea.sflag [#allocation4], %s11406
        %s11408 = sand.u32 %s520, 1
        %s11409 = smul.addr %s11408, 32
        %s11410 = scalar_lea.vmem [#allocation3], %s11409
        // Predicated region
        $region97: #{egnn_net_pallas.1} parent=91 // pred_check
          %p11411 = pneg %p530
        $region98: #{egnn_net_pallas.1} parent=91 // pred_check_branch
          %11413 = sbr.rel (%p11411) target = $region100
        $region99: #{egnn_net_pallas.1} parent=91 // pred_region
          %s11415 = ssub.s32 512, 512
          %11416 = vsyncadd %s11407, %s11415
          %s11417 = smul.addr %s36, 4
          %s11418 = smul.addr %s11417, 128
          %s11419 = scalar_lea.hbm %s18, %s11418
          %s11420 = sshll.u32 %s11410, 4
          %s11421 = int_to_ptr.vmem [resolvable:$true] %s11420
          %11426 = dma.vmem_to_hbm [thread:$0]  %s11421, 512, %s11419, %s11407, 128, 128, 8
        $region100: #{egnn_net_pallas.1} parent=91 // pred_fallthru
          _
      $region92: #{egnn_net_pallas.1} parent=5 // pred_fallthru
        _
      %p11427 = scmp.le.s32.totalorder 2, %s27
      // Predicated region
      $region101: #{egnn_net_pallas.1} parent=5 // pred_check
        %p11428 = pneg %p11427
      $region102: #{egnn_net_pallas.1} parent=5 // pred_check_branch
        %11430 = sbr.rel (%p11428) target = $region104
      $region103: #{egnn_net_pallas.1} parent=5 // pred_region
        %s11431 = ssub.s32 %s27, 2
        // Predicated region
        $region105: #{egnn_net_pallas.1} parent=103 // pred_check
          %p11432 = pneg %p536
        $region106: #{egnn_net_pallas.1} parent=103 // pred_check_branch
          %11434 = sbr.rel (%p11432) target = $region108
        $region107: #{egnn_net_pallas.1} parent=103 // pred_region
          %s11435 = sand.u32 %s521, 1
          %s11436 = scalar_lea.sflag [#allocation4], %s11435
          %s11437 = sand.u32 %s521, 1
          %s11438 = smul.addr %s11437, 32
          %s11439 = scalar_lea.vmem [#allocation3], %s11438
          %11440 = dma.done %s11436, 512
        $region108: #{egnn_net_pallas.1} parent=103 // pred_fallthru
          _
      $region104: #{egnn_net_pallas.1} parent=5 // pred_fallthru
        _
    $region6: #{egnn_net_pallas.1} parent=1 // loop_footer
      %s31 = sadd.s32 1, %s27
    $region7: #{egnn_net_pallas.1} parent=1 // loop_footer_branch
      %26 = sbr.rel target = $region3
    $region8: #{egnn_net_pallas.1} parent=1 // loop_exit
      _
    %11441 = vsyncpa [#allocation4], 1
    %s11442 = scalar_lea.sflag [#allocation4], 1
    %11443 = vsyncpa %s11442, 1

</llo_original>
